<compile_context>
chip_gen: v7x
topology: tpu7x:2x2x1
jax: 0.10.0
libtpu: 0.0.40
codegen_flags: <defaults>
</compile_context>

<pallas_src>
import functools

import jax
import jax.numpy as jnp
from jax.experimental import pallas as pl
from jax.experimental.pallas import tpu as pltpu

VOCAB = 80
EMBED = 128
HIDDEN = 256
NUM_LAYERS = 2          # fixed to 2 in the fused kernel below
V_PAD = 128             # vocab / logits lane dim padded to 128 for unmasked tiles


def _lstm_cell(gates, c_prev, H):
    """PyTorch nn.LSTM gate order: [i, f, g, o]. sigmoid via tanh (1 EUP op/gate)."""
    i = 0.5 * (jnp.tanh(0.5 * gates[:, 0 * H:1 * H]) + 1.0)
    f = 0.5 * (jnp.tanh(0.5 * gates[:, 1 * H:2 * H]) + 1.0)
    g = jnp.tanh(gates[:, 2 * H:3 * H])
    o = 0.5 * (jnp.tanh(0.5 * gates[:, 3 * H:4 * H]) + 1.0)
    c = f * c_prev + i * g
    h = o * jnp.tanh(c)
    return h, c


def _char_lstm_kernel(tok_ref, femb_ref, whh1_ref, b1_ref, w2_hbm, b2_ref,
                      wout_hbm, bout_ref, out_ref,
                      w2_vmem, wout_vmem, sems, *, T, B, H):
    # ---- kick off the bulk weight DMAs; they overlap the prologue matmuls ----
    w2_cp = pltpu.make_async_copy(w2_hbm, w2_vmem, sems.at[0])
    wout_cp = pltpu.make_async_copy(wout_hbm, wout_vmem, sems.at[1])
    w2_cp.start()
    wout_cp.start()

    # ---- fused embedding + layer-1 input projection (one-hot MXU matmul) -----
    tok = tok_ref[...]                                           # (T*B, 128) int32, lane-dense
    vocab_iota = jax.lax.broadcasted_iota(jnp.int32, (T * B, V_PAD), 1)
    onehot = (tok == vocab_iota).astype(jnp.bfloat16)            # (T*B, 128) pure VPU compare
    xg1 = jnp.dot(onehot, femb_ref[...],
                  preferred_element_type=jnp.float32) + b1_ref[...]   # (T*B, 4H) f32

    whh1 = whh1_ref[...]                                         # (H, 4H) bf16
    b2 = b2_ref[...]                                             # (1, 4H) f32

    zeros = jnp.zeros((B, H), jnp.float32)
    h1, c1 = zeros, zeros
    h2, c2 = zeros, zeros

    # layer-2 weights are needed from t=0; the DMA has been hidden behind the prologue
    w2_cp.wait()
    w_ih2 = w2_vmem[0:H, :]                                      # (H, 4H) bf16
    w_hh2 = w2_vmem[H:2 * H, :]                                  # (H, 4H) bf16

    # ---- interleaved 2-layer recurrence, fully unrolled (T static/small) -----
    for t in range(T):
        # layer-1 step: only the recurrent bf16 matmul sits on the serial chain
        g1 = xg1[t * B:(t + 1) * B, :] + jnp.dot(
            h1.astype(jnp.bfloat16), whh1, preferred_element_type=jnp.float32)
        h1, c1 = _lstm_cell(g1, c1, H)

        # layer-2 step: two independent K=H dots (no per-step concat copy)
        g2 = (jnp.dot(h1.astype(jnp.bfloat16), w_ih2, preferred_element_type=jnp.float32)
              + jnp.dot(h2.astype(jnp.bfloat16), w_hh2, preferred_element_type=jnp.float32)
              + b2)
        h2, c2 = _lstm_cell(g2, c2, H)

    # ---- Dropout (eval) = identity; Linear on last timestep only (x[:, -1, :]) ----
    # TODO(synk): nn.Dropout training-mode masking not implemented (eval = identity).
    wout_cp.wait()
    logits = jnp.dot(h2.astype(jnp.bfloat16), wout_vmem[...],
                     preferred_element_type=jnp.float32) + bout_ref[...]
    out_ref[...] = logits                                        # (B, 128) lane-dense store


@jax.jit
def char_lstm_forward(params, tokens):
    # tokens: (B, T) int32
    B, T = tokens.shape
    B_pad = max(8, ((B + 7) // 8) * 8)                 # pad batch to sublane width
    tok_p = jnp.pad(tokens, ((0, B_pad - B), (0, 0))).astype(jnp.int32)
    # time-major flattened ids, pre-broadcast to 128 lanes (lane-dense compare)
    tok_tb = tok_p.T.reshape(T * B_pad, 1)
    tok_lane = jnp.broadcast_to(tok_tb, (T * B_pad, V_PAD))

    kernel = functools.partial(_char_lstm_kernel, T=T, B=B_pad, H=HIDDEN)
    logits_pad = pl.pallas_call(
        kernel,
        out_shape=jax.ShapeDtypeStruct((B_pad, V_PAD), jnp.float32),
        in_specs=[
            pl.BlockSpec(memory_space=pltpu.MemorySpace.VMEM),   # tokens (T*B,128)
            pl.BlockSpec(memory_space=pltpu.MemorySpace.VMEM),   # fused embed@W_ih1 (128,4H)
            pl.BlockSpec(memory_space=pltpu.MemorySpace.VMEM),   # W_hh1^T (H,4H)
            pl.BlockSpec(memory_space=pltpu.MemorySpace.VMEM),   # b1 (1,4H)
            pl.BlockSpec(memory_space=pl.ANY),                   # w2 stacked (manual DMA)
            pl.BlockSpec(memory_space=pltpu.MemorySpace.VMEM),   # b2 (1,4H)
            pl.BlockSpec(memory_space=pl.ANY),                   # W_out^T (manual DMA)
            pl.BlockSpec(memory_space=pltpu.MemorySpace.VMEM),   # b_out (1,128)
        ],
        out_specs=pl.BlockSpec(memory_space=pltpu.MemorySpace.VMEM),
        scratch_shapes=[
            pltpu.VMEM((2 * HIDDEN, 4 * HIDDEN), jnp.bfloat16),  # w2 landing buffer
            pltpu.VMEM((HIDDEN, V_PAD), jnp.bfloat16),           # w_out landing buffer
            pltpu.SemaphoreType.DMA((2,)),
        ],
    )(tok_lane, params["femb_ih1"], params["w_hh1_t"], params["b1"],
      params["w2_stacked"], params["b2"],
      params["w_out_t_pad"], params["b_out_pad"])

    return logits_pad[:B, :VOCAB]                                # (B, V) f32


# ---------------------------------------------------------------------------
# Parameter init (deterministic, PyTorch-style uniform(-1/sqrt(H), 1/sqrt(H)))
# Weights stored bf16 (MXU operands); biases stay f32 (added post-accumulation).
# ---------------------------------------------------------------------------
def init_params(key):
    k = iter(jax.random.split(key, 12))
    params = {}
    bound = 1.0 / jnp.sqrt(HIDDEN)

    embed = jax.random.normal(next(k), (VOCAB, EMBED), jnp.float32)

    # layer 1: fold the embedding into the input projection -> (V_PAD, 4H)
    w_ih1 = jax.random.uniform(next(k), (4 * HIDDEN, EMBED), jnp.float32, -bound, bound)
    w_hh1 = jax.random.uniform(next(k), (4 * HIDDEN, HIDDEN), jnp.float32, -bound, bound)
    b_ih1 = jax.random.uniform(next(k), (4 * HIDDEN,), jnp.float32, -bound, bound)
    b_hh1 = jax.random.uniform(next(k), (4 * HIDDEN,), jnp.float32, -bound, bound)
    fused = embed @ w_ih1.T                                      # (V, 4H) f32
    femb = jnp.zeros((V_PAD, 4 * HIDDEN), jnp.float32).at[:VOCAB, :].set(fused)
    params["femb_ih1"] = femb.astype(jnp.bfloat16)               # (128, 4H) bf16
    params["w_hh1_t"] = w_hh1.T.astype(jnp.bfloat16)             # (H, 4H) bf16
    params["b1"] = (b_ih1 + b_hh1)[None, :]                      # (1, 4H) f32

    # layer 2: stacked [W_ih2^T; W_hh2^T] in one HBM array (single DMA, sliced in-kernel)
    w_ih2 = jax.random.uniform(next(k), (4 * HIDDEN, HIDDEN), jnp.float32, -bound, bound)
    w_hh2 = jax.random.uniform(next(k), (4 * HIDDEN, HIDDEN), jnp.float32, -bound, bound)
    b_ih2 = jax.random.uniform(next(k), (4 * HIDDEN,), jnp.float32, -bound, bound)
    b_hh2 = jax.random.uniform(next(k), (4 * HIDDEN,), jnp.float32, -bound, bound)
    params["w2_stacked"] = jnp.concatenate(
        [w_ih2.T, w_hh2.T], axis=0).astype(jnp.bfloat16)         # (2H, 4H) bf16
    params["b2"] = (b_ih2 + b_hh2)[None, :]                      # (1, 4H) f32

    # output Linear, lane-padded to 128 for unmasked stores
    w_out = jax.random.uniform(next(k), (VOCAB, HIDDEN), jnp.float32, -bound, bound)
    b_out = jax.random.uniform(next(k), (VOCAB,), jnp.float32, -bound, bound)
    w_out_pad = jnp.zeros((HIDDEN, V_PAD), jnp.float32).at[:, :VOCAB].set(w_out.T)
    params["w_out_t_pad"] = w_out_pad.astype(jnp.bfloat16)       # (H, 128) bf16
    params["b_out_pad"] = jnp.zeros((1, V_PAD), jnp.float32).at[:, :VOCAB].set(b_out)
    return params


if __name__ == "__main__":
    key = jax.random.PRNGKey(0)
    pkey, dkey = jax.random.split(key)
    params = init_params(pkey)

    B, T = 2, 8
    tokens = jax.random.randint(dkey, (B, T), 0, VOCAB, dtype=jnp.int32)

    logits = char_lstm_forward(params, tokens)
    jax.block_until_ready(logits)
    assert logits.shape == (B, VOCAB), logits.shape
    assert logits.dtype == jnp.float32
    assert bool(jnp.all(jnp.isfinite(logits)))
    print("KERNEL_OK")
</pallas_src>

<mosaic_0001>
module attributes {stable_mosaic.version = 11 : i64} {
  func.func @_char_lstm_kernel(%arg0: memref<64x128xi32, #tpu.memory_space<vmem>>, %arg1: memref<128x1024xbf16, #tpu.memory_space<vmem>>, %arg2: memref<256x1024xbf16, #tpu.memory_space<vmem>>, %arg3: memref<1x1024xf32, #tpu.memory_space<vmem>>, %arg4: memref<512x1024xbf16, #tpu.memory_space<any>>, %arg5: memref<1x1024xf32, #tpu.memory_space<vmem>>, %arg6: memref<256x128xbf16, #tpu.memory_space<any>>, %arg7: memref<1x128xf32, #tpu.memory_space<vmem>>, %arg8: memref<8x128xf32, #tpu.memory_space<vmem>>, %arg9: memref<512x1024xbf16, #tpu.memory_space<vmem>>, %arg10: memref<256x128xbf16, #tpu.memory_space<vmem>>, %arg11: memref<2x!tpu.dma_semaphore, #tpu.memory_space<semaphore_mem>>) attributes {dimension_semantics = [], scalar_prefetch = 0 : i64, scratch_operands = 3 : i64, tpu.core_type = #tpu.core_type<tc>} {
    %c0_i32 = arith.constant 0 : i32
    %0 = tpu.memref_slice %arg11[%c0_i32] : memref<2x!tpu.dma_semaphore, #tpu.memory_space<semaphore_mem>> -> memref<1x!tpu.dma_semaphore, #tpu.memory_space<semaphore_mem>>
    %1 = tpu.memref_squeeze %0 : memref<1x!tpu.dma_semaphore, #tpu.memory_space<semaphore_mem>> -> memref<!tpu.dma_semaphore, #tpu.memory_space<semaphore_mem>>
    tpu.enqueue_dma source(%arg4 : memref<512x1024xbf16, #tpu.memory_space<any>>) target(%arg9 : memref<512x1024xbf16, #tpu.memory_space<vmem>>) target_semaphore(%1 : memref<!tpu.dma_semaphore, #tpu.memory_space<semaphore_mem>>)
    %c1_i32 = arith.constant 1 : i32
    %2 = tpu.memref_slice %arg11[%c1_i32] : memref<2x!tpu.dma_semaphore, #tpu.memory_space<semaphore_mem>> -> memref<1x!tpu.dma_semaphore, #tpu.memory_space<semaphore_mem>>
    %3 = tpu.memref_squeeze %2 : memref<1x!tpu.dma_semaphore, #tpu.memory_space<semaphore_mem>> -> memref<!tpu.dma_semaphore, #tpu.memory_space<semaphore_mem>>
    tpu.enqueue_dma source(%arg6 : memref<256x128xbf16, #tpu.memory_space<any>>) target(%arg10 : memref<256x128xbf16, #tpu.memory_space<vmem>>) target_semaphore(%3 : memref<!tpu.dma_semaphore, #tpu.memory_space<semaphore_mem>>)
    %c0 = arith.constant 0 : index
    %c0_0 = arith.constant 0 : index
    %4 = vector.load %arg0[%c0, %c0_0] : memref<64x128xi32, #tpu.memory_space<vmem>>, vector<64x128xi32>
    %5 = tpu.iota {dimensions = array<i32: 1>} : vector<64x128xi32>
    %6 = arith.cmpi eq, %4, %5 : vector<64x128xi32>
    %7 = arith.extui %6 : vector<64x128xi1> to vector<64x128xi32>
    %8 = arith.sitofp %7 : vector<64x128xi32> to vector<64x128xf32>
    %9 = arith.truncf %8 : vector<64x128xf32> to vector<64x128xbf16>
    %c0_1 = arith.constant 0 : index
    %c0_2 = arith.constant 0 : index
    %10 = vector.load %arg1[%c0_1, %c0_2] : memref<128x1024xbf16, #tpu.memory_space<vmem>>, vector<128x1024xbf16>
    %cst = arith.constant dense<0.000000e+00> : vector<64x1024xf32>
    %11 = tpu.matmul %9, %10, %cst {dimension_numbers = #tpu.dot_dimension_numbers<[1], [0], [0], [1], [0, 0, 1, 1], [], []>} : vector<64x128xbf16>, vector<128x1024xbf16>, vector<64x1024xf32> -> vector<64x1024xf32>
    %c0_3 = arith.constant 0 : index
    %c0_4 = arith.constant 0 : index
    %12 = vector.load %arg3[%c0_3, %c0_4] : memref<1x1024xf32, #tpu.memory_space<vmem>>, vector<1x1024xf32>
    %13 = vector.broadcast %12 : vector<1x1024xf32> to vector<64x1024xf32>
    %14 = arith.addf %11, %13 : vector<64x1024xf32>
    %c0_5 = arith.constant 0 : index
    %c0_6 = arith.constant 0 : index
    %15 = vector.load %arg2[%c0_5, %c0_6] : memref<256x1024xbf16, #tpu.memory_space<vmem>>, vector<256x1024xbf16>
    %c0_7 = arith.constant 0 : index
    %c0_8 = arith.constant 0 : index
    %16 = vector.load %arg5[%c0_7, %c0_8] : memref<1x1024xf32, #tpu.memory_space<vmem>>, vector<1x1024xf32>
    %cst_9 = arith.constant 0.000000e+00 : f32
    %17 = vector.broadcast %cst_9 : f32 to vector<8x256xf32>
    %c0_i32_10 = arith.constant 0 : i32
    %18 = tpu.memref_slice %arg11[%c0_i32_10] : memref<2x!tpu.dma_semaphore, #tpu.memory_space<semaphore_mem>> -> memref<1x!tpu.dma_semaphore, #tpu.memory_space<semaphore_mem>>
    %19 = tpu.memref_squeeze %18 : memref<1x!tpu.dma_semaphore, #tpu.memory_space<semaphore_mem>> -> memref<!tpu.dma_semaphore, #tpu.memory_space<semaphore_mem>>
    tpu.wait_dma2 semaphore(%19 : memref<!tpu.dma_semaphore, #tpu.memory_space<semaphore_mem>>) src(%arg4 : memref<512x1024xbf16, #tpu.memory_space<any>>) dst(%arg9 : memref<512x1024xbf16, #tpu.memory_space<vmem>>)
    %c0_11 = arith.constant 0 : index
    %c0_12 = arith.constant 0 : index
    %20 = vector.load %arg9[%c0_11, %c0_12] : memref<512x1024xbf16, #tpu.memory_space<vmem>>, vector<256x1024xbf16>
    %c256 = arith.constant 256 : index
    %c0_13 = arith.constant 0 : index
    %21 = vector.load %arg9[%c256, %c0_13] : memref<512x1024xbf16, #tpu.memory_space<vmem>>, vector<256x1024xbf16>
    %22 = vector.extract_strided_slice %14 {offsets = [0, 0], sizes = [8, 1024], strides = [1, 1]} : vector<64x1024xf32> to vector<8x1024xf32>
    %23 = arith.truncf %17 : vector<8x256xf32> to vector<8x256xbf16>
    %cst_14 = arith.constant dense<0.000000e+00> : vector<8x1024xf32>
    %24 = tpu.matmul %23, %15, %cst_14 {dimension_numbers = #tpu.dot_dimension_numbers<[1], [0], [0], [1], [0, 0, 1, 1], [], []>} : vector<8x256xbf16>, vector<256x1024xbf16>, vector<8x1024xf32> -> vector<8x1024xf32>
    %25 = arith.addf %22, %24 : vector<8x1024xf32>
    %26 = vector.extract_strided_slice %25 {offsets = [0, 0], sizes = [8, 256], strides = [1, 1]} : vector<8x1024xf32> to vector<8x256xf32>
    %cst_15 = arith.constant 5.000000e-01 : f32
    %27 = vector.broadcast %cst_15 : f32 to vector<8x256xf32>
    %28 = arith.mulf %27, %26 : vector<8x256xf32>
    %29 = math.tanh %28 : vector<8x256xf32>
    %cst_16 = arith.constant 1.000000e+00 : f32
    %30 = vector.broadcast %cst_16 : f32 to vector<8x256xf32>
    %31 = arith.addf %29, %30 : vector<8x256xf32>
    %cst_17 = arith.constant 5.000000e-01 : f32
    %32 = vector.broadcast %cst_17 : f32 to vector<8x256xf32>
    %33 = arith.mulf %32, %31 : vector<8x256xf32>
    %34 = vector.extract_strided_slice %25 {offsets = [0, 256], sizes = [8, 256], strides = [1, 1]} : vector<8x1024xf32> to vector<8x256xf32>
    %cst_18 = arith.constant 5.000000e-01 : f32
    %35 = vector.broadcast %cst_18 : f32 to vector<8x256xf32>
    %36 = arith.mulf %35, %34 : vector<8x256xf32>
    %37 = math.tanh %36 : vector<8x256xf32>
    %cst_19 = arith.constant 1.000000e+00 : f32
    %38 = vector.broadcast %cst_19 : f32 to vector<8x256xf32>
    %39 = arith.addf %37, %38 : vector<8x256xf32>
    %cst_20 = arith.constant 5.000000e-01 : f32
    %40 = vector.broadcast %cst_20 : f32 to vector<8x256xf32>
    %41 = arith.mulf %40, %39 : vector<8x256xf32>
    %42 = vector.extract_strided_slice %25 {offsets = [0, 512], sizes = [8, 256], strides = [1, 1]} : vector<8x1024xf32> to vector<8x256xf32>
    %43 = math.tanh %42 : vector<8x256xf32>
    %44 = vector.extract_strided_slice %25 {offsets = [0, 768], sizes = [8, 256], strides = [1, 1]} : vector<8x1024xf32> to vector<8x256xf32>
    %cst_21 = arith.constant 5.000000e-01 : f32
    %45 = vector.broadcast %cst_21 : f32 to vector<8x256xf32>
    %46 = arith.mulf %45, %44 : vector<8x256xf32>
    %47 = math.tanh %46 : vector<8x256xf32>
    %cst_22 = arith.constant 1.000000e+00 : f32
    %48 = vector.broadcast %cst_22 : f32 to vector<8x256xf32>
    %49 = arith.addf %47, %48 : vector<8x256xf32>
    %cst_23 = arith.constant 5.000000e-01 : f32
    %50 = vector.broadcast %cst_23 : f32 to vector<8x256xf32>
    %51 = arith.mulf %50, %49 : vector<8x256xf32>
    %52 = arith.mulf %41, %17 : vector<8x256xf32>
    %53 = arith.mulf %33, %43 : vector<8x256xf32>
    %54 = arith.addf %52, %53 : vector<8x256xf32>
    %55 = math.tanh %54 : vector<8x256xf32>
    %56 = arith.mulf %51, %55 : vector<8x256xf32>
    %57 = arith.truncf %56 : vector<8x256xf32> to vector<8x256xbf16>
    %cst_24 = arith.constant dense<0.000000e+00> : vector<8x1024xf32>
    %58 = tpu.matmul %57, %20, %cst_24 {dimension_numbers = #tpu.dot_dimension_numbers<[1], [0], [0], [1], [0, 0, 1, 1], [], []>} : vector<8x256xbf16>, vector<256x1024xbf16>, vector<8x1024xf32> -> vector<8x1024xf32>
    %59 = arith.truncf %17 : vector<8x256xf32> to vector<8x256xbf16>
    %cst_25 = arith.constant dense<0.000000e+00> : vector<8x1024xf32>
    %60 = tpu.matmul %59, %21, %cst_25 {dimension_numbers = #tpu.dot_dimension_numbers<[1], [0], [0], [1], [0, 0, 1, 1], [], []>} : vector<8x256xbf16>, vector<256x1024xbf16>, vector<8x1024xf32> -> vector<8x1024xf32>
    %61 = arith.addf %58, %60 : vector<8x1024xf32>
    %62 = vector.broadcast %16 : vector<1x1024xf32> to vector<8x1024xf32>
    %63 = arith.addf %61, %62 : vector<8x1024xf32>
    %64 = vector.extract_strided_slice %63 {offsets = [0, 0], sizes = [8, 256], strides = [1, 1]} : vector<8x1024xf32> to vector<8x256xf32>
    %cst_26 = arith.constant 5.000000e-01 : f32
    %65 = vector.broadcast %cst_26 : f32 to vector<8x256xf32>
    %66 = arith.mulf %65, %64 : vector<8x256xf32>
    %67 = math.tanh %66 : vector<8x256xf32>
    %cst_27 = arith.constant 1.000000e+00 : f32
    %68 = vector.broadcast %cst_27 : f32 to vector<8x256xf32>
    %69 = arith.addf %67, %68 : vector<8x256xf32>
    %cst_28 = arith.constant 5.000000e-01 : f32
    %70 = vector.broadcast %cst_28 : f32 to vector<8x256xf32>
    %71 = arith.mulf %70, %69 : vector<8x256xf32>
    %72 = vector.extract_strided_slice %63 {offsets = [0, 256], sizes = [8, 256], strides = [1, 1]} : vector<8x1024xf32> to vector<8x256xf32>
    %cst_29 = arith.constant 5.000000e-01 : f32
    %73 = vector.broadcast %cst_29 : f32 to vector<8x256xf32>
    %74 = arith.mulf %73, %72 : vector<8x256xf32>
    %75 = math.tanh %74 : vector<8x256xf32>
    %cst_30 = arith.constant 1.000000e+00 : f32
    %76 = vector.broadcast %cst_30 : f32 to vector<8x256xf32>
    %77 = arith.addf %75, %76 : vector<8x256xf32>
    %cst_31 = arith.constant 5.000000e-01 : f32
    %78 = vector.broadcast %cst_31 : f32 to vector<8x256xf32>
    %79 = arith.mulf %78, %77 : vector<8x256xf32>
    %80 = vector.extract_strided_slice %63 {offsets = [0, 512], sizes = [8, 256], strides = [1, 1]} : vector<8x1024xf32> to vector<8x256xf32>
    %81 = math.tanh %80 : vector<8x256xf32>
    %82 = vector.extract_strided_slice %63 {offsets = [0, 768], sizes = [8, 256], strides = [1, 1]} : vector<8x1024xf32> to vector<8x256xf32>
    %cst_32 = arith.constant 5.000000e-01 : f32
    %83 = vector.broadcast %cst_32 : f32 to vector<8x256xf32>
    %84 = arith.mulf %83, %82 : vector<8x256xf32>
    %85 = math.tanh %84 : vector<8x256xf32>
    %cst_33 = arith.constant 1.000000e+00 : f32
    %86 = vector.broadcast %cst_33 : f32 to vector<8x256xf32>
    %87 = arith.addf %85, %86 : vector<8x256xf32>
    %cst_34 = arith.constant 5.000000e-01 : f32
    %88 = vector.broadcast %cst_34 : f32 to vector<8x256xf32>
    %89 = arith.mulf %88, %87 : vector<8x256xf32>
    %90 = arith.mulf %79, %17 : vector<8x256xf32>
    %91 = arith.mulf %71, %81 : vector<8x256xf32>
    %92 = arith.addf %90, %91 : vector<8x256xf32>
    %93 = math.tanh %92 : vector<8x256xf32>
    %94 = arith.mulf %89, %93 : vector<8x256xf32>
    %95 = vector.extract_strided_slice %14 {offsets = [8, 0], sizes = [8, 1024], strides = [1, 1]} : vector<64x1024xf32> to vector<8x1024xf32>
    %96 = arith.truncf %56 : vector<8x256xf32> to vector<8x256xbf16>
    %cst_35 = arith.constant dense<0.000000e+00> : vector<8x1024xf32>
    %97 = tpu.matmul %96, %15, %cst_35 {dimension_numbers = #tpu.dot_dimension_numbers<[1], [0], [0], [1], [0, 0, 1, 1], [], []>} : vector<8x256xbf16>, vector<256x1024xbf16>, vector<8x1024xf32> -> vector<8x1024xf32>
    %98 = arith.addf %95, %97 : vector<8x1024xf32>
    %99 = vector.extract_strided_slice %98 {offsets = [0, 0], sizes = [8, 256], strides = [1, 1]} : vector<8x1024xf32> to vector<8x256xf32>
    %cst_36 = arith.constant 5.000000e-01 : f32
    %100 = vector.broadcast %cst_36 : f32 to vector<8x256xf32>
    %101 = arith.mulf %100, %99 : vector<8x256xf32>
    %102 = math.tanh %101 : vector<8x256xf32>
    %cst_37 = arith.constant 1.000000e+00 : f32
    %103 = vector.broadcast %cst_37 : f32 to vector<8x256xf32>
    %104 = arith.addf %102, %103 : vector<8x256xf32>
    %cst_38 = arith.constant 5.000000e-01 : f32
    %105 = vector.broadcast %cst_38 : f32 to vector<8x256xf32>
    %106 = arith.mulf %105, %104 : vector<8x256xf32>
    %107 = vector.extract_strided_slice %98 {offsets = [0, 256], sizes = [8, 256], strides = [1, 1]} : vector<8x1024xf32> to vector<8x256xf32>
    %cst_39 = arith.constant 5.000000e-01 : f32
    %108 = vector.broadcast %cst_39 : f32 to vector<8x256xf32>
    %109 = arith.mulf %108, %107 : vector<8x256xf32>
    %110 = math.tanh %109 : vector<8x256xf32>
    %cst_40 = arith.constant 1.000000e+00 : f32
    %111 = vector.broadcast %cst_40 : f32 to vector<8x256xf32>
    %112 = arith.addf %110, %111 : vector<8x256xf32>
    %cst_41 = arith.constant 5.000000e-01 : f32
    %113 = vector.broadcast %cst_41 : f32 to vector<8x256xf32>
    %114 = arith.mulf %113, %112 : vector<8x256xf32>
    %115 = vector.extract_strided_slice %98 {offsets = [0, 512], sizes = [8, 256], strides = [1, 1]} : vector<8x1024xf32> to vector<8x256xf32>
    %116 = math.tanh %115 : vector<8x256xf32>
    %117 = vector.extract_strided_slice %98 {offsets = [0, 768], sizes = [8, 256], strides = [1, 1]} : vector<8x1024xf32> to vector<8x256xf32>
    %cst_42 = arith.constant 5.000000e-01 : f32
    %118 = vector.broadcast %cst_42 : f32 to vector<8x256xf32>
    %119 = arith.mulf %118, %117 : vector<8x256xf32>
    %120 = math.tanh %119 : vector<8x256xf32>
    %cst_43 = arith.constant 1.000000e+00 : f32
    %121 = vector.broadcast %cst_43 : f32 to vector<8x256xf32>
    %122 = arith.addf %120, %121 : vector<8x256xf32>
    %cst_44 = arith.constant 5.000000e-01 : f32
    %123 = vector.broadcast %cst_44 : f32 to vector<8x256xf32>
    %124 = arith.mulf %123, %122 : vector<8x256xf32>
    %125 = arith.mulf %114, %54 : vector<8x256xf32>
    %126 = arith.mulf %106, %116 : vector<8x256xf32>
    %127 = arith.addf %125, %126 : vector<8x256xf32>
    %128 = math.tanh %127 : vector<8x256xf32>
    %129 = arith.mulf %124, %128 : vector<8x256xf32>
    %130 = arith.truncf %129 : vector<8x256xf32> to vector<8x256xbf16>
    %cst_45 = arith.constant dense<0.000000e+00> : vector<8x1024xf32>
    %131 = tpu.matmul %130, %20, %cst_45 {dimension_numbers = #tpu.dot_dimension_numbers<[1], [0], [0], [1], [0, 0, 1, 1], [], []>} : vector<8x256xbf16>, vector<256x1024xbf16>, vector<8x1024xf32> -> vector<8x1024xf32>
    %132 = arith.truncf %94 : vector<8x256xf32> to vector<8x256xbf16>
    %cst_46 = arith.constant dense<0.000000e+00> : vector<8x1024xf32>
    %133 = tpu.matmul %132, %21, %cst_46 {dimension_numbers = #tpu.dot_dimension_numbers<[1], [0], [0], [1], [0, 0, 1, 1], [], []>} : vector<8x256xbf16>, vector<256x1024xbf16>, vector<8x1024xf32> -> vector<8x1024xf32>
    %134 = arith.addf %131, %133 : vector<8x1024xf32>
    %135 = vector.broadcast %16 : vector<1x1024xf32> to vector<8x1024xf32>
    %136 = arith.addf %134, %135 : vector<8x1024xf32>
    %137 = vector.extract_strided_slice %136 {offsets = [0, 0], sizes = [8, 256], strides = [1, 1]} : vector<8x1024xf32> to vector<8x256xf32>
    %cst_47 = arith.constant 5.000000e-01 : f32
    %138 = vector.broadcast %cst_47 : f32 to vector<8x256xf32>
    %139 = arith.mulf %138, %137 : vector<8x256xf32>
    %140 = math.tanh %139 : vector<8x256xf32>
    %cst_48 = arith.constant 1.000000e+00 : f32
    %141 = vector.broadcast %cst_48 : f32 to vector<8x256xf32>
    %142 = arith.addf %140, %141 : vector<8x256xf32>
    %cst_49 = arith.constant 5.000000e-01 : f32
    %143 = vector.broadcast %cst_49 : f32 to vector<8x256xf32>
    %144 = arith.mulf %143, %142 : vector<8x256xf32>
    %145 = vector.extract_strided_slice %136 {offsets = [0, 256], sizes = [8, 256], strides = [1, 1]} : vector<8x1024xf32> to vector<8x256xf32>
    %cst_50 = arith.constant 5.000000e-01 : f32
    %146 = vector.broadcast %cst_50 : f32 to vector<8x256xf32>
    %147 = arith.mulf %146, %145 : vector<8x256xf32>
    %148 = math.tanh %147 : vector<8x256xf32>
    %cst_51 = arith.constant 1.000000e+00 : f32
    %149 = vector.broadcast %cst_51 : f32 to vector<8x256xf32>
    %150 = arith.addf %148, %149 : vector<8x256xf32>
    %cst_52 = arith.constant 5.000000e-01 : f32
    %151 = vector.broadcast %cst_52 : f32 to vector<8x256xf32>
    %152 = arith.mulf %151, %150 : vector<8x256xf32>
    %153 = vector.extract_strided_slice %136 {offsets = [0, 512], sizes = [8, 256], strides = [1, 1]} : vector<8x1024xf32> to vector<8x256xf32>
    %154 = math.tanh %153 : vector<8x256xf32>
    %155 = vector.extract_strided_slice %136 {offsets = [0, 768], sizes = [8, 256], strides = [1, 1]} : vector<8x1024xf32> to vector<8x256xf32>
    %cst_53 = arith.constant 5.000000e-01 : f32
    %156 = vector.broadcast %cst_53 : f32 to vector<8x256xf32>
    %157 = arith.mulf %156, %155 : vector<8x256xf32>
    %158 = math.tanh %157 : vector<8x256xf32>
    %cst_54 = arith.constant 1.000000e+00 : f32
    %159 = vector.broadcast %cst_54 : f32 to vector<8x256xf32>
    %160 = arith.addf %158, %159 : vector<8x256xf32>
    %cst_55 = arith.constant 5.000000e-01 : f32
    %161 = vector.broadcast %cst_55 : f32 to vector<8x256xf32>
    %162 = arith.mulf %161, %160 : vector<8x256xf32>
    %163 = arith.mulf %152, %92 : vector<8x256xf32>
    %164 = arith.mulf %144, %154 : vector<8x256xf32>
    %165 = arith.addf %163, %164 : vector<8x256xf32>
    %166 = math.tanh %165 : vector<8x256xf32>
    %167 = arith.mulf %162, %166 : vector<8x256xf32>
    %168 = vector.extract_strided_slice %14 {offsets = [16, 0], sizes = [8, 1024], strides = [1, 1]} : vector<64x1024xf32> to vector<8x1024xf32>
    %169 = arith.truncf %129 : vector<8x256xf32> to vector<8x256xbf16>
    %cst_56 = arith.constant dense<0.000000e+00> : vector<8x1024xf32>
    %170 = tpu.matmul %169, %15, %cst_56 {dimension_numbers = #tpu.dot_dimension_numbers<[1], [0], [0], [1], [0, 0, 1, 1], [], []>} : vector<8x256xbf16>, vector<256x1024xbf16>, vector<8x1024xf32> -> vector<8x1024xf32>
    %171 = arith.addf %168, %170 : vector<8x1024xf32>
    %172 = vector.extract_strided_slice %171 {offsets = [0, 0], sizes = [8, 256], strides = [1, 1]} : vector<8x1024xf32> to vector<8x256xf32>
    %cst_57 = arith.constant 5.000000e-01 : f32
    %173 = vector.broadcast %cst_57 : f32 to vector<8x256xf32>
    %174 = arith.mulf %173, %172 : vector<8x256xf32>
    %175 = math.tanh %174 : vector<8x256xf32>
    %cst_58 = arith.constant 1.000000e+00 : f32
    %176 = vector.broadcast %cst_58 : f32 to vector<8x256xf32>
    %177 = arith.addf %175, %176 : vector<8x256xf32>
    %cst_59 = arith.constant 5.000000e-01 : f32
    %178 = vector.broadcast %cst_59 : f32 to vector<8x256xf32>
    %179 = arith.mulf %178, %177 : vector<8x256xf32>
    %180 = vector.extract_strided_slice %171 {offsets = [0, 256], sizes = [8, 256], strides = [1, 1]} : vector<8x1024xf32> to vector<8x256xf32>
    %cst_60 = arith.constant 5.000000e-01 : f32
    %181 = vector.broadcast %cst_60 : f32 to vector<8x256xf32>
    %182 = arith.mulf %181, %180 : vector<8x256xf32>
    %183 = math.tanh %182 : vector<8x256xf32>
    %cst_61 = arith.constant 1.000000e+00 : f32
    %184 = vector.broadcast %cst_61 : f32 to vector<8x256xf32>
    %185 = arith.addf %183, %184 : vector<8x256xf32>
    %cst_62 = arith.constant 5.000000e-01 : f32
    %186 = vector.broadcast %cst_62 : f32 to vector<8x256xf32>
    %187 = arith.mulf %186, %185 : vector<8x256xf32>
    %188 = vector.extract_strided_slice %171 {offsets = [0, 512], sizes = [8, 256], strides = [1, 1]} : vector<8x1024xf32> to vector<8x256xf32>
    %189 = math.tanh %188 : vector<8x256xf32>
    %190 = vector.extract_strided_slice %171 {offsets = [0, 768], sizes = [8, 256], strides = [1, 1]} : vector<8x1024xf32> to vector<8x256xf32>
    %cst_63 = arith.constant 5.000000e-01 : f32
    %191 = vector.broadcast %cst_63 : f32 to vector<8x256xf32>
    %192 = arith.mulf %191, %190 : vector<8x256xf32>
    %193 = math.tanh %192 : vector<8x256xf32>
    %cst_64 = arith.constant 1.000000e+00 : f32
    %194 = vector.broadcast %cst_64 : f32 to vector<8x256xf32>
    %195 = arith.addf %193, %194 : vector<8x256xf32>
    %cst_65 = arith.constant 5.000000e-01 : f32
    %196 = vector.broadcast %cst_65 : f32 to vector<8x256xf32>
    %197 = arith.mulf %196, %195 : vector<8x256xf32>
    %198 = arith.mulf %187, %127 : vector<8x256xf32>
    %199 = arith.mulf %179, %189 : vector<8x256xf32>
    %200 = arith.addf %198, %199 : vector<8x256xf32>
    %201 = math.tanh %200 : vector<8x256xf32>
    %202 = arith.mulf %197, %201 : vector<8x256xf32>
    %203 = arith.truncf %202 : vector<8x256xf32> to vector<8x256xbf16>
    %cst_66 = arith.constant dense<0.000000e+00> : vector<8x1024xf32>
    %204 = tpu.matmul %203, %20, %cst_66 {dimension_numbers = #tpu.dot_dimension_numbers<[1], [0], [0], [1], [0, 0, 1, 1], [], []>} : vector<8x256xbf16>, vector<256x1024xbf16>, vector<8x1024xf32> -> vector<8x1024xf32>
    %205 = arith.truncf %167 : vector<8x256xf32> to vector<8x256xbf16>
    %cst_67 = arith.constant dense<0.000000e+00> : vector<8x1024xf32>
    %206 = tpu.matmul %205, %21, %cst_67 {dimension_numbers = #tpu.dot_dimension_numbers<[1], [0], [0], [1], [0, 0, 1, 1], [], []>} : vector<8x256xbf16>, vector<256x1024xbf16>, vector<8x1024xf32> -> vector<8x1024xf32>
    %207 = arith.addf %204, %206 : vector<8x1024xf32>
    %208 = vector.broadcast %16 : vector<1x1024xf32> to vector<8x1024xf32>
    %209 = arith.addf %207, %208 : vector<8x1024xf32>
    %210 = vector.extract_strided_slice %209 {offsets = [0, 0], sizes = [8, 256], strides = [1, 1]} : vector<8x1024xf32> to vector<8x256xf32>
    %cst_68 = arith.constant 5.000000e-01 : f32
    %211 = vector.broadcast %cst_68 : f32 to vector<8x256xf32>
    %212 = arith.mulf %211, %210 : vector<8x256xf32>
    %213 = math.tanh %212 : vector<8x256xf32>
    %cst_69 = arith.constant 1.000000e+00 : f32
    %214 = vector.broadcast %cst_69 : f32 to vector<8x256xf32>
    %215 = arith.addf %213, %214 : vector<8x256xf32>
    %cst_70 = arith.constant 5.000000e-01 : f32
    %216 = vector.broadcast %cst_70 : f32 to vector<8x256xf32>
    %217 = arith.mulf %216, %215 : vector<8x256xf32>
    %218 = vector.extract_strided_slice %209 {offsets = [0, 256], sizes = [8, 256], strides = [1, 1]} : vector<8x1024xf32> to vector<8x256xf32>
    %cst_71 = arith.constant 5.000000e-01 : f32
    %219 = vector.broadcast %cst_71 : f32 to vector<8x256xf32>
    %220 = arith.mulf %219, %218 : vector<8x256xf32>
    %221 = math.tanh %220 : vector<8x256xf32>
    %cst_72 = arith.constant 1.000000e+00 : f32
    %222 = vector.broadcast %cst_72 : f32 to vector<8x256xf32>
    %223 = arith.addf %221, %222 : vector<8x256xf32>
    %cst_73 = arith.constant 5.000000e-01 : f32
    %224 = vector.broadcast %cst_73 : f32 to vector<8x256xf32>
    %225 = arith.mulf %224, %223 : vector<8x256xf32>
    %226 = vector.extract_strided_slice %209 {offsets = [0, 512], sizes = [8, 256], strides = [1, 1]} : vector<8x1024xf32> to vector<8x256xf32>
    %227 = math.tanh %226 : vector<8x256xf32>
    %228 = vector.extract_strided_slice %209 {offsets = [0, 768], sizes = [8, 256], strides = [1, 1]} : vector<8x1024xf32> to vector<8x256xf32>
    %cst_74 = arith.constant 5.000000e-01 : f32
    %229 = vector.broadcast %cst_74 : f32 to vector<8x256xf32>
    %230 = arith.mulf %229, %228 : vector<8x256xf32>
    %231 = math.tanh %230 : vector<8x256xf32>
    %cst_75 = arith.constant 1.000000e+00 : f32
    %232 = vector.broadcast %cst_75 : f32 to vector<8x256xf32>
    %233 = arith.addf %231, %232 : vector<8x256xf32>
    %cst_76 = arith.constant 5.000000e-01 : f32
    %234 = vector.broadcast %cst_76 : f32 to vector<8x256xf32>
    %235 = arith.mulf %234, %233 : vector<8x256xf32>
    %236 = arith.mulf %225, %165 : vector<8x256xf32>
    %237 = arith.mulf %217, %227 : vector<8x256xf32>
    %238 = arith.addf %236, %237 : vector<8x256xf32>
    %239 = math.tanh %238 : vector<8x256xf32>
    %240 = arith.mulf %235, %239 : vector<8x256xf32>
    %241 = vector.extract_strided_slice %14 {offsets = [24, 0], sizes = [8, 1024], strides = [1, 1]} : vector<64x1024xf32> to vector<8x1024xf32>
    %242 = arith.truncf %202 : vector<8x256xf32> to vector<8x256xbf16>
    %cst_77 = arith.constant dense<0.000000e+00> : vector<8x1024xf32>
    %243 = tpu.matmul %242, %15, %cst_77 {dimension_numbers = #tpu.dot_dimension_numbers<[1], [0], [0], [1], [0, 0, 1, 1], [], []>} : vector<8x256xbf16>, vector<256x1024xbf16>, vector<8x1024xf32> -> vector<8x1024xf32>
    %244 = arith.addf %241, %243 : vector<8x1024xf32>
    %245 = vector.extract_strided_slice %244 {offsets = [0, 0], sizes = [8, 256], strides = [1, 1]} : vector<8x1024xf32> to vector<8x256xf32>
    %cst_78 = arith.constant 5.000000e-01 : f32
    %246 = vector.broadcast %cst_78 : f32 to vector<8x256xf32>
    %247 = arith.mulf %246, %245 : vector<8x256xf32>
    %248 = math.tanh %247 : vector<8x256xf32>
    %cst_79 = arith.constant 1.000000e+00 : f32
    %249 = vector.broadcast %cst_79 : f32 to vector<8x256xf32>
    %250 = arith.addf %248, %249 : vector<8x256xf32>
    %cst_80 = arith.constant 5.000000e-01 : f32
    %251 = vector.broadcast %cst_80 : f32 to vector<8x256xf32>
    %252 = arith.mulf %251, %250 : vector<8x256xf32>
    %253 = vector.extract_strided_slice %244 {offsets = [0, 256], sizes = [8, 256], strides = [1, 1]} : vector<8x1024xf32> to vector<8x256xf32>
    %cst_81 = arith.constant 5.000000e-01 : f32
    %254 = vector.broadcast %cst_81 : f32 to vector<8x256xf32>
    %255 = arith.mulf %254, %253 : vector<8x256xf32>
    %256 = math.tanh %255 : vector<8x256xf32>
    %cst_82 = arith.constant 1.000000e+00 : f32
    %257 = vector.broadcast %cst_82 : f32 to vector<8x256xf32>
    %258 = arith.addf %256, %257 : vector<8x256xf32>
    %cst_83 = arith.constant 5.000000e-01 : f32
    %259 = vector.broadcast %cst_83 : f32 to vector<8x256xf32>
    %260 = arith.mulf %259, %258 : vector<8x256xf32>
    %261 = vector.extract_strided_slice %244 {offsets = [0, 512], sizes = [8, 256], strides = [1, 1]} : vector<8x1024xf32> to vector<8x256xf32>
    %262 = math.tanh %261 : vector<8x256xf32>
    %263 = vector.extract_strided_slice %244 {offsets = [0, 768], sizes = [8, 256], strides = [1, 1]} : vector<8x1024xf32> to vector<8x256xf32>
    %cst_84 = arith.constant 5.000000e-01 : f32
    %264 = vector.broadcast %cst_84 : f32 to vector<8x256xf32>
    %265 = arith.mulf %264, %263 : vector<8x256xf32>
    %266 = math.tanh %265 : vector<8x256xf32>
    %cst_85 = arith.constant 1.000000e+00 : f32
    %267 = vector.broadcast %cst_85 : f32 to vector<8x256xf32>
    %268 = arith.addf %266, %267 : vector<8x256xf32>
    %cst_86 = arith.constant 5.000000e-01 : f32
    %269 = vector.broadcast %cst_86 : f32 to vector<8x256xf32>
    %270 = arith.mulf %269, %268 : vector<8x256xf32>
    %271 = arith.mulf %260, %200 : vector<8x256xf32>
    %272 = arith.mulf %252, %262 : vector<8x256xf32>
    %273 = arith.addf %271, %272 : vector<8x256xf32>
    %274 = math.tanh %273 : vector<8x256xf32>
    %275 = arith.mulf %270, %274 : vector<8x256xf32>
    %276 = arith.truncf %275 : vector<8x256xf32> to vector<8x256xbf16>
    %cst_87 = arith.constant dense<0.000000e+00> : vector<8x1024xf32>
    %277 = tpu.matmul %276, %20, %cst_87 {dimension_numbers = #tpu.dot_dimension_numbers<[1], [0], [0], [1], [0, 0, 1, 1], [], []>} : vector<8x256xbf16>, vector<256x1024xbf16>, vector<8x1024xf32> -> vector<8x1024xf32>
    %278 = arith.truncf %240 : vector<8x256xf32> to vector<8x256xbf16>
    %cst_88 = arith.constant dense<0.000000e+00> : vector<8x1024xf32>
    %279 = tpu.matmul %278, %21, %cst_88 {dimension_numbers = #tpu.dot_dimension_numbers<[1], [0], [0], [1], [0, 0, 1, 1], [], []>} : vector<8x256xbf16>, vector<256x1024xbf16>, vector<8x1024xf32> -> vector<8x1024xf32>
    %280 = arith.addf %277, %279 : vector<8x1024xf32>
    %281 = vector.broadcast %16 : vector<1x1024xf32> to vector<8x1024xf32>
    %282 = arith.addf %280, %281 : vector<8x1024xf32>
    %283 = vector.extract_strided_slice %282 {offsets = [0, 0], sizes = [8, 256], strides = [1, 1]} : vector<8x1024xf32> to vector<8x256xf32>
    %cst_89 = arith.constant 5.000000e-01 : f32
    %284 = vector.broadcast %cst_89 : f32 to vector<8x256xf32>
    %285 = arith.mulf %284, %283 : vector<8x256xf32>
    %286 = math.tanh %285 : vector<8x256xf32>
    %cst_90 = arith.constant 1.000000e+00 : f32
    %287 = vector.broadcast %cst_90 : f32 to vector<8x256xf32>
    %288 = arith.addf %286, %287 : vector<8x256xf32>
    %cst_91 = arith.constant 5.000000e-01 : f32
    %289 = vector.broadcast %cst_91 : f32 to vector<8x256xf32>
    %290 = arith.mulf %289, %288 : vector<8x256xf32>
    %291 = vector.extract_strided_slice %282 {offsets = [0, 256], sizes = [8, 256], strides = [1, 1]} : vector<8x1024xf32> to vector<8x256xf32>
    %cst_92 = arith.constant 5.000000e-01 : f32
    %292 = vector.broadcast %cst_92 : f32 to vector<8x256xf32>
    %293 = arith.mulf %292, %291 : vector<8x256xf32>
    %294 = math.tanh %293 : vector<8x256xf32>
    %cst_93 = arith.constant 1.000000e+00 : f32
    %295 = vector.broadcast %cst_93 : f32 to vector<8x256xf32>
    %296 = arith.addf %294, %295 : vector<8x256xf32>
    %cst_94 = arith.constant 5.000000e-01 : f32
    %297 = vector.broadcast %cst_94 : f32 to vector<8x256xf32>
    %298 = arith.mulf %297, %296 : vector<8x256xf32>
    %299 = vector.extract_strided_slice %282 {offsets = [0, 512], sizes = [8, 256], strides = [1, 1]} : vector<8x1024xf32> to vector<8x256xf32>
    %300 = math.tanh %299 : vector<8x256xf32>
    %301 = vector.extract_strided_slice %282 {offsets = [0, 768], sizes = [8, 256], strides = [1, 1]} : vector<8x1024xf32> to vector<8x256xf32>
    %cst_95 = arith.constant 5.000000e-01 : f32
    %302 = vector.broadcast %cst_95 : f32 to vector<8x256xf32>
    %303 = arith.mulf %302, %301 : vector<8x256xf32>
    %304 = math.tanh %303 : vector<8x256xf32>
    %cst_96 = arith.constant 1.000000e+00 : f32
    %305 = vector.broadcast %cst_96 : f32 to vector<8x256xf32>
    %306 = arith.addf %304, %305 : vector<8x256xf32>
    %cst_97 = arith.constant 5.000000e-01 : f32
    %307 = vector.broadcast %cst_97 : f32 to vector<8x256xf32>
    %308 = arith.mulf %307, %306 : vector<8x256xf32>
    %309 = arith.mulf %298, %238 : vector<8x256xf32>
    %310 = arith.mulf %290, %300 : vector<8x256xf32>
    %311 = arith.addf %309, %310 : vector<8x256xf32>
    %312 = math.tanh %311 : vector<8x256xf32>
    %313 = arith.mulf %308, %312 : vector<8x256xf32>
    %314 = vector.extract_strided_slice %14 {offsets = [32, 0], sizes = [8, 1024], strides = [1, 1]} : vector<64x1024xf32> to vector<8x1024xf32>
    %315 = arith.truncf %275 : vector<8x256xf32> to vector<8x256xbf16>
    %cst_98 = arith.constant dense<0.000000e+00> : vector<8x1024xf32>
    %316 = tpu.matmul %315, %15, %cst_98 {dimension_numbers = #tpu.dot_dimension_numbers<[1], [0], [0], [1], [0, 0, 1, 1], [], []>} : vector<8x256xbf16>, vector<256x1024xbf16>, vector<8x1024xf32> -> vector<8x1024xf32>
    %317 = arith.addf %314, %316 : vector<8x1024xf32>
    %318 = vector.extract_strided_slice %317 {offsets = [0, 0], sizes = [8, 256], strides = [1, 1]} : vector<8x1024xf32> to vector<8x256xf32>
    %cst_99 = arith.constant 5.000000e-01 : f32
    %319 = vector.broadcast %cst_99 : f32 to vector<8x256xf32>
    %320 = arith.mulf %319, %318 : vector<8x256xf32>
    %321 = math.tanh %320 : vector<8x256xf32>
    %cst_100 = arith.constant 1.000000e+00 : f32
    %322 = vector.broadcast %cst_100 : f32 to vector<8x256xf32>
    %323 = arith.addf %321, %322 : vector<8x256xf32>
    %cst_101 = arith.constant 5.000000e-01 : f32
    %324 = vector.broadcast %cst_101 : f32 to vector<8x256xf32>
    %325 = arith.mulf %324, %323 : vector<8x256xf32>
    %326 = vector.extract_strided_slice %317 {offsets = [0, 256], sizes = [8, 256], strides = [1, 1]} : vector<8x1024xf32> to vector<8x256xf32>
    %cst_102 = arith.constant 5.000000e-01 : f32
    %327 = vector.broadcast %cst_102 : f32 to vector<8x256xf32>
    %328 = arith.mulf %327, %326 : vector<8x256xf32>
    %329 = math.tanh %328 : vector<8x256xf32>
    %cst_103 = arith.constant 1.000000e+00 : f32
    %330 = vector.broadcast %cst_103 : f32 to vector<8x256xf32>
    %331 = arith.addf %329, %330 : vector<8x256xf32>
    %cst_104 = arith.constant 5.000000e-01 : f32
    %332 = vector.broadcast %cst_104 : f32 to vector<8x256xf32>
    %333 = arith.mulf %332, %331 : vector<8x256xf32>
    %334 = vector.extract_strided_slice %317 {offsets = [0, 512], sizes = [8, 256], strides = [1, 1]} : vector<8x1024xf32> to vector<8x256xf32>
    %335 = math.tanh %334 : vector<8x256xf32>
    %336 = vector.extract_strided_slice %317 {offsets = [0, 768], sizes = [8, 256], strides = [1, 1]} : vector<8x1024xf32> to vector<8x256xf32>
    %cst_105 = arith.constant 5.000000e-01 : f32
    %337 = vector.broadcast %cst_105 : f32 to vector<8x256xf32>
    %338 = arith.mulf %337, %336 : vector<8x256xf32>
    %339 = math.tanh %338 : vector<8x256xf32>
    %cst_106 = arith.constant 1.000000e+00 : f32
    %340 = vector.broadcast %cst_106 : f32 to vector<8x256xf32>
    %341 = arith.addf %339, %340 : vector<8x256xf32>
    %cst_107 = arith.constant 5.000000e-01 : f32
    %342 = vector.broadcast %cst_107 : f32 to vector<8x256xf32>
    %343 = arith.mulf %342, %341 : vector<8x256xf32>
    %344 = arith.mulf %333, %273 : vector<8x256xf32>
    %345 = arith.mulf %325, %335 : vector<8x256xf32>
    %346 = arith.addf %344, %345 : vector<8x256xf32>
    %347 = math.tanh %346 : vector<8x256xf32>
    %348 = arith.mulf %343, %347 : vector<8x256xf32>
    %349 = arith.truncf %348 : vector<8x256xf32> to vector<8x256xbf16>
    %cst_108 = arith.constant dense<0.000000e+00> : vector<8x1024xf32>
    %350 = tpu.matmul %349, %20, %cst_108 {dimension_numbers = #tpu.dot_dimension_numbers<[1], [0], [0], [1], [0, 0, 1, 1], [], []>} : vector<8x256xbf16>, vector<256x1024xbf16>, vector<8x1024xf32> -> vector<8x1024xf32>
    %351 = arith.truncf %313 : vector<8x256xf32> to vector<8x256xbf16>
    %cst_109 = arith.constant dense<0.000000e+00> : vector<8x1024xf32>
    %352 = tpu.matmul %351, %21, %cst_109 {dimension_numbers = #tpu.dot_dimension_numbers<[1], [0], [0], [1], [0, 0, 1, 1], [], []>} : vector<8x256xbf16>, vector<256x1024xbf16>, vector<8x1024xf32> -> vector<8x1024xf32>
    %353 = arith.addf %350, %352 : vector<8x1024xf32>
    %354 = vector.broadcast %16 : vector<1x1024xf32> to vector<8x1024xf32>
    %355 = arith.addf %353, %354 : vector<8x1024xf32>
    %356 = vector.extract_strided_slice %355 {offsets = [0, 0], sizes = [8, 256], strides = [1, 1]} : vector<8x1024xf32> to vector<8x256xf32>
    %cst_110 = arith.constant 5.000000e-01 : f32
    %357 = vector.broadcast %cst_110 : f32 to vector<8x256xf32>
    %358 = arith.mulf %357, %356 : vector<8x256xf32>
    %359 = math.tanh %358 : vector<8x256xf32>
    %cst_111 = arith.constant 1.000000e+00 : f32
    %360 = vector.broadcast %cst_111 : f32 to vector<8x256xf32>
    %361 = arith.addf %359, %360 : vector<8x256xf32>
    %cst_112 = arith.constant 5.000000e-01 : f32
    %362 = vector.broadcast %cst_112 : f32 to vector<8x256xf32>
    %363 = arith.mulf %362, %361 : vector<8x256xf32>
    %364 = vector.extract_strided_slice %355 {offsets = [0, 256], sizes = [8, 256], strides = [1, 1]} : vector<8x1024xf32> to vector<8x256xf32>
    %cst_113 = arith.constant 5.000000e-01 : f32
    %365 = vector.broadcast %cst_113 : f32 to vector<8x256xf32>
    %366 = arith.mulf %365, %364 : vector<8x256xf32>
    %367 = math.tanh %366 : vector<8x256xf32>
    %cst_114 = arith.constant 1.000000e+00 : f32
    %368 = vector.broadcast %cst_114 : f32 to vector<8x256xf32>
    %369 = arith.addf %367, %368 : vector<8x256xf32>
    %cst_115 = arith.constant 5.000000e-01 : f32
    %370 = vector.broadcast %cst_115 : f32 to vector<8x256xf32>
    %371 = arith.mulf %370, %369 : vector<8x256xf32>
    %372 = vector.extract_strided_slice %355 {offsets = [0, 512], sizes = [8, 256], strides = [1, 1]} : vector<8x1024xf32> to vector<8x256xf32>
    %373 = math.tanh %372 : vector<8x256xf32>
    %374 = vector.extract_strided_slice %355 {offsets = [0, 768], sizes = [8, 256], strides = [1, 1]} : vector<8x1024xf32> to vector<8x256xf32>
    %cst_116 = arith.constant 5.000000e-01 : f32
    %375 = vector.broadcast %cst_116 : f32 to vector<8x256xf32>
    %376 = arith.mulf %375, %374 : vector<8x256xf32>
    %377 = math.tanh %376 : vector<8x256xf32>
    %cst_117 = arith.constant 1.000000e+00 : f32
    %378 = vector.broadcast %cst_117 : f32 to vector<8x256xf32>
    %379 = arith.addf %377, %378 : vector<8x256xf32>
    %cst_118 = arith.constant 5.000000e-01 : f32
    %380 = vector.broadcast %cst_118 : f32 to vector<8x256xf32>
    %381 = arith.mulf %380, %379 : vector<8x256xf32>
    %382 = arith.mulf %371, %311 : vector<8x256xf32>
    %383 = arith.mulf %363, %373 : vector<8x256xf32>
    %384 = arith.addf %382, %383 : vector<8x256xf32>
    %385 = math.tanh %384 : vector<8x256xf32>
    %386 = arith.mulf %381, %385 : vector<8x256xf32>
    %387 = vector.extract_strided_slice %14 {offsets = [40, 0], sizes = [8, 1024], strides = [1, 1]} : vector<64x1024xf32> to vector<8x1024xf32>
    %388 = arith.truncf %348 : vector<8x256xf32> to vector<8x256xbf16>
    %cst_119 = arith.constant dense<0.000000e+00> : vector<8x1024xf32>
    %389 = tpu.matmul %388, %15, %cst_119 {dimension_numbers = #tpu.dot_dimension_numbers<[1], [0], [0], [1], [0, 0, 1, 1], [], []>} : vector<8x256xbf16>, vector<256x1024xbf16>, vector<8x1024xf32> -> vector<8x1024xf32>
    %390 = arith.addf %387, %389 : vector<8x1024xf32>
    %391 = vector.extract_strided_slice %390 {offsets = [0, 0], sizes = [8, 256], strides = [1, 1]} : vector<8x1024xf32> to vector<8x256xf32>
    %cst_120 = arith.constant 5.000000e-01 : f32
    %392 = vector.broadcast %cst_120 : f32 to vector<8x256xf32>
    %393 = arith.mulf %392, %391 : vector<8x256xf32>
    %394 = math.tanh %393 : vector<8x256xf32>
    %cst_121 = arith.constant 1.000000e+00 : f32
    %395 = vector.broadcast %cst_121 : f32 to vector<8x256xf32>
    %396 = arith.addf %394, %395 : vector<8x256xf32>
    %cst_122 = arith.constant 5.000000e-01 : f32
    %397 = vector.broadcast %cst_122 : f32 to vector<8x256xf32>
    %398 = arith.mulf %397, %396 : vector<8x256xf32>
    %399 = vector.extract_strided_slice %390 {offsets = [0, 256], sizes = [8, 256], strides = [1, 1]} : vector<8x1024xf32> to vector<8x256xf32>
    %cst_123 = arith.constant 5.000000e-01 : f32
    %400 = vector.broadcast %cst_123 : f32 to vector<8x256xf32>
    %401 = arith.mulf %400, %399 : vector<8x256xf32>
    %402 = math.tanh %401 : vector<8x256xf32>
    %cst_124 = arith.constant 1.000000e+00 : f32
    %403 = vector.broadcast %cst_124 : f32 to vector<8x256xf32>
    %404 = arith.addf %402, %403 : vector<8x256xf32>
    %cst_125 = arith.constant 5.000000e-01 : f32
    %405 = vector.broadcast %cst_125 : f32 to vector<8x256xf32>
    %406 = arith.mulf %405, %404 : vector<8x256xf32>
    %407 = vector.extract_strided_slice %390 {offsets = [0, 512], sizes = [8, 256], strides = [1, 1]} : vector<8x1024xf32> to vector<8x256xf32>
    %408 = math.tanh %407 : vector<8x256xf32>
    %409 = vector.extract_strided_slice %390 {offsets = [0, 768], sizes = [8, 256], strides = [1, 1]} : vector<8x1024xf32> to vector<8x256xf32>
    %cst_126 = arith.constant 5.000000e-01 : f32
    %410 = vector.broadcast %cst_126 : f32 to vector<8x256xf32>
    %411 = arith.mulf %410, %409 : vector<8x256xf32>
    %412 = math.tanh %411 : vector<8x256xf32>
    %cst_127 = arith.constant 1.000000e+00 : f32
    %413 = vector.broadcast %cst_127 : f32 to vector<8x256xf32>
    %414 = arith.addf %412, %413 : vector<8x256xf32>
    %cst_128 = arith.constant 5.000000e-01 : f32
    %415 = vector.broadcast %cst_128 : f32 to vector<8x256xf32>
    %416 = arith.mulf %415, %414 : vector<8x256xf32>
    %417 = arith.mulf %406, %346 : vector<8x256xf32>
    %418 = arith.mulf %398, %408 : vector<8x256xf32>
    %419 = arith.addf %417, %418 : vector<8x256xf32>
    %420 = math.tanh %419 : vector<8x256xf32>
    %421 = arith.mulf %416, %420 : vector<8x256xf32>
    %422 = arith.truncf %421 : vector<8x256xf32> to vector<8x256xbf16>
    %cst_129 = arith.constant dense<0.000000e+00> : vector<8x1024xf32>
    %423 = tpu.matmul %422, %20, %cst_129 {dimension_numbers = #tpu.dot_dimension_numbers<[1], [0], [0], [1], [0, 0, 1, 1], [], []>} : vector<8x256xbf16>, vector<256x1024xbf16>, vector<8x1024xf32> -> vector<8x1024xf32>
    %424 = arith.truncf %386 : vector<8x256xf32> to vector<8x256xbf16>
    %cst_130 = arith.constant dense<0.000000e+00> : vector<8x1024xf32>
    %425 = tpu.matmul %424, %21, %cst_130 {dimension_numbers = #tpu.dot_dimension_numbers<[1], [0], [0], [1], [0, 0, 1, 1], [], []>} : vector<8x256xbf16>, vector<256x1024xbf16>, vector<8x1024xf32> -> vector<8x1024xf32>
    %426 = arith.addf %423, %425 : vector<8x1024xf32>
    %427 = vector.broadcast %16 : vector<1x1024xf32> to vector<8x1024xf32>
    %428 = arith.addf %426, %427 : vector<8x1024xf32>
    %429 = vector.extract_strided_slice %428 {offsets = [0, 0], sizes = [8, 256], strides = [1, 1]} : vector<8x1024xf32> to vector<8x256xf32>
    %cst_131 = arith.constant 5.000000e-01 : f32
    %430 = vector.broadcast %cst_131 : f32 to vector<8x256xf32>
    %431 = arith.mulf %430, %429 : vector<8x256xf32>
    %432 = math.tanh %431 : vector<8x256xf32>
    %cst_132 = arith.constant 1.000000e+00 : f32
    %433 = vector.broadcast %cst_132 : f32 to vector<8x256xf32>
    %434 = arith.addf %432, %433 : vector<8x256xf32>
    %cst_133 = arith.constant 5.000000e-01 : f32
    %435 = vector.broadcast %cst_133 : f32 to vector<8x256xf32>
    %436 = arith.mulf %435, %434 : vector<8x256xf32>
    %437 = vector.extract_strided_slice %428 {offsets = [0, 256], sizes = [8, 256], strides = [1, 1]} : vector<8x1024xf32> to vector<8x256xf32>
    %cst_134 = arith.constant 5.000000e-01 : f32
    %438 = vector.broadcast %cst_134 : f32 to vector<8x256xf32>
    %439 = arith.mulf %438, %437 : vector<8x256xf32>
    %440 = math.tanh %439 : vector<8x256xf32>
    %cst_135 = arith.constant 1.000000e+00 : f32
    %441 = vector.broadcast %cst_135 : f32 to vector<8x256xf32>
    %442 = arith.addf %440, %441 : vector<8x256xf32>
    %cst_136 = arith.constant 5.000000e-01 : f32
    %443 = vector.broadcast %cst_136 : f32 to vector<8x256xf32>
    %444 = arith.mulf %443, %442 : vector<8x256xf32>
    %445 = vector.extract_strided_slice %428 {offsets = [0, 512], sizes = [8, 256], strides = [1, 1]} : vector<8x1024xf32> to vector<8x256xf32>
    %446 = math.tanh %445 : vector<8x256xf32>
    %447 = vector.extract_strided_slice %428 {offsets = [0, 768], sizes = [8, 256], strides = [1, 1]} : vector<8x1024xf32> to vector<8x256xf32>
    %cst_137 = arith.constant 5.000000e-01 : f32
    %448 = vector.broadcast %cst_137 : f32 to vector<8x256xf32>
    %449 = arith.mulf %448, %447 : vector<8x256xf32>
    %450 = math.tanh %449 : vector<8x256xf32>
    %cst_138 = arith.constant 1.000000e+00 : f32
    %451 = vector.broadcast %cst_138 : f32 to vector<8x256xf32>
    %452 = arith.addf %450, %451 : vector<8x256xf32>
    %cst_139 = arith.constant 5.000000e-01 : f32
    %453 = vector.broadcast %cst_139 : f32 to vector<8x256xf32>
    %454 = arith.mulf %453, %452 : vector<8x256xf32>
    %455 = arith.mulf %444, %384 : vector<8x256xf32>
    %456 = arith.mulf %436, %446 : vector<8x256xf32>
    %457 = arith.addf %455, %456 : vector<8x256xf32>
    %458 = math.tanh %457 : vector<8x256xf32>
    %459 = arith.mulf %454, %458 : vector<8x256xf32>
    %460 = vector.extract_strided_slice %14 {offsets = [48, 0], sizes = [8, 1024], strides = [1, 1]} : vector<64x1024xf32> to vector<8x1024xf32>
    %461 = arith.truncf %421 : vector<8x256xf32> to vector<8x256xbf16>
    %cst_140 = arith.constant dense<0.000000e+00> : vector<8x1024xf32>
    %462 = tpu.matmul %461, %15, %cst_140 {dimension_numbers = #tpu.dot_dimension_numbers<[1], [0], [0], [1], [0, 0, 1, 1], [], []>} : vector<8x256xbf16>, vector<256x1024xbf16>, vector<8x1024xf32> -> vector<8x1024xf32>
    %463 = arith.addf %460, %462 : vector<8x1024xf32>
    %464 = vector.extract_strided_slice %463 {offsets = [0, 0], sizes = [8, 256], strides = [1, 1]} : vector<8x1024xf32> to vector<8x256xf32>
    %cst_141 = arith.constant 5.000000e-01 : f32
    %465 = vector.broadcast %cst_141 : f32 to vector<8x256xf32>
    %466 = arith.mulf %465, %464 : vector<8x256xf32>
    %467 = math.tanh %466 : vector<8x256xf32>
    %cst_142 = arith.constant 1.000000e+00 : f32
    %468 = vector.broadcast %cst_142 : f32 to vector<8x256xf32>
    %469 = arith.addf %467, %468 : vector<8x256xf32>
    %cst_143 = arith.constant 5.000000e-01 : f32
    %470 = vector.broadcast %cst_143 : f32 to vector<8x256xf32>
    %471 = arith.mulf %470, %469 : vector<8x256xf32>
    %472 = vector.extract_strided_slice %463 {offsets = [0, 256], sizes = [8, 256], strides = [1, 1]} : vector<8x1024xf32> to vector<8x256xf32>
    %cst_144 = arith.constant 5.000000e-01 : f32
    %473 = vector.broadcast %cst_144 : f32 to vector<8x256xf32>
    %474 = arith.mulf %473, %472 : vector<8x256xf32>
    %475 = math.tanh %474 : vector<8x256xf32>
    %cst_145 = arith.constant 1.000000e+00 : f32
    %476 = vector.broadcast %cst_145 : f32 to vector<8x256xf32>
    %477 = arith.addf %475, %476 : vector<8x256xf32>
    %cst_146 = arith.constant 5.000000e-01 : f32
    %478 = vector.broadcast %cst_146 : f32 to vector<8x256xf32>
    %479 = arith.mulf %478, %477 : vector<8x256xf32>
    %480 = vector.extract_strided_slice %463 {offsets = [0, 512], sizes = [8, 256], strides = [1, 1]} : vector<8x1024xf32> to vector<8x256xf32>
    %481 = math.tanh %480 : vector<8x256xf32>
    %482 = vector.extract_strided_slice %463 {offsets = [0, 768], sizes = [8, 256], strides = [1, 1]} : vector<8x1024xf32> to vector<8x256xf32>
    %cst_147 = arith.constant 5.000000e-01 : f32
    %483 = vector.broadcast %cst_147 : f32 to vector<8x256xf32>
    %484 = arith.mulf %483, %482 : vector<8x256xf32>
    %485 = math.tanh %484 : vector<8x256xf32>
    %cst_148 = arith.constant 1.000000e+00 : f32
    %486 = vector.broadcast %cst_148 : f32 to vector<8x256xf32>
    %487 = arith.addf %485, %486 : vector<8x256xf32>
    %cst_149 = arith.constant 5.000000e-01 : f32
    %488 = vector.broadcast %cst_149 : f32 to vector<8x256xf32>
    %489 = arith.mulf %488, %487 : vector<8x256xf32>
    %490 = arith.mulf %479, %419 : vector<8x256xf32>
    %491 = arith.mulf %471, %481 : vector<8x256xf32>
    %492 = arith.addf %490, %491 : vector<8x256xf32>
    %493 = math.tanh %492 : vector<8x256xf32>
    %494 = arith.mulf %489, %493 : vector<8x256xf32>
    %495 = arith.truncf %494 : vector<8x256xf32> to vector<8x256xbf16>
    %cst_150 = arith.constant dense<0.000000e+00> : vector<8x1024xf32>
    %496 = tpu.matmul %495, %20, %cst_150 {dimension_numbers = #tpu.dot_dimension_numbers<[1], [0], [0], [1], [0, 0, 1, 1], [], []>} : vector<8x256xbf16>, vector<256x1024xbf16>, vector<8x1024xf32> -> vector<8x1024xf32>
    %497 = arith.truncf %459 : vector<8x256xf32> to vector<8x256xbf16>
    %cst_151 = arith.constant dense<0.000000e+00> : vector<8x1024xf32>
    %498 = tpu.matmul %497, %21, %cst_151 {dimension_numbers = #tpu.dot_dimension_numbers<[1], [0], [0], [1], [0, 0, 1, 1], [], []>} : vector<8x256xbf16>, vector<256x1024xbf16>, vector<8x1024xf32> -> vector<8x1024xf32>
    %499 = arith.addf %496, %498 : vector<8x1024xf32>
    %500 = vector.broadcast %16 : vector<1x1024xf32> to vector<8x1024xf32>
    %501 = arith.addf %499, %500 : vector<8x1024xf32>
    %502 = vector.extract_strided_slice %501 {offsets = [0, 0], sizes = [8, 256], strides = [1, 1]} : vector<8x1024xf32> to vector<8x256xf32>
    %cst_152 = arith.constant 5.000000e-01 : f32
    %503 = vector.broadcast %cst_152 : f32 to vector<8x256xf32>
    %504 = arith.mulf %503, %502 : vector<8x256xf32>
    %505 = math.tanh %504 : vector<8x256xf32>
    %cst_153 = arith.constant 1.000000e+00 : f32
    %506 = vector.broadcast %cst_153 : f32 to vector<8x256xf32>
    %507 = arith.addf %505, %506 : vector<8x256xf32>
    %cst_154 = arith.constant 5.000000e-01 : f32
    %508 = vector.broadcast %cst_154 : f32 to vector<8x256xf32>
    %509 = arith.mulf %508, %507 : vector<8x256xf32>
    %510 = vector.extract_strided_slice %501 {offsets = [0, 256], sizes = [8, 256], strides = [1, 1]} : vector<8x1024xf32> to vector<8x256xf32>
    %cst_155 = arith.constant 5.000000e-01 : f32
    %511 = vector.broadcast %cst_155 : f32 to vector<8x256xf32>
    %512 = arith.mulf %511, %510 : vector<8x256xf32>
    %513 = math.tanh %512 : vector<8x256xf32>
    %cst_156 = arith.constant 1.000000e+00 : f32
    %514 = vector.broadcast %cst_156 : f32 to vector<8x256xf32>
    %515 = arith.addf %513, %514 : vector<8x256xf32>
    %cst_157 = arith.constant 5.000000e-01 : f32
    %516 = vector.broadcast %cst_157 : f32 to vector<8x256xf32>
    %517 = arith.mulf %516, %515 : vector<8x256xf32>
    %518 = vector.extract_strided_slice %501 {offsets = [0, 512], sizes = [8, 256], strides = [1, 1]} : vector<8x1024xf32> to vector<8x256xf32>
    %519 = math.tanh %518 : vector<8x256xf32>
    %520 = vector.extract_strided_slice %501 {offsets = [0, 768], sizes = [8, 256], strides = [1, 1]} : vector<8x1024xf32> to vector<8x256xf32>
    %cst_158 = arith.constant 5.000000e-01 : f32
    %521 = vector.broadcast %cst_158 : f32 to vector<8x256xf32>
    %522 = arith.mulf %521, %520 : vector<8x256xf32>
    %523 = math.tanh %522 : vector<8x256xf32>
    %cst_159 = arith.constant 1.000000e+00 : f32
    %524 = vector.broadcast %cst_159 : f32 to vector<8x256xf32>
    %525 = arith.addf %523, %524 : vector<8x256xf32>
    %cst_160 = arith.constant 5.000000e-01 : f32
    %526 = vector.broadcast %cst_160 : f32 to vector<8x256xf32>
    %527 = arith.mulf %526, %525 : vector<8x256xf32>
    %528 = arith.mulf %517, %457 : vector<8x256xf32>
    %529 = arith.mulf %509, %519 : vector<8x256xf32>
    %530 = arith.addf %528, %529 : vector<8x256xf32>
    %531 = math.tanh %530 : vector<8x256xf32>
    %532 = arith.mulf %527, %531 : vector<8x256xf32>
    %533 = vector.extract_strided_slice %14 {offsets = [56, 0], sizes = [8, 1024], strides = [1, 1]} : vector<64x1024xf32> to vector<8x1024xf32>
    %534 = arith.truncf %494 : vector<8x256xf32> to vector<8x256xbf16>
    %cst_161 = arith.constant dense<0.000000e+00> : vector<8x1024xf32>
    %535 = tpu.matmul %534, %15, %cst_161 {dimension_numbers = #tpu.dot_dimension_numbers<[1], [0], [0], [1], [0, 0, 1, 1], [], []>} : vector<8x256xbf16>, vector<256x1024xbf16>, vector<8x1024xf32> -> vector<8x1024xf32>
    %536 = arith.addf %533, %535 : vector<8x1024xf32>
    %537 = vector.extract_strided_slice %536 {offsets = [0, 0], sizes = [8, 256], strides = [1, 1]} : vector<8x1024xf32> to vector<8x256xf32>
    %cst_162 = arith.constant 5.000000e-01 : f32
    %538 = vector.broadcast %cst_162 : f32 to vector<8x256xf32>
    %539 = arith.mulf %538, %537 : vector<8x256xf32>
    %540 = math.tanh %539 : vector<8x256xf32>
    %cst_163 = arith.constant 1.000000e+00 : f32
    %541 = vector.broadcast %cst_163 : f32 to vector<8x256xf32>
    %542 = arith.addf %540, %541 : vector<8x256xf32>
    %cst_164 = arith.constant 5.000000e-01 : f32
    %543 = vector.broadcast %cst_164 : f32 to vector<8x256xf32>
    %544 = arith.mulf %543, %542 : vector<8x256xf32>
    %545 = vector.extract_strided_slice %536 {offsets = [0, 256], sizes = [8, 256], strides = [1, 1]} : vector<8x1024xf32> to vector<8x256xf32>
    %cst_165 = arith.constant 5.000000e-01 : f32
    %546 = vector.broadcast %cst_165 : f32 to vector<8x256xf32>
    %547 = arith.mulf %546, %545 : vector<8x256xf32>
    %548 = math.tanh %547 : vector<8x256xf32>
    %cst_166 = arith.constant 1.000000e+00 : f32
    %549 = vector.broadcast %cst_166 : f32 to vector<8x256xf32>
    %550 = arith.addf %548, %549 : vector<8x256xf32>
    %cst_167 = arith.constant 5.000000e-01 : f32
    %551 = vector.broadcast %cst_167 : f32 to vector<8x256xf32>
    %552 = arith.mulf %551, %550 : vector<8x256xf32>
    %553 = vector.extract_strided_slice %536 {offsets = [0, 512], sizes = [8, 256], strides = [1, 1]} : vector<8x1024xf32> to vector<8x256xf32>
    %554 = math.tanh %553 : vector<8x256xf32>
    %555 = vector.extract_strided_slice %536 {offsets = [0, 768], sizes = [8, 256], strides = [1, 1]} : vector<8x1024xf32> to vector<8x256xf32>
    %cst_168 = arith.constant 5.000000e-01 : f32
    %556 = vector.broadcast %cst_168 : f32 to vector<8x256xf32>
    %557 = arith.mulf %556, %555 : vector<8x256xf32>
    %558 = math.tanh %557 : vector<8x256xf32>
    %cst_169 = arith.constant 1.000000e+00 : f32
    %559 = vector.broadcast %cst_169 : f32 to vector<8x256xf32>
    %560 = arith.addf %558, %559 : vector<8x256xf32>
    %cst_170 = arith.constant 5.000000e-01 : f32
    %561 = vector.broadcast %cst_170 : f32 to vector<8x256xf32>
    %562 = arith.mulf %561, %560 : vector<8x256xf32>
    %563 = arith.mulf %552, %492 : vector<8x256xf32>
    %564 = arith.mulf %544, %554 : vector<8x256xf32>
    %565 = arith.addf %563, %564 : vector<8x256xf32>
    %566 = math.tanh %565 : vector<8x256xf32>
    %567 = arith.mulf %562, %566 : vector<8x256xf32>
    %568 = arith.truncf %567 : vector<8x256xf32> to vector<8x256xbf16>
    %cst_171 = arith.constant dense<0.000000e+00> : vector<8x1024xf32>
    %569 = tpu.matmul %568, %20, %cst_171 {dimension_numbers = #tpu.dot_dimension_numbers<[1], [0], [0], [1], [0, 0, 1, 1], [], []>} : vector<8x256xbf16>, vector<256x1024xbf16>, vector<8x1024xf32> -> vector<8x1024xf32>
    %570 = arith.truncf %532 : vector<8x256xf32> to vector<8x256xbf16>
    %cst_172 = arith.constant dense<0.000000e+00> : vector<8x1024xf32>
    %571 = tpu.matmul %570, %21, %cst_172 {dimension_numbers = #tpu.dot_dimension_numbers<[1], [0], [0], [1], [0, 0, 1, 1], [], []>} : vector<8x256xbf16>, vector<256x1024xbf16>, vector<8x1024xf32> -> vector<8x1024xf32>
    %572 = arith.addf %569, %571 : vector<8x1024xf32>
    %573 = vector.broadcast %16 : vector<1x1024xf32> to vector<8x1024xf32>
    %574 = arith.addf %572, %573 : vector<8x1024xf32>
    %575 = vector.extract_strided_slice %574 {offsets = [0, 0], sizes = [8, 256], strides = [1, 1]} : vector<8x1024xf32> to vector<8x256xf32>
    %cst_173 = arith.constant 5.000000e-01 : f32
    %576 = vector.broadcast %cst_173 : f32 to vector<8x256xf32>
    %577 = arith.mulf %576, %575 : vector<8x256xf32>
    %578 = math.tanh %577 : vector<8x256xf32>
    %cst_174 = arith.constant 1.000000e+00 : f32
    %579 = vector.broadcast %cst_174 : f32 to vector<8x256xf32>
    %580 = arith.addf %578, %579 : vector<8x256xf32>
    %cst_175 = arith.constant 5.000000e-01 : f32
    %581 = vector.broadcast %cst_175 : f32 to vector<8x256xf32>
    %582 = arith.mulf %581, %580 : vector<8x256xf32>
    %583 = vector.extract_strided_slice %574 {offsets = [0, 256], sizes = [8, 256], strides = [1, 1]} : vector<8x1024xf32> to vector<8x256xf32>
    %cst_176 = arith.constant 5.000000e-01 : f32
    %584 = vector.broadcast %cst_176 : f32 to vector<8x256xf32>
    %585 = arith.mulf %584, %583 : vector<8x256xf32>
    %586 = math.tanh %585 : vector<8x256xf32>
    %cst_177 = arith.constant 1.000000e+00 : f32
    %587 = vector.broadcast %cst_177 : f32 to vector<8x256xf32>
    %588 = arith.addf %586, %587 : vector<8x256xf32>
    %cst_178 = arith.constant 5.000000e-01 : f32
    %589 = vector.broadcast %cst_178 : f32 to vector<8x256xf32>
    %590 = arith.mulf %589, %588 : vector<8x256xf32>
    %591 = vector.extract_strided_slice %574 {offsets = [0, 512], sizes = [8, 256], strides = [1, 1]} : vector<8x1024xf32> to vector<8x256xf32>
    %592 = math.tanh %591 : vector<8x256xf32>
    %593 = vector.extract_strided_slice %574 {offsets = [0, 768], sizes = [8, 256], strides = [1, 1]} : vector<8x1024xf32> to vector<8x256xf32>
    %cst_179 = arith.constant 5.000000e-01 : f32
    %594 = vector.broadcast %cst_179 : f32 to vector<8x256xf32>
    %595 = arith.mulf %594, %593 : vector<8x256xf32>
    %596 = math.tanh %595 : vector<8x256xf32>
    %cst_180 = arith.constant 1.000000e+00 : f32
    %597 = vector.broadcast %cst_180 : f32 to vector<8x256xf32>
    %598 = arith.addf %596, %597 : vector<8x256xf32>
    %cst_181 = arith.constant 5.000000e-01 : f32
    %599 = vector.broadcast %cst_181 : f32 to vector<8x256xf32>
    %600 = arith.mulf %599, %598 : vector<8x256xf32>
    %601 = arith.mulf %590, %530 : vector<8x256xf32>
    %602 = arith.mulf %582, %592 : vector<8x256xf32>
    %603 = arith.addf %601, %602 : vector<8x256xf32>
    %604 = math.tanh %603 : vector<8x256xf32>
    %605 = arith.mulf %600, %604 : vector<8x256xf32>
    %c1_i32_182 = arith.constant 1 : i32
    %606 = tpu.memref_slice %arg11[%c1_i32_182] : memref<2x!tpu.dma_semaphore, #tpu.memory_space<semaphore_mem>> -> memref<1x!tpu.dma_semaphore, #tpu.memory_space<semaphore_mem>>
    %607 = tpu.memref_squeeze %606 : memref<1x!tpu.dma_semaphore, #tpu.memory_space<semaphore_mem>> -> memref<!tpu.dma_semaphore, #tpu.memory_space<semaphore_mem>>
    tpu.wait_dma2 semaphore(%607 : memref<!tpu.dma_semaphore, #tpu.memory_space<semaphore_mem>>) src(%arg6 : memref<256x128xbf16, #tpu.memory_space<any>>) dst(%arg10 : memref<256x128xbf16, #tpu.memory_space<vmem>>)
    %608 = arith.truncf %605 : vector<8x256xf32> to vector<8x256xbf16>
    %c0_183 = arith.constant 0 : index
    %c0_184 = arith.constant 0 : index
    %609 = vector.load %arg10[%c0_183, %c0_184] : memref<256x128xbf16, #tpu.memory_space<vmem>>, vector<256x128xbf16>
    %cst_185 = arith.constant dense<0.000000e+00> : vector<8x128xf32>
    %610 = tpu.matmul %608, %609, %cst_185 {dimension_numbers = #tpu.dot_dimension_numbers<[1], [0], [0], [1], [0, 0, 1, 1], [], []>} : vector<8x256xbf16>, vector<256x128xbf16>, vector<8x128xf32> -> vector<8x128xf32>
    %c0_186 = arith.constant 0 : index
    %c0_187 = arith.constant 0 : index
    %611 = vector.load %arg7[%c0_186, %c0_187] : memref<1x128xf32, #tpu.memory_space<vmem>>, vector<1x128xf32>
    %612 = vector.broadcast %611 : vector<1x128xf32> to vector<8x128xf32>
    %613 = arith.addf %610, %612 : vector<8x128xf32>
    %c0_188 = arith.constant 0 : index
    %c0_189 = arith.constant 0 : index
    %614 = vector.load %arg8[%c0_188, %c0_189] : memref<8x128xf32, #tpu.memory_space<vmem>>, vector<8x128xf32>
    tpu.vector_store %arg8[%c0_188, %c0_189], %613 {strides = array<i32>} : memref<8x128xf32, #tpu.memory_space<vmem>>, vector<8x128xf32>,
    return
  }
}

</mosaic_0001>

<llo_original>
// kernel: char_lstm_forward.1
$region0: #{char_lstm_forward.1}
  #allocation0 [shape = 'u32[]', space=smem, size = 0x4, offset = 0x4, fixed_abs, tag = 'smem constant byte address 0x4 - core index']
  #allocation1 [shape = 'u32[144,128]{1,0:T(1,128)}', space=vmem, size = 0x12000, scoped, tag = 'internal scratch']
  #allocation2 [shape = 'bf16[512,1024]{1,0:T(16,128)(2,1)}', space=vmem, size = 0x100000, scoped, tag = 'scratch operand']
  #allocation3 [shape = 'bf16[256,128]{1,0:T(16,128)(2,1)}', space=vmem, size = 0x10000, scoped, tag = 'scratch operand']
  #allocation4 [shape = 's32[2]{0}', space=sflag, size = 0x8, scoped, tag = 'scratch operand']
  #allocation9 [shape = 's32[]', space=sflag, size = 0x4, offset = 0, fixed_abs, tag = 'sflag constant byte address 0x0 - dummy sync flag']
  #allocation11 [shape = 's32[]', space=sflag, size = 0x4, offset = 0, fixed_abs, tag = 'sflag constant byte address 0x0 - dummy sync flag']
  #allocation12 [shape = 's32[]', space=sflag, size = 0x4, offset = 0, fixed_abs, tag = 'sflag constant byte address 0x0 - dummy sync flag']
  #allocation13 [shape = 'u32[]', space=smem, size = 0x4, offset = 0x44, fixed_abs, tag = 'smem constant byte address 0x44 - assertion arg 0']
  #allocation14 [shape = 'u32[]', space=smem, size = 0x4, offset = 0x48, fixed_abs, tag = 'smem constant byte address 0x48 - assertion arg 1']
  %s0 = inlined_call_operand.vmem [shape: s32[64,128], index: 0, kind: input, shape index: {}]
  %s1 = inlined_call_operand.hbm [shape: bf16[128,1024], index: 1, kind: input, shape index: {}]
  %s2 = inlined_call_operand.hbm [shape: bf16[256,1024], index: 2, kind: input, shape index: {}]
  %s3 = inlined_call_operand.vmem [shape: f32[1,1024], index: 3, kind: input, shape index: {}]
  %s4 = inlined_call_operand.hbm [shape: bf16[512,1024], index: 4, kind: input, shape index: {}]
  %s5 = inlined_call_operand.vmem [shape: f32[1,1024], index: 5, kind: input, shape index: {}]
  %s6 = inlined_call_operand.hbm [shape: bf16[256,128], index: 6, kind: input, shape index: {}]
  %s7 = inlined_call_operand.vmem [shape: f32[1,128], index: 7, kind: input, shape index: {}]
  %s8 = inlined_call_operand.vmem [shape: f32[8,128], index: 8, kind: output, shape index: {}]
  %s9 = sld [smem:[#allocation0]]
  $region46: #{char_lstm_forward.1} parent=0
    _
  %s11 = ssub.s32 1, %s9
  %s12 = scalar_select 0, %s11, %s9
  $region1: #{char_lstm_forward.1} parent=0
    #allocation5 [shape = 'u8[262144]{0}', space=vmem, size = 0x40000, scoped, tag = 'input window, operand 1, single buffered']
    #allocation6 [shape = 's32[1]{0}', space=sflag, size = 0x4, scoped, tag = 'scoped memory for char_lstm_forward.1']
    #allocation7 [shape = 'u8[524288]{0}', space=vmem, size = 0x80000, scoped, tag = 'input window, operand 2, single buffered']
    #allocation8 [shape = 's32[1]{0}', space=sflag, size = 0x4, scoped, tag = 'scoped memory for char_lstm_forward.1']
    #allocation10 [shape = 'u32[9]{0}', space=smem, size = 0x24, scoped, tag = 'DMA stride descriptor']
    %13 = vsyncpa [#allocation6], 0
    %14 = vsyncpa [#allocation8], 0
    // Predicated region
    $region2: #{char_lstm_forward.1} parent=1 // pred_check
      _
    $region3: #{char_lstm_forward.1} parent=1 // pred_check_branch
      %16 = sbr.rel (0) target = $region5
    $region4: #{char_lstm_forward.1} parent=1 // pred_region
      _
    $region5: #{char_lstm_forward.1} parent=1 // pred_fallthru
      _
    // Predicated region
    $region6: #{char_lstm_forward.1} parent=1 // pred_check
      _
    $region7: #{char_lstm_forward.1} parent=1 // pred_check_branch
      %18 = sbr.rel (0) target = $region9
    $region8: #{char_lstm_forward.1} parent=1 // pred_region
      %s20 = ssub.s32 8192, 8192
      %21 = vsyncadd [#allocation6], %s20
      %s22 = sshll.u32 [#allocation5], 4
      %s23 = int_to_ptr.vmem [resolvable:$true] %s22
      %28 = dma.hbm_to_vmem [thread:$0]  %s1, 8192, %s23, [#allocation6], 512, 512, 32
    $region9: #{char_lstm_forward.1} parent=1 // pred_fallthru
      _
    // Predicated region
    $region10: #{char_lstm_forward.1} parent=1 // pred_check
      _
    $region11: #{char_lstm_forward.1} parent=1 // pred_check_branch
      %30 = sbr.rel (0) target = $region13
    $region12: #{char_lstm_forward.1} parent=1 // pred_region
      %s32 = ssub.s32 16384, 16384
      %33 = vsyncadd [#allocation8], %s32
      %s34 = sshll.u32 [#allocation7], 4
      %s35 = int_to_ptr.vmem [resolvable:$true] %s34
      %40 = dma.hbm_to_vmem [thread:$0]  %s2, 16384, %s35, [#allocation8], 512, 512, 32
    $region13: #{char_lstm_forward.1} parent=1 // pred_fallthru
      _
    // Predicated region
    $region14: #{char_lstm_forward.1} parent=1 // pred_check
      _
    $region15: #{char_lstm_forward.1} parent=1 // pred_check_branch
      %42 = sbr.rel (0) target = $region17
    $region16: #{char_lstm_forward.1} parent=1 // pred_region
      _
    $region17: #{char_lstm_forward.1} parent=1 // pred_fallthru
      _
    // Predicated region
    $region18: #{char_lstm_forward.1} parent=1 // pred_check
      _
    $region19: #{char_lstm_forward.1} parent=1 // pred_check_branch
      %44 = sbr.rel (0) target = $region21
    $region20: #{char_lstm_forward.1} parent=1 // pred_region
      _
    $region21: #{char_lstm_forward.1} parent=1 // pred_fallthru
      _
    // Predicated region
    $region22: #{char_lstm_forward.1} parent=1 // pred_check
      _
    $region23: #{char_lstm_forward.1} parent=1 // pred_check_branch
      %46 = sbr.rel (0) target = $region25
    $region24: #{char_lstm_forward.1} parent=1 // pred_region
      _
    $region25: #{char_lstm_forward.1} parent=1 // pred_fallthru
      _
    // Predicated region
    $region26: #{char_lstm_forward.1} parent=1 // pred_check
      _
    $region27: #{char_lstm_forward.1} parent=1 // pred_check_branch
      %48 = sbr.rel (0) target = $region29
    $region28: #{char_lstm_forward.1} parent=1 // pred_region
      %49 = dma.done [#allocation6], 8192
    $region29: #{char_lstm_forward.1} parent=1 // pred_fallthru
      _
    // Predicated region
    $region30: #{char_lstm_forward.1} parent=1 // pred_check
      _
    $region31: #{char_lstm_forward.1} parent=1 // pred_check_branch
      %51 = sbr.rel (0) target = $region33
    $region32: #{char_lstm_forward.1} parent=1 // pred_region
      %52 = dma.done [#allocation8], 16384
    $region33: #{char_lstm_forward.1} parent=1 // pred_fallthru
      _
    %s55 = sshll.u32 1, 14
    %s56 = sxor.u32 4294967295, %s55
    %s58 = sld [smem:[#allocation0]]
    %s59 = sadd.s32 2, %s58
    %s61 = sshll.u32 7, 26
    %s62 = sxor.u32 4294967295, %s61
    %s63 = sand.u32 0, %s62
    %s64 = sshll.u32 %s59, 26
    %s65 = sor.u32 %s63, %s64
    %s66 = sshll.u32 [#allocation2], 4
    %s67 = int_to_ptr.vmem [resolvable:$true] %s66
    %70 = sst [smem:[#allocation10]] 1024
    %s71 = scalar_lea.smem [#allocation10], 1
    %72 = sst [smem:[%s71]] 1024
    %s73 = scalar_lea.smem [#allocation10], 2
    %74 = sst [smem:[%s73]] 8
    %s75 = scalar_lea.smem [#allocation10], 3
    %76 = sst [smem:[%s75]] 64
    %s77 = scalar_lea.smem [#allocation10], 4
    %78 = sst [smem:[%s77]] 128
    %s79 = scalar_lea.smem [#allocation10], 5
    %80 = sst [smem:[%s79]] 2
    %s81 = scalar_lea.smem [#allocation10], 6
    %82 = sst [smem:[%s81]] 512
    %s83 = scalar_lea.smem [#allocation10], 7
    %84 = sst [smem:[%s83]] 64
    %s85 = scalar_lea.smem [#allocation10], 8
    %86 = sst [smem:[%s85]] 4
    %88 = dma.general %s4, 32768, %s67, [#allocation4], [#allocation9], [#allocation10], %s65, 0
    %s89 = scalar_lea.sflag [#allocation4], 1
    // Predicated region
    $region34: #{char_lstm_forward.1} parent=1 // pred_check
      _
    $region35: #{char_lstm_forward.1} parent=1 // pred_check_branch
      %91 = sbr.rel target = $region37
    $region36: #{char_lstm_forward.1} parent=1 // pred_region
      %92 = sst [smem:[#allocation13]] [#allocation12]
      %93 = sst [smem:[#allocation14]] [#allocation11]
    $region37: #{char_lstm_forward.1} parent=1 // pred_fallthru
      _
    %95 = shalt.err (0)
    %s97 = sshll.u32 [#allocation3], 4
    %s98 = int_to_ptr.vmem [resolvable:$true] %s97
    %100 = dma.hbm_to_vmem [thread:$0]  %s6, 2048, %s98, %s89
    %v101 = vld [vmem:[%s0] sm:$0xff]
    %v102 = vld [vmem:[%s0 + $0x8] sm:$0xff]
    %v103 = vld [vmem:[%s0 + $0x10] sm:$0xff]
    %v104 = vld [vmem:[%s0 + $0x18] sm:$0xff]
    %v105 = vld [vmem:[%s0 + $0x20] sm:$0xff]
    %v106 = vld [vmem:[%s0 + $0x28] sm:$0xff]
    %v107 = vld [vmem:[%s0 + $0x30] sm:$0xff]
    %v108 = vld [vmem:[%s0 + $0x38] sm:$0xff]
    %v109 = vlaneseq
    %v110 = vand.u32 %v109, 127
    %vm111 = vcmp.eq.s32.totalorder %v101, %v110
    %vm112 = vcmp.eq.s32.totalorder %v102, %v110
    %vm113 = vcmp.eq.s32.totalorder %v103, %v110
    %vm114 = vcmp.eq.s32.totalorder %v104, %v110
    %vm115 = vcmp.eq.s32.totalorder %v105, %v110
    %vm116 = vcmp.eq.s32.totalorder %v106, %v110
    %vm117 = vcmp.eq.s32.totalorder %v107, %v110
    %vm118 = vcmp.eq.s32.totalorder %v108, %v110
    %v119 = vsel %vm111, 1, 0
    %v120 = vsel %vm112, 1, 0
    %v121 = vsel %vm113, 1, 0
    %v122 = vsel %vm114, 1, 0
    %v123 = vsel %vm115, 1, 0
    %v124 = vsel %vm116, 1, 0
    %v125 = vsel %vm117, 1, 0
    %v126 = vsel %vm118, 1, 0
    %v127 = vcvt.s32.f32 %v119
    %v128 = vcvt.s32.f32 %v120
    %v129 = vcvt.s32.f32 %v121
    %v130 = vcvt.s32.f32 %v122
    %v131 = vcvt.s32.f32 %v123
    %v132 = vcvt.s32.f32 %v124
    %v133 = vcvt.s32.f32 %v125
    %v134 = vcvt.s32.f32 %v126
    %v135 = vpack.c.bf16 %v128, %v127
    %v136 = vpack.c.bf16 %v130, %v129
    %v137 = vpack.c.bf16 %v132, %v131
    %v138 = vpack.c.bf16 %v134, %v133
    %v139 = vld [vmem:[#allocation5] sm:$0xff]
    %v140 = vld [vmem:[#allocation5 + $0x8] sm:$0xff]
    %v141 = vld [vmem:[#allocation5 + $0x10] sm:$0xff]
    %v142 = vld [vmem:[#allocation5 + $0x18] sm:$0xff]
    %v143 = vld [vmem:[#allocation5 + $0x20] sm:$0xff]
    %v144 = vld [vmem:[#allocation5 + $0x28] sm:$0xff]
    %v145 = vld [vmem:[#allocation5 + $0x30] sm:$0xff]
    %v146 = vld [vmem:[#allocation5 + $0x38] sm:$0xff]
    %v147 = vld [vmem:[#allocation5 + $0x40] sm:$0xff]
    %v148 = vld [vmem:[#allocation5 + $0x48] sm:$0xff]
    %v149 = vld [vmem:[#allocation5 + $0x50] sm:$0xff]
    %v150 = vld [vmem:[#allocation5 + $0x58] sm:$0xff]
    %v151 = vld [vmem:[#allocation5 + $0x60] sm:$0xff]
    %v152 = vld [vmem:[#allocation5 + $0x68] sm:$0xff]
    %v153 = vld [vmem:[#allocation5 + $0x70] sm:$0xff]
    %v154 = vld [vmem:[#allocation5 + $0x78] sm:$0xff]
    %v155 = vld [vmem:[#allocation5 + $0x80] sm:$0xff]
    %v156 = vld [vmem:[#allocation5 + $0x88] sm:$0xff]
    %v157 = vld [vmem:[#allocation5 + $0x90] sm:$0xff]
    %v158 = vld [vmem:[#allocation5 + $0x98] sm:$0xff]
    %v159 = vld [vmem:[#allocation5 + $0xa0] sm:$0xff]
    %v160 = vld [vmem:[#allocation5 + $0xa8] sm:$0xff]
    %v161 = vld [vmem:[#allocation5 + $0xb0] sm:$0xff]
    %v162 = vld [vmem:[#allocation5 + $0xb8] sm:$0xff]
    %v163 = vld [vmem:[#allocation5 + $0xc0] sm:$0xff]
    %v164 = vld [vmem:[#allocation5 + $0xc8] sm:$0xff]
    %v165 = vld [vmem:[#allocation5 + $0xd0] sm:$0xff]
    %v166 = vld [vmem:[#allocation5 + $0xd8] sm:$0xff]
    %v167 = vld [vmem:[#allocation5 + $0xe0] sm:$0xff]
    %v168 = vld [vmem:[#allocation5 + $0xe8] sm:$0xff]
    %v169 = vld [vmem:[#allocation5 + $0xf0] sm:$0xff]
    %v170 = vld [vmem:[#allocation5 + $0xf8] sm:$0xff]
    %v171 = vld [vmem:[#allocation5 + $0x100] sm:$0xff]
    %v172 = vld [vmem:[#allocation5 + $0x108] sm:$0xff]
    %v173 = vld [vmem:[#allocation5 + $0x110] sm:$0xff]
    %v174 = vld [vmem:[#allocation5 + $0x118] sm:$0xff]
    %v175 = vld [vmem:[#allocation5 + $0x120] sm:$0xff]
    %v176 = vld [vmem:[#allocation5 + $0x128] sm:$0xff]
    %v177 = vld [vmem:[#allocation5 + $0x130] sm:$0xff]
    %v178 = vld [vmem:[#allocation5 + $0x138] sm:$0xff]
    %v179 = vld [vmem:[#allocation5 + $0x140] sm:$0xff]
    %v180 = vld [vmem:[#allocation5 + $0x148] sm:$0xff]
    %v181 = vld [vmem:[#allocation5 + $0x150] sm:$0xff]
    %v182 = vld [vmem:[#allocation5 + $0x158] sm:$0xff]
    %v183 = vld [vmem:[#allocation5 + $0x160] sm:$0xff]
    %v184 = vld [vmem:[#allocation5 + $0x168] sm:$0xff]
    %v185 = vld [vmem:[#allocation5 + $0x170] sm:$0xff]
    %v186 = vld [vmem:[#allocation5 + $0x178] sm:$0xff]
    %v187 = vld [vmem:[#allocation5 + $0x180] sm:$0xff]
    %v188 = vld [vmem:[#allocation5 + $0x188] sm:$0xff]
    %v189 = vld [vmem:[#allocation5 + $0x190] sm:$0xff]
    %v190 = vld [vmem:[#allocation5 + $0x198] sm:$0xff]
    %v191 = vld [vmem:[#allocation5 + $0x1a0] sm:$0xff]
    %v192 = vld [vmem:[#allocation5 + $0x1a8] sm:$0xff]
    %v193 = vld [vmem:[#allocation5 + $0x1b0] sm:$0xff]
    %v194 = vld [vmem:[#allocation5 + $0x1b8] sm:$0xff]
    %v195 = vld [vmem:[#allocation5 + $0x1c0] sm:$0xff]
    %v196 = vld [vmem:[#allocation5 + $0x1c8] sm:$0xff]
    %v197 = vld [vmem:[#allocation5 + $0x1d0] sm:$0xff]
    %v198 = vld [vmem:[#allocation5 + $0x1d8] sm:$0xff]
    %v199 = vld [vmem:[#allocation5 + $0x1e0] sm:$0xff]
    %v200 = vld [vmem:[#allocation5 + $0x1e8] sm:$0xff]
    %v201 = vld [vmem:[#allocation5 + $0x1f0] sm:$0xff]
    %v202 = vld [vmem:[#allocation5 + $0x1f8] sm:$0xff]
    %v203 = vld [vmem:[%s3] sm:$0xff]
    %v205 = vlaneseq
    %v206 = vshrl.u32 %v205, 7
    %v207 = vsub.s32 0, %v206
    %v208 = vrot.slane %v203, %v207
    %v209 = vlaneseq
    %v210 = vshrl.u32 %v209, 7
    %v211 = vsub.s32 1, %v210
    %v212 = vrot.slane %v203, %v211
    %v213 = vlaneseq
    %v214 = vshrl.u32 %v213, 7
    %v215 = vsub.s32 2, %v214
    %v216 = vrot.slane %v203, %v215
    %v217 = vlaneseq
    %v218 = vshrl.u32 %v217, 7
    %v219 = vsub.s32 3, %v218
    %v220 = vrot.slane %v203, %v219
    %v221 = vlaneseq
    %v222 = vshrl.u32 %v221, 7
    %v223 = vsub.s32 4, %v222
    %v224 = vrot.slane %v203, %v223
    %v225 = vlaneseq
    %v226 = vshrl.u32 %v225, 7
    %v227 = vsub.s32 5, %v226
    %v228 = vrot.slane %v203, %v227
    %v229 = vlaneseq
    %v230 = vshrl.u32 %v229, 7
    %v231 = vsub.s32 6, %v230
    %v232 = vrot.slane %v203, %v231
    %v233 = vlaneseq
    %v234 = vshrl.u32 %v233, 7
    %v235 = vsub.s32 7, %v234
    %v236 = vrot.slane %v203, %v235
    %v309 = vunpack.c.l.b16 %v139
    %v310 = vunpack.c.h.b16 %v139
    %v311 = vunpack.c.l.b16 %v140
    %v312 = vunpack.c.h.b16 %v140
    %v313 = vunpack.c.l.b16 %v141
    %v314 = vunpack.c.h.b16 %v141
    %v315 = vunpack.c.l.b16 %v142
    %v316 = vunpack.c.h.b16 %v142
    %v317 = vunpack.c.l.b16 %v143
    %v318 = vunpack.c.h.b16 %v143
    %v319 = vunpack.c.l.b16 %v144
    %v320 = vunpack.c.h.b16 %v144
    %v321 = vunpack.c.l.b16 %v145
    %v322 = vunpack.c.h.b16 %v145
    %v323 = vunpack.c.l.b16 %v146
    %v324 = vunpack.c.h.b16 %v146
    %v325 = vunpack.c.l.b16 %v147
    %v326 = vunpack.c.h.b16 %v147
    %v327 = vunpack.c.l.b16 %v148
    %v328 = vunpack.c.h.b16 %v148
    %v329 = vunpack.c.l.b16 %v149
    %v330 = vunpack.c.h.b16 %v149
    %v331 = vunpack.c.l.b16 %v150
    %v332 = vunpack.c.h.b16 %v150
    %v333 = vunpack.c.l.b16 %v151
    %v334 = vunpack.c.h.b16 %v151
    %v335 = vunpack.c.l.b16 %v152
    %v336 = vunpack.c.h.b16 %v152
    %v337 = vunpack.c.l.b16 %v153
    %v338 = vunpack.c.h.b16 %v153
    %v339 = vunpack.c.l.b16 %v154
    %v340 = vunpack.c.h.b16 %v154
    %v341 = vunpack.c.l.b16 %v155
    %v342 = vunpack.c.h.b16 %v155
    %v343 = vunpack.c.l.b16 %v156
    %v344 = vunpack.c.h.b16 %v156
    %v345 = vunpack.c.l.b16 %v157
    %v346 = vunpack.c.h.b16 %v157
    %v347 = vunpack.c.l.b16 %v158
    %v348 = vunpack.c.h.b16 %v158
    %v349 = vunpack.c.l.b16 %v159
    %v350 = vunpack.c.h.b16 %v159
    %v351 = vunpack.c.l.b16 %v160
    %v352 = vunpack.c.h.b16 %v160
    %v353 = vunpack.c.l.b16 %v161
    %v354 = vunpack.c.h.b16 %v161
    %v355 = vunpack.c.l.b16 %v162
    %v356 = vunpack.c.h.b16 %v162
    %v357 = vunpack.c.l.b16 %v163
    %v358 = vunpack.c.h.b16 %v163
    %v359 = vunpack.c.l.b16 %v164
    %v360 = vunpack.c.h.b16 %v164
    %v361 = vunpack.c.l.b16 %v165
    %v362 = vunpack.c.h.b16 %v165
    %v363 = vunpack.c.l.b16 %v166
    %v364 = vunpack.c.h.b16 %v166
    %v365 = vunpack.c.l.b16 %v167
    %v366 = vunpack.c.h.b16 %v167
    %v367 = vunpack.c.l.b16 %v168
    %v368 = vunpack.c.h.b16 %v168
    %v369 = vunpack.c.l.b16 %v169
    %v370 = vunpack.c.h.b16 %v169
    %v371 = vunpack.c.l.b16 %v170
    %v372 = vunpack.c.h.b16 %v170
    %v373 = vunpack.c.l.b16 %v171
    %v374 = vunpack.c.h.b16 %v171
    %v375 = vunpack.c.l.b16 %v172
    %v376 = vunpack.c.h.b16 %v172
    %v377 = vunpack.c.l.b16 %v173
    %v378 = vunpack.c.h.b16 %v173
    %v379 = vunpack.c.l.b16 %v174
    %v380 = vunpack.c.h.b16 %v174
    %v381 = vunpack.c.l.b16 %v175
    %v382 = vunpack.c.h.b16 %v175
    %v383 = vunpack.c.l.b16 %v176
    %v384 = vunpack.c.h.b16 %v176
    %v385 = vunpack.c.l.b16 %v177
    %v386 = vunpack.c.h.b16 %v177
    %v387 = vunpack.c.l.b16 %v178
    %v388 = vunpack.c.h.b16 %v178
    %v389 = vunpack.c.l.b16 %v179
    %v390 = vunpack.c.h.b16 %v179
    %v391 = vunpack.c.l.b16 %v180
    %v392 = vunpack.c.h.b16 %v180
    %v393 = vunpack.c.l.b16 %v181
    %v394 = vunpack.c.h.b16 %v181
    %v395 = vunpack.c.l.b16 %v182
    %v396 = vunpack.c.h.b16 %v182
    %v397 = vunpack.c.l.b16 %v183
    %v398 = vunpack.c.h.b16 %v183
    %v399 = vunpack.c.l.b16 %v184
    %v400 = vunpack.c.h.b16 %v184
    %v401 = vunpack.c.l.b16 %v185
    %v402 = vunpack.c.h.b16 %v185
    %v403 = vunpack.c.l.b16 %v186
    %v404 = vunpack.c.h.b16 %v186
    %v405 = vunpack.c.l.b16 %v187
    %v406 = vunpack.c.h.b16 %v187
    %v407 = vunpack.c.l.b16 %v188
    %v408 = vunpack.c.h.b16 %v188
    %v409 = vunpack.c.l.b16 %v189
    %v410 = vunpack.c.h.b16 %v189
    %v411 = vunpack.c.l.b16 %v190
    %v412 = vunpack.c.h.b16 %v190
    %v413 = vunpack.c.l.b16 %v191
    %v414 = vunpack.c.h.b16 %v191
    %v415 = vunpack.c.l.b16 %v192
    %v416 = vunpack.c.h.b16 %v192
    %v417 = vunpack.c.l.b16 %v193
    %v418 = vunpack.c.h.b16 %v193
    %v419 = vunpack.c.l.b16 %v194
    %v420 = vunpack.c.h.b16 %v194
    %v421 = vunpack.c.l.b16 %v195
    %v422 = vunpack.c.h.b16 %v195
    %v423 = vunpack.c.l.b16 %v196
    %v424 = vunpack.c.h.b16 %v196
    %v425 = vunpack.c.l.b16 %v197
    %v426 = vunpack.c.h.b16 %v197
    %v427 = vunpack.c.l.b16 %v198
    %v428 = vunpack.c.h.b16 %v198
    %v429 = vunpack.c.l.b16 %v199
    %v430 = vunpack.c.h.b16 %v199
    %v431 = vunpack.c.l.b16 %v200
    %v432 = vunpack.c.h.b16 %v200
    %v433 = vunpack.c.l.b16 %v201
    %v434 = vunpack.c.h.b16 %v201
    %v435 = vunpack.c.l.b16 %v202
    %v436 = vunpack.c.h.b16 %v202
    %v437 = vpack.c.b16 %v317, %v309
    %v438 = vpack.c.b16 %v318, %v310
    %v439 = vpack.c.b16 %v319, %v311
    %v440 = vpack.c.b16 %v320, %v312
    %v441 = vpack.c.b16 %v321, %v313
    %v442 = vpack.c.b16 %v322, %v314
    %v443 = vpack.c.b16 %v323, %v315
    %v444 = vpack.c.b16 %v324, %v316
    %v445 = vpack.c.b16 %v333, %v325
    %v446 = vpack.c.b16 %v334, %v326
    %v447 = vpack.c.b16 %v335, %v327
    %v448 = vpack.c.b16 %v336, %v328
    %v449 = vpack.c.b16 %v337, %v329
    %v450 = vpack.c.b16 %v338, %v330
    %v451 = vpack.c.b16 %v339, %v331
    %v452 = vpack.c.b16 %v340, %v332
    %v453 = vpack.c.b16 %v349, %v341
    %v454 = vpack.c.b16 %v350, %v342
    %v455 = vpack.c.b16 %v351, %v343
    %v456 = vpack.c.b16 %v352, %v344
    %v457 = vpack.c.b16 %v353, %v345
    %v458 = vpack.c.b16 %v354, %v346
    %v459 = vpack.c.b16 %v355, %v347
    %v460 = vpack.c.b16 %v356, %v348
    %v461 = vpack.c.b16 %v365, %v357
    %v462 = vpack.c.b16 %v366, %v358
    %v463 = vpack.c.b16 %v367, %v359
    %v464 = vpack.c.b16 %v368, %v360
    %v465 = vpack.c.b16 %v369, %v361
    %v466 = vpack.c.b16 %v370, %v362
    %v467 = vpack.c.b16 %v371, %v363
    %v468 = vpack.c.b16 %v372, %v364
    %v469 = vpack.c.b16 %v381, %v373
    %v470 = vpack.c.b16 %v382, %v374
    %v471 = vpack.c.b16 %v383, %v375
    %v472 = vpack.c.b16 %v384, %v376
    %v473 = vpack.c.b16 %v385, %v377
    %v474 = vpack.c.b16 %v386, %v378
    %v475 = vpack.c.b16 %v387, %v379
    %v476 = vpack.c.b16 %v388, %v380
    %v477 = vpack.c.b16 %v397, %v389
    %v478 = vpack.c.b16 %v398, %v390
    %v479 = vpack.c.b16 %v399, %v391
    %v480 = vpack.c.b16 %v400, %v392
    %v481 = vpack.c.b16 %v401, %v393
    %v482 = vpack.c.b16 %v402, %v394
    %v483 = vpack.c.b16 %v403, %v395
    %v484 = vpack.c.b16 %v404, %v396
    %v485 = vpack.c.b16 %v413, %v405
    %v486 = vpack.c.b16 %v414, %v406
    %v487 = vpack.c.b16 %v415, %v407
    %v488 = vpack.c.b16 %v416, %v408
    %v489 = vpack.c.b16 %v417, %v409
    %v490 = vpack.c.b16 %v418, %v410
    %v491 = vpack.c.b16 %v419, %v411
    %v492 = vpack.c.b16 %v420, %v412
    %v493 = vpack.c.b16 %v429, %v421
    %v494 = vpack.c.b16 %v430, %v422
    %v495 = vpack.c.b16 %v431, %v423
    %v496 = vpack.c.b16 %v432, %v424
    %v497 = vpack.c.b16 %v433, %v425
    %v498 = vpack.c.b16 %v434, %v426
    %v499 = vpack.c.b16 %v435, %v427
    %v500 = vpack.c.b16 %v436, %v428
    %565 = vmatprep.subr.bf16.mxu0 %v438
    %566 = vmatpush1.bf16.msra.mxu0 %v437
    %567 = vmatprep.subr.bf16.mxu0 %v446
    %568 = vmatpush1.bf16.msra.mxu0 %v445
    %569 = vmatprep.subr.bf16.mxu0 %v454
    %570 = vmatpush1.bf16.msra.mxu0 %v453
    %571 = vmatprep.subr.bf16.mxu0 %v462
    %572 = vmatpush1.bf16.msra.mxu0 %v461
    %573 = vmatprep.subr.bf16.mxu0 %v470
    %574 = vmatpush1.bf16.msra.mxu0 %v469
    %575 = vmatprep.subr.bf16.mxu0 %v478
    %576 = vmatpush1.bf16.msra.mxu0 %v477
    %577 = vmatprep.subr.bf16.mxu0 %v486
    %578 = vmatpush1.bf16.msra.mxu0 %v485
    %579 = vmatprep.subr.bf16.mxu0 %v494
    %580 = vmatpush1.bf16.msra.mxu0 %v493
    %581 = vmatprep.subr.bf16.mxu0 0
    %582 = vmatpush1.bf16.msra.mxu0 0
    %583 = vmatprep.subr.bf16.mxu0 0
    %584 = vmatpush1.bf16.msra.mxu0 0
    %585 = vmatprep.subr.bf16.mxu0 0
    %586 = vmatpush1.bf16.msra.mxu0 0
    %587 = vmatprep.subr.bf16.mxu0 0
    %588 = vmatpush1.bf16.msra.mxu0 0
    %589 = vmatprep.subr.bf16.mxu0 0
    %590 = vmatpush1.bf16.msra.mxu0 0
    %591 = vmatprep.subr.bf16.mxu0 0
    %592 = vmatpush1.bf16.msra.mxu0 0
    %593 = vmatprep.subr.bf16.mxu0 0
    %594 = vmatpush1.bf16.msra.mxu0 0
    %595 = vmatprep.subr.bf16.mxu0 0
    %596 = vmatpush1.bf16.msra.mxu0 0
    %597 = vmatprep.mubr.bf16.mxu0 0
    %598 = vmatmul.mubr.bf16.gmra.mrb[0].mxu0 %v135
    %v599 = vpop.f32.mrb[0].mxu0
    %v600 = vadd.f32 %v208, %v599
    %v601 = vpop.f32.mrb[0].mxu0
    %v602 = vadd.f32 %v212, %v601
    %v603 = vpop.f32.mrb[0].mxu0
    %v604 = vadd.f32 %v208, %v603
    %v605 = vpop.f32.mrb[0].mxu0
    %v606 = vadd.f32 %v212, %v605
    %607 = vmatprep.mubr.bf16.mxu0 0
    %608 = vmatmul.mubr.bf16.gmra.mrb[0].mxu0 %v136
    %v609 = vpop.f32.mrb[0].mxu0
    %v610 = vadd.f32 %v208, %v609
    %v611 = vpop.f32.mrb[0].mxu0
    %v612 = vadd.f32 %v212, %v611
    %v613 = vpop.f32.mrb[0].mxu0
    %v614 = vadd.f32 %v208, %v613
    %v615 = vpop.f32.mrb[0].mxu0
    %v616 = vadd.f32 %v212, %v615
    %617 = vmatprep.mubr.bf16.mxu0 0
    %618 = vmatmul.mubr.bf16.gmra.mrb[0].mxu0 %v137
    %v619 = vpop.f32.mrb[0].mxu0
    %v620 = vadd.f32 %v208, %v619
    %v621 = vpop.f32.mrb[0].mxu0
    %v622 = vadd.f32 %v212, %v621
    %v623 = vpop.f32.mrb[0].mxu0
    %v624 = vadd.f32 %v208, %v623
    %v625 = vpop.f32.mrb[0].mxu0
    %v626 = vadd.f32 %v212, %v625
    %627 = vmatprep.mubr.bf16.mxu0 0
    %628 = vmatmul.mubr.bf16.gmra.mrb[0].mxu0 %v138
    %v629 = vpop.f32.mrb[0].mxu0
    %v630 = vadd.f32 %v208, %v629
    %v631 = vpop.f32.mrb[0].mxu0
    %v632 = vadd.f32 %v212, %v631
    %v633 = vpop.f32.mrb[0].mxu0
    %v634 = vadd.f32 %v208, %v633
    %v635 = vpop.f32.mrb[0].mxu0
    %v636 = vadd.f32 %v212, %v635
    %637 = vdwg.mxu0
    %638 = vmatprep.subr.bf16.mxu0 %v440
    %639 = vmatpush1.bf16.msra.mxu0 %v439
    %640 = vmatprep.subr.bf16.mxu0 %v448
    %641 = vmatpush1.bf16.msra.mxu0 %v447
    %642 = vmatprep.subr.bf16.mxu0 %v456
    %643 = vmatpush1.bf16.msra.mxu0 %v455
    %644 = vmatprep.subr.bf16.mxu0 %v464
    %645 = vmatpush1.bf16.msra.mxu0 %v463
    %646 = vmatprep.subr.bf16.mxu0 %v472
    %647 = vmatpush1.bf16.msra.mxu0 %v471
    %648 = vmatprep.subr.bf16.mxu0 %v480
    %649 = vmatpush1.bf16.msra.mxu0 %v479
    %650 = vmatprep.subr.bf16.mxu0 %v488
    %651 = vmatpush1.bf16.msra.mxu0 %v487
    %652 = vmatprep.subr.bf16.mxu0 %v496
    %653 = vmatpush1.bf16.msra.mxu0 %v495
    %654 = vmatprep.subr.bf16.mxu0 0
    %655 = vmatpush1.bf16.msra.mxu0 0
    %656 = vmatprep.subr.bf16.mxu0 0
    %657 = vmatpush1.bf16.msra.mxu0 0
    %658 = vmatprep.subr.bf16.mxu0 0
    %659 = vmatpush1.bf16.msra.mxu0 0
    %660 = vmatprep.subr.bf16.mxu0 0
    %661 = vmatpush1.bf16.msra.mxu0 0
    %662 = vmatprep.subr.bf16.mxu0 0
    %663 = vmatpush1.bf16.msra.mxu0 0
    %664 = vmatprep.subr.bf16.mxu0 0
    %665 = vmatpush1.bf16.msra.mxu0 0
    %666 = vmatprep.subr.bf16.mxu0 0
    %667 = vmatpush1.bf16.msra.mxu0 0
    %668 = vmatprep.subr.bf16.mxu0 0
    %669 = vmatpush1.bf16.msra.mxu0 0
    %670 = vmatprep.mubr.bf16.mxu0 0
    %671 = vmatmul.mubr.bf16.gmra.mrb[0].mxu0 %v135
    %v672 = vpop.f32.mrb[0].mxu0
    %v673 = vadd.f32 %v216, %v672
    %v674 = vpop.f32.mrb[0].mxu0
    %v675 = vadd.f32 %v220, %v674
    %v676 = vpop.f32.mrb[0].mxu0
    %v677 = vadd.f32 %v216, %v676
    %v678 = vpop.f32.mrb[0].mxu0
    %v679 = vadd.f32 %v220, %v678
    %680 = vmatprep.mubr.bf16.mxu0 0
    %681 = vmatmul.mubr.bf16.gmra.mrb[0].mxu0 %v136
    %v682 = vpop.f32.mrb[0].mxu0
    %v683 = vadd.f32 %v216, %v682
    %v684 = vpop.f32.mrb[0].mxu0
    %v685 = vadd.f32 %v220, %v684
    %v686 = vpop.f32.mrb[0].mxu0
    %v687 = vadd.f32 %v216, %v686
    %v688 = vpop.f32.mrb[0].mxu0
    %v689 = vadd.f32 %v220, %v688
    %690 = vmatprep.mubr.bf16.mxu0 0
    %691 = vmatmul.mubr.bf16.gmra.mrb[0].mxu0 %v137
    %v692 = vpop.f32.mrb[0].mxu0
    %v693 = vadd.f32 %v216, %v692
    %v694 = vpop.f32.mrb[0].mxu0
    %v695 = vadd.f32 %v220, %v694
    %v696 = vpop.f32.mrb[0].mxu0
    %v697 = vadd.f32 %v216, %v696
    %v698 = vpop.f32.mrb[0].mxu0
    %v699 = vadd.f32 %v220, %v698
    %700 = vmatprep.mubr.bf16.mxu0 0
    %701 = vmatmul.mubr.bf16.gmra.mrb[0].mxu0 %v138
    %v702 = vpop.f32.mrb[0].mxu0
    %v703 = vadd.f32 %v216, %v702
    %v704 = vpop.f32.mrb[0].mxu0
    %v705 = vadd.f32 %v220, %v704
    %v706 = vpop.f32.mrb[0].mxu0
    %v707 = vadd.f32 %v216, %v706
    %v708 = vpop.f32.mrb[0].mxu0
    %v709 = vadd.f32 %v220, %v708
    %710 = vdwg.mxu0
    %711 = vmatprep.subr.bf16.mxu0 %v442
    %712 = vmatpush1.bf16.msra.mxu0 %v441
    %713 = vmatprep.subr.bf16.mxu0 %v450
    %714 = vmatpush1.bf16.msra.mxu0 %v449
    %715 = vmatprep.subr.bf16.mxu0 %v458
    %716 = vmatpush1.bf16.msra.mxu0 %v457
    %717 = vmatprep.subr.bf16.mxu0 %v466
    %718 = vmatpush1.bf16.msra.mxu0 %v465
    %719 = vmatprep.subr.bf16.mxu0 %v474
    %720 = vmatpush1.bf16.msra.mxu0 %v473
    %721 = vmatprep.subr.bf16.mxu0 %v482
    %722 = vmatpush1.bf16.msra.mxu0 %v481
    %723 = vmatprep.subr.bf16.mxu0 %v490
    %724 = vmatpush1.bf16.msra.mxu0 %v489
    %725 = vmatprep.subr.bf16.mxu0 %v498
    %726 = vmatpush1.bf16.msra.mxu0 %v497
    %727 = vmatprep.subr.bf16.mxu0 0
    %728 = vmatpush1.bf16.msra.mxu0 0
    %729 = vmatprep.subr.bf16.mxu0 0
    %730 = vmatpush1.bf16.msra.mxu0 0
    %731 = vmatprep.subr.bf16.mxu0 0
    %732 = vmatpush1.bf16.msra.mxu0 0
    %733 = vmatprep.subr.bf16.mxu0 0
    %734 = vmatpush1.bf16.msra.mxu0 0
    %735 = vmatprep.subr.bf16.mxu0 0
    %736 = vmatpush1.bf16.msra.mxu0 0
    %737 = vmatprep.subr.bf16.mxu0 0
    %738 = vmatpush1.bf16.msra.mxu0 0
    %739 = vmatprep.subr.bf16.mxu0 0
    %740 = vmatpush1.bf16.msra.mxu0 0
    %741 = vmatprep.subr.bf16.mxu0 0
    %742 = vmatpush1.bf16.msra.mxu0 0
    %743 = vmatprep.mubr.bf16.mxu0 0
    %744 = vmatmul.mubr.bf16.gmra.mrb[0].mxu0 %v135
    %v745 = vpop.f32.mrb[0].mxu0
    %v746 = vadd.f32 %v224, %v745
    %v747 = vpop.f32.mrb[0].mxu0
    %v748 = vadd.f32 %v228, %v747
    %v749 = vpop.f32.mrb[0].mxu0
    %v750 = vadd.f32 %v224, %v749
    %v751 = vpop.f32.mrb[0].mxu0
    %v752 = vadd.f32 %v228, %v751
    %753 = vmatprep.mubr.bf16.mxu0 0
    %754 = vmatmul.mubr.bf16.gmra.mrb[0].mxu0 %v136
    %v755 = vpop.f32.mrb[0].mxu0
    %v756 = vadd.f32 %v224, %v755
    %v757 = vpop.f32.mrb[0].mxu0
    %v758 = vadd.f32 %v228, %v757
    %v759 = vpop.f32.mrb[0].mxu0
    %v760 = vadd.f32 %v224, %v759
    %v761 = vpop.f32.mrb[0].mxu0
    %v762 = vadd.f32 %v228, %v761
    %763 = vmatprep.mubr.bf16.mxu0 0
    %764 = vmatmul.mubr.bf16.gmra.mrb[0].mxu0 %v137
    %v765 = vpop.f32.mrb[0].mxu0
    %v766 = vadd.f32 %v224, %v765
    %v767 = vpop.f32.mrb[0].mxu0
    %v768 = vadd.f32 %v228, %v767
    %v769 = vpop.f32.mrb[0].mxu0
    %v770 = vadd.f32 %v224, %v769
    %v771 = vpop.f32.mrb[0].mxu0
    %v772 = vadd.f32 %v228, %v771
    %773 = vmatprep.mubr.bf16.mxu0 0
    %774 = vmatmul.mubr.bf16.gmra.mrb[0].mxu0 %v138
    %v775 = vpop.f32.mrb[0].mxu0
    %v776 = vadd.f32 %v224, %v775
    %v777 = vpop.f32.mrb[0].mxu0
    %v778 = vadd.f32 %v228, %v777
    %v779 = vpop.f32.mrb[0].mxu0
    %v780 = vadd.f32 %v224, %v779
    %v781 = vpop.f32.mrb[0].mxu0
    %v782 = vadd.f32 %v228, %v781
    %783 = vdwg.mxu0
    %784 = vmatprep.subr.bf16.mxu0 %v444
    %785 = vmatpush1.bf16.msra.mxu0 %v443
    %786 = vmatprep.subr.bf16.mxu0 %v452
    %787 = vmatpush1.bf16.msra.mxu0 %v451
    %788 = vmatprep.subr.bf16.mxu0 %v460
    %789 = vmatpush1.bf16.msra.mxu0 %v459
    %790 = vmatprep.subr.bf16.mxu0 %v468
    %791 = vmatpush1.bf16.msra.mxu0 %v467
    %792 = vmatprep.subr.bf16.mxu0 %v476
    %793 = vmatpush1.bf16.msra.mxu0 %v475
    %794 = vmatprep.subr.bf16.mxu0 %v484
    %795 = vmatpush1.bf16.msra.mxu0 %v483
    %796 = vmatprep.subr.bf16.mxu0 %v492
    %797 = vmatpush1.bf16.msra.mxu0 %v491
    %798 = vmatprep.subr.bf16.mxu0 %v500
    %799 = vmatpush1.bf16.msra.mxu0 %v499
    %800 = vmatprep.subr.bf16.mxu0 0
    %801 = vmatpush1.bf16.msra.mxu0 0
    %802 = vmatprep.subr.bf16.mxu0 0
    %803 = vmatpush1.bf16.msra.mxu0 0
    %804 = vmatprep.subr.bf16.mxu0 0
    %805 = vmatpush1.bf16.msra.mxu0 0
    %806 = vmatprep.subr.bf16.mxu0 0
    %807 = vmatpush1.bf16.msra.mxu0 0
    %808 = vmatprep.subr.bf16.mxu0 0
    %809 = vmatpush1.bf16.msra.mxu0 0
    %810 = vmatprep.subr.bf16.mxu0 0
    %811 = vmatpush1.bf16.msra.mxu0 0
    %812 = vmatprep.subr.bf16.mxu0 0
    %813 = vmatpush1.bf16.msra.mxu0 0
    %814 = vmatprep.subr.bf16.mxu0 0
    %815 = vmatpush1.bf16.msra.mxu0 0
    %816 = vmatprep.mubr.bf16.mxu0 0
    %817 = vmatmul.mubr.bf16.gmra.mrb[0].mxu0 %v135
    %v818 = vpop.f32.mrb[0].mxu0
    %v819 = vadd.f32 %v232, %v818
    %v820 = vpop.f32.mrb[0].mxu0
    %v821 = vadd.f32 %v236, %v820
    %v822 = vpop.f32.mrb[0].mxu0
    %v823 = vadd.f32 %v232, %v822
    %v824 = vpop.f32.mrb[0].mxu0
    %v825 = vadd.f32 %v236, %v824
    %826 = vmatprep.mubr.bf16.mxu0 0
    %827 = vmatmul.mubr.bf16.gmra.mrb[0].mxu0 %v136
    %v828 = vpop.f32.mrb[0].mxu0
    %v829 = vadd.f32 %v232, %v828
    %v830 = vpop.f32.mrb[0].mxu0
    %v831 = vadd.f32 %v236, %v830
    %v832 = vpop.f32.mrb[0].mxu0
    %v833 = vadd.f32 %v232, %v832
    %v834 = vpop.f32.mrb[0].mxu0
    %v835 = vadd.f32 %v236, %v834
    %836 = vmatprep.mubr.bf16.mxu0 0
    %837 = vmatmul.mubr.bf16.gmra.mrb[0].mxu0 %v137
    %v838 = vpop.f32.mrb[0].mxu0
    %v839 = vadd.f32 %v232, %v838
    %v840 = vpop.f32.mrb[0].mxu0
    %v841 = vadd.f32 %v236, %v840
    %v842 = vpop.f32.mrb[0].mxu0
    %v843 = vadd.f32 %v232, %v842
    %v844 = vpop.f32.mrb[0].mxu0
    %v845 = vadd.f32 %v236, %v844
    %846 = vmatprep.mubr.bf16.mxu0 0
    %847 = vmatmul.mubr.bf16.gmra.mrb[0].mxu0 %v138
    %v848 = vpop.f32.mrb[0].mxu0
    %v849 = vadd.f32 %v232, %v848
    %v850 = vpop.f32.mrb[0].mxu0
    %v851 = vadd.f32 %v236, %v850
    %v852 = vpop.f32.mrb[0].mxu0
    %v853 = vadd.f32 %v232, %v852
    %v854 = vpop.f32.mrb[0].mxu0
    %v855 = vadd.f32 %v236, %v854
    %856 = vdwg.mxu0
    %v857 = vld [vmem:[#allocation7] sm:$0xff]
    %v858 = vld [vmem:[#allocation7 + $0x8] sm:$0xff]
    %v859 = vld [vmem:[#allocation7 + $0x10] sm:$0xff]
    %v860 = vld [vmem:[#allocation7 + $0x18] sm:$0xff]
    %v861 = vld [vmem:[#allocation7 + $0x20] sm:$0xff]
    %v862 = vld [vmem:[#allocation7 + $0x28] sm:$0xff]
    %v863 = vld [vmem:[#allocation7 + $0x30] sm:$0xff]
    %v864 = vld [vmem:[#allocation7 + $0x38] sm:$0xff]
    %v865 = vld [vmem:[#allocation7 + $0x40] sm:$0xff]
    %v866 = vld [vmem:[#allocation7 + $0x48] sm:$0xff]
    %v867 = vld [vmem:[#allocation7 + $0x50] sm:$0xff]
    %v868 = vld [vmem:[#allocation7 + $0x58] sm:$0xff]
    %v869 = vld [vmem:[#allocation7 + $0x60] sm:$0xff]
    %v870 = vld [vmem:[#allocation7 + $0x68] sm:$0xff]
    %v871 = vld [vmem:[#allocation7 + $0x70] sm:$0xff]
    %v872 = vld [vmem:[#allocation7 + $0x78] sm:$0xff]
    %v873 = vld [vmem:[#allocation7 + $0x80] sm:$0xff]
    %v874 = vld [vmem:[#allocation7 + $0x88] sm:$0xff]
    %v875 = vld [vmem:[#allocation7 + $0x90] sm:$0xff]
    %v876 = vld [vmem:[#allocation7 + $0x98] sm:$0xff]
    %v877 = vld [vmem:[#allocation7 + $0xa0] sm:$0xff]
    %v878 = vld [vmem:[#allocation7 + $0xa8] sm:$0xff]
    %v879 = vld [vmem:[#allocation7 + $0xb0] sm:$0xff]
    %v880 = vld [vmem:[#allocation7 + $0xb8] sm:$0xff]
    %v881 = vld [vmem:[#allocation7 + $0xc0] sm:$0xff]
    %v882 = vld [vmem:[#allocation7 + $0xc8] sm:$0xff]
    %v883 = vld [vmem:[#allocation7 + $0xd0] sm:$0xff]
    %v884 = vld [vmem:[#allocation7 + $0xd8] sm:$0xff]
    %v885 = vld [vmem:[#allocation7 + $0xe0] sm:$0xff]
    %v886 = vld [vmem:[#allocation7 + $0xe8] sm:$0xff]
    %v887 = vld [vmem:[#allocation7 + $0xf0] sm:$0xff]
    %v888 = vld [vmem:[#allocation7 + $0xf8] sm:$0xff]
    %v889 = vld [vmem:[#allocation7 + $0x100] sm:$0xff]
    %v890 = vld [vmem:[#allocation7 + $0x108] sm:$0xff]
    %v891 = vld [vmem:[#allocation7 + $0x110] sm:$0xff]
    %v892 = vld [vmem:[#allocation7 + $0x118] sm:$0xff]
    %v893 = vld [vmem:[#allocation7 + $0x120] sm:$0xff]
    %v894 = vld [vmem:[#allocation7 + $0x128] sm:$0xff]
    %v895 = vld [vmem:[#allocation7 + $0x130] sm:$0xff]
    %v896 = vld [vmem:[#allocation7 + $0x138] sm:$0xff]
    %v897 = vld [vmem:[#allocation7 + $0x140] sm:$0xff]
    %v898 = vld [vmem:[#allocation7 + $0x148] sm:$0xff]
    %v899 = vld [vmem:[#allocation7 + $0x150] sm:$0xff]
    %v900 = vld [vmem:[#allocation7 + $0x158] sm:$0xff]
    %v901 = vld [vmem:[#allocation7 + $0x160] sm:$0xff]
    %v902 = vld [vmem:[#allocation7 + $0x168] sm:$0xff]
    %v903 = vld [vmem:[#allocation7 + $0x170] sm:$0xff]
    %v904 = vld [vmem:[#allocation7 + $0x178] sm:$0xff]
    %v905 = vld [vmem:[#allocation7 + $0x180] sm:$0xff]
    %v906 = vld [vmem:[#allocation7 + $0x188] sm:$0xff]
    %v907 = vld [vmem:[#allocation7 + $0x190] sm:$0xff]
    %v908 = vld [vmem:[#allocation7 + $0x198] sm:$0xff]
    %v909 = vld [vmem:[#allocation7 + $0x1a0] sm:$0xff]
    %v910 = vld [vmem:[#allocation7 + $0x1a8] sm:$0xff]
    %v911 = vld [vmem:[#allocation7 + $0x1b0] sm:$0xff]
    %v912 = vld [vmem:[#allocation7 + $0x1b8] sm:$0xff]
    %v913 = vld [vmem:[#allocation7 + $0x1c0] sm:$0xff]
    %v914 = vld [vmem:[#allocation7 + $0x1c8] sm:$0xff]
    %v915 = vld [vmem:[#allocation7 + $0x1d0] sm:$0xff]
    %v916 = vld [vmem:[#allocation7 + $0x1d8] sm:$0xff]
    %v917 = vld [vmem:[#allocation7 + $0x1e0] sm:$0xff]
    %v918 = vld [vmem:[#allocation7 + $0x1e8] sm:$0xff]
    %v919 = vld [vmem:[#allocation7 + $0x1f0] sm:$0xff]
    %v920 = vld [vmem:[#allocation7 + $0x1f8] sm:$0xff]
    %v921 = vld [vmem:[#allocation7 + $0x200] sm:$0xff]
    %v922 = vld [vmem:[#allocation7 + $0x208] sm:$0xff]
    %v923 = vld [vmem:[#allocation7 + $0x210] sm:$0xff]
    %v924 = vld [vmem:[#allocation7 + $0x218] sm:$0xff]
    %v925 = vld [vmem:[#allocation7 + $0x220] sm:$0xff]
    %v926 = vld [vmem:[#allocation7 + $0x228] sm:$0xff]
    %v927 = vld [vmem:[#allocation7 + $0x230] sm:$0xff]
    %v928 = vld [vmem:[#allocation7 + $0x238] sm:$0xff]
    %v929 = vld [vmem:[#allocation7 + $0x240] sm:$0xff]
    %v930 = vld [vmem:[#allocation7 + $0x248] sm:$0xff]
    %v931 = vld [vmem:[#allocation7 + $0x250] sm:$0xff]
    %v932 = vld [vmem:[#allocation7 + $0x258] sm:$0xff]
    %v933 = vld [vmem:[#allocation7 + $0x260] sm:$0xff]
    %v934 = vld [vmem:[#allocation7 + $0x268] sm:$0xff]
    %v935 = vld [vmem:[#allocation7 + $0x270] sm:$0xff]
    %v936 = vld [vmem:[#allocation7 + $0x278] sm:$0xff]
    %v937 = vld [vmem:[#allocation7 + $0x280] sm:$0xff]
    %v938 = vld [vmem:[#allocation7 + $0x288] sm:$0xff]
    %v939 = vld [vmem:[#allocation7 + $0x290] sm:$0xff]
    %v940 = vld [vmem:[#allocation7 + $0x298] sm:$0xff]
    %v941 = vld [vmem:[#allocation7 + $0x2a0] sm:$0xff]
    %v942 = vld [vmem:[#allocation7 + $0x2a8] sm:$0xff]
    %v943 = vld [vmem:[#allocation7 + $0x2b0] sm:$0xff]
    %v944 = vld [vmem:[#allocation7 + $0x2b8] sm:$0xff]
    %v945 = vld [vmem:[#allocation7 + $0x2c0] sm:$0xff]
    %v946 = vld [vmem:[#allocation7 + $0x2c8] sm:$0xff]
    %v947 = vld [vmem:[#allocation7 + $0x2d0] sm:$0xff]
    %v948 = vld [vmem:[#allocation7 + $0x2d8] sm:$0xff]
    %v949 = vld [vmem:[#allocation7 + $0x2e0] sm:$0xff]
    %v950 = vld [vmem:[#allocation7 + $0x2e8] sm:$0xff]
    %v951 = vld [vmem:[#allocation7 + $0x2f0] sm:$0xff]
    %v952 = vld [vmem:[#allocation7 + $0x2f8] sm:$0xff]
    %v953 = vld [vmem:[#allocation7 + $0x300] sm:$0xff]
    %v954 = vld [vmem:[#allocation7 + $0x308] sm:$0xff]
    %v955 = vld [vmem:[#allocation7 + $0x310] sm:$0xff]
    %v956 = vld [vmem:[#allocation7 + $0x318] sm:$0xff]
    %v957 = vld [vmem:[#allocation7 + $0x320] sm:$0xff]
    %v958 = vld [vmem:[#allocation7 + $0x328] sm:$0xff]
    %v959 = vld [vmem:[#allocation7 + $0x330] sm:$0xff]
    %v960 = vld [vmem:[#allocation7 + $0x338] sm:$0xff]
    %v961 = vld [vmem:[#allocation7 + $0x340] sm:$0xff]
    %v962 = vld [vmem:[#allocation7 + $0x348] sm:$0xff]
    %v963 = vld [vmem:[#allocation7 + $0x350] sm:$0xff]
    %v964 = vld [vmem:[#allocation7 + $0x358] sm:$0xff]
    %v965 = vld [vmem:[#allocation7 + $0x360] sm:$0xff]
    %v966 = vld [vmem:[#allocation7 + $0x368] sm:$0xff]
    %v967 = vld [vmem:[#allocation7 + $0x370] sm:$0xff]
    %v968 = vld [vmem:[#allocation7 + $0x378] sm:$0xff]
    %v969 = vld [vmem:[#allocation7 + $0x380] sm:$0xff]
    %v970 = vld [vmem:[#allocation7 + $0x388] sm:$0xff]
    %v971 = vld [vmem:[#allocation7 + $0x390] sm:$0xff]
    %v972 = vld [vmem:[#allocation7 + $0x398] sm:$0xff]
    %v973 = vld [vmem:[#allocation7 + $0x3a0] sm:$0xff]
    %v974 = vld [vmem:[#allocation7 + $0x3a8] sm:$0xff]
    %v975 = vld [vmem:[#allocation7 + $0x3b0] sm:$0xff]
    %v976 = vld [vmem:[#allocation7 + $0x3b8] sm:$0xff]
    %v977 = vld [vmem:[#allocation7 + $0x3c0] sm:$0xff]
    %v978 = vld [vmem:[#allocation7 + $0x3c8] sm:$0xff]
    %v979 = vld [vmem:[#allocation7 + $0x3d0] sm:$0xff]
    %v980 = vld [vmem:[#allocation7 + $0x3d8] sm:$0xff]
    %v981 = vld [vmem:[#allocation7 + $0x3e0] sm:$0xff]
    %v982 = vld [vmem:[#allocation7 + $0x3e8] sm:$0xff]
    %v983 = vld [vmem:[#allocation7 + $0x3f0] sm:$0xff]
    %v984 = vld [vmem:[#allocation7 + $0x3f8] sm:$0xff]
    %v985 = vld [vmem:[%s5] sm:$0xff]
    %s986 = smul.u32 4, 64
    %s987 = smul.u32 %s986, 8
    %s988 = sshll.u32 %s987, 4
    %989 = dma.done [#allocation4], %s988
    %v990 = vld [vmem:[#allocation2] sm:$0xff]
    %v991 = vld [vmem:[#allocation2 + $0x8] sm:$0xff]
    %v992 = vld [vmem:[#allocation2 + $0x10] sm:$0xff]
    %v993 = vld [vmem:[#allocation2 + $0x18] sm:$0xff]
    %v994 = vld [vmem:[#allocation2 + $0x20] sm:$0xff]
    %v995 = vld [vmem:[#allocation2 + $0x28] sm:$0xff]
    %v996 = vld [vmem:[#allocation2 + $0x30] sm:$0xff]
    %v997 = vld [vmem:[#allocation2 + $0x38] sm:$0xff]
    %v998 = vld [vmem:[#allocation2 + $0x40] sm:$0xff]
    %v999 = vld [vmem:[#allocation2 + $0x48] sm:$0xff]
    %v1000 = vld [vmem:[#allocation2 + $0x50] sm:$0xff]
    %v1001 = vld [vmem:[#allocation2 + $0x58] sm:$0xff]
    %v1002 = vld [vmem:[#allocation2 + $0x60] sm:$0xff]
    %v1003 = vld [vmem:[#allocation2 + $0x68] sm:$0xff]
    %v1004 = vld [vmem:[#allocation2 + $0x70] sm:$0xff]
    %v1005 = vld [vmem:[#allocation2 + $0x78] sm:$0xff]
    %v1006 = vld [vmem:[#allocation2 + $0x80] sm:$0xff]
    %v1007 = vld [vmem:[#allocation2 + $0x88] sm:$0xff]
    %v1008 = vld [vmem:[#allocation2 + $0x90] sm:$0xff]
    %v1009 = vld [vmem:[#allocation2 + $0x98] sm:$0xff]
    %v1010 = vld [vmem:[#allocation2 + $0xa0] sm:$0xff]
    %v1011 = vld [vmem:[#allocation2 + $0xa8] sm:$0xff]
    %v1012 = vld [vmem:[#allocation2 + $0xb0] sm:$0xff]
    %v1013 = vld [vmem:[#allocation2 + $0xb8] sm:$0xff]
    %v1014 = vld [vmem:[#allocation2 + $0xc0] sm:$0xff]
    %v1015 = vld [vmem:[#allocation2 + $0xc8] sm:$0xff]
    %v1016 = vld [vmem:[#allocation2 + $0xd0] sm:$0xff]
    %v1017 = vld [vmem:[#allocation2 + $0xd8] sm:$0xff]
    %v1018 = vld [vmem:[#allocation2 + $0xe0] sm:$0xff]
    %v1019 = vld [vmem:[#allocation2 + $0xe8] sm:$0xff]
    %v1020 = vld [vmem:[#allocation2 + $0xf0] sm:$0xff]
    %v1021 = vld [vmem:[#allocation2 + $0xf8] sm:$0xff]
    %v1022 = vld [vmem:[#allocation2 + $0x100] sm:$0xff]
    %v1023 = vld [vmem:[#allocation2 + $0x108] sm:$0xff]
    %v1024 = vld [vmem:[#allocation2 + $0x110] sm:$0xff]
    %v1025 = vld [vmem:[#allocation2 + $0x118] sm:$0xff]
    %v1026 = vld [vmem:[#allocation2 + $0x120] sm:$0xff]
    %v1027 = vld [vmem:[#allocation2 + $0x128] sm:$0xff]
    %v1028 = vld [vmem:[#allocation2 + $0x130] sm:$0xff]
    %v1029 = vld [vmem:[#allocation2 + $0x138] sm:$0xff]
    %v1030 = vld [vmem:[#allocation2 + $0x140] sm:$0xff]
    %v1031 = vld [vmem:[#allocation2 + $0x148] sm:$0xff]
    %v1032 = vld [vmem:[#allocation2 + $0x150] sm:$0xff]
    %v1033 = vld [vmem:[#allocation2 + $0x158] sm:$0xff]
    %v1034 = vld [vmem:[#allocation2 + $0x160] sm:$0xff]
    %v1035 = vld [vmem:[#allocation2 + $0x168] sm:$0xff]
    %v1036 = vld [vmem:[#allocation2 + $0x170] sm:$0xff]
    %v1037 = vld [vmem:[#allocation2 + $0x178] sm:$0xff]
    %v1038 = vld [vmem:[#allocation2 + $0x180] sm:$0xff]
    %v1039 = vld [vmem:[#allocation2 + $0x188] sm:$0xff]
    %v1040 = vld [vmem:[#allocation2 + $0x190] sm:$0xff]
    %v1041 = vld [vmem:[#allocation2 + $0x198] sm:$0xff]
    %v1042 = vld [vmem:[#allocation2 + $0x1a0] sm:$0xff]
    %v1043 = vld [vmem:[#allocation2 + $0x1a8] sm:$0xff]
    %v1044 = vld [vmem:[#allocation2 + $0x1b0] sm:$0xff]
    %v1045 = vld [vmem:[#allocation2 + $0x1b8] sm:$0xff]
    %v1046 = vld [vmem:[#allocation2 + $0x1c0] sm:$0xff]
    %v1047 = vld [vmem:[#allocation2 + $0x1c8] sm:$0xff]
    %v1048 = vld [vmem:[#allocation2 + $0x1d0] sm:$0xff]
    %v1049 = vld [vmem:[#allocation2 + $0x1d8] sm:$0xff]
    %v1050 = vld [vmem:[#allocation2 + $0x1e0] sm:$0xff]
    %v1051 = vld [vmem:[#allocation2 + $0x1e8] sm:$0xff]
    %v1052 = vld [vmem:[#allocation2 + $0x1f0] sm:$0xff]
    %v1053 = vld [vmem:[#allocation2 + $0x1f8] sm:$0xff]
    %v1054 = vld [vmem:[#allocation2 + $0x200] sm:$0xff]
    %v1055 = vld [vmem:[#allocation2 + $0x208] sm:$0xff]
    %v1056 = vld [vmem:[#allocation2 + $0x210] sm:$0xff]
    %v1057 = vld [vmem:[#allocation2 + $0x218] sm:$0xff]
    %v1058 = vld [vmem:[#allocation2 + $0x220] sm:$0xff]
    %v1059 = vld [vmem:[#allocation2 + $0x228] sm:$0xff]
    %v1060 = vld [vmem:[#allocation2 + $0x230] sm:$0xff]
    %v1061 = vld [vmem:[#allocation2 + $0x238] sm:$0xff]
    %v1062 = vld [vmem:[#allocation2 + $0x240] sm:$0xff]
    %v1063 = vld [vmem:[#allocation2 + $0x248] sm:$0xff]
    %v1064 = vld [vmem:[#allocation2 + $0x250] sm:$0xff]
    %v1065 = vld [vmem:[#allocation2 + $0x258] sm:$0xff]
    %v1066 = vld [vmem:[#allocation2 + $0x260] sm:$0xff]
    %v1067 = vld [vmem:[#allocation2 + $0x268] sm:$0xff]
    %v1068 = vld [vmem:[#allocation2 + $0x270] sm:$0xff]
    %v1069 = vld [vmem:[#allocation2 + $0x278] sm:$0xff]
    %v1070 = vld [vmem:[#allocation2 + $0x280] sm:$0xff]
    %v1071 = vld [vmem:[#allocation2 + $0x288] sm:$0xff]
    %v1072 = vld [vmem:[#allocation2 + $0x290] sm:$0xff]
    %v1073 = vld [vmem:[#allocation2 + $0x298] sm:$0xff]
    %v1074 = vld [vmem:[#allocation2 + $0x2a0] sm:$0xff]
    %v1075 = vld [vmem:[#allocation2 + $0x2a8] sm:$0xff]
    %v1076 = vld [vmem:[#allocation2 + $0x2b0] sm:$0xff]
    %v1077 = vld [vmem:[#allocation2 + $0x2b8] sm:$0xff]
    %v1078 = vld [vmem:[#allocation2 + $0x2c0] sm:$0xff]
    %v1079 = vld [vmem:[#allocation2 + $0x2c8] sm:$0xff]
    %v1080 = vld [vmem:[#allocation2 + $0x2d0] sm:$0xff]
    %v1081 = vld [vmem:[#allocation2 + $0x2d8] sm:$0xff]
    %v1082 = vld [vmem:[#allocation2 + $0x2e0] sm:$0xff]
    %v1083 = vld [vmem:[#allocation2 + $0x2e8] sm:$0xff]
    %v1084 = vld [vmem:[#allocation2 + $0x2f0] sm:$0xff]
    %v1085 = vld [vmem:[#allocation2 + $0x2f8] sm:$0xff]
    %v1086 = vld [vmem:[#allocation2 + $0x300] sm:$0xff]
    %v1087 = vld [vmem:[#allocation2 + $0x308] sm:$0xff]
    %v1088 = vld [vmem:[#allocation2 + $0x310] sm:$0xff]
    %v1089 = vld [vmem:[#allocation2 + $0x318] sm:$0xff]
    %v1090 = vld [vmem:[#allocation2 + $0x320] sm:$0xff]
    %v1091 = vld [vmem:[#allocation2 + $0x328] sm:$0xff]
    %v1092 = vld [vmem:[#allocation2 + $0x330] sm:$0xff]
    %v1093 = vld [vmem:[#allocation2 + $0x338] sm:$0xff]
    %v1094 = vld [vmem:[#allocation2 + $0x340] sm:$0xff]
    %v1095 = vld [vmem:[#allocation2 + $0x348] sm:$0xff]
    %v1096 = vld [vmem:[#allocation2 + $0x350] sm:$0xff]
    %v1097 = vld [vmem:[#allocation2 + $0x358] sm:$0xff]
    %v1098 = vld [vmem:[#allocation2 + $0x360] sm:$0xff]
    %v1099 = vld [vmem:[#allocation2 + $0x368] sm:$0xff]
    %v1100 = vld [vmem:[#allocation2 + $0x370] sm:$0xff]
    %v1101 = vld [vmem:[#allocation2 + $0x378] sm:$0xff]
    %v1102 = vld [vmem:[#allocation2 + $0x380] sm:$0xff]
    %v1103 = vld [vmem:[#allocation2 + $0x388] sm:$0xff]
    %v1104 = vld [vmem:[#allocation2 + $0x390] sm:$0xff]
    %v1105 = vld [vmem:[#allocation2 + $0x398] sm:$0xff]
    %v1106 = vld [vmem:[#allocation2 + $0x3a0] sm:$0xff]
    %v1107 = vld [vmem:[#allocation2 + $0x3a8] sm:$0xff]
    %v1108 = vld [vmem:[#allocation2 + $0x3b0] sm:$0xff]
    %v1109 = vld [vmem:[#allocation2 + $0x3b8] sm:$0xff]
    %v1110 = vld [vmem:[#allocation2 + $0x3c0] sm:$0xff]
    %v1111 = vld [vmem:[#allocation2 + $0x3c8] sm:$0xff]
    %v1112 = vld [vmem:[#allocation2 + $0x3d0] sm:$0xff]
    %v1113 = vld [vmem:[#allocation2 + $0x3d8] sm:$0xff]
    %v1114 = vld [vmem:[#allocation2 + $0x3e0] sm:$0xff]
    %v1115 = vld [vmem:[#allocation2 + $0x3e8] sm:$0xff]
    %v1116 = vld [vmem:[#allocation2 + $0x3f0] sm:$0xff]
    %v1117 = vld [vmem:[#allocation2 + $0x3f8] sm:$0xff]
    %v1118 = vld [vmem:[#allocation2 + $0x400] sm:$0xff]
    %v1119 = vld [vmem:[#allocation2 + $0x408] sm:$0xff]
    %v1120 = vld [vmem:[#allocation2 + $0x410] sm:$0xff]
    %v1121 = vld [vmem:[#allocation2 + $0x418] sm:$0xff]
    %v1122 = vld [vmem:[#allocation2 + $0x420] sm:$0xff]
    %v1123 = vld [vmem:[#allocation2 + $0x428] sm:$0xff]
    %v1124 = vld [vmem:[#allocation2 + $0x430] sm:$0xff]
    %v1125 = vld [vmem:[#allocation2 + $0x438] sm:$0xff]
    %v1126 = vld [vmem:[#allocation2 + $0x440] sm:$0xff]
    %v1127 = vld [vmem:[#allocation2 + $0x448] sm:$0xff]
    %v1128 = vld [vmem:[#allocation2 + $0x450] sm:$0xff]
    %v1129 = vld [vmem:[#allocation2 + $0x458] sm:$0xff]
    %v1130 = vld [vmem:[#allocation2 + $0x460] sm:$0xff]
    %v1131 = vld [vmem:[#allocation2 + $0x468] sm:$0xff]
    %v1132 = vld [vmem:[#allocation2 + $0x470] sm:$0xff]
    %v1133 = vld [vmem:[#allocation2 + $0x478] sm:$0xff]
    %v1134 = vld [vmem:[#allocation2 + $0x480] sm:$0xff]
    %v1135 = vld [vmem:[#allocation2 + $0x488] sm:$0xff]
    %v1136 = vld [vmem:[#allocation2 + $0x490] sm:$0xff]
    %v1137 = vld [vmem:[#allocation2 + $0x498] sm:$0xff]
    %v1138 = vld [vmem:[#allocation2 + $0x4a0] sm:$0xff]
    %v1139 = vld [vmem:[#allocation2 + $0x4a8] sm:$0xff]
    %v1140 = vld [vmem:[#allocation2 + $0x4b0] sm:$0xff]
    %v1141 = vld [vmem:[#allocation2 + $0x4b8] sm:$0xff]
    %v1142 = vld [vmem:[#allocation2 + $0x4c0] sm:$0xff]
    %v1143 = vld [vmem:[#allocation2 + $0x4c8] sm:$0xff]
    %v1144 = vld [vmem:[#allocation2 + $0x4d0] sm:$0xff]
    %v1145 = vld [vmem:[#allocation2 + $0x4d8] sm:$0xff]
    %v1146 = vld [vmem:[#allocation2 + $0x4e0] sm:$0xff]
    %v1147 = vld [vmem:[#allocation2 + $0x4e8] sm:$0xff]
    %v1148 = vld [vmem:[#allocation2 + $0x4f0] sm:$0xff]
    %v1149 = vld [vmem:[#allocation2 + $0x4f8] sm:$0xff]
    %v1150 = vld [vmem:[#allocation2 + $0x500] sm:$0xff]
    %v1151 = vld [vmem:[#allocation2 + $0x508] sm:$0xff]
    %v1152 = vld [vmem:[#allocation2 + $0x510] sm:$0xff]
    %v1153 = vld [vmem:[#allocation2 + $0x518] sm:$0xff]
    %v1154 = vld [vmem:[#allocation2 + $0x520] sm:$0xff]
    %v1155 = vld [vmem:[#allocation2 + $0x528] sm:$0xff]
    %v1156 = vld [vmem:[#allocation2 + $0x530] sm:$0xff]
    %v1157 = vld [vmem:[#allocation2 + $0x538] sm:$0xff]
    %v1158 = vld [vmem:[#allocation2 + $0x540] sm:$0xff]
    %v1159 = vld [vmem:[#allocation2 + $0x548] sm:$0xff]
    %v1160 = vld [vmem:[#allocation2 + $0x550] sm:$0xff]
    %v1161 = vld [vmem:[#allocation2 + $0x558] sm:$0xff]
    %v1162 = vld [vmem:[#allocation2 + $0x560] sm:$0xff]
    %v1163 = vld [vmem:[#allocation2 + $0x568] sm:$0xff]
    %v1164 = vld [vmem:[#allocation2 + $0x570] sm:$0xff]
    %v1165 = vld [vmem:[#allocation2 + $0x578] sm:$0xff]
    %v1166 = vld [vmem:[#allocation2 + $0x580] sm:$0xff]
    %v1167 = vld [vmem:[#allocation2 + $0x588] sm:$0xff]
    %v1168 = vld [vmem:[#allocation2 + $0x590] sm:$0xff]
    %v1169 = vld [vmem:[#allocation2 + $0x598] sm:$0xff]
    %v1170 = vld [vmem:[#allocation2 + $0x5a0] sm:$0xff]
    %v1171 = vld [vmem:[#allocation2 + $0x5a8] sm:$0xff]
    %v1172 = vld [vmem:[#allocation2 + $0x5b0] sm:$0xff]
    %v1173 = vld [vmem:[#allocation2 + $0x5b8] sm:$0xff]
    %v1174 = vld [vmem:[#allocation2 + $0x5c0] sm:$0xff]
    %v1175 = vld [vmem:[#allocation2 + $0x5c8] sm:$0xff]
    %v1176 = vld [vmem:[#allocation2 + $0x5d0] sm:$0xff]
    %v1177 = vld [vmem:[#allocation2 + $0x5d8] sm:$0xff]
    %v1178 = vld [vmem:[#allocation2 + $0x5e0] sm:$0xff]
    %v1179 = vld [vmem:[#allocation2 + $0x5e8] sm:$0xff]
    %v1180 = vld [vmem:[#allocation2 + $0x5f0] sm:$0xff]
    %v1181 = vld [vmem:[#allocation2 + $0x5f8] sm:$0xff]
    %v1182 = vld [vmem:[#allocation2 + $0x600] sm:$0xff]
    %v1183 = vld [vmem:[#allocation2 + $0x608] sm:$0xff]
    %v1184 = vld [vmem:[#allocation2 + $0x610] sm:$0xff]
    %v1185 = vld [vmem:[#allocation2 + $0x618] sm:$0xff]
    %v1186 = vld [vmem:[#allocation2 + $0x620] sm:$0xff]
    %v1187 = vld [vmem:[#allocation2 + $0x628] sm:$0xff]
    %v1188 = vld [vmem:[#allocation2 + $0x630] sm:$0xff]
    %v1189 = vld [vmem:[#allocation2 + $0x638] sm:$0xff]
    %v1190 = vld [vmem:[#allocation2 + $0x640] sm:$0xff]
    %v1191 = vld [vmem:[#allocation2 + $0x648] sm:$0xff]
    %v1192 = vld [vmem:[#allocation2 + $0x650] sm:$0xff]
    %v1193 = vld [vmem:[#allocation2 + $0x658] sm:$0xff]
    %v1194 = vld [vmem:[#allocation2 + $0x660] sm:$0xff]
    %v1195 = vld [vmem:[#allocation2 + $0x668] sm:$0xff]
    %v1196 = vld [vmem:[#allocation2 + $0x670] sm:$0xff]
    %v1197 = vld [vmem:[#allocation2 + $0x678] sm:$0xff]
    %v1198 = vld [vmem:[#allocation2 + $0x680] sm:$0xff]
    %v1199 = vld [vmem:[#allocation2 + $0x688] sm:$0xff]
    %v1200 = vld [vmem:[#allocation2 + $0x690] sm:$0xff]
    %v1201 = vld [vmem:[#allocation2 + $0x698] sm:$0xff]
    %v1202 = vld [vmem:[#allocation2 + $0x6a0] sm:$0xff]
    %v1203 = vld [vmem:[#allocation2 + $0x6a8] sm:$0xff]
    %v1204 = vld [vmem:[#allocation2 + $0x6b0] sm:$0xff]
    %v1205 = vld [vmem:[#allocation2 + $0x6b8] sm:$0xff]
    %v1206 = vld [vmem:[#allocation2 + $0x6c0] sm:$0xff]
    %v1207 = vld [vmem:[#allocation2 + $0x6c8] sm:$0xff]
    %v1208 = vld [vmem:[#allocation2 + $0x6d0] sm:$0xff]
    %v1209 = vld [vmem:[#allocation2 + $0x6d8] sm:$0xff]
    %v1210 = vld [vmem:[#allocation2 + $0x6e0] sm:$0xff]
    %v1211 = vld [vmem:[#allocation2 + $0x6e8] sm:$0xff]
    %v1212 = vld [vmem:[#allocation2 + $0x6f0] sm:$0xff]
    %v1213 = vld [vmem:[#allocation2 + $0x6f8] sm:$0xff]
    %v1214 = vld [vmem:[#allocation2 + $0x700] sm:$0xff]
    %v1215 = vld [vmem:[#allocation2 + $0x708] sm:$0xff]
    %v1216 = vld [vmem:[#allocation2 + $0x710] sm:$0xff]
    %v1217 = vld [vmem:[#allocation2 + $0x718] sm:$0xff]
    %v1218 = vld [vmem:[#allocation2 + $0x720] sm:$0xff]
    %v1219 = vld [vmem:[#allocation2 + $0x728] sm:$0xff]
    %v1220 = vld [vmem:[#allocation2 + $0x730] sm:$0xff]
    %v1221 = vld [vmem:[#allocation2 + $0x738] sm:$0xff]
    %v1222 = vld [vmem:[#allocation2 + $0x740] sm:$0xff]
    %v1223 = vld [vmem:[#allocation2 + $0x748] sm:$0xff]
    %v1224 = vld [vmem:[#allocation2 + $0x750] sm:$0xff]
    %v1225 = vld [vmem:[#allocation2 + $0x758] sm:$0xff]
    %v1226 = vld [vmem:[#allocation2 + $0x760] sm:$0xff]
    %v1227 = vld [vmem:[#allocation2 + $0x768] sm:$0xff]
    %v1228 = vld [vmem:[#allocation2 + $0x770] sm:$0xff]
    %v1229 = vld [vmem:[#allocation2 + $0x778] sm:$0xff]
    %v1230 = vld [vmem:[#allocation2 + $0x780] sm:$0xff]
    %v1231 = vld [vmem:[#allocation2 + $0x788] sm:$0xff]
    %v1232 = vld [vmem:[#allocation2 + $0x790] sm:$0xff]
    %v1233 = vld [vmem:[#allocation2 + $0x798] sm:$0xff]
    %v1234 = vld [vmem:[#allocation2 + $0x7a0] sm:$0xff]
    %v1235 = vld [vmem:[#allocation2 + $0x7a8] sm:$0xff]
    %v1236 = vld [vmem:[#allocation2 + $0x7b0] sm:$0xff]
    %v1237 = vld [vmem:[#allocation2 + $0x7b8] sm:$0xff]
    %v1238 = vld [vmem:[#allocation2 + $0x7c0] sm:$0xff]
    %v1239 = vld [vmem:[#allocation2 + $0x7c8] sm:$0xff]
    %v1240 = vld [vmem:[#allocation2 + $0x7d0] sm:$0xff]
    %v1241 = vld [vmem:[#allocation2 + $0x7d8] sm:$0xff]
    %v1242 = vld [vmem:[#allocation2 + $0x7e0] sm:$0xff]
    %v1243 = vld [vmem:[#allocation2 + $0x7e8] sm:$0xff]
    %v1244 = vld [vmem:[#allocation2 + $0x7f0] sm:$0xff]
    %v1245 = vld [vmem:[#allocation2 + $0x7f8] sm:$0xff]
    %v1374 = vunpack.c.l.b16 %v857
    %v1375 = vunpack.c.h.b16 %v857
    %v1376 = vunpack.c.l.b16 %v858
    %v1377 = vunpack.c.h.b16 %v858
    %v1378 = vunpack.c.l.b16 %v859
    %v1379 = vunpack.c.h.b16 %v859
    %v1380 = vunpack.c.l.b16 %v860
    %v1381 = vunpack.c.h.b16 %v860
    %v1382 = vunpack.c.l.b16 %v861
    %v1383 = vunpack.c.h.b16 %v861
    %v1384 = vunpack.c.l.b16 %v862
    %v1385 = vunpack.c.h.b16 %v862
    %v1386 = vunpack.c.l.b16 %v863
    %v1387 = vunpack.c.h.b16 %v863
    %v1388 = vunpack.c.l.b16 %v864
    %v1389 = vunpack.c.h.b16 %v864
    %v1390 = vunpack.c.l.b16 %v865
    %v1391 = vunpack.c.h.b16 %v865
    %v1392 = vunpack.c.l.b16 %v866
    %v1393 = vunpack.c.h.b16 %v866
    %v1394 = vunpack.c.l.b16 %v867
    %v1395 = vunpack.c.h.b16 %v867
    %v1396 = vunpack.c.l.b16 %v868
    %v1397 = vunpack.c.h.b16 %v868
    %v1398 = vunpack.c.l.b16 %v869
    %v1399 = vunpack.c.h.b16 %v869
    %v1400 = vunpack.c.l.b16 %v870
    %v1401 = vunpack.c.h.b16 %v870
    %v1402 = vunpack.c.l.b16 %v871
    %v1403 = vunpack.c.h.b16 %v871
    %v1404 = vunpack.c.l.b16 %v872
    %v1405 = vunpack.c.h.b16 %v872
    %v1406 = vunpack.c.l.b16 %v873
    %v1407 = vunpack.c.h.b16 %v873
    %v1408 = vunpack.c.l.b16 %v874
    %v1409 = vunpack.c.h.b16 %v874
    %v1410 = vunpack.c.l.b16 %v875
    %v1411 = vunpack.c.h.b16 %v875
    %v1412 = vunpack.c.l.b16 %v876
    %v1413 = vunpack.c.h.b16 %v876
    %v1414 = vunpack.c.l.b16 %v877
    %v1415 = vunpack.c.h.b16 %v877
    %v1416 = vunpack.c.l.b16 %v878
    %v1417 = vunpack.c.h.b16 %v878
    %v1418 = vunpack.c.l.b16 %v879
    %v1419 = vunpack.c.h.b16 %v879
    %v1420 = vunpack.c.l.b16 %v880
    %v1421 = vunpack.c.h.b16 %v880
    %v1422 = vunpack.c.l.b16 %v881
    %v1423 = vunpack.c.h.b16 %v881
    %v1424 = vunpack.c.l.b16 %v882
    %v1425 = vunpack.c.h.b16 %v882
    %v1426 = vunpack.c.l.b16 %v883
    %v1427 = vunpack.c.h.b16 %v883
    %v1428 = vunpack.c.l.b16 %v884
    %v1429 = vunpack.c.h.b16 %v884
    %v1430 = vunpack.c.l.b16 %v885
    %v1431 = vunpack.c.h.b16 %v885
    %v1432 = vunpack.c.l.b16 %v886
    %v1433 = vunpack.c.h.b16 %v886
    %v1434 = vunpack.c.l.b16 %v887
    %v1435 = vunpack.c.h.b16 %v887
    %v1436 = vunpack.c.l.b16 %v888
    %v1437 = vunpack.c.h.b16 %v888
    %v1438 = vunpack.c.l.b16 %v889
    %v1439 = vunpack.c.h.b16 %v889
    %v1440 = vunpack.c.l.b16 %v890
    %v1441 = vunpack.c.h.b16 %v890
    %v1442 = vunpack.c.l.b16 %v891
    %v1443 = vunpack.c.h.b16 %v891
    %v1444 = vunpack.c.l.b16 %v892
    %v1445 = vunpack.c.h.b16 %v892
    %v1446 = vunpack.c.l.b16 %v893
    %v1447 = vunpack.c.h.b16 %v893
    %v1448 = vunpack.c.l.b16 %v894
    %v1449 = vunpack.c.h.b16 %v894
    %v1450 = vunpack.c.l.b16 %v895
    %v1451 = vunpack.c.h.b16 %v895
    %v1452 = vunpack.c.l.b16 %v896
    %v1453 = vunpack.c.h.b16 %v896
    %v1454 = vunpack.c.l.b16 %v897
    %v1455 = vunpack.c.h.b16 %v897
    %v1456 = vunpack.c.l.b16 %v898
    %v1457 = vunpack.c.h.b16 %v898
    %v1458 = vunpack.c.l.b16 %v899
    %v1459 = vunpack.c.h.b16 %v899
    %v1460 = vunpack.c.l.b16 %v900
    %v1461 = vunpack.c.h.b16 %v900
    %v1462 = vunpack.c.l.b16 %v901
    %v1463 = vunpack.c.h.b16 %v901
    %v1464 = vunpack.c.l.b16 %v902
    %v1465 = vunpack.c.h.b16 %v902
    %v1466 = vunpack.c.l.b16 %v903
    %v1467 = vunpack.c.h.b16 %v903
    %v1468 = vunpack.c.l.b16 %v904
    %v1469 = vunpack.c.h.b16 %v904
    %v1470 = vunpack.c.l.b16 %v905
    %v1471 = vunpack.c.h.b16 %v905
    %v1472 = vunpack.c.l.b16 %v906
    %v1473 = vunpack.c.h.b16 %v906
    %v1474 = vunpack.c.l.b16 %v907
    %v1475 = vunpack.c.h.b16 %v907
    %v1476 = vunpack.c.l.b16 %v908
    %v1477 = vunpack.c.h.b16 %v908
    %v1478 = vunpack.c.l.b16 %v909
    %v1479 = vunpack.c.h.b16 %v909
    %v1480 = vunpack.c.l.b16 %v910
    %v1481 = vunpack.c.h.b16 %v910
    %v1482 = vunpack.c.l.b16 %v911
    %v1483 = vunpack.c.h.b16 %v911
    %v1484 = vunpack.c.l.b16 %v912
    %v1485 = vunpack.c.h.b16 %v912
    %v1486 = vunpack.c.l.b16 %v913
    %v1487 = vunpack.c.h.b16 %v913
    %v1488 = vunpack.c.l.b16 %v914
    %v1489 = vunpack.c.h.b16 %v914
    %v1490 = vunpack.c.l.b16 %v915
    %v1491 = vunpack.c.h.b16 %v915
    %v1492 = vunpack.c.l.b16 %v916
    %v1493 = vunpack.c.h.b16 %v916
    %v1494 = vunpack.c.l.b16 %v917
    %v1495 = vunpack.c.h.b16 %v917
    %v1496 = vunpack.c.l.b16 %v918
    %v1497 = vunpack.c.h.b16 %v918
    %v1498 = vunpack.c.l.b16 %v919
    %v1499 = vunpack.c.h.b16 %v919
    %v1500 = vunpack.c.l.b16 %v920
    %v1501 = vunpack.c.h.b16 %v920
    %v1502 = vunpack.c.l.b16 %v921
    %v1503 = vunpack.c.h.b16 %v921
    %v1504 = vunpack.c.l.b16 %v922
    %v1505 = vunpack.c.h.b16 %v922
    %v1506 = vunpack.c.l.b16 %v923
    %v1507 = vunpack.c.h.b16 %v923
    %v1508 = vunpack.c.l.b16 %v924
    %v1509 = vunpack.c.h.b16 %v924
    %v1510 = vunpack.c.l.b16 %v925
    %v1511 = vunpack.c.h.b16 %v925
    %v1512 = vunpack.c.l.b16 %v926
    %v1513 = vunpack.c.h.b16 %v926
    %v1514 = vunpack.c.l.b16 %v927
    %v1515 = vunpack.c.h.b16 %v927
    %v1516 = vunpack.c.l.b16 %v928
    %v1517 = vunpack.c.h.b16 %v928
    %v1518 = vunpack.c.l.b16 %v929
    %v1519 = vunpack.c.h.b16 %v929
    %v1520 = vunpack.c.l.b16 %v930
    %v1521 = vunpack.c.h.b16 %v930
    %v1522 = vunpack.c.l.b16 %v931
    %v1523 = vunpack.c.h.b16 %v931
    %v1524 = vunpack.c.l.b16 %v932
    %v1525 = vunpack.c.h.b16 %v932
    %v1526 = vunpack.c.l.b16 %v933
    %v1527 = vunpack.c.h.b16 %v933
    %v1528 = vunpack.c.l.b16 %v934
    %v1529 = vunpack.c.h.b16 %v934
    %v1530 = vunpack.c.l.b16 %v935
    %v1531 = vunpack.c.h.b16 %v935
    %v1532 = vunpack.c.l.b16 %v936
    %v1533 = vunpack.c.h.b16 %v936
    %v1534 = vunpack.c.l.b16 %v937
    %v1535 = vunpack.c.h.b16 %v937
    %v1536 = vunpack.c.l.b16 %v938
    %v1537 = vunpack.c.h.b16 %v938
    %v1538 = vunpack.c.l.b16 %v939
    %v1539 = vunpack.c.h.b16 %v939
    %v1540 = vunpack.c.l.b16 %v940
    %v1541 = vunpack.c.h.b16 %v940
    %v1542 = vunpack.c.l.b16 %v941
    %v1543 = vunpack.c.h.b16 %v941
    %v1544 = vunpack.c.l.b16 %v942
    %v1545 = vunpack.c.h.b16 %v942
    %v1546 = vunpack.c.l.b16 %v943
    %v1547 = vunpack.c.h.b16 %v943
    %v1548 = vunpack.c.l.b16 %v944
    %v1549 = vunpack.c.h.b16 %v944
    %v1550 = vunpack.c.l.b16 %v945
    %v1551 = vunpack.c.h.b16 %v945
    %v1552 = vunpack.c.l.b16 %v946
    %v1553 = vunpack.c.h.b16 %v946
    %v1554 = vunpack.c.l.b16 %v947
    %v1555 = vunpack.c.h.b16 %v947
    %v1556 = vunpack.c.l.b16 %v948
    %v1557 = vunpack.c.h.b16 %v948
    %v1558 = vunpack.c.l.b16 %v949
    %v1559 = vunpack.c.h.b16 %v949
    %v1560 = vunpack.c.l.b16 %v950
    %v1561 = vunpack.c.h.b16 %v950
    %v1562 = vunpack.c.l.b16 %v951
    %v1563 = vunpack.c.h.b16 %v951
    %v1564 = vunpack.c.l.b16 %v952
    %v1565 = vunpack.c.h.b16 %v952
    %v1566 = vunpack.c.l.b16 %v953
    %v1567 = vunpack.c.h.b16 %v953
    %v1568 = vunpack.c.l.b16 %v954
    %v1569 = vunpack.c.h.b16 %v954
    %v1570 = vunpack.c.l.b16 %v955
    %v1571 = vunpack.c.h.b16 %v955
    %v1572 = vunpack.c.l.b16 %v956
    %v1573 = vunpack.c.h.b16 %v956
    %v1574 = vunpack.c.l.b16 %v957
    %v1575 = vunpack.c.h.b16 %v957
    %v1576 = vunpack.c.l.b16 %v958
    %v1577 = vunpack.c.h.b16 %v958
    %v1578 = vunpack.c.l.b16 %v959
    %v1579 = vunpack.c.h.b16 %v959
    %v1580 = vunpack.c.l.b16 %v960
    %v1581 = vunpack.c.h.b16 %v960
    %v1582 = vunpack.c.l.b16 %v961
    %v1583 = vunpack.c.h.b16 %v961
    %v1584 = vunpack.c.l.b16 %v962
    %v1585 = vunpack.c.h.b16 %v962
    %v1586 = vunpack.c.l.b16 %v963
    %v1587 = vunpack.c.h.b16 %v963
    %v1588 = vunpack.c.l.b16 %v964
    %v1589 = vunpack.c.h.b16 %v964
    %v1590 = vunpack.c.l.b16 %v965
    %v1591 = vunpack.c.h.b16 %v965
    %v1592 = vunpack.c.l.b16 %v966
    %v1593 = vunpack.c.h.b16 %v966
    %v1594 = vunpack.c.l.b16 %v967
    %v1595 = vunpack.c.h.b16 %v967
    %v1596 = vunpack.c.l.b16 %v968
    %v1597 = vunpack.c.h.b16 %v968
    %v1598 = vunpack.c.l.b16 %v969
    %v1599 = vunpack.c.h.b16 %v969
    %v1600 = vunpack.c.l.b16 %v970
    %v1601 = vunpack.c.h.b16 %v970
    %v1602 = vunpack.c.l.b16 %v971
    %v1603 = vunpack.c.h.b16 %v971
    %v1604 = vunpack.c.l.b16 %v972
    %v1605 = vunpack.c.h.b16 %v972
    %v1606 = vunpack.c.l.b16 %v973
    %v1607 = vunpack.c.h.b16 %v973
    %v1608 = vunpack.c.l.b16 %v974
    %v1609 = vunpack.c.h.b16 %v974
    %v1610 = vunpack.c.l.b16 %v975
    %v1611 = vunpack.c.h.b16 %v975
    %v1612 = vunpack.c.l.b16 %v976
    %v1613 = vunpack.c.h.b16 %v976
    %v1614 = vunpack.c.l.b16 %v977
    %v1615 = vunpack.c.h.b16 %v977
    %v1616 = vunpack.c.l.b16 %v978
    %v1617 = vunpack.c.h.b16 %v978
    %v1618 = vunpack.c.l.b16 %v979
    %v1619 = vunpack.c.h.b16 %v979
    %v1620 = vunpack.c.l.b16 %v980
    %v1621 = vunpack.c.h.b16 %v980
    %v1622 = vunpack.c.l.b16 %v981
    %v1623 = vunpack.c.h.b16 %v981
    %v1624 = vunpack.c.l.b16 %v982
    %v1625 = vunpack.c.h.b16 %v982
    %v1626 = vunpack.c.l.b16 %v983
    %v1627 = vunpack.c.h.b16 %v983
    %v1628 = vunpack.c.l.b16 %v984
    %v1629 = vunpack.c.h.b16 %v984
    %v1630 = vpack.c.b16 %v1382, %v1374
    %v1631 = vpack.c.b16 %v1383, %v1375
    %v1632 = vpack.c.b16 %v1384, %v1376
    %v1633 = vpack.c.b16 %v1385, %v1377
    %v1634 = vpack.c.b16 %v1386, %v1378
    %v1635 = vpack.c.b16 %v1387, %v1379
    %v1636 = vpack.c.b16 %v1388, %v1380
    %v1637 = vpack.c.b16 %v1389, %v1381
    %v1638 = vpack.c.b16 %v1398, %v1390
    %v1639 = vpack.c.b16 %v1399, %v1391
    %v1640 = vpack.c.b16 %v1400, %v1392
    %v1641 = vpack.c.b16 %v1401, %v1393
    %v1642 = vpack.c.b16 %v1402, %v1394
    %v1643 = vpack.c.b16 %v1403, %v1395
    %v1644 = vpack.c.b16 %v1404, %v1396
    %v1645 = vpack.c.b16 %v1405, %v1397
    %v1646 = vpack.c.b16 %v1414, %v1406
    %v1647 = vpack.c.b16 %v1415, %v1407
    %v1648 = vpack.c.b16 %v1416, %v1408
    %v1649 = vpack.c.b16 %v1417, %v1409
    %v1650 = vpack.c.b16 %v1418, %v1410
    %v1651 = vpack.c.b16 %v1419, %v1411
    %v1652 = vpack.c.b16 %v1420, %v1412
    %v1653 = vpack.c.b16 %v1421, %v1413
    %v1654 = vpack.c.b16 %v1430, %v1422
    %v1655 = vpack.c.b16 %v1431, %v1423
    %v1656 = vpack.c.b16 %v1432, %v1424
    %v1657 = vpack.c.b16 %v1433, %v1425
    %v1658 = vpack.c.b16 %v1434, %v1426
    %v1659 = vpack.c.b16 %v1435, %v1427
    %v1660 = vpack.c.b16 %v1436, %v1428
    %v1661 = vpack.c.b16 %v1437, %v1429
    %v1662 = vpack.c.b16 %v1446, %v1438
    %v1663 = vpack.c.b16 %v1447, %v1439
    %v1664 = vpack.c.b16 %v1448, %v1440
    %v1665 = vpack.c.b16 %v1449, %v1441
    %v1666 = vpack.c.b16 %v1450, %v1442
    %v1667 = vpack.c.b16 %v1451, %v1443
    %v1668 = vpack.c.b16 %v1452, %v1444
    %v1669 = vpack.c.b16 %v1453, %v1445
    %v1670 = vpack.c.b16 %v1462, %v1454
    %v1671 = vpack.c.b16 %v1463, %v1455
    %v1672 = vpack.c.b16 %v1464, %v1456
    %v1673 = vpack.c.b16 %v1465, %v1457
    %v1674 = vpack.c.b16 %v1466, %v1458
    %v1675 = vpack.c.b16 %v1467, %v1459
    %v1676 = vpack.c.b16 %v1468, %v1460
    %v1677 = vpack.c.b16 %v1469, %v1461
    %v1678 = vpack.c.b16 %v1478, %v1470
    %v1679 = vpack.c.b16 %v1479, %v1471
    %v1680 = vpack.c.b16 %v1480, %v1472
    %v1681 = vpack.c.b16 %v1481, %v1473
    %v1682 = vpack.c.b16 %v1482, %v1474
    %v1683 = vpack.c.b16 %v1483, %v1475
    %v1684 = vpack.c.b16 %v1484, %v1476
    %v1685 = vpack.c.b16 %v1485, %v1477
    %v1686 = vpack.c.b16 %v1494, %v1486
    %v1687 = vpack.c.b16 %v1495, %v1487
    %v1688 = vpack.c.b16 %v1496, %v1488
    %v1689 = vpack.c.b16 %v1497, %v1489
    %v1690 = vpack.c.b16 %v1498, %v1490
    %v1691 = vpack.c.b16 %v1499, %v1491
    %v1692 = vpack.c.b16 %v1500, %v1492
    %v1693 = vpack.c.b16 %v1501, %v1493
    %v1694 = vpack.c.b16 %v1510, %v1502
    %v1695 = vpack.c.b16 %v1511, %v1503
    %v1696 = vpack.c.b16 %v1512, %v1504
    %v1697 = vpack.c.b16 %v1513, %v1505
    %v1698 = vpack.c.b16 %v1514, %v1506
    %v1699 = vpack.c.b16 %v1515, %v1507
    %v1700 = vpack.c.b16 %v1516, %v1508
    %v1701 = vpack.c.b16 %v1517, %v1509
    %v1702 = vpack.c.b16 %v1526, %v1518
    %v1703 = vpack.c.b16 %v1527, %v1519
    %v1704 = vpack.c.b16 %v1528, %v1520
    %v1705 = vpack.c.b16 %v1529, %v1521
    %v1706 = vpack.c.b16 %v1530, %v1522
    %v1707 = vpack.c.b16 %v1531, %v1523
    %v1708 = vpack.c.b16 %v1532, %v1524
    %v1709 = vpack.c.b16 %v1533, %v1525
    %v1710 = vpack.c.b16 %v1542, %v1534
    %v1711 = vpack.c.b16 %v1543, %v1535
    %v1712 = vpack.c.b16 %v1544, %v1536
    %v1713 = vpack.c.b16 %v1545, %v1537
    %v1714 = vpack.c.b16 %v1546, %v1538
    %v1715 = vpack.c.b16 %v1547, %v1539
    %v1716 = vpack.c.b16 %v1548, %v1540
    %v1717 = vpack.c.b16 %v1549, %v1541
    %v1718 = vpack.c.b16 %v1558, %v1550
    %v1719 = vpack.c.b16 %v1559, %v1551
    %v1720 = vpack.c.b16 %v1560, %v1552
    %v1721 = vpack.c.b16 %v1561, %v1553
    %v1722 = vpack.c.b16 %v1562, %v1554
    %v1723 = vpack.c.b16 %v1563, %v1555
    %v1724 = vpack.c.b16 %v1564, %v1556
    %v1725 = vpack.c.b16 %v1565, %v1557
    %v1726 = vpack.c.b16 %v1574, %v1566
    %v1727 = vpack.c.b16 %v1575, %v1567
    %v1728 = vpack.c.b16 %v1576, %v1568
    %v1729 = vpack.c.b16 %v1577, %v1569
    %v1730 = vpack.c.b16 %v1578, %v1570
    %v1731 = vpack.c.b16 %v1579, %v1571
    %v1732 = vpack.c.b16 %v1580, %v1572
    %v1733 = vpack.c.b16 %v1581, %v1573
    %v1734 = vpack.c.b16 %v1590, %v1582
    %v1735 = vpack.c.b16 %v1591, %v1583
    %v1736 = vpack.c.b16 %v1592, %v1584
    %v1737 = vpack.c.b16 %v1593, %v1585
    %v1738 = vpack.c.b16 %v1594, %v1586
    %v1739 = vpack.c.b16 %v1595, %v1587
    %v1740 = vpack.c.b16 %v1596, %v1588
    %v1741 = vpack.c.b16 %v1597, %v1589
    %v1742 = vpack.c.b16 %v1606, %v1598
    %v1743 = vpack.c.b16 %v1607, %v1599
    %v1744 = vpack.c.b16 %v1608, %v1600
    %v1745 = vpack.c.b16 %v1609, %v1601
    %v1746 = vpack.c.b16 %v1610, %v1602
    %v1747 = vpack.c.b16 %v1611, %v1603
    %v1748 = vpack.c.b16 %v1612, %v1604
    %v1749 = vpack.c.b16 %v1613, %v1605
    %v1750 = vpack.c.b16 %v1622, %v1614
    %v1751 = vpack.c.b16 %v1623, %v1615
    %v1752 = vpack.c.b16 %v1624, %v1616
    %v1753 = vpack.c.b16 %v1625, %v1617
    %v1754 = vpack.c.b16 %v1626, %v1618
    %v1755 = vpack.c.b16 %v1627, %v1619
    %v1756 = vpack.c.b16 %v1628, %v1620
    %v1757 = vpack.c.b16 %v1629, %v1621
    %1886 = vmatprep.subr.bf16.mxu0 %v1631
    %1887 = vmatpush1.bf16.msra.mxu0 %v1630
    %1888 = vmatprep.subr.bf16.mxu0 %v1639
    %1889 = vmatpush1.bf16.msra.mxu0 %v1638
    %1890 = vmatprep.subr.bf16.mxu0 %v1647
    %1891 = vmatpush1.bf16.msra.mxu0 %v1646
    %1892 = vmatprep.subr.bf16.mxu0 %v1655
    %1893 = vmatpush1.bf16.msra.mxu0 %v1654
    %1894 = vmatprep.subr.bf16.mxu0 %v1663
    %1895 = vmatpush1.bf16.msra.mxu0 %v1662
    %1896 = vmatprep.subr.bf16.mxu0 %v1671
    %1897 = vmatpush1.bf16.msra.mxu0 %v1670
    %1898 = vmatprep.subr.bf16.mxu0 %v1679
    %1899 = vmatpush1.bf16.msra.mxu0 %v1678
    %1900 = vmatprep.subr.bf16.mxu0 %v1687
    %1901 = vmatpush1.bf16.msra.mxu0 %v1686
    %1902 = vmatprep.subr.bf16.mxu0 %v1695
    %1903 = vmatpush1.bf16.msra.mxu0 %v1694
    %1904 = vmatprep.subr.bf16.mxu0 %v1703
    %1905 = vmatpush1.bf16.msra.mxu0 %v1702
    %1906 = vmatprep.subr.bf16.mxu0 %v1711
    %1907 = vmatpush1.bf16.msra.mxu0 %v1710
    %1908 = vmatprep.subr.bf16.mxu0 %v1719
    %1909 = vmatpush1.bf16.msra.mxu0 %v1718
    %1910 = vmatprep.subr.bf16.mxu0 %v1727
    %1911 = vmatpush1.bf16.msra.mxu0 %v1726
    %1912 = vmatprep.subr.bf16.mxu0 %v1735
    %1913 = vmatpush1.bf16.msra.mxu0 %v1734
    %1914 = vmatprep.subr.bf16.mxu0 %v1743
    %1915 = vmatpush1.bf16.msra.mxu0 %v1742
    %1916 = vmatprep.subr.bf16.mxu0 %v1751
    %1917 = vmatpush1.bf16.msra.mxu0 %v1750
    %1918 = vmatprep.mubr.bf16.mxu0 0
    %1919 = vmatmul.mubr.bf16.gmra.mrb[0].mxu0 0
    %v1920 = vpop.f32.mrb[0].mxu0
    %v1921 = vadd.f32 0.0, %v1920
    %v1922 = vpop.f32.mrb[0].mxu0
    %v1923 = vadd.f32 0.0, %v1922
    %v1924 = vpop.f32.mrb[0].mxu0
    %v1925 = vpop.f32.mrb[0].mxu0
    %1926 = vdwg.mxu0
    %1927 = vmatprep.subr.bf16.mxu0 %v1633
    %1928 = vmatpush1.bf16.msra.mxu0 %v1632
    %1929 = vmatprep.subr.bf16.mxu0 %v1641
    %1930 = vmatpush1.bf16.msra.mxu0 %v1640
    %1931 = vmatprep.subr.bf16.mxu0 %v1649
    %1932 = vmatpush1.bf16.msra.mxu0 %v1648
    %1933 = vmatprep.subr.bf16.mxu0 %v1657
    %1934 = vmatpush1.bf16.msra.mxu0 %v1656
    %1935 = vmatprep.subr.bf16.mxu0 %v1665
    %1936 = vmatpush1.bf16.msra.mxu0 %v1664
    %1937 = vmatprep.subr.bf16.mxu0 %v1673
    %1938 = vmatpush1.bf16.msra.mxu0 %v1672
    %1939 = vmatprep.subr.bf16.mxu0 %v1681
    %1940 = vmatpush1.bf16.msra.mxu0 %v1680
    %1941 = vmatprep.subr.bf16.mxu0 %v1689
    %1942 = vmatpush1.bf16.msra.mxu0 %v1688
    %1943 = vmatprep.subr.bf16.mxu0 %v1697
    %1944 = vmatpush1.bf16.msra.mxu0 %v1696
    %1945 = vmatprep.subr.bf16.mxu0 %v1705
    %1946 = vmatpush1.bf16.msra.mxu0 %v1704
    %1947 = vmatprep.subr.bf16.mxu0 %v1713
    %1948 = vmatpush1.bf16.msra.mxu0 %v1712
    %1949 = vmatprep.subr.bf16.mxu0 %v1721
    %1950 = vmatpush1.bf16.msra.mxu0 %v1720
    %1951 = vmatprep.subr.bf16.mxu0 %v1729
    %1952 = vmatpush1.bf16.msra.mxu0 %v1728
    %1953 = vmatprep.subr.bf16.mxu0 %v1737
    %1954 = vmatpush1.bf16.msra.mxu0 %v1736
    %1955 = vmatprep.subr.bf16.mxu0 %v1745
    %1956 = vmatpush1.bf16.msra.mxu0 %v1744
    %1957 = vmatprep.subr.bf16.mxu0 %v1753
    %1958 = vmatpush1.bf16.msra.mxu0 %v1752
    %1959 = vmatprep.mubr.bf16.mxu0 0
    %1960 = vmatmul.mubr.bf16.gmra.mrb[0].mxu0 0
    %v1961 = vpop.f32.mrb[0].mxu0
    %v1962 = vadd.f32 0.0, %v1961
    %v1963 = vpop.f32.mrb[0].mxu0
    %v1964 = vadd.f32 0.0, %v1963
    %v1965 = vpop.f32.mrb[0].mxu0
    %v1966 = vpop.f32.mrb[0].mxu0
    %1967 = vdwg.mxu0
    %1968 = vmatprep.subr.bf16.mxu0 %v1635
    %1969 = vmatpush1.bf16.msra.mxu0 %v1634
    %1970 = vmatprep.subr.bf16.mxu0 %v1643
    %1971 = vmatpush1.bf16.msra.mxu0 %v1642
    %1972 = vmatprep.subr.bf16.mxu0 %v1651
    %1973 = vmatpush1.bf16.msra.mxu0 %v1650
    %1974 = vmatprep.subr.bf16.mxu0 %v1659
    %1975 = vmatpush1.bf16.msra.mxu0 %v1658
    %1976 = vmatprep.subr.bf16.mxu0 %v1667
    %1977 = vmatpush1.bf16.msra.mxu0 %v1666
    %1978 = vmatprep.subr.bf16.mxu0 %v1675
    %1979 = vmatpush1.bf16.msra.mxu0 %v1674
    %1980 = vmatprep.subr.bf16.mxu0 %v1683
    %1981 = vmatpush1.bf16.msra.mxu0 %v1682
    %1982 = vmatprep.subr.bf16.mxu0 %v1691
    %1983 = vmatpush1.bf16.msra.mxu0 %v1690
    %1984 = vmatprep.subr.bf16.mxu0 %v1699
    %1985 = vmatpush1.bf16.msra.mxu0 %v1698
    %1986 = vmatprep.subr.bf16.mxu0 %v1707
    %1987 = vmatpush1.bf16.msra.mxu0 %v1706
    %1988 = vmatprep.subr.bf16.mxu0 %v1715
    %1989 = vmatpush1.bf16.msra.mxu0 %v1714
    %1990 = vmatprep.subr.bf16.mxu0 %v1723
    %1991 = vmatpush1.bf16.msra.mxu0 %v1722
    %1992 = vmatprep.subr.bf16.mxu0 %v1731
    %1993 = vmatpush1.bf16.msra.mxu0 %v1730
    %1994 = vmatprep.subr.bf16.mxu0 %v1739
    %1995 = vmatpush1.bf16.msra.mxu0 %v1738
    %1996 = vmatprep.subr.bf16.mxu0 %v1747
    %1997 = vmatpush1.bf16.msra.mxu0 %v1746
    %1998 = vmatprep.subr.bf16.mxu0 %v1755
    %1999 = vmatpush1.bf16.msra.mxu0 %v1754
    %2000 = vmatprep.mubr.bf16.mxu0 0
    %2001 = vmatmul.mubr.bf16.gmra.mrb[0].mxu0 0
    %v2002 = vpop.f32.mrb[0].mxu0
    %v2003 = vadd.f32 0.0, %v2002
    %v2004 = vpop.f32.mrb[0].mxu0
    %v2005 = vadd.f32 0.0, %v2004
    %v2006 = vpop.f32.mrb[0].mxu0
    %v2007 = vpop.f32.mrb[0].mxu0
    %2008 = vdwg.mxu0
    %2009 = vmatprep.subr.bf16.mxu0 %v1637
    %2010 = vmatpush1.bf16.msra.mxu0 %v1636
    %2011 = vmatprep.subr.bf16.mxu0 %v1645
    %2012 = vmatpush1.bf16.msra.mxu0 %v1644
    %2013 = vmatprep.subr.bf16.mxu0 %v1653
    %2014 = vmatpush1.bf16.msra.mxu0 %v1652
    %2015 = vmatprep.subr.bf16.mxu0 %v1661
    %2016 = vmatpush1.bf16.msra.mxu0 %v1660
    %2017 = vmatprep.subr.bf16.mxu0 %v1669
    %2018 = vmatpush1.bf16.msra.mxu0 %v1668
    %2019 = vmatprep.subr.bf16.mxu0 %v1677
    %2020 = vmatpush1.bf16.msra.mxu0 %v1676
    %2021 = vmatprep.subr.bf16.mxu0 %v1685
    %2022 = vmatpush1.bf16.msra.mxu0 %v1684
    %2023 = vmatprep.subr.bf16.mxu0 %v1693
    %2024 = vmatpush1.bf16.msra.mxu0 %v1692
    %2025 = vmatprep.subr.bf16.mxu0 %v1701
    %2026 = vmatpush1.bf16.msra.mxu0 %v1700
    %2027 = vmatprep.subr.bf16.mxu0 %v1709
    %2028 = vmatpush1.bf16.msra.mxu0 %v1708
    %2029 = vmatprep.subr.bf16.mxu0 %v1717
    %2030 = vmatpush1.bf16.msra.mxu0 %v1716
    %2031 = vmatprep.subr.bf16.mxu0 %v1725
    %2032 = vmatpush1.bf16.msra.mxu0 %v1724
    %2033 = vmatprep.subr.bf16.mxu0 %v1733
    %2034 = vmatpush1.bf16.msra.mxu0 %v1732
    %2035 = vmatprep.subr.bf16.mxu0 %v1741
    %2036 = vmatpush1.bf16.msra.mxu0 %v1740
    %2037 = vmatprep.subr.bf16.mxu0 %v1749
    %2038 = vmatpush1.bf16.msra.mxu0 %v1748
    %2039 = vmatprep.subr.bf16.mxu0 %v1757
    %2040 = vmatpush1.bf16.msra.mxu0 %v1756
    %2041 = vmatprep.mubr.bf16.mxu0 0
    %2042 = vmatmul.mubr.bf16.gmra.mrb[0].mxu0 0
    %v2043 = vpop.f32.mrb[0].mxu0
    %v2044 = vadd.f32 0.0, %v2043
    %v2045 = vpop.f32.mrb[0].mxu0
    %v2046 = vadd.f32 0.0, %v2045
    %v2047 = vpop.f32.mrb[0].mxu0
    %v2048 = vpop.f32.mrb[0].mxu0
    %2049 = vdwg.mxu0
    %v2050 = vadd.f32 %v600, %v1921
    %v2051 = vadd.f32 %v602, %v1923
    %v2052 = vadd.f32 %v673, %v1962
    %v2053 = vadd.f32 %v675, %v1964
    %v2054 = vadd.f32 %v746, %v2003
    %v2055 = vadd.f32 %v748, %v2005
    %v2056 = vadd.f32 %v819, %v2044
    %v2057 = vadd.f32 %v821, %v2046
    %v2058 = vmul.f32 %v2050, 0.5
    %v2059 = vmul.f32 %v2051, 0.5
    %v2060 = vtanh.pop %v2058
    %v2061 = vtanh.pop %v2059
    %v2062 = vadd.f32 %v2060, 1.0
    %v2063 = vadd.f32 %v2061, 1.0
    %v2064 = vmul.f32 %v2062, 0.5
    %v2065 = vmul.f32 %v2063, 0.5
    %v2066 = vmul.f32 %v2052, 0.5
    %v2067 = vmul.f32 %v2053, 0.5
    %v2068 = vtanh.pop %v2066
    %v2069 = vtanh.pop %v2067
    %v2070 = vadd.f32 %v2068, 1.0
    %v2071 = vadd.f32 %v2069, 1.0
    %v2072 = vmul.f32 %v2070, 0.5
    %v2073 = vmul.f32 %v2071, 0.5
    %v2074 = vtanh.pop %v2054
    %v2075 = vtanh.pop %v2055
    %v2076 = vmul.f32 %v2056, 0.5
    %v2077 = vmul.f32 %v2057, 0.5
    %v2078 = vtanh.pop %v2076
    %v2079 = vtanh.pop %v2077
    %v2080 = vadd.f32 %v2078, 1.0
    %v2081 = vadd.f32 %v2079, 1.0
    %v2082 = vmul.f32 %v2080, 0.5
    %v2083 = vmul.f32 %v2081, 0.5
    %v2084 = vmul.f32 %v2072, 0.0
    %v2085 = vmul.f32 %v2073, 0.0
    %v2086 = vmul.f32 %v2064, %v2074
    %v2087 = vmul.f32 %v2065, %v2075
    %v2088 = vadd.f32 %v2084, %v2086
    %v2089 = vadd.f32 %v2085, %v2087
    %v2090 = vtanh.pop %v2088
    %v2091 = vtanh.pop %v2089
    %v2092 = vmul.f32 %v2082, %v2090
    %v2093 = vmul.f32 %v2083, %v2091
    %v2094 = vpack.c.bf16 %v2092, %v2092
    %v2095 = vpack.c.bf16 %v2093, %v2093
    %2096 = vmatprep.subr.bf16.mxu0 %v1119
    %2097 = vmatpush1.bf16.msra.mxu0 %v1118
    %2098 = vmatprep.subr.bf16.mxu0 %v1127
    %2099 = vmatpush1.bf16.msra.mxu0 %v1126
    %2100 = vmatprep.subr.bf16.mxu0 %v1135
    %2101 = vmatpush1.bf16.msra.mxu0 %v1134
    %2102 = vmatprep.subr.bf16.mxu0 %v1143
    %2103 = vmatpush1.bf16.msra.mxu0 %v1142
    %2104 = vmatprep.subr.bf16.mxu0 %v1151
    %2105 = vmatpush1.bf16.msra.mxu0 %v1150
    %2106 = vmatprep.subr.bf16.mxu0 %v1159
    %2107 = vmatpush1.bf16.msra.mxu0 %v1158
    %2108 = vmatprep.subr.bf16.mxu0 %v1167
    %2109 = vmatpush1.bf16.msra.mxu0 %v1166
    %2110 = vmatprep.subr.bf16.mxu0 %v1175
    %2111 = vmatpush1.bf16.msra.mxu0 %v1174
    %2112 = vmatprep.subr.bf16.mxu0 %v1183
    %2113 = vmatpush1.bf16.msra.mxu0 %v1182
    %2114 = vmatprep.subr.bf16.mxu0 %v1191
    %2115 = vmatpush1.bf16.msra.mxu0 %v1190
    %2116 = vmatprep.subr.bf16.mxu0 %v1199
    %2117 = vmatpush1.bf16.msra.mxu0 %v1198
    %2118 = vmatprep.subr.bf16.mxu0 %v1207
    %2119 = vmatpush1.bf16.msra.mxu0 %v1206
    %2120 = vmatprep.subr.bf16.mxu0 %v1215
    %2121 = vmatpush1.bf16.msra.mxu0 %v1214
    %2122 = vmatprep.subr.bf16.mxu0 %v1223
    %2123 = vmatpush1.bf16.msra.mxu0 %v1222
    %2124 = vmatprep.subr.bf16.mxu0 %v1231
    %2125 = vmatpush1.bf16.msra.mxu0 %v1230
    %2126 = vmatprep.subr.bf16.mxu0 %v1239
    %2127 = vmatpush1.bf16.msra.mxu0 %v1238
    %2128 = vmatprep.mubr.bf16.mxu0 0
    %2129 = vmatmul.mubr.bf16.gmra.mrb[0].mxu0 0
    %v2130 = vpop.f32.mrb[0].mxu0
    %v2131 = vadd.f32 0.0, %v2130
    %v2132 = vpop.f32.mrb[0].mxu0
    %v2133 = vadd.f32 0.0, %v2132
    %v2134 = vpop.f32.mrb[0].mxu0
    %v2135 = vpop.f32.mrb[0].mxu0
    %2136 = vdwg.mxu0
    %2137 = vmatprep.subr.bf16.mxu0 %v1121
    %2138 = vmatpush1.bf16.msra.mxu0 %v1120
    %2139 = vmatprep.subr.bf16.mxu0 %v1129
    %2140 = vmatpush1.bf16.msra.mxu0 %v1128
    %2141 = vmatprep.subr.bf16.mxu0 %v1137
    %2142 = vmatpush1.bf16.msra.mxu0 %v1136
    %2143 = vmatprep.subr.bf16.mxu0 %v1145
    %2144 = vmatpush1.bf16.msra.mxu0 %v1144
    %2145 = vmatprep.subr.bf16.mxu0 %v1153
    %2146 = vmatpush1.bf16.msra.mxu0 %v1152
    %2147 = vmatprep.subr.bf16.mxu0 %v1161
    %2148 = vmatpush1.bf16.msra.mxu0 %v1160
    %2149 = vmatprep.subr.bf16.mxu0 %v1169
    %2150 = vmatpush1.bf16.msra.mxu0 %v1168
    %2151 = vmatprep.subr.bf16.mxu0 %v1177
    %2152 = vmatpush1.bf16.msra.mxu0 %v1176
    %2153 = vmatprep.subr.bf16.mxu0 %v1185
    %2154 = vmatpush1.bf16.msra.mxu0 %v1184
    %2155 = vmatprep.subr.bf16.mxu0 %v1193
    %2156 = vmatpush1.bf16.msra.mxu0 %v1192
    %2157 = vmatprep.subr.bf16.mxu0 %v1201
    %2158 = vmatpush1.bf16.msra.mxu0 %v1200
    %2159 = vmatprep.subr.bf16.mxu0 %v1209
    %2160 = vmatpush1.bf16.msra.mxu0 %v1208
    %2161 = vmatprep.subr.bf16.mxu0 %v1217
    %2162 = vmatpush1.bf16.msra.mxu0 %v1216
    %2163 = vmatprep.subr.bf16.mxu0 %v1225
    %2164 = vmatpush1.bf16.msra.mxu0 %v1224
    %2165 = vmatprep.subr.bf16.mxu0 %v1233
    %2166 = vmatpush1.bf16.msra.mxu0 %v1232
    %2167 = vmatprep.subr.bf16.mxu0 %v1241
    %2168 = vmatpush1.bf16.msra.mxu0 %v1240
    %2169 = vmatprep.mubr.bf16.mxu0 0
    %2170 = vmatmul.mubr.bf16.gmra.mrb[0].mxu0 0
    %v2171 = vpop.f32.mrb[0].mxu0
    %v2172 = vadd.f32 0.0, %v2171
    %v2173 = vpop.f32.mrb[0].mxu0
    %v2174 = vadd.f32 0.0, %v2173
    %v2175 = vpop.f32.mrb[0].mxu0
    %v2176 = vpop.f32.mrb[0].mxu0
    %2177 = vdwg.mxu0
    %2178 = vmatprep.subr.bf16.mxu0 %v1123
    %2179 = vmatpush1.bf16.msra.mxu0 %v1122
    %2180 = vmatprep.subr.bf16.mxu0 %v1131
    %2181 = vmatpush1.bf16.msra.mxu0 %v1130
    %2182 = vmatprep.subr.bf16.mxu0 %v1139
    %2183 = vmatpush1.bf16.msra.mxu0 %v1138
    %2184 = vmatprep.subr.bf16.mxu0 %v1147
    %2185 = vmatpush1.bf16.msra.mxu0 %v1146
    %2186 = vmatprep.subr.bf16.mxu0 %v1155
    %2187 = vmatpush1.bf16.msra.mxu0 %v1154
    %2188 = vmatprep.subr.bf16.mxu0 %v1163
    %2189 = vmatpush1.bf16.msra.mxu0 %v1162
    %2190 = vmatprep.subr.bf16.mxu0 %v1171
    %2191 = vmatpush1.bf16.msra.mxu0 %v1170
    %2192 = vmatprep.subr.bf16.mxu0 %v1179
    %2193 = vmatpush1.bf16.msra.mxu0 %v1178
    %2194 = vmatprep.subr.bf16.mxu0 %v1187
    %2195 = vmatpush1.bf16.msra.mxu0 %v1186
    %2196 = vmatprep.subr.bf16.mxu0 %v1195
    %2197 = vmatpush1.bf16.msra.mxu0 %v1194
    %2198 = vmatprep.subr.bf16.mxu0 %v1203
    %2199 = vmatpush1.bf16.msra.mxu0 %v1202
    %2200 = vmatprep.subr.bf16.mxu0 %v1211
    %2201 = vmatpush1.bf16.msra.mxu0 %v1210
    %2202 = vmatprep.subr.bf16.mxu0 %v1219
    %2203 = vmatpush1.bf16.msra.mxu0 %v1218
    %2204 = vmatprep.subr.bf16.mxu0 %v1227
    %2205 = vmatpush1.bf16.msra.mxu0 %v1226
    %2206 = vmatprep.subr.bf16.mxu0 %v1235
    %2207 = vmatpush1.bf16.msra.mxu0 %v1234
    %2208 = vmatprep.subr.bf16.mxu0 %v1243
    %2209 = vmatpush1.bf16.msra.mxu0 %v1242
    %2210 = vmatprep.mubr.bf16.mxu0 0
    %2211 = vmatmul.mubr.bf16.gmra.mrb[0].mxu0 0
    %v2212 = vpop.f32.mrb[0].mxu0
    %v2213 = vadd.f32 0.0, %v2212
    %v2214 = vpop.f32.mrb[0].mxu0
    %v2215 = vadd.f32 0.0, %v2214
    %v2216 = vpop.f32.mrb[0].mxu0
    %v2217 = vpop.f32.mrb[0].mxu0
    %2218 = vdwg.mxu0
    %2219 = vmatprep.subr.bf16.mxu0 %v1125
    %2220 = vmatpush1.bf16.msra.mxu0 %v1124
    %2221 = vmatprep.subr.bf16.mxu0 %v1133
    %2222 = vmatpush1.bf16.msra.mxu0 %v1132
    %2223 = vmatprep.subr.bf16.mxu0 %v1141
    %2224 = vmatpush1.bf16.msra.mxu0 %v1140
    %2225 = vmatprep.subr.bf16.mxu0 %v1149
    %2226 = vmatpush1.bf16.msra.mxu0 %v1148
    %2227 = vmatprep.subr.bf16.mxu0 %v1157
    %2228 = vmatpush1.bf16.msra.mxu0 %v1156
    %2229 = vmatprep.subr.bf16.mxu0 %v1165
    %2230 = vmatpush1.bf16.msra.mxu0 %v1164
    %2231 = vmatprep.subr.bf16.mxu0 %v1173
    %2232 = vmatpush1.bf16.msra.mxu0 %v1172
    %2233 = vmatprep.subr.bf16.mxu0 %v1181
    %2234 = vmatpush1.bf16.msra.mxu0 %v1180
    %2235 = vmatprep.subr.bf16.mxu0 %v1189
    %2236 = vmatpush1.bf16.msra.mxu0 %v1188
    %2237 = vmatprep.subr.bf16.mxu0 %v1197
    %2238 = vmatpush1.bf16.msra.mxu0 %v1196
    %2239 = vmatprep.subr.bf16.mxu0 %v1205
    %2240 = vmatpush1.bf16.msra.mxu0 %v1204
    %2241 = vmatprep.subr.bf16.mxu0 %v1213
    %2242 = vmatpush1.bf16.msra.mxu0 %v1212
    %2243 = vmatprep.subr.bf16.mxu0 %v1221
    %2244 = vmatpush1.bf16.msra.mxu0 %v1220
    %2245 = vmatprep.subr.bf16.mxu0 %v1229
    %2246 = vmatpush1.bf16.msra.mxu0 %v1228
    %2247 = vmatprep.subr.bf16.mxu0 %v1237
    %2248 = vmatpush1.bf16.msra.mxu0 %v1236
    %2249 = vmatprep.subr.bf16.mxu0 %v1245
    %2250 = vmatpush1.bf16.msra.mxu0 %v1244
    %2251 = vmatprep.mubr.bf16.mxu0 0
    %2252 = vmatmul.mubr.bf16.gmra.mrb[0].mxu0 0
    %v2253 = vpop.f32.mrb[0].mxu0
    %v2254 = vadd.f32 0.0, %v2253
    %v2255 = vpop.f32.mrb[0].mxu0
    %v2256 = vadd.f32 0.0, %v2255
    %v2257 = vpop.f32.mrb[0].mxu0
    %v2258 = vpop.f32.mrb[0].mxu0
    %2259 = vdwg.mxu0
    %2260 = vmatprep.subr.bf16.mxu0 %v991
    %2261 = vmatpush1.bf16.msra.mxu0 %v990
    %2262 = vmatprep.subr.bf16.mxu0 %v999
    %2263 = vmatpush1.bf16.msra.mxu0 %v998
    %2264 = vmatprep.subr.bf16.mxu0 %v1007
    %2265 = vmatpush1.bf16.msra.mxu0 %v1006
    %2266 = vmatprep.subr.bf16.mxu0 %v1015
    %2267 = vmatpush1.bf16.msra.mxu0 %v1014
    %2268 = vmatprep.subr.bf16.mxu0 %v1023
    %2269 = vmatpush1.bf16.msra.mxu0 %v1022
    %2270 = vmatprep.subr.bf16.mxu0 %v1031
    %2271 = vmatpush1.bf16.msra.mxu0 %v1030
    %2272 = vmatprep.subr.bf16.mxu0 %v1039
    %2273 = vmatpush1.bf16.msra.mxu0 %v1038
    %2274 = vmatprep.subr.bf16.mxu0 %v1047
    %2275 = vmatpush1.bf16.msra.mxu0 %v1046
    %2276 = vmatprep.subr.bf16.mxu0 %v1055
    %2277 = vmatpush1.bf16.msra.mxu0 %v1054
    %2278 = vmatprep.subr.bf16.mxu0 %v1063
    %2279 = vmatpush1.bf16.msra.mxu0 %v1062
    %2280 = vmatprep.subr.bf16.mxu0 %v1071
    %2281 = vmatpush1.bf16.msra.mxu0 %v1070
    %2282 = vmatprep.subr.bf16.mxu0 %v1079
    %2283 = vmatpush1.bf16.msra.mxu0 %v1078
    %2284 = vmatprep.subr.bf16.mxu0 %v1087
    %2285 = vmatpush1.bf16.msra.mxu0 %v1086
    %2286 = vmatprep.subr.bf16.mxu0 %v1095
    %2287 = vmatpush1.bf16.msra.mxu0 %v1094
    %2288 = vmatprep.subr.bf16.mxu0 %v1103
    %2289 = vmatpush1.bf16.msra.mxu0 %v1102
    %2290 = vmatprep.subr.bf16.mxu0 %v1111
    %2291 = vmatpush1.bf16.msra.mxu0 %v1110
    %2292 = vmatprep.mubr.bf16.mxu0 %v2095
    %2293 = vmatmul.mubr.bf16.gmra.mrb[0].mxu0 %v2094
    %v2294 = vpop.f32.mrb[0].mxu0
    %v2295 = vadd.f32 %v2131, %v2294
    %v2296 = vpop.f32.mrb[0].mxu0
    %v2297 = vadd.f32 %v2133, %v2296
    %v2298 = vpop.f32.mrb[0].mxu0
    %v2299 = vpop.f32.mrb[0].mxu0
    %2300 = vdwg.mxu0
    %2301 = vmatprep.subr.bf16.mxu0 %v993
    %2302 = vmatpush1.bf16.msra.mxu0 %v992
    %2303 = vmatprep.subr.bf16.mxu0 %v1001
    %2304 = vmatpush1.bf16.msra.mxu0 %v1000
    %2305 = vmatprep.subr.bf16.mxu0 %v1009
    %2306 = vmatpush1.bf16.msra.mxu0 %v1008
    %2307 = vmatprep.subr.bf16.mxu0 %v1017
    %2308 = vmatpush1.bf16.msra.mxu0 %v1016
    %2309 = vmatprep.subr.bf16.mxu0 %v1025
    %2310 = vmatpush1.bf16.msra.mxu0 %v1024
    %2311 = vmatprep.subr.bf16.mxu0 %v1033
    %2312 = vmatpush1.bf16.msra.mxu0 %v1032
    %2313 = vmatprep.subr.bf16.mxu0 %v1041
    %2314 = vmatpush1.bf16.msra.mxu0 %v1040
    %2315 = vmatprep.subr.bf16.mxu0 %v1049
    %2316 = vmatpush1.bf16.msra.mxu0 %v1048
    %2317 = vmatprep.subr.bf16.mxu0 %v1057
    %2318 = vmatpush1.bf16.msra.mxu0 %v1056
    %2319 = vmatprep.subr.bf16.mxu0 %v1065
    %2320 = vmatpush1.bf16.msra.mxu0 %v1064
    %2321 = vmatprep.subr.bf16.mxu0 %v1073
    %2322 = vmatpush1.bf16.msra.mxu0 %v1072
    %2323 = vmatprep.subr.bf16.mxu0 %v1081
    %2324 = vmatpush1.bf16.msra.mxu0 %v1080
    %2325 = vmatprep.subr.bf16.mxu0 %v1089
    %2326 = vmatpush1.bf16.msra.mxu0 %v1088
    %2327 = vmatprep.subr.bf16.mxu0 %v1097
    %2328 = vmatpush1.bf16.msra.mxu0 %v1096
    %2329 = vmatprep.subr.bf16.mxu0 %v1105
    %2330 = vmatpush1.bf16.msra.mxu0 %v1104
    %2331 = vmatprep.subr.bf16.mxu0 %v1113
    %2332 = vmatpush1.bf16.msra.mxu0 %v1112
    %2333 = vmatprep.mubr.bf16.mxu0 %v2095
    %2334 = vmatmul.mubr.bf16.gmra.mrb[0].mxu0 %v2094
    %v2335 = vpop.f32.mrb[0].mxu0
    %v2336 = vadd.f32 %v2172, %v2335
    %v2337 = vpop.f32.mrb[0].mxu0
    %v2338 = vadd.f32 %v2174, %v2337
    %v2339 = vpop.f32.mrb[0].mxu0
    %v2340 = vpop.f32.mrb[0].mxu0
    %2341 = vdwg.mxu0
    %2342 = vmatprep.subr.bf16.mxu0 %v995
    %2343 = vmatpush1.bf16.msra.mxu0 %v994
    %2344 = vmatprep.subr.bf16.mxu0 %v1003
    %2345 = vmatpush1.bf16.msra.mxu0 %v1002
    %2346 = vmatprep.subr.bf16.mxu0 %v1011
    %2347 = vmatpush1.bf16.msra.mxu0 %v1010
    %2348 = vmatprep.subr.bf16.mxu0 %v1019
    %2349 = vmatpush1.bf16.msra.mxu0 %v1018
    %2350 = vmatprep.subr.bf16.mxu0 %v1027
    %2351 = vmatpush1.bf16.msra.mxu0 %v1026
    %2352 = vmatprep.subr.bf16.mxu0 %v1035
    %2353 = vmatpush1.bf16.msra.mxu0 %v1034
    %2354 = vmatprep.subr.bf16.mxu0 %v1043
    %2355 = vmatpush1.bf16.msra.mxu0 %v1042
    %2356 = vmatprep.subr.bf16.mxu0 %v1051
    %2357 = vmatpush1.bf16.msra.mxu0 %v1050
    %2358 = vmatprep.subr.bf16.mxu0 %v1059
    %2359 = vmatpush1.bf16.msra.mxu0 %v1058
    %2360 = vmatprep.subr.bf16.mxu0 %v1067
    %2361 = vmatpush1.bf16.msra.mxu0 %v1066
    %2362 = vmatprep.subr.bf16.mxu0 %v1075
    %2363 = vmatpush1.bf16.msra.mxu0 %v1074
    %2364 = vmatprep.subr.bf16.mxu0 %v1083
    %2365 = vmatpush1.bf16.msra.mxu0 %v1082
    %2366 = vmatprep.subr.bf16.mxu0 %v1091
    %2367 = vmatpush1.bf16.msra.mxu0 %v1090
    %2368 = vmatprep.subr.bf16.mxu0 %v1099
    %2369 = vmatpush1.bf16.msra.mxu0 %v1098
    %2370 = vmatprep.subr.bf16.mxu0 %v1107
    %2371 = vmatpush1.bf16.msra.mxu0 %v1106
    %2372 = vmatprep.subr.bf16.mxu0 %v1115
    %2373 = vmatpush1.bf16.msra.mxu0 %v1114
    %2374 = vmatprep.mubr.bf16.mxu0 %v2095
    %2375 = vmatmul.mubr.bf16.gmra.mrb[0].mxu0 %v2094
    %v2376 = vpop.f32.mrb[0].mxu0
    %v2377 = vadd.f32 %v2213, %v2376
    %v2378 = vpop.f32.mrb[0].mxu0
    %v2379 = vadd.f32 %v2215, %v2378
    %v2380 = vpop.f32.mrb[0].mxu0
    %v2381 = vpop.f32.mrb[0].mxu0
    %2382 = vdwg.mxu0
    %2383 = vmatprep.subr.bf16.mxu0 %v997
    %2384 = vmatpush1.bf16.msra.mxu0 %v996
    %2385 = vmatprep.subr.bf16.mxu0 %v1005
    %2386 = vmatpush1.bf16.msra.mxu0 %v1004
    %2387 = vmatprep.subr.bf16.mxu0 %v1013
    %2388 = vmatpush1.bf16.msra.mxu0 %v1012
    %2389 = vmatprep.subr.bf16.mxu0 %v1021
    %2390 = vmatpush1.bf16.msra.mxu0 %v1020
    %2391 = vmatprep.subr.bf16.mxu0 %v1029
    %2392 = vmatpush1.bf16.msra.mxu0 %v1028
    %2393 = vmatprep.subr.bf16.mxu0 %v1037
    %2394 = vmatpush1.bf16.msra.mxu0 %v1036
    %2395 = vmatprep.subr.bf16.mxu0 %v1045
    %2396 = vmatpush1.bf16.msra.mxu0 %v1044
    %2397 = vmatprep.subr.bf16.mxu0 %v1053
    %2398 = vmatpush1.bf16.msra.mxu0 %v1052
    %2399 = vmatprep.subr.bf16.mxu0 %v1061
    %2400 = vmatpush1.bf16.msra.mxu0 %v1060
    %2401 = vmatprep.subr.bf16.mxu0 %v1069
    %2402 = vmatpush1.bf16.msra.mxu0 %v1068
    %2403 = vmatprep.subr.bf16.mxu0 %v1077
    %2404 = vmatpush1.bf16.msra.mxu0 %v1076
    %2405 = vmatprep.subr.bf16.mxu0 %v1085
    %2406 = vmatpush1.bf16.msra.mxu0 %v1084
    %2407 = vmatprep.subr.bf16.mxu0 %v1093
    %2408 = vmatpush1.bf16.msra.mxu0 %v1092
    %2409 = vmatprep.subr.bf16.mxu0 %v1101
    %2410 = vmatpush1.bf16.msra.mxu0 %v1100
    %2411 = vmatprep.subr.bf16.mxu0 %v1109
    %2412 = vmatpush1.bf16.msra.mxu0 %v1108
    %2413 = vmatprep.subr.bf16.mxu0 %v1117
    %2414 = vmatpush1.bf16.msra.mxu0 %v1116
    %2415 = vmatprep.mubr.bf16.mxu0 %v2095
    %2416 = vmatmul.mubr.bf16.gmra.mrb[0].mxu0 %v2094
    %v2417 = vpop.f32.mrb[0].mxu0
    %v2418 = vadd.f32 %v2254, %v2417
    %v2419 = vpop.f32.mrb[0].mxu0
    %v2420 = vadd.f32 %v2256, %v2419
    %v2421 = vpop.f32.mrb[0].mxu0
    %v2422 = vpop.f32.mrb[0].mxu0
    %2423 = vdwg.mxu0
    %v2425 = vlaneseq
    %v2426 = vshrl.u32 %v2425, 7
    %v2427 = vsub.s32 0, %v2426
    %v2428 = vrot.slane %v985, %v2427
    %v2429 = vlaneseq
    %v2430 = vshrl.u32 %v2429, 7
    %v2431 = vsub.s32 1, %v2430
    %v2432 = vrot.slane %v985, %v2431
    %v2433 = vlaneseq
    %v2434 = vshrl.u32 %v2433, 7
    %v2435 = vsub.s32 2, %v2434
    %v2436 = vrot.slane %v985, %v2435
    %v2437 = vlaneseq
    %v2438 = vshrl.u32 %v2437, 7
    %v2439 = vsub.s32 3, %v2438
    %v2440 = vrot.slane %v985, %v2439
    %v2441 = vlaneseq
    %v2442 = vshrl.u32 %v2441, 7
    %v2443 = vsub.s32 4, %v2442
    %v2444 = vrot.slane %v985, %v2443
    %v2445 = vlaneseq
    %v2446 = vshrl.u32 %v2445, 7
    %v2447 = vsub.s32 5, %v2446
    %v2448 = vrot.slane %v985, %v2447
    %v2449 = vlaneseq
    %v2450 = vshrl.u32 %v2449, 7
    %v2451 = vsub.s32 6, %v2450
    %v2452 = vrot.slane %v985, %v2451
    %v2453 = vlaneseq
    %v2454 = vshrl.u32 %v2453, 7
    %v2455 = vsub.s32 7, %v2454
    %v2456 = vrot.slane %v985, %v2455
    %v2465 = vadd.f32 %v2295, %v2428
    %v2466 = vadd.f32 %v2297, %v2432
    %v2467 = vadd.f32 %v2336, %v2436
    %v2468 = vadd.f32 %v2338, %v2440
    %v2469 = vadd.f32 %v2377, %v2444
    %v2470 = vadd.f32 %v2379, %v2448
    %v2471 = vadd.f32 %v2418, %v2452
    %v2472 = vadd.f32 %v2420, %v2456
    %v2473 = vmul.f32 %v2465, 0.5
    %v2474 = vmul.f32 %v2466, 0.5
    %v2475 = vtanh.pop %v2473
    %v2476 = vtanh.pop %v2474
    %v2477 = vadd.f32 %v2475, 1.0
    %v2478 = vadd.f32 %v2476, 1.0
    %v2479 = vmul.f32 %v2477, 0.5
    %v2480 = vmul.f32 %v2478, 0.5
    %v2481 = vmul.f32 %v2467, 0.5
    %v2482 = vmul.f32 %v2468, 0.5
    %v2483 = vtanh.pop %v2481
    %v2484 = vtanh.pop %v2482
    %v2485 = vadd.f32 %v2483, 1.0
    %v2486 = vadd.f32 %v2484, 1.0
    %v2487 = vmul.f32 %v2485, 0.5
    %v2488 = vmul.f32 %v2486, 0.5
    %v2489 = vtanh.pop %v2469
    %v2490 = vtanh.pop %v2470
    %v2491 = vmul.f32 %v2471, 0.5
    %v2492 = vmul.f32 %v2472, 0.5
    %v2493 = vtanh.pop %v2491
    %v2494 = vtanh.pop %v2492
    %v2495 = vadd.f32 %v2493, 1.0
    %v2496 = vadd.f32 %v2494, 1.0
    %v2497 = vmul.f32 %v2495, 0.5
    %v2498 = vmul.f32 %v2496, 0.5
    %v2499 = vmul.f32 %v2487, 0.0
    %v2500 = vmul.f32 %v2488, 0.0
    %v2501 = vmul.f32 %v2479, %v2489
    %v2502 = vmul.f32 %v2480, %v2490
    %v2503 = vadd.f32 %v2499, %v2501
    %v2504 = vadd.f32 %v2500, %v2502
    %v2505 = vtanh.pop %v2503
    %v2506 = vtanh.pop %v2504
    %v2507 = vmul.f32 %v2497, %v2505
    %v2508 = vmul.f32 %v2498, %v2506
    %2509 = vmatprep.subr.bf16.mxu0 %v1631
    %2510 = vmatpush1.bf16.msra.mxu0 %v1630
    %2511 = vmatprep.subr.bf16.mxu0 %v1639
    %2512 = vmatpush1.bf16.msra.mxu0 %v1638
    %2513 = vmatprep.subr.bf16.mxu0 %v1647
    %2514 = vmatpush1.bf16.msra.mxu0 %v1646
    %2515 = vmatprep.subr.bf16.mxu0 %v1655
    %2516 = vmatpush1.bf16.msra.mxu0 %v1654
    %2517 = vmatprep.subr.bf16.mxu0 %v1663
    %2518 = vmatpush1.bf16.msra.mxu0 %v1662
    %2519 = vmatprep.subr.bf16.mxu0 %v1671
    %2520 = vmatpush1.bf16.msra.mxu0 %v1670
    %2521 = vmatprep.subr.bf16.mxu0 %v1679
    %2522 = vmatpush1.bf16.msra.mxu0 %v1678
    %2523 = vmatprep.subr.bf16.mxu0 %v1687
    %2524 = vmatpush1.bf16.msra.mxu0 %v1686
    %2525 = vmatprep.subr.bf16.mxu0 %v1695
    %2526 = vmatpush1.bf16.msra.mxu0 %v1694
    %2527 = vmatprep.subr.bf16.mxu0 %v1703
    %2528 = vmatpush1.bf16.msra.mxu0 %v1702
    %2529 = vmatprep.subr.bf16.mxu0 %v1711
    %2530 = vmatpush1.bf16.msra.mxu0 %v1710
    %2531 = vmatprep.subr.bf16.mxu0 %v1719
    %2532 = vmatpush1.bf16.msra.mxu0 %v1718
    %2533 = vmatprep.subr.bf16.mxu0 %v1727
    %2534 = vmatpush1.bf16.msra.mxu0 %v1726
    %2535 = vmatprep.subr.bf16.mxu0 %v1735
    %2536 = vmatpush1.bf16.msra.mxu0 %v1734
    %2537 = vmatprep.subr.bf16.mxu0 %v1743
    %2538 = vmatpush1.bf16.msra.mxu0 %v1742
    %2539 = vmatprep.subr.bf16.mxu0 %v1751
    %2540 = vmatpush1.bf16.msra.mxu0 %v1750
    %2541 = vmatprep.mubr.bf16.mxu0 %v2095
    %2542 = vmatmul.mubr.bf16.gmra.mrb[0].mxu0 %v2094
    %v2543 = vpop.f32.mrb[0].mxu0
    %v2544 = vadd.f32 0.0, %v2543
    %v2545 = vpop.f32.mrb[0].mxu0
    %v2546 = vadd.f32 0.0, %v2545
    %v2547 = vpop.f32.mrb[0].mxu0
    %v2548 = vpop.f32.mrb[0].mxu0
    %2549 = vdwg.mxu0
    %2550 = vmatprep.subr.bf16.mxu0 %v1633
    %2551 = vmatpush1.bf16.msra.mxu0 %v1632
    %2552 = vmatprep.subr.bf16.mxu0 %v1641
    %2553 = vmatpush1.bf16.msra.mxu0 %v1640
    %2554 = vmatprep.subr.bf16.mxu0 %v1649
    %2555 = vmatpush1.bf16.msra.mxu0 %v1648
    %2556 = vmatprep.subr.bf16.mxu0 %v1657
    %2557 = vmatpush1.bf16.msra.mxu0 %v1656
    %2558 = vmatprep.subr.bf16.mxu0 %v1665
    %2559 = vmatpush1.bf16.msra.mxu0 %v1664
    %2560 = vmatprep.subr.bf16.mxu0 %v1673
    %2561 = vmatpush1.bf16.msra.mxu0 %v1672
    %2562 = vmatprep.subr.bf16.mxu0 %v1681
    %2563 = vmatpush1.bf16.msra.mxu0 %v1680
    %2564 = vmatprep.subr.bf16.mxu0 %v1689
    %2565 = vmatpush1.bf16.msra.mxu0 %v1688
    %2566 = vmatprep.subr.bf16.mxu0 %v1697
    %2567 = vmatpush1.bf16.msra.mxu0 %v1696
    %2568 = vmatprep.subr.bf16.mxu0 %v1705
    %2569 = vmatpush1.bf16.msra.mxu0 %v1704
    %2570 = vmatprep.subr.bf16.mxu0 %v1713
    %2571 = vmatpush1.bf16.msra.mxu0 %v1712
    %2572 = vmatprep.subr.bf16.mxu0 %v1721
    %2573 = vmatpush1.bf16.msra.mxu0 %v1720
    %2574 = vmatprep.subr.bf16.mxu0 %v1729
    %2575 = vmatpush1.bf16.msra.mxu0 %v1728
    %2576 = vmatprep.subr.bf16.mxu0 %v1737
    %2577 = vmatpush1.bf16.msra.mxu0 %v1736
    %2578 = vmatprep.subr.bf16.mxu0 %v1745
    %2579 = vmatpush1.bf16.msra.mxu0 %v1744
    %2580 = vmatprep.subr.bf16.mxu0 %v1753
    %2581 = vmatpush1.bf16.msra.mxu0 %v1752
    %2582 = vmatprep.mubr.bf16.mxu0 %v2095
    %2583 = vmatmul.mubr.bf16.gmra.mrb[0].mxu0 %v2094
    %v2584 = vpop.f32.mrb[0].mxu0
    %v2585 = vadd.f32 0.0, %v2584
    %v2586 = vpop.f32.mrb[0].mxu0
    %v2587 = vadd.f32 0.0, %v2586
    %v2588 = vpop.f32.mrb[0].mxu0
    %v2589 = vpop.f32.mrb[0].mxu0
    %2590 = vdwg.mxu0
    %2591 = vmatprep.subr.bf16.mxu0 %v1635
    %2592 = vmatpush1.bf16.msra.mxu0 %v1634
    %2593 = vmatprep.subr.bf16.mxu0 %v1643
    %2594 = vmatpush1.bf16.msra.mxu0 %v1642
    %2595 = vmatprep.subr.bf16.mxu0 %v1651
    %2596 = vmatpush1.bf16.msra.mxu0 %v1650
    %2597 = vmatprep.subr.bf16.mxu0 %v1659
    %2598 = vmatpush1.bf16.msra.mxu0 %v1658
    %2599 = vmatprep.subr.bf16.mxu0 %v1667
    %2600 = vmatpush1.bf16.msra.mxu0 %v1666
    %2601 = vmatprep.subr.bf16.mxu0 %v1675
    %2602 = vmatpush1.bf16.msra.mxu0 %v1674
    %2603 = vmatprep.subr.bf16.mxu0 %v1683
    %2604 = vmatpush1.bf16.msra.mxu0 %v1682
    %2605 = vmatprep.subr.bf16.mxu0 %v1691
    %2606 = vmatpush1.bf16.msra.mxu0 %v1690
    %2607 = vmatprep.subr.bf16.mxu0 %v1699
    %2608 = vmatpush1.bf16.msra.mxu0 %v1698
    %2609 = vmatprep.subr.bf16.mxu0 %v1707
    %2610 = vmatpush1.bf16.msra.mxu0 %v1706
    %2611 = vmatprep.subr.bf16.mxu0 %v1715
    %2612 = vmatpush1.bf16.msra.mxu0 %v1714
    %2613 = vmatprep.subr.bf16.mxu0 %v1723
    %2614 = vmatpush1.bf16.msra.mxu0 %v1722
    %2615 = vmatprep.subr.bf16.mxu0 %v1731
    %2616 = vmatpush1.bf16.msra.mxu0 %v1730
    %2617 = vmatprep.subr.bf16.mxu0 %v1739
    %2618 = vmatpush1.bf16.msra.mxu0 %v1738
    %2619 = vmatprep.subr.bf16.mxu0 %v1747
    %2620 = vmatpush1.bf16.msra.mxu0 %v1746
    %2621 = vmatprep.subr.bf16.mxu0 %v1755
    %2622 = vmatpush1.bf16.msra.mxu0 %v1754
    %2623 = vmatprep.mubr.bf16.mxu0 %v2095
    %2624 = vmatmul.mubr.bf16.gmra.mrb[0].mxu0 %v2094
    %v2625 = vpop.f32.mrb[0].mxu0
    %v2626 = vadd.f32 0.0, %v2625
    %v2627 = vpop.f32.mrb[0].mxu0
    %v2628 = vadd.f32 0.0, %v2627
    %v2629 = vpop.f32.mrb[0].mxu0
    %v2630 = vpop.f32.mrb[0].mxu0
    %2631 = vdwg.mxu0
    %2632 = vmatprep.subr.bf16.mxu0 %v1637
    %2633 = vmatpush1.bf16.msra.mxu0 %v1636
    %2634 = vmatprep.subr.bf16.mxu0 %v1645
    %2635 = vmatpush1.bf16.msra.mxu0 %v1644
    %2636 = vmatprep.subr.bf16.mxu0 %v1653
    %2637 = vmatpush1.bf16.msra.mxu0 %v1652
    %2638 = vmatprep.subr.bf16.mxu0 %v1661
    %2639 = vmatpush1.bf16.msra.mxu0 %v1660
    %2640 = vmatprep.subr.bf16.mxu0 %v1669
    %2641 = vmatpush1.bf16.msra.mxu0 %v1668
    %2642 = vmatprep.subr.bf16.mxu0 %v1677
    %2643 = vmatpush1.bf16.msra.mxu0 %v1676
    %2644 = vmatprep.subr.bf16.mxu0 %v1685
    %2645 = vmatpush1.bf16.msra.mxu0 %v1684
    %2646 = vmatprep.subr.bf16.mxu0 %v1693
    %2647 = vmatpush1.bf16.msra.mxu0 %v1692
    %2648 = vmatprep.subr.bf16.mxu0 %v1701
    %2649 = vmatpush1.bf16.msra.mxu0 %v1700
    %2650 = vmatprep.subr.bf16.mxu0 %v1709
    %2651 = vmatpush1.bf16.msra.mxu0 %v1708
    %2652 = vmatprep.subr.bf16.mxu0 %v1717
    %2653 = vmatpush1.bf16.msra.mxu0 %v1716
    %2654 = vmatprep.subr.bf16.mxu0 %v1725
    %2655 = vmatpush1.bf16.msra.mxu0 %v1724
    %2656 = vmatprep.subr.bf16.mxu0 %v1733
    %2657 = vmatpush1.bf16.msra.mxu0 %v1732
    %2658 = vmatprep.subr.bf16.mxu0 %v1741
    %2659 = vmatpush1.bf16.msra.mxu0 %v1740
    %2660 = vmatprep.subr.bf16.mxu0 %v1749
    %2661 = vmatpush1.bf16.msra.mxu0 %v1748
    %2662 = vmatprep.subr.bf16.mxu0 %v1757
    %2663 = vmatpush1.bf16.msra.mxu0 %v1756
    %2664 = vmatprep.mubr.bf16.mxu0 %v2095
    %2665 = vmatmul.mubr.bf16.gmra.mrb[0].mxu0 %v2094
    %v2666 = vpop.f32.mrb[0].mxu0
    %v2667 = vadd.f32 0.0, %v2666
    %v2668 = vpop.f32.mrb[0].mxu0
    %v2669 = vadd.f32 0.0, %v2668
    %v2670 = vpop.f32.mrb[0].mxu0
    %v2671 = vpop.f32.mrb[0].mxu0
    %2672 = vdwg.mxu0
    %v2673 = vadd.f32 %v604, %v2544
    %v2674 = vadd.f32 %v606, %v2546
    %v2675 = vadd.f32 %v677, %v2585
    %v2676 = vadd.f32 %v679, %v2587
    %v2677 = vadd.f32 %v750, %v2626
    %v2678 = vadd.f32 %v752, %v2628
    %v2679 = vadd.f32 %v823, %v2667
    %v2680 = vadd.f32 %v825, %v2669
    %v2681 = vmul.f32 %v2673, 0.5
    %v2682 = vmul.f32 %v2674, 0.5
    %v2683 = vtanh.pop %v2681
    %v2684 = vtanh.pop %v2682
    %v2685 = vadd.f32 %v2683, 1.0
    %v2686 = vadd.f32 %v2684, 1.0
    %v2687 = vmul.f32 %v2685, 0.5
    %v2688 = vmul.f32 %v2686, 0.5
    %v2689 = vmul.f32 %v2675, 0.5
    %v2690 = vmul.f32 %v2676, 0.5
    %v2691 = vtanh.pop %v2689
    %v2692 = vtanh.pop %v2690
    %v2693 = vadd.f32 %v2691, 1.0
    %v2694 = vadd.f32 %v2692, 1.0
    %v2695 = vmul.f32 %v2693, 0.5
    %v2696 = vmul.f32 %v2694, 0.5
    %v2697 = vtanh.pop %v2677
    %v2698 = vtanh.pop %v2678
    %v2699 = vmul.f32 %v2679, 0.5
    %v2700 = vmul.f32 %v2680, 0.5
    %v2701 = vtanh.pop %v2699
    %v2702 = vtanh.pop %v2700
    %v2703 = vadd.f32 %v2701, 1.0
    %v2704 = vadd.f32 %v2702, 1.0
    %v2705 = vmul.f32 %v2703, 0.5
    %v2706 = vmul.f32 %v2704, 0.5
    %v2707 = vmul.f32 %v2695, %v2088
    %v2708 = vmul.f32 %v2696, %v2089
    %v2709 = vmul.f32 %v2687, %v2697
    %v2710 = vmul.f32 %v2688, %v2698
    %v2711 = vadd.f32 %v2707, %v2709
    %v2712 = vadd.f32 %v2708, %v2710
    %v2713 = vtanh.pop %v2711
    %v2714 = vtanh.pop %v2712
    %v2715 = vmul.f32 %v2705, %v2713
    %v2716 = vmul.f32 %v2706, %v2714
    %v2717 = vpack.c.bf16 %v2715, %v2715
    %v2718 = vpack.c.bf16 %v2716, %v2716
    %v2719 = vpack.c.bf16 %v2507, %v2507
    %v2720 = vpack.c.bf16 %v2508, %v2508
    %2721 = vmatprep.subr.bf16.mxu0 %v1119
    %2722 = vmatpush1.bf16.msra.mxu0 %v1118
    %2723 = vmatprep.subr.bf16.mxu0 %v1127
    %2724 = vmatpush1.bf16.msra.mxu0 %v1126
    %2725 = vmatprep.subr.bf16.mxu0 %v1135
    %2726 = vmatpush1.bf16.msra.mxu0 %v1134
    %2727 = vmatprep.subr.bf16.mxu0 %v1143
    %2728 = vmatpush1.bf16.msra.mxu0 %v1142
    %2729 = vmatprep.subr.bf16.mxu0 %v1151
    %2730 = vmatpush1.bf16.msra.mxu0 %v1150
    %2731 = vmatprep.subr.bf16.mxu0 %v1159
    %2732 = vmatpush1.bf16.msra.mxu0 %v1158
    %2733 = vmatprep.subr.bf16.mxu0 %v1167
    %2734 = vmatpush1.bf16.msra.mxu0 %v1166
    %2735 = vmatprep.subr.bf16.mxu0 %v1175
    %2736 = vmatpush1.bf16.msra.mxu0 %v1174
    %2737 = vmatprep.subr.bf16.mxu0 %v1183
    %2738 = vmatpush1.bf16.msra.mxu0 %v1182
    %2739 = vmatprep.subr.bf16.mxu0 %v1191
    %2740 = vmatpush1.bf16.msra.mxu0 %v1190
    %2741 = vmatprep.subr.bf16.mxu0 %v1199
    %2742 = vmatpush1.bf16.msra.mxu0 %v1198
    %2743 = vmatprep.subr.bf16.mxu0 %v1207
    %2744 = vmatpush1.bf16.msra.mxu0 %v1206
    %2745 = vmatprep.subr.bf16.mxu0 %v1215
    %2746 = vmatpush1.bf16.msra.mxu0 %v1214
    %2747 = vmatprep.subr.bf16.mxu0 %v1223
    %2748 = vmatpush1.bf16.msra.mxu0 %v1222
    %2749 = vmatprep.subr.bf16.mxu0 %v1231
    %2750 = vmatpush1.bf16.msra.mxu0 %v1230
    %2751 = vmatprep.subr.bf16.mxu0 %v1239
    %2752 = vmatpush1.bf16.msra.mxu0 %v1238
    %2753 = vmatprep.mubr.bf16.mxu0 %v2720
    %2754 = vmatmul.mubr.bf16.gmra.mrb[0].mxu0 %v2719
    %v2755 = vpop.f32.mrb[0].mxu0
    %v2756 = vadd.f32 0.0, %v2755
    %v2757 = vpop.f32.mrb[0].mxu0
    %v2758 = vadd.f32 0.0, %v2757
    %v2759 = vpop.f32.mrb[0].mxu0
    %v2760 = vpop.f32.mrb[0].mxu0
    %2761 = vdwg.mxu0
    %2762 = vmatprep.subr.bf16.mxu0 %v1121
    %2763 = vmatpush1.bf16.msra.mxu0 %v1120
    %2764 = vmatprep.subr.bf16.mxu0 %v1129
    %2765 = vmatpush1.bf16.msra.mxu0 %v1128
    %2766 = vmatprep.subr.bf16.mxu0 %v1137
    %2767 = vmatpush1.bf16.msra.mxu0 %v1136
    %2768 = vmatprep.subr.bf16.mxu0 %v1145
    %2769 = vmatpush1.bf16.msra.mxu0 %v1144
    %2770 = vmatprep.subr.bf16.mxu0 %v1153
    %2771 = vmatpush1.bf16.msra.mxu0 %v1152
    %2772 = vmatprep.subr.bf16.mxu0 %v1161
    %2773 = vmatpush1.bf16.msra.mxu0 %v1160
    %2774 = vmatprep.subr.bf16.mxu0 %v1169
    %2775 = vmatpush1.bf16.msra.mxu0 %v1168
    %2776 = vmatprep.subr.bf16.mxu0 %v1177
    %2777 = vmatpush1.bf16.msra.mxu0 %v1176
    %2778 = vmatprep.subr.bf16.mxu0 %v1185
    %2779 = vmatpush1.bf16.msra.mxu0 %v1184
    %2780 = vmatprep.subr.bf16.mxu0 %v1193
    %2781 = vmatpush1.bf16.msra.mxu0 %v1192
    %2782 = vmatprep.subr.bf16.mxu0 %v1201
    %2783 = vmatpush1.bf16.msra.mxu0 %v1200
    %2784 = vmatprep.subr.bf16.mxu0 %v1209
    %2785 = vmatpush1.bf16.msra.mxu0 %v1208
    %2786 = vmatprep.subr.bf16.mxu0 %v1217
    %2787 = vmatpush1.bf16.msra.mxu0 %v1216
    %2788 = vmatprep.subr.bf16.mxu0 %v1225
    %2789 = vmatpush1.bf16.msra.mxu0 %v1224
    %2790 = vmatprep.subr.bf16.mxu0 %v1233
    %2791 = vmatpush1.bf16.msra.mxu0 %v1232
    %2792 = vmatprep.subr.bf16.mxu0 %v1241
    %2793 = vmatpush1.bf16.msra.mxu0 %v1240
    %2794 = vmatprep.mubr.bf16.mxu0 %v2720
    %2795 = vmatmul.mubr.bf16.gmra.mrb[0].mxu0 %v2719
    %v2796 = vpop.f32.mrb[0].mxu0
    %v2797 = vadd.f32 0.0, %v2796
    %v2798 = vpop.f32.mrb[0].mxu0
    %v2799 = vadd.f32 0.0, %v2798
    %v2800 = vpop.f32.mrb[0].mxu0
    %v2801 = vpop.f32.mrb[0].mxu0
    %2802 = vdwg.mxu0
    %2803 = vmatprep.subr.bf16.mxu0 %v1123
    %2804 = vmatpush1.bf16.msra.mxu0 %v1122
    %2805 = vmatprep.subr.bf16.mxu0 %v1131
    %2806 = vmatpush1.bf16.msra.mxu0 %v1130
    %2807 = vmatprep.subr.bf16.mxu0 %v1139
    %2808 = vmatpush1.bf16.msra.mxu0 %v1138
    %2809 = vmatprep.subr.bf16.mxu0 %v1147
    %2810 = vmatpush1.bf16.msra.mxu0 %v1146
    %2811 = vmatprep.subr.bf16.mxu0 %v1155
    %2812 = vmatpush1.bf16.msra.mxu0 %v1154
    %2813 = vmatprep.subr.bf16.mxu0 %v1163
    %2814 = vmatpush1.bf16.msra.mxu0 %v1162
    %2815 = vmatprep.subr.bf16.mxu0 %v1171
    %2816 = vmatpush1.bf16.msra.mxu0 %v1170
    %2817 = vmatprep.subr.bf16.mxu0 %v1179
    %2818 = vmatpush1.bf16.msra.mxu0 %v1178
    %2819 = vmatprep.subr.bf16.mxu0 %v1187
    %2820 = vmatpush1.bf16.msra.mxu0 %v1186
    %2821 = vmatprep.subr.bf16.mxu0 %v1195
    %2822 = vmatpush1.bf16.msra.mxu0 %v1194
    %2823 = vmatprep.subr.bf16.mxu0 %v1203
    %2824 = vmatpush1.bf16.msra.mxu0 %v1202
    %2825 = vmatprep.subr.bf16.mxu0 %v1211
    %2826 = vmatpush1.bf16.msra.mxu0 %v1210
    %2827 = vmatprep.subr.bf16.mxu0 %v1219
    %2828 = vmatpush1.bf16.msra.mxu0 %v1218
    %2829 = vmatprep.subr.bf16.mxu0 %v1227
    %2830 = vmatpush1.bf16.msra.mxu0 %v1226
    %2831 = vmatprep.subr.bf16.mxu0 %v1235
    %2832 = vmatpush1.bf16.msra.mxu0 %v1234
    %2833 = vmatprep.subr.bf16.mxu0 %v1243
    %2834 = vmatpush1.bf16.msra.mxu0 %v1242
    %2835 = vmatprep.mubr.bf16.mxu0 %v2720
    %2836 = vmatmul.mubr.bf16.gmra.mrb[0].mxu0 %v2719
    %v2837 = vpop.f32.mrb[0].mxu0
    %v2838 = vadd.f32 0.0, %v2837
    %v2839 = vpop.f32.mrb[0].mxu0
    %v2840 = vadd.f32 0.0, %v2839
    %v2841 = vpop.f32.mrb[0].mxu0
    %v2842 = vpop.f32.mrb[0].mxu0
    %2843 = vdwg.mxu0
    %2844 = vmatprep.subr.bf16.mxu0 %v1125
    %2845 = vmatpush1.bf16.msra.mxu0 %v1124
    %2846 = vmatprep.subr.bf16.mxu0 %v1133
    %2847 = vmatpush1.bf16.msra.mxu0 %v1132
    %2848 = vmatprep.subr.bf16.mxu0 %v1141
    %2849 = vmatpush1.bf16.msra.mxu0 %v1140
    %2850 = vmatprep.subr.bf16.mxu0 %v1149
    %2851 = vmatpush1.bf16.msra.mxu0 %v1148
    %2852 = vmatprep.subr.bf16.mxu0 %v1157
    %2853 = vmatpush1.bf16.msra.mxu0 %v1156
    %2854 = vmatprep.subr.bf16.mxu0 %v1165
    %2855 = vmatpush1.bf16.msra.mxu0 %v1164
    %2856 = vmatprep.subr.bf16.mxu0 %v1173
    %2857 = vmatpush1.bf16.msra.mxu0 %v1172
    %2858 = vmatprep.subr.bf16.mxu0 %v1181
    %2859 = vmatpush1.bf16.msra.mxu0 %v1180
    %2860 = vmatprep.subr.bf16.mxu0 %v1189
    %2861 = vmatpush1.bf16.msra.mxu0 %v1188
    %2862 = vmatprep.subr.bf16.mxu0 %v1197
    %2863 = vmatpush1.bf16.msra.mxu0 %v1196
    %2864 = vmatprep.subr.bf16.mxu0 %v1205
    %2865 = vmatpush1.bf16.msra.mxu0 %v1204
    %2866 = vmatprep.subr.bf16.mxu0 %v1213
    %2867 = vmatpush1.bf16.msra.mxu0 %v1212
    %2868 = vmatprep.subr.bf16.mxu0 %v1221
    %2869 = vmatpush1.bf16.msra.mxu0 %v1220
    %2870 = vmatprep.subr.bf16.mxu0 %v1229
    %2871 = vmatpush1.bf16.msra.mxu0 %v1228
    %2872 = vmatprep.subr.bf16.mxu0 %v1237
    %2873 = vmatpush1.bf16.msra.mxu0 %v1236
    %2874 = vmatprep.subr.bf16.mxu0 %v1245
    %2875 = vmatpush1.bf16.msra.mxu0 %v1244
    %2876 = vmatprep.mubr.bf16.mxu0 %v2720
    %2877 = vmatmul.mubr.bf16.gmra.mrb[0].mxu0 %v2719
    %v2878 = vpop.f32.mrb[0].mxu0
    %v2879 = vadd.f32 0.0, %v2878
    %v2880 = vpop.f32.mrb[0].mxu0
    %v2881 = vadd.f32 0.0, %v2880
    %v2882 = vpop.f32.mrb[0].mxu0
    %v2883 = vpop.f32.mrb[0].mxu0
    %2884 = vdwg.mxu0
    %2885 = vmatprep.subr.bf16.mxu0 %v991
    %2886 = vmatpush1.bf16.msra.mxu0 %v990
    %2887 = vmatprep.subr.bf16.mxu0 %v999
    %2888 = vmatpush1.bf16.msra.mxu0 %v998
    %2889 = vmatprep.subr.bf16.mxu0 %v1007
    %2890 = vmatpush1.bf16.msra.mxu0 %v1006
    %2891 = vmatprep.subr.bf16.mxu0 %v1015
    %2892 = vmatpush1.bf16.msra.mxu0 %v1014
    %2893 = vmatprep.subr.bf16.mxu0 %v1023
    %2894 = vmatpush1.bf16.msra.mxu0 %v1022
    %2895 = vmatprep.subr.bf16.mxu0 %v1031
    %2896 = vmatpush1.bf16.msra.mxu0 %v1030
    %2897 = vmatprep.subr.bf16.mxu0 %v1039
    %2898 = vmatpush1.bf16.msra.mxu0 %v1038
    %2899 = vmatprep.subr.bf16.mxu0 %v1047
    %2900 = vmatpush1.bf16.msra.mxu0 %v1046
    %2901 = vmatprep.subr.bf16.mxu0 %v1055
    %2902 = vmatpush1.bf16.msra.mxu0 %v1054
    %2903 = vmatprep.subr.bf16.mxu0 %v1063
    %2904 = vmatpush1.bf16.msra.mxu0 %v1062
    %2905 = vmatprep.subr.bf16.mxu0 %v1071
    %2906 = vmatpush1.bf16.msra.mxu0 %v1070
    %2907 = vmatprep.subr.bf16.mxu0 %v1079
    %2908 = vmatpush1.bf16.msra.mxu0 %v1078
    %2909 = vmatprep.subr.bf16.mxu0 %v1087
    %2910 = vmatpush1.bf16.msra.mxu0 %v1086
    %2911 = vmatprep.subr.bf16.mxu0 %v1095
    %2912 = vmatpush1.bf16.msra.mxu0 %v1094
    %2913 = vmatprep.subr.bf16.mxu0 %v1103
    %2914 = vmatpush1.bf16.msra.mxu0 %v1102
    %2915 = vmatprep.subr.bf16.mxu0 %v1111
    %2916 = vmatpush1.bf16.msra.mxu0 %v1110
    %2917 = vmatprep.mubr.bf16.mxu0 %v2718
    %2918 = vmatmul.mubr.bf16.gmra.mrb[0].mxu0 %v2717
    %v2919 = vpop.f32.mrb[0].mxu0
    %v2920 = vadd.f32 %v2756, %v2919
    %v2921 = vpop.f32.mrb[0].mxu0
    %v2922 = vadd.f32 %v2758, %v2921
    %v2923 = vpop.f32.mrb[0].mxu0
    %v2924 = vpop.f32.mrb[0].mxu0
    %2925 = vdwg.mxu0
    %2926 = vmatprep.subr.bf16.mxu0 %v993
    %2927 = vmatpush1.bf16.msra.mxu0 %v992
    %2928 = vmatprep.subr.bf16.mxu0 %v1001
    %2929 = vmatpush1.bf16.msra.mxu0 %v1000
    %2930 = vmatprep.subr.bf16.mxu0 %v1009
    %2931 = vmatpush1.bf16.msra.mxu0 %v1008
    %2932 = vmatprep.subr.bf16.mxu0 %v1017
    %2933 = vmatpush1.bf16.msra.mxu0 %v1016
    %2934 = vmatprep.subr.bf16.mxu0 %v1025
    %2935 = vmatpush1.bf16.msra.mxu0 %v1024
    %2936 = vmatprep.subr.bf16.mxu0 %v1033
    %2937 = vmatpush1.bf16.msra.mxu0 %v1032
    %2938 = vmatprep.subr.bf16.mxu0 %v1041
    %2939 = vmatpush1.bf16.msra.mxu0 %v1040
    %2940 = vmatprep.subr.bf16.mxu0 %v1049
    %2941 = vmatpush1.bf16.msra.mxu0 %v1048
    %2942 = vmatprep.subr.bf16.mxu0 %v1057
    %2943 = vmatpush1.bf16.msra.mxu0 %v1056
    %2944 = vmatprep.subr.bf16.mxu0 %v1065
    %2945 = vmatpush1.bf16.msra.mxu0 %v1064
    %2946 = vmatprep.subr.bf16.mxu0 %v1073
    %2947 = vmatpush1.bf16.msra.mxu0 %v1072
    %2948 = vmatprep.subr.bf16.mxu0 %v1081
    %2949 = vmatpush1.bf16.msra.mxu0 %v1080
    %2950 = vmatprep.subr.bf16.mxu0 %v1089
    %2951 = vmatpush1.bf16.msra.mxu0 %v1088
    %2952 = vmatprep.subr.bf16.mxu0 %v1097
    %2953 = vmatpush1.bf16.msra.mxu0 %v1096
    %2954 = vmatprep.subr.bf16.mxu0 %v1105
    %2955 = vmatpush1.bf16.msra.mxu0 %v1104
    %2956 = vmatprep.subr.bf16.mxu0 %v1113
    %2957 = vmatpush1.bf16.msra.mxu0 %v1112
    %2958 = vmatprep.mubr.bf16.mxu0 %v2718
    %2959 = vmatmul.mubr.bf16.gmra.mrb[0].mxu0 %v2717
    %v2960 = vpop.f32.mrb[0].mxu0
    %v2961 = vadd.f32 %v2797, %v2960
    %v2962 = vpop.f32.mrb[0].mxu0
    %v2963 = vadd.f32 %v2799, %v2962
    %v2964 = vpop.f32.mrb[0].mxu0
    %v2965 = vpop.f32.mrb[0].mxu0
    %2966 = vdwg.mxu0
    %2967 = vmatprep.subr.bf16.mxu0 %v995
    %2968 = vmatpush1.bf16.msra.mxu0 %v994
    %2969 = vmatprep.subr.bf16.mxu0 %v1003
    %2970 = vmatpush1.bf16.msra.mxu0 %v1002
    %2971 = vmatprep.subr.bf16.mxu0 %v1011
    %2972 = vmatpush1.bf16.msra.mxu0 %v1010
    %2973 = vmatprep.subr.bf16.mxu0 %v1019
    %2974 = vmatpush1.bf16.msra.mxu0 %v1018
    %2975 = vmatprep.subr.bf16.mxu0 %v1027
    %2976 = vmatpush1.bf16.msra.mxu0 %v1026
    %2977 = vmatprep.subr.bf16.mxu0 %v1035
    %2978 = vmatpush1.bf16.msra.mxu0 %v1034
    %2979 = vmatprep.subr.bf16.mxu0 %v1043
    %2980 = vmatpush1.bf16.msra.mxu0 %v1042
    %2981 = vmatprep.subr.bf16.mxu0 %v1051
    %2982 = vmatpush1.bf16.msra.mxu0 %v1050
    %2983 = vmatprep.subr.bf16.mxu0 %v1059
    %2984 = vmatpush1.bf16.msra.mxu0 %v1058
    %2985 = vmatprep.subr.bf16.mxu0 %v1067
    %2986 = vmatpush1.bf16.msra.mxu0 %v1066
    %2987 = vmatprep.subr.bf16.mxu0 %v1075
    %2988 = vmatpush1.bf16.msra.mxu0 %v1074
    %2989 = vmatprep.subr.bf16.mxu0 %v1083
    %2990 = vmatpush1.bf16.msra.mxu0 %v1082
    %2991 = vmatprep.subr.bf16.mxu0 %v1091
    %2992 = vmatpush1.bf16.msra.mxu0 %v1090
    %2993 = vmatprep.subr.bf16.mxu0 %v1099
    %2994 = vmatpush1.bf16.msra.mxu0 %v1098
    %2995 = vmatprep.subr.bf16.mxu0 %v1107
    %2996 = vmatpush1.bf16.msra.mxu0 %v1106
    %2997 = vmatprep.subr.bf16.mxu0 %v1115
    %2998 = vmatpush1.bf16.msra.mxu0 %v1114
    %2999 = vmatprep.mubr.bf16.mxu0 %v2718
    %3000 = vmatmul.mubr.bf16.gmra.mrb[0].mxu0 %v2717
    %v3001 = vpop.f32.mrb[0].mxu0
    %v3002 = vadd.f32 %v2838, %v3001
    %v3003 = vpop.f32.mrb[0].mxu0
    %v3004 = vadd.f32 %v2840, %v3003
    %v3005 = vpop.f32.mrb[0].mxu0
    %v3006 = vpop.f32.mrb[0].mxu0
    %3007 = vdwg.mxu0
    %3008 = vmatprep.subr.bf16.mxu0 %v997
    %3009 = vmatpush1.bf16.msra.mxu0 %v996
    %3010 = vmatprep.subr.bf16.mxu0 %v1005
    %3011 = vmatpush1.bf16.msra.mxu0 %v1004
    %3012 = vmatprep.subr.bf16.mxu0 %v1013
    %3013 = vmatpush1.bf16.msra.mxu0 %v1012
    %3014 = vmatprep.subr.bf16.mxu0 %v1021
    %3015 = vmatpush1.bf16.msra.mxu0 %v1020
    %3016 = vmatprep.subr.bf16.mxu0 %v1029
    %3017 = vmatpush1.bf16.msra.mxu0 %v1028
    %3018 = vmatprep.subr.bf16.mxu0 %v1037
    %3019 = vmatpush1.bf16.msra.mxu0 %v1036
    %3020 = vmatprep.subr.bf16.mxu0 %v1045
    %3021 = vmatpush1.bf16.msra.mxu0 %v1044
    %3022 = vmatprep.subr.bf16.mxu0 %v1053
    %3023 = vmatpush1.bf16.msra.mxu0 %v1052
    %3024 = vmatprep.subr.bf16.mxu0 %v1061
    %3025 = vmatpush1.bf16.msra.mxu0 %v1060
    %3026 = vmatprep.subr.bf16.mxu0 %v1069
    %3027 = vmatpush1.bf16.msra.mxu0 %v1068
    %3028 = vmatprep.subr.bf16.mxu0 %v1077
    %3029 = vmatpush1.bf16.msra.mxu0 %v1076
    %3030 = vmatprep.subr.bf16.mxu0 %v1085
    %3031 = vmatpush1.bf16.msra.mxu0 %v1084
    %3032 = vmatprep.subr.bf16.mxu0 %v1093
    %3033 = vmatpush1.bf16.msra.mxu0 %v1092
    %3034 = vmatprep.subr.bf16.mxu0 %v1101
    %3035 = vmatpush1.bf16.msra.mxu0 %v1100
    %3036 = vmatprep.subr.bf16.mxu0 %v1109
    %3037 = vmatpush1.bf16.msra.mxu0 %v1108
    %3038 = vmatprep.subr.bf16.mxu0 %v1117
    %3039 = vmatpush1.bf16.msra.mxu0 %v1116
    %3040 = vmatprep.mubr.bf16.mxu0 %v2718
    %3041 = vmatmul.mubr.bf16.gmra.mrb[0].mxu0 %v2717
    %v3042 = vpop.f32.mrb[0].mxu0
    %v3043 = vadd.f32 %v2879, %v3042
    %v3044 = vpop.f32.mrb[0].mxu0
    %v3045 = vadd.f32 %v2881, %v3044
    %v3046 = vpop.f32.mrb[0].mxu0
    %v3047 = vpop.f32.mrb[0].mxu0
    %3048 = vdwg.mxu0
    %v3049 = vadd.f32 %v2920, %v2428
    %v3050 = vadd.f32 %v2922, %v2432
    %v3051 = vadd.f32 %v2961, %v2436
    %v3052 = vadd.f32 %v2963, %v2440
    %v3053 = vadd.f32 %v3002, %v2444
    %v3054 = vadd.f32 %v3004, %v2448
    %v3055 = vadd.f32 %v3043, %v2452
    %v3056 = vadd.f32 %v3045, %v2456
    %v3057 = vmul.f32 %v3049, 0.5
    %v3058 = vmul.f32 %v3050, 0.5
    %v3059 = vtanh.pop %v3057
    %v3060 = vtanh.pop %v3058
    %v3061 = vadd.f32 %v3059, 1.0
    %v3062 = vadd.f32 %v3060, 1.0
    %v3063 = vmul.f32 %v3061, 0.5
    %v3064 = vmul.f32 %v3062, 0.5
    %v3065 = vmul.f32 %v3051, 0.5
    %v3066 = vmul.f32 %v3052, 0.5
    %v3067 = vtanh.pop %v3065
    %v3068 = vtanh.pop %v3066
    %v3069 = vadd.f32 %v3067, 1.0
    %v3070 = vadd.f32 %v3068, 1.0
    %v3071 = vmul.f32 %v3069, 0.5
    %v3072 = vmul.f32 %v3070, 0.5
    %v3073 = vtanh.pop %v3053
    %v3074 = vtanh.pop %v3054
    %v3075 = vmul.f32 %v3055, 0.5
    %v3076 = vmul.f32 %v3056, 0.5
    %v3077 = vtanh.pop %v3075
    %v3078 = vtanh.pop %v3076
    %v3079 = vadd.f32 %v3077, 1.0
    %v3080 = vadd.f32 %v3078, 1.0
    %v3081 = vmul.f32 %v3079, 0.5
    %v3082 = vmul.f32 %v3080, 0.5
    %v3083 = vmul.f32 %v3071, %v2503
    %v3084 = vmul.f32 %v3072, %v2504
    %v3085 = vmul.f32 %v3063, %v3073
    %v3086 = vmul.f32 %v3064, %v3074
    %v3087 = vadd.f32 %v3083, %v3085
    %v3088 = vadd.f32 %v3084, %v3086
    %v3089 = vtanh.pop %v3087
    %v3090 = vtanh.pop %v3088
    %v3091 = vmul.f32 %v3081, %v3089
    %v3092 = vmul.f32 %v3082, %v3090
    %3093 = vmatprep.subr.bf16.mxu0 %v1631
    %3094 = vmatpush1.bf16.msra.mxu0 %v1630
    %3095 = vmatprep.subr.bf16.mxu0 %v1639
    %3096 = vmatpush1.bf16.msra.mxu0 %v1638
    %3097 = vmatprep.subr.bf16.mxu0 %v1647
    %3098 = vmatpush1.bf16.msra.mxu0 %v1646
    %3099 = vmatprep.subr.bf16.mxu0 %v1655
    %3100 = vmatpush1.bf16.msra.mxu0 %v1654
    %3101 = vmatprep.subr.bf16.mxu0 %v1663
    %3102 = vmatpush1.bf16.msra.mxu0 %v1662
    %3103 = vmatprep.subr.bf16.mxu0 %v1671
    %3104 = vmatpush1.bf16.msra.mxu0 %v1670
    %3105 = vmatprep.subr.bf16.mxu0 %v1679
    %3106 = vmatpush1.bf16.msra.mxu0 %v1678
    %3107 = vmatprep.subr.bf16.mxu0 %v1687
    %3108 = vmatpush1.bf16.msra.mxu0 %v1686
    %3109 = vmatprep.subr.bf16.mxu0 %v1695
    %3110 = vmatpush1.bf16.msra.mxu0 %v1694
    %3111 = vmatprep.subr.bf16.mxu0 %v1703
    %3112 = vmatpush1.bf16.msra.mxu0 %v1702
    %3113 = vmatprep.subr.bf16.mxu0 %v1711
    %3114 = vmatpush1.bf16.msra.mxu0 %v1710
    %3115 = vmatprep.subr.bf16.mxu0 %v1719
    %3116 = vmatpush1.bf16.msra.mxu0 %v1718
    %3117 = vmatprep.subr.bf16.mxu0 %v1727
    %3118 = vmatpush1.bf16.msra.mxu0 %v1726
    %3119 = vmatprep.subr.bf16.mxu0 %v1735
    %3120 = vmatpush1.bf16.msra.mxu0 %v1734
    %3121 = vmatprep.subr.bf16.mxu0 %v1743
    %3122 = vmatpush1.bf16.msra.mxu0 %v1742
    %3123 = vmatprep.subr.bf16.mxu0 %v1751
    %3124 = vmatpush1.bf16.msra.mxu0 %v1750
    %3125 = vmatprep.mubr.bf16.mxu0 %v2718
    %3126 = vmatmul.mubr.bf16.gmra.mrb[0].mxu0 %v2717
    %v3127 = vpop.f32.mrb[0].mxu0
    %v3128 = vadd.f32 0.0, %v3127
    %v3129 = vpop.f32.mrb[0].mxu0
    %v3130 = vadd.f32 0.0, %v3129
    %v3131 = vpop.f32.mrb[0].mxu0
    %v3132 = vpop.f32.mrb[0].mxu0
    %3133 = vdwg.mxu0
    %3134 = vmatprep.subr.bf16.mxu0 %v1633
    %3135 = vmatpush1.bf16.msra.mxu0 %v1632
    %3136 = vmatprep.subr.bf16.mxu0 %v1641
    %3137 = vmatpush1.bf16.msra.mxu0 %v1640
    %3138 = vmatprep.subr.bf16.mxu0 %v1649
    %3139 = vmatpush1.bf16.msra.mxu0 %v1648
    %3140 = vmatprep.subr.bf16.mxu0 %v1657
    %3141 = vmatpush1.bf16.msra.mxu0 %v1656
    %3142 = vmatprep.subr.bf16.mxu0 %v1665
    %3143 = vmatpush1.bf16.msra.mxu0 %v1664
    %3144 = vmatprep.subr.bf16.mxu0 %v1673
    %3145 = vmatpush1.bf16.msra.mxu0 %v1672
    %3146 = vmatprep.subr.bf16.mxu0 %v1681
    %3147 = vmatpush1.bf16.msra.mxu0 %v1680
    %3148 = vmatprep.subr.bf16.mxu0 %v1689
    %3149 = vmatpush1.bf16.msra.mxu0 %v1688
    %3150 = vmatprep.subr.bf16.mxu0 %v1697
    %3151 = vmatpush1.bf16.msra.mxu0 %v1696
    %3152 = vmatprep.subr.bf16.mxu0 %v1705
    %3153 = vmatpush1.bf16.msra.mxu0 %v1704
    %3154 = vmatprep.subr.bf16.mxu0 %v1713
    %3155 = vmatpush1.bf16.msra.mxu0 %v1712
    %3156 = vmatprep.subr.bf16.mxu0 %v1721
    %3157 = vmatpush1.bf16.msra.mxu0 %v1720
    %3158 = vmatprep.subr.bf16.mxu0 %v1729
    %3159 = vmatpush1.bf16.msra.mxu0 %v1728
    %3160 = vmatprep.subr.bf16.mxu0 %v1737
    %3161 = vmatpush1.bf16.msra.mxu0 %v1736
    %3162 = vmatprep.subr.bf16.mxu0 %v1745
    %3163 = vmatpush1.bf16.msra.mxu0 %v1744
    %3164 = vmatprep.subr.bf16.mxu0 %v1753
    %3165 = vmatpush1.bf16.msra.mxu0 %v1752
    %3166 = vmatprep.mubr.bf16.mxu0 %v2718
    %3167 = vmatmul.mubr.bf16.gmra.mrb[0].mxu0 %v2717
    %v3168 = vpop.f32.mrb[0].mxu0
    %v3169 = vadd.f32 0.0, %v3168
    %v3170 = vpop.f32.mrb[0].mxu0
    %v3171 = vadd.f32 0.0, %v3170
    %v3172 = vpop.f32.mrb[0].mxu0
    %v3173 = vpop.f32.mrb[0].mxu0
    %3174 = vdwg.mxu0
    %3175 = vmatprep.subr.bf16.mxu0 %v1635
    %3176 = vmatpush1.bf16.msra.mxu0 %v1634
    %3177 = vmatprep.subr.bf16.mxu0 %v1643
    %3178 = vmatpush1.bf16.msra.mxu0 %v1642
    %3179 = vmatprep.subr.bf16.mxu0 %v1651
    %3180 = vmatpush1.bf16.msra.mxu0 %v1650
    %3181 = vmatprep.subr.bf16.mxu0 %v1659
    %3182 = vmatpush1.bf16.msra.mxu0 %v1658
    %3183 = vmatprep.subr.bf16.mxu0 %v1667
    %3184 = vmatpush1.bf16.msra.mxu0 %v1666
    %3185 = vmatprep.subr.bf16.mxu0 %v1675
    %3186 = vmatpush1.bf16.msra.mxu0 %v1674
    %3187 = vmatprep.subr.bf16.mxu0 %v1683
    %3188 = vmatpush1.bf16.msra.mxu0 %v1682
    %3189 = vmatprep.subr.bf16.mxu0 %v1691
    %3190 = vmatpush1.bf16.msra.mxu0 %v1690
    %3191 = vmatprep.subr.bf16.mxu0 %v1699
    %3192 = vmatpush1.bf16.msra.mxu0 %v1698
    %3193 = vmatprep.subr.bf16.mxu0 %v1707
    %3194 = vmatpush1.bf16.msra.mxu0 %v1706
    %3195 = vmatprep.subr.bf16.mxu0 %v1715
    %3196 = vmatpush1.bf16.msra.mxu0 %v1714
    %3197 = vmatprep.subr.bf16.mxu0 %v1723
    %3198 = vmatpush1.bf16.msra.mxu0 %v1722
    %3199 = vmatprep.subr.bf16.mxu0 %v1731
    %3200 = vmatpush1.bf16.msra.mxu0 %v1730
    %3201 = vmatprep.subr.bf16.mxu0 %v1739
    %3202 = vmatpush1.bf16.msra.mxu0 %v1738
    %3203 = vmatprep.subr.bf16.mxu0 %v1747
    %3204 = vmatpush1.bf16.msra.mxu0 %v1746
    %3205 = vmatprep.subr.bf16.mxu0 %v1755
    %3206 = vmatpush1.bf16.msra.mxu0 %v1754
    %3207 = vmatprep.mubr.bf16.mxu0 %v2718
    %3208 = vmatmul.mubr.bf16.gmra.mrb[0].mxu0 %v2717
    %v3209 = vpop.f32.mrb[0].mxu0
    %v3210 = vadd.f32 0.0, %v3209
    %v3211 = vpop.f32.mrb[0].mxu0
    %v3212 = vadd.f32 0.0, %v3211
    %v3213 = vpop.f32.mrb[0].mxu0
    %v3214 = vpop.f32.mrb[0].mxu0
    %3215 = vdwg.mxu0
    %3216 = vmatprep.subr.bf16.mxu0 %v1637
    %3217 = vmatpush1.bf16.msra.mxu0 %v1636
    %3218 = vmatprep.subr.bf16.mxu0 %v1645
    %3219 = vmatpush1.bf16.msra.mxu0 %v1644
    %3220 = vmatprep.subr.bf16.mxu0 %v1653
    %3221 = vmatpush1.bf16.msra.mxu0 %v1652
    %3222 = vmatprep.subr.bf16.mxu0 %v1661
    %3223 = vmatpush1.bf16.msra.mxu0 %v1660
    %3224 = vmatprep.subr.bf16.mxu0 %v1669
    %3225 = vmatpush1.bf16.msra.mxu0 %v1668
    %3226 = vmatprep.subr.bf16.mxu0 %v1677
    %3227 = vmatpush1.bf16.msra.mxu0 %v1676
    %3228 = vmatprep.subr.bf16.mxu0 %v1685
    %3229 = vmatpush1.bf16.msra.mxu0 %v1684
    %3230 = vmatprep.subr.bf16.mxu0 %v1693
    %3231 = vmatpush1.bf16.msra.mxu0 %v1692
    %3232 = vmatprep.subr.bf16.mxu0 %v1701
    %3233 = vmatpush1.bf16.msra.mxu0 %v1700
    %3234 = vmatprep.subr.bf16.mxu0 %v1709
    %3235 = vmatpush1.bf16.msra.mxu0 %v1708
    %3236 = vmatprep.subr.bf16.mxu0 %v1717
    %3237 = vmatpush1.bf16.msra.mxu0 %v1716
    %3238 = vmatprep.subr.bf16.mxu0 %v1725
    %3239 = vmatpush1.bf16.msra.mxu0 %v1724
    %3240 = vmatprep.subr.bf16.mxu0 %v1733
    %3241 = vmatpush1.bf16.msra.mxu0 %v1732
    %3242 = vmatprep.subr.bf16.mxu0 %v1741
    %3243 = vmatpush1.bf16.msra.mxu0 %v1740
    %3244 = vmatprep.subr.bf16.mxu0 %v1749
    %3245 = vmatpush1.bf16.msra.mxu0 %v1748
    %3246 = vmatprep.subr.bf16.mxu0 %v1757
    %3247 = vmatpush1.bf16.msra.mxu0 %v1756
    %3248 = vmatprep.mubr.bf16.mxu0 %v2718
    %3249 = vmatmul.mubr.bf16.gmra.mrb[0].mxu0 %v2717
    %v3250 = vpop.f32.mrb[0].mxu0
    %v3251 = vadd.f32 0.0, %v3250
    %v3252 = vpop.f32.mrb[0].mxu0
    %v3253 = vadd.f32 0.0, %v3252
    %v3254 = vpop.f32.mrb[0].mxu0
    %v3255 = vpop.f32.mrb[0].mxu0
    %3256 = vdwg.mxu0
    %v3257 = vadd.f32 %v610, %v3128
    %v3258 = vadd.f32 %v612, %v3130
    %v3259 = vadd.f32 %v683, %v3169
    %v3260 = vadd.f32 %v685, %v3171
    %v3261 = vadd.f32 %v756, %v3210
    %v3262 = vadd.f32 %v758, %v3212
    %v3263 = vadd.f32 %v829, %v3251
    %v3264 = vadd.f32 %v831, %v3253
    %v3265 = vmul.f32 %v3257, 0.5
    %v3266 = vmul.f32 %v3258, 0.5
    %v3267 = vtanh.pop %v3265
    %v3268 = vtanh.pop %v3266
    %v3269 = vadd.f32 %v3267, 1.0
    %v3270 = vadd.f32 %v3268, 1.0
    %v3271 = vmul.f32 %v3269, 0.5
    %v3272 = vmul.f32 %v3270, 0.5
    %v3273 = vmul.f32 %v3259, 0.5
    %v3274 = vmul.f32 %v3260, 0.5
    %v3275 = vtanh.pop %v3273
    %v3276 = vtanh.pop %v3274
    %v3277 = vadd.f32 %v3275, 1.0
    %v3278 = vadd.f32 %v3276, 1.0
    %v3279 = vmul.f32 %v3277, 0.5
    %v3280 = vmul.f32 %v3278, 0.5
    %v3281 = vtanh.pop %v3261
    %v3282 = vtanh.pop %v3262
    %v3283 = vmul.f32 %v3263, 0.5
    %v3284 = vmul.f32 %v3264, 0.5
    %v3285 = vtanh.pop %v3283
    %v3286 = vtanh.pop %v3284
    %v3287 = vadd.f32 %v3285, 1.0
    %v3288 = vadd.f32 %v3286, 1.0
    %v3289 = vmul.f32 %v3287, 0.5
    %v3290 = vmul.f32 %v3288, 0.5
    %v3291 = vmul.f32 %v3279, %v2711
    %v3292 = vmul.f32 %v3280, %v2712
    %v3293 = vmul.f32 %v3271, %v3281
    %v3294 = vmul.f32 %v3272, %v3282
    %v3295 = vadd.f32 %v3291, %v3293
    %v3296 = vadd.f32 %v3292, %v3294
    %v3297 = vtanh.pop %v3295
    %v3298 = vtanh.pop %v3296
    %v3299 = vmul.f32 %v3289, %v3297
    %v3300 = vmul.f32 %v3290, %v3298
    %v3301 = vpack.c.bf16 %v3299, %v3299
    %v3302 = vpack.c.bf16 %v3300, %v3300
    %v3303 = vpack.c.bf16 %v3091, %v3091
    %v3304 = vpack.c.bf16 %v3092, %v3092
    %3305 = vmatprep.subr.bf16.mxu0 %v1119
    %3306 = vmatpush1.bf16.msra.mxu0 %v1118
    %3307 = vmatprep.subr.bf16.mxu0 %v1127
    %3308 = vmatpush1.bf16.msra.mxu0 %v1126
    %3309 = vmatprep.subr.bf16.mxu0 %v1135
    %3310 = vmatpush1.bf16.msra.mxu0 %v1134
    %3311 = vmatprep.subr.bf16.mxu0 %v1143
    %3312 = vmatpush1.bf16.msra.mxu0 %v1142
    %3313 = vmatprep.subr.bf16.mxu0 %v1151
    %3314 = vmatpush1.bf16.msra.mxu0 %v1150
    %3315 = vmatprep.subr.bf16.mxu0 %v1159
    %3316 = vmatpush1.bf16.msra.mxu0 %v1158
    %3317 = vmatprep.subr.bf16.mxu0 %v1167
    %3318 = vmatpush1.bf16.msra.mxu0 %v1166
    %3319 = vmatprep.subr.bf16.mxu0 %v1175
    %3320 = vmatpush1.bf16.msra.mxu0 %v1174
    %3321 = vmatprep.subr.bf16.mxu0 %v1183
    %3322 = vmatpush1.bf16.msra.mxu0 %v1182
    %3323 = vmatprep.subr.bf16.mxu0 %v1191
    %3324 = vmatpush1.bf16.msra.mxu0 %v1190
    %3325 = vmatprep.subr.bf16.mxu0 %v1199
    %3326 = vmatpush1.bf16.msra.mxu0 %v1198
    %3327 = vmatprep.subr.bf16.mxu0 %v1207
    %3328 = vmatpush1.bf16.msra.mxu0 %v1206
    %3329 = vmatprep.subr.bf16.mxu0 %v1215
    %3330 = vmatpush1.bf16.msra.mxu0 %v1214
    %3331 = vmatprep.subr.bf16.mxu0 %v1223
    %3332 = vmatpush1.bf16.msra.mxu0 %v1222
    %3333 = vmatprep.subr.bf16.mxu0 %v1231
    %3334 = vmatpush1.bf16.msra.mxu0 %v1230
    %3335 = vmatprep.subr.bf16.mxu0 %v1239
    %3336 = vmatpush1.bf16.msra.mxu0 %v1238
    %3337 = vmatprep.mubr.bf16.mxu0 %v3304
    %3338 = vmatmul.mubr.bf16.gmra.mrb[0].mxu0 %v3303
    %v3339 = vpop.f32.mrb[0].mxu0
    %v3340 = vadd.f32 0.0, %v3339
    %v3341 = vpop.f32.mrb[0].mxu0
    %v3342 = vadd.f32 0.0, %v3341
    %v3343 = vpop.f32.mrb[0].mxu0
    %v3344 = vpop.f32.mrb[0].mxu0
    %3345 = vdwg.mxu0
    %3346 = vmatprep.subr.bf16.mxu0 %v1121
    %3347 = vmatpush1.bf16.msra.mxu0 %v1120
    %3348 = vmatprep.subr.bf16.mxu0 %v1129
    %3349 = vmatpush1.bf16.msra.mxu0 %v1128
    %3350 = vmatprep.subr.bf16.mxu0 %v1137
    %3351 = vmatpush1.bf16.msra.mxu0 %v1136
    %3352 = vmatprep.subr.bf16.mxu0 %v1145
    %3353 = vmatpush1.bf16.msra.mxu0 %v1144
    %3354 = vmatprep.subr.bf16.mxu0 %v1153
    %3355 = vmatpush1.bf16.msra.mxu0 %v1152
    %3356 = vmatprep.subr.bf16.mxu0 %v1161
    %3357 = vmatpush1.bf16.msra.mxu0 %v1160
    %3358 = vmatprep.subr.bf16.mxu0 %v1169
    %3359 = vmatpush1.bf16.msra.mxu0 %v1168
    %3360 = vmatprep.subr.bf16.mxu0 %v1177
    %3361 = vmatpush1.bf16.msra.mxu0 %v1176
    %3362 = vmatprep.subr.bf16.mxu0 %v1185
    %3363 = vmatpush1.bf16.msra.mxu0 %v1184
    %3364 = vmatprep.subr.bf16.mxu0 %v1193
    %3365 = vmatpush1.bf16.msra.mxu0 %v1192
    %3366 = vmatprep.subr.bf16.mxu0 %v1201
    %3367 = vmatpush1.bf16.msra.mxu0 %v1200
    %3368 = vmatprep.subr.bf16.mxu0 %v1209
    %3369 = vmatpush1.bf16.msra.mxu0 %v1208
    %3370 = vmatprep.subr.bf16.mxu0 %v1217
    %3371 = vmatpush1.bf16.msra.mxu0 %v1216
    %3372 = vmatprep.subr.bf16.mxu0 %v1225
    %3373 = vmatpush1.bf16.msra.mxu0 %v1224
    %3374 = vmatprep.subr.bf16.mxu0 %v1233
    %3375 = vmatpush1.bf16.msra.mxu0 %v1232
    %3376 = vmatprep.subr.bf16.mxu0 %v1241
    %3377 = vmatpush1.bf16.msra.mxu0 %v1240
    %3378 = vmatprep.mubr.bf16.mxu0 %v3304
    %3379 = vmatmul.mubr.bf16.gmra.mrb[0].mxu0 %v3303
    %v3380 = vpop.f32.mrb[0].mxu0
    %v3381 = vadd.f32 0.0, %v3380
    %v3382 = vpop.f32.mrb[0].mxu0
    %v3383 = vadd.f32 0.0, %v3382
    %v3384 = vpop.f32.mrb[0].mxu0
    %v3385 = vpop.f32.mrb[0].mxu0
    %3386 = vdwg.mxu0
    %3387 = vmatprep.subr.bf16.mxu0 %v1123
    %3388 = vmatpush1.bf16.msra.mxu0 %v1122
    %3389 = vmatprep.subr.bf16.mxu0 %v1131
    %3390 = vmatpush1.bf16.msra.mxu0 %v1130
    %3391 = vmatprep.subr.bf16.mxu0 %v1139
    %3392 = vmatpush1.bf16.msra.mxu0 %v1138
    %3393 = vmatprep.subr.bf16.mxu0 %v1147
    %3394 = vmatpush1.bf16.msra.mxu0 %v1146
    %3395 = vmatprep.subr.bf16.mxu0 %v1155
    %3396 = vmatpush1.bf16.msra.mxu0 %v1154
    %3397 = vmatprep.subr.bf16.mxu0 %v1163
    %3398 = vmatpush1.bf16.msra.mxu0 %v1162
    %3399 = vmatprep.subr.bf16.mxu0 %v1171
    %3400 = vmatpush1.bf16.msra.mxu0 %v1170
    %3401 = vmatprep.subr.bf16.mxu0 %v1179
    %3402 = vmatpush1.bf16.msra.mxu0 %v1178
    %3403 = vmatprep.subr.bf16.mxu0 %v1187
    %3404 = vmatpush1.bf16.msra.mxu0 %v1186
    %3405 = vmatprep.subr.bf16.mxu0 %v1195
    %3406 = vmatpush1.bf16.msra.mxu0 %v1194
    %3407 = vmatprep.subr.bf16.mxu0 %v1203
    %3408 = vmatpush1.bf16.msra.mxu0 %v1202
    %3409 = vmatprep.subr.bf16.mxu0 %v1211
    %3410 = vmatpush1.bf16.msra.mxu0 %v1210
    %3411 = vmatprep.subr.bf16.mxu0 %v1219
    %3412 = vmatpush1.bf16.msra.mxu0 %v1218
    %3413 = vmatprep.subr.bf16.mxu0 %v1227
    %3414 = vmatpush1.bf16.msra.mxu0 %v1226
    %3415 = vmatprep.subr.bf16.mxu0 %v1235
    %3416 = vmatpush1.bf16.msra.mxu0 %v1234
    %3417 = vmatprep.subr.bf16.mxu0 %v1243
    %3418 = vmatpush1.bf16.msra.mxu0 %v1242
    %3419 = vmatprep.mubr.bf16.mxu0 %v3304
    %3420 = vmatmul.mubr.bf16.gmra.mrb[0].mxu0 %v3303
    %v3421 = vpop.f32.mrb[0].mxu0
    %v3422 = vadd.f32 0.0, %v3421
    %v3423 = vpop.f32.mrb[0].mxu0
    %v3424 = vadd.f32 0.0, %v3423
    %v3425 = vpop.f32.mrb[0].mxu0
    %v3426 = vpop.f32.mrb[0].mxu0
    %3427 = vdwg.mxu0
    %3428 = vmatprep.subr.bf16.mxu0 %v1125
    %3429 = vmatpush1.bf16.msra.mxu0 %v1124
    %3430 = vmatprep.subr.bf16.mxu0 %v1133
    %3431 = vmatpush1.bf16.msra.mxu0 %v1132
    %3432 = vmatprep.subr.bf16.mxu0 %v1141
    %3433 = vmatpush1.bf16.msra.mxu0 %v1140
    %3434 = vmatprep.subr.bf16.mxu0 %v1149
    %3435 = vmatpush1.bf16.msra.mxu0 %v1148
    %3436 = vmatprep.subr.bf16.mxu0 %v1157
    %3437 = vmatpush1.bf16.msra.mxu0 %v1156
    %3438 = vmatprep.subr.bf16.mxu0 %v1165
    %3439 = vmatpush1.bf16.msra.mxu0 %v1164
    %3440 = vmatprep.subr.bf16.mxu0 %v1173
    %3441 = vmatpush1.bf16.msra.mxu0 %v1172
    %3442 = vmatprep.subr.bf16.mxu0 %v1181
    %3443 = vmatpush1.bf16.msra.mxu0 %v1180
    %3444 = vmatprep.subr.bf16.mxu0 %v1189
    %3445 = vmatpush1.bf16.msra.mxu0 %v1188
    %3446 = vmatprep.subr.bf16.mxu0 %v1197
    %3447 = vmatpush1.bf16.msra.mxu0 %v1196
    %3448 = vmatprep.subr.bf16.mxu0 %v1205
    %3449 = vmatpush1.bf16.msra.mxu0 %v1204
    %3450 = vmatprep.subr.bf16.mxu0 %v1213
    %3451 = vmatpush1.bf16.msra.mxu0 %v1212
    %3452 = vmatprep.subr.bf16.mxu0 %v1221
    %3453 = vmatpush1.bf16.msra.mxu0 %v1220
    %3454 = vmatprep.subr.bf16.mxu0 %v1229
    %3455 = vmatpush1.bf16.msra.mxu0 %v1228
    %3456 = vmatprep.subr.bf16.mxu0 %v1237
    %3457 = vmatpush1.bf16.msra.mxu0 %v1236
    %3458 = vmatprep.subr.bf16.mxu0 %v1245
    %3459 = vmatpush1.bf16.msra.mxu0 %v1244
    %3460 = vmatprep.mubr.bf16.mxu0 %v3304
    %3461 = vmatmul.mubr.bf16.gmra.mrb[0].mxu0 %v3303
    %v3462 = vpop.f32.mrb[0].mxu0
    %v3463 = vadd.f32 0.0, %v3462
    %v3464 = vpop.f32.mrb[0].mxu0
    %v3465 = vadd.f32 0.0, %v3464
    %v3466 = vpop.f32.mrb[0].mxu0
    %v3467 = vpop.f32.mrb[0].mxu0
    %3468 = vdwg.mxu0
    %3469 = vmatprep.subr.bf16.mxu0 %v991
    %3470 = vmatpush1.bf16.msra.mxu0 %v990
    %3471 = vmatprep.subr.bf16.mxu0 %v999
    %3472 = vmatpush1.bf16.msra.mxu0 %v998
    %3473 = vmatprep.subr.bf16.mxu0 %v1007
    %3474 = vmatpush1.bf16.msra.mxu0 %v1006
    %3475 = vmatprep.subr.bf16.mxu0 %v1015
    %3476 = vmatpush1.bf16.msra.mxu0 %v1014
    %3477 = vmatprep.subr.bf16.mxu0 %v1023
    %3478 = vmatpush1.bf16.msra.mxu0 %v1022
    %3479 = vmatprep.subr.bf16.mxu0 %v1031
    %3480 = vmatpush1.bf16.msra.mxu0 %v1030
    %3481 = vmatprep.subr.bf16.mxu0 %v1039
    %3482 = vmatpush1.bf16.msra.mxu0 %v1038
    %3483 = vmatprep.subr.bf16.mxu0 %v1047
    %3484 = vmatpush1.bf16.msra.mxu0 %v1046
    %3485 = vmatprep.subr.bf16.mxu0 %v1055
    %3486 = vmatpush1.bf16.msra.mxu0 %v1054
    %3487 = vmatprep.subr.bf16.mxu0 %v1063
    %3488 = vmatpush1.bf16.msra.mxu0 %v1062
    %3489 = vmatprep.subr.bf16.mxu0 %v1071
    %3490 = vmatpush1.bf16.msra.mxu0 %v1070
    %3491 = vmatprep.subr.bf16.mxu0 %v1079
    %3492 = vmatpush1.bf16.msra.mxu0 %v1078
    %3493 = vmatprep.subr.bf16.mxu0 %v1087
    %3494 = vmatpush1.bf16.msra.mxu0 %v1086
    %3495 = vmatprep.subr.bf16.mxu0 %v1095
    %3496 = vmatpush1.bf16.msra.mxu0 %v1094
    %3497 = vmatprep.subr.bf16.mxu0 %v1103
    %3498 = vmatpush1.bf16.msra.mxu0 %v1102
    %3499 = vmatprep.subr.bf16.mxu0 %v1111
    %3500 = vmatpush1.bf16.msra.mxu0 %v1110
    %3501 = vmatprep.mubr.bf16.mxu0 %v3302
    %3502 = vmatmul.mubr.bf16.gmra.mrb[0].mxu0 %v3301
    %v3503 = vpop.f32.mrb[0].mxu0
    %v3504 = vadd.f32 %v3340, %v3503
    %v3505 = vpop.f32.mrb[0].mxu0
    %v3506 = vadd.f32 %v3342, %v3505
    %v3507 = vpop.f32.mrb[0].mxu0
    %v3508 = vpop.f32.mrb[0].mxu0
    %3509 = vdwg.mxu0
    %3510 = vmatprep.subr.bf16.mxu0 %v993
    %3511 = vmatpush1.bf16.msra.mxu0 %v992
    %3512 = vmatprep.subr.bf16.mxu0 %v1001
    %3513 = vmatpush1.bf16.msra.mxu0 %v1000
    %3514 = vmatprep.subr.bf16.mxu0 %v1009
    %3515 = vmatpush1.bf16.msra.mxu0 %v1008
    %3516 = vmatprep.subr.bf16.mxu0 %v1017
    %3517 = vmatpush1.bf16.msra.mxu0 %v1016
    %3518 = vmatprep.subr.bf16.mxu0 %v1025
    %3519 = vmatpush1.bf16.msra.mxu0 %v1024
    %3520 = vmatprep.subr.bf16.mxu0 %v1033
    %3521 = vmatpush1.bf16.msra.mxu0 %v1032
    %3522 = vmatprep.subr.bf16.mxu0 %v1041
    %3523 = vmatpush1.bf16.msra.mxu0 %v1040
    %3524 = vmatprep.subr.bf16.mxu0 %v1049
    %3525 = vmatpush1.bf16.msra.mxu0 %v1048
    %3526 = vmatprep.subr.bf16.mxu0 %v1057
    %3527 = vmatpush1.bf16.msra.mxu0 %v1056
    %3528 = vmatprep.subr.bf16.mxu0 %v1065
    %3529 = vmatpush1.bf16.msra.mxu0 %v1064
    %3530 = vmatprep.subr.bf16.mxu0 %v1073
    %3531 = vmatpush1.bf16.msra.mxu0 %v1072
    %3532 = vmatprep.subr.bf16.mxu0 %v1081
    %3533 = vmatpush1.bf16.msra.mxu0 %v1080
    %3534 = vmatprep.subr.bf16.mxu0 %v1089
    %3535 = vmatpush1.bf16.msra.mxu0 %v1088
    %3536 = vmatprep.subr.bf16.mxu0 %v1097
    %3537 = vmatpush1.bf16.msra.mxu0 %v1096
    %3538 = vmatprep.subr.bf16.mxu0 %v1105
    %3539 = vmatpush1.bf16.msra.mxu0 %v1104
    %3540 = vmatprep.subr.bf16.mxu0 %v1113
    %3541 = vmatpush1.bf16.msra.mxu0 %v1112
    %3542 = vmatprep.mubr.bf16.mxu0 %v3302
    %3543 = vmatmul.mubr.bf16.gmra.mrb[0].mxu0 %v3301
    %v3544 = vpop.f32.mrb[0].mxu0
    %v3545 = vadd.f32 %v3381, %v3544
    %v3546 = vpop.f32.mrb[0].mxu0
    %v3547 = vadd.f32 %v3383, %v3546
    %v3548 = vpop.f32.mrb[0].mxu0
    %v3549 = vpop.f32.mrb[0].mxu0
    %3550 = vdwg.mxu0
    %3551 = vmatprep.subr.bf16.mxu0 %v995
    %3552 = vmatpush1.bf16.msra.mxu0 %v994
    %3553 = vmatprep.subr.bf16.mxu0 %v1003
    %3554 = vmatpush1.bf16.msra.mxu0 %v1002
    %3555 = vmatprep.subr.bf16.mxu0 %v1011
    %3556 = vmatpush1.bf16.msra.mxu0 %v1010
    %3557 = vmatprep.subr.bf16.mxu0 %v1019
    %3558 = vmatpush1.bf16.msra.mxu0 %v1018
    %3559 = vmatprep.subr.bf16.mxu0 %v1027
    %3560 = vmatpush1.bf16.msra.mxu0 %v1026
    %3561 = vmatprep.subr.bf16.mxu0 %v1035
    %3562 = vmatpush1.bf16.msra.mxu0 %v1034
    %3563 = vmatprep.subr.bf16.mxu0 %v1043
    %3564 = vmatpush1.bf16.msra.mxu0 %v1042
    %3565 = vmatprep.subr.bf16.mxu0 %v1051
    %3566 = vmatpush1.bf16.msra.mxu0 %v1050
    %3567 = vmatprep.subr.bf16.mxu0 %v1059
    %3568 = vmatpush1.bf16.msra.mxu0 %v1058
    %3569 = vmatprep.subr.bf16.mxu0 %v1067
    %3570 = vmatpush1.bf16.msra.mxu0 %v1066
    %3571 = vmatprep.subr.bf16.mxu0 %v1075
    %3572 = vmatpush1.bf16.msra.mxu0 %v1074
    %3573 = vmatprep.subr.bf16.mxu0 %v1083
    %3574 = vmatpush1.bf16.msra.mxu0 %v1082
    %3575 = vmatprep.subr.bf16.mxu0 %v1091
    %3576 = vmatpush1.bf16.msra.mxu0 %v1090
    %3577 = vmatprep.subr.bf16.mxu0 %v1099
    %3578 = vmatpush1.bf16.msra.mxu0 %v1098
    %3579 = vmatprep.subr.bf16.mxu0 %v1107
    %3580 = vmatpush1.bf16.msra.mxu0 %v1106
    %3581 = vmatprep.subr.bf16.mxu0 %v1115
    %3582 = vmatpush1.bf16.msra.mxu0 %v1114
    %3583 = vmatprep.mubr.bf16.mxu0 %v3302
    %3584 = vmatmul.mubr.bf16.gmra.mrb[0].mxu0 %v3301
    %v3585 = vpop.f32.mrb[0].mxu0
    %v3586 = vadd.f32 %v3422, %v3585
    %v3587 = vpop.f32.mrb[0].mxu0
    %v3588 = vadd.f32 %v3424, %v3587
    %v3589 = vpop.f32.mrb[0].mxu0
    %v3590 = vpop.f32.mrb[0].mxu0
    %3591 = vdwg.mxu0
    %3592 = vmatprep.subr.bf16.mxu0 %v997
    %3593 = vmatpush1.bf16.msra.mxu0 %v996
    %3594 = vmatprep.subr.bf16.mxu0 %v1005
    %3595 = vmatpush1.bf16.msra.mxu0 %v1004
    %3596 = vmatprep.subr.bf16.mxu0 %v1013
    %3597 = vmatpush1.bf16.msra.mxu0 %v1012
    %3598 = vmatprep.subr.bf16.mxu0 %v1021
    %3599 = vmatpush1.bf16.msra.mxu0 %v1020
    %3600 = vmatprep.subr.bf16.mxu0 %v1029
    %3601 = vmatpush1.bf16.msra.mxu0 %v1028
    %3602 = vmatprep.subr.bf16.mxu0 %v1037
    %3603 = vmatpush1.bf16.msra.mxu0 %v1036
    %3604 = vmatprep.subr.bf16.mxu0 %v1045
    %3605 = vmatpush1.bf16.msra.mxu0 %v1044
    %3606 = vmatprep.subr.bf16.mxu0 %v1053
    %3607 = vmatpush1.bf16.msra.mxu0 %v1052
    %3608 = vmatprep.subr.bf16.mxu0 %v1061
    %3609 = vmatpush1.bf16.msra.mxu0 %v1060
    %3610 = vmatprep.subr.bf16.mxu0 %v1069
    %3611 = vmatpush1.bf16.msra.mxu0 %v1068
    %3612 = vmatprep.subr.bf16.mxu0 %v1077
    %3613 = vmatpush1.bf16.msra.mxu0 %v1076
    %3614 = vmatprep.subr.bf16.mxu0 %v1085
    %3615 = vmatpush1.bf16.msra.mxu0 %v1084
    %3616 = vmatprep.subr.bf16.mxu0 %v1093
    %3617 = vmatpush1.bf16.msra.mxu0 %v1092
    %3618 = vmatprep.subr.bf16.mxu0 %v1101
    %3619 = vmatpush1.bf16.msra.mxu0 %v1100
    %3620 = vmatprep.subr.bf16.mxu0 %v1109
    %3621 = vmatpush1.bf16.msra.mxu0 %v1108
    %3622 = vmatprep.subr.bf16.mxu0 %v1117
    %3623 = vmatpush1.bf16.msra.mxu0 %v1116
    %3624 = vmatprep.mubr.bf16.mxu0 %v3302
    %3625 = vmatmul.mubr.bf16.gmra.mrb[0].mxu0 %v3301
    %v3626 = vpop.f32.mrb[0].mxu0
    %v3627 = vadd.f32 %v3463, %v3626
    %v3628 = vpop.f32.mrb[0].mxu0
    %v3629 = vadd.f32 %v3465, %v3628
    %v3630 = vpop.f32.mrb[0].mxu0
    %v3631 = vpop.f32.mrb[0].mxu0
    %3632 = vdwg.mxu0
    %v3633 = vadd.f32 %v3504, %v2428
    %v3634 = vadd.f32 %v3506, %v2432
    %v3635 = vadd.f32 %v3545, %v2436
    %v3636 = vadd.f32 %v3547, %v2440
    %v3637 = vadd.f32 %v3586, %v2444
    %v3638 = vadd.f32 %v3588, %v2448
    %v3639 = vadd.f32 %v3627, %v2452
    %v3640 = vadd.f32 %v3629, %v2456
    %v3641 = vmul.f32 %v3633, 0.5
    %v3642 = vmul.f32 %v3634, 0.5
    %v3643 = vtanh.pop %v3641
    %v3644 = vtanh.pop %v3642
    %v3645 = vadd.f32 %v3643, 1.0
    %v3646 = vadd.f32 %v3644, 1.0
    %v3647 = vmul.f32 %v3645, 0.5
    %v3648 = vmul.f32 %v3646, 0.5
    %v3649 = vmul.f32 %v3635, 0.5
    %v3650 = vmul.f32 %v3636, 0.5
    %v3651 = vtanh.pop %v3649
    %v3652 = vtanh.pop %v3650
    %v3653 = vadd.f32 %v3651, 1.0
    %v3654 = vadd.f32 %v3652, 1.0
    %v3655 = vmul.f32 %v3653, 0.5
    %v3656 = vmul.f32 %v3654, 0.5
    %v3657 = vtanh.pop %v3637
    %v3658 = vtanh.pop %v3638
    %v3659 = vmul.f32 %v3639, 0.5
    %v3660 = vmul.f32 %v3640, 0.5
    %v3661 = vtanh.pop %v3659
    %v3662 = vtanh.pop %v3660
    %v3663 = vadd.f32 %v3661, 1.0
    %v3664 = vadd.f32 %v3662, 1.0
    %v3665 = vmul.f32 %v3663, 0.5
    %v3666 = vmul.f32 %v3664, 0.5
    %v3667 = vmul.f32 %v3655, %v3087
    %v3668 = vmul.f32 %v3656, %v3088
    %v3669 = vmul.f32 %v3647, %v3657
    %v3670 = vmul.f32 %v3648, %v3658
    %v3671 = vadd.f32 %v3667, %v3669
    %v3672 = vadd.f32 %v3668, %v3670
    %v3673 = vtanh.pop %v3671
    %v3674 = vtanh.pop %v3672
    %v3675 = vmul.f32 %v3665, %v3673
    %v3676 = vmul.f32 %v3666, %v3674
    %3677 = vmatprep.subr.bf16.mxu0 %v1631
    %3678 = vmatpush1.bf16.msra.mxu0 %v1630
    %3679 = vmatprep.subr.bf16.mxu0 %v1639
    %3680 = vmatpush1.bf16.msra.mxu0 %v1638
    %3681 = vmatprep.subr.bf16.mxu0 %v1647
    %3682 = vmatpush1.bf16.msra.mxu0 %v1646
    %3683 = vmatprep.subr.bf16.mxu0 %v1655
    %3684 = vmatpush1.bf16.msra.mxu0 %v1654
    %3685 = vmatprep.subr.bf16.mxu0 %v1663
    %3686 = vmatpush1.bf16.msra.mxu0 %v1662
    %3687 = vmatprep.subr.bf16.mxu0 %v1671
    %3688 = vmatpush1.bf16.msra.mxu0 %v1670
    %3689 = vmatprep.subr.bf16.mxu0 %v1679
    %3690 = vmatpush1.bf16.msra.mxu0 %v1678
    %3691 = vmatprep.subr.bf16.mxu0 %v1687
    %3692 = vmatpush1.bf16.msra.mxu0 %v1686
    %3693 = vmatprep.subr.bf16.mxu0 %v1695
    %3694 = vmatpush1.bf16.msra.mxu0 %v1694
    %3695 = vmatprep.subr.bf16.mxu0 %v1703
    %3696 = vmatpush1.bf16.msra.mxu0 %v1702
    %3697 = vmatprep.subr.bf16.mxu0 %v1711
    %3698 = vmatpush1.bf16.msra.mxu0 %v1710
    %3699 = vmatprep.subr.bf16.mxu0 %v1719
    %3700 = vmatpush1.bf16.msra.mxu0 %v1718
    %3701 = vmatprep.subr.bf16.mxu0 %v1727
    %3702 = vmatpush1.bf16.msra.mxu0 %v1726
    %3703 = vmatprep.subr.bf16.mxu0 %v1735
    %3704 = vmatpush1.bf16.msra.mxu0 %v1734
    %3705 = vmatprep.subr.bf16.mxu0 %v1743
    %3706 = vmatpush1.bf16.msra.mxu0 %v1742
    %3707 = vmatprep.subr.bf16.mxu0 %v1751
    %3708 = vmatpush1.bf16.msra.mxu0 %v1750
    %3709 = vmatprep.mubr.bf16.mxu0 %v3302
    %3710 = vmatmul.mubr.bf16.gmra.mrb[0].mxu0 %v3301
    %v3711 = vpop.f32.mrb[0].mxu0
    %v3712 = vadd.f32 0.0, %v3711
    %v3713 = vpop.f32.mrb[0].mxu0
    %v3714 = vadd.f32 0.0, %v3713
    %v3715 = vpop.f32.mrb[0].mxu0
    %v3716 = vpop.f32.mrb[0].mxu0
    %3717 = vdwg.mxu0
    %3718 = vmatprep.subr.bf16.mxu0 %v1633
    %3719 = vmatpush1.bf16.msra.mxu0 %v1632
    %3720 = vmatprep.subr.bf16.mxu0 %v1641
    %3721 = vmatpush1.bf16.msra.mxu0 %v1640
    %3722 = vmatprep.subr.bf16.mxu0 %v1649
    %3723 = vmatpush1.bf16.msra.mxu0 %v1648
    %3724 = vmatprep.subr.bf16.mxu0 %v1657
    %3725 = vmatpush1.bf16.msra.mxu0 %v1656
    %3726 = vmatprep.subr.bf16.mxu0 %v1665
    %3727 = vmatpush1.bf16.msra.mxu0 %v1664
    %3728 = vmatprep.subr.bf16.mxu0 %v1673
    %3729 = vmatpush1.bf16.msra.mxu0 %v1672
    %3730 = vmatprep.subr.bf16.mxu0 %v1681
    %3731 = vmatpush1.bf16.msra.mxu0 %v1680
    %3732 = vmatprep.subr.bf16.mxu0 %v1689
    %3733 = vmatpush1.bf16.msra.mxu0 %v1688
    %3734 = vmatprep.subr.bf16.mxu0 %v1697
    %3735 = vmatpush1.bf16.msra.mxu0 %v1696
    %3736 = vmatprep.subr.bf16.mxu0 %v1705
    %3737 = vmatpush1.bf16.msra.mxu0 %v1704
    %3738 = vmatprep.subr.bf16.mxu0 %v1713
    %3739 = vmatpush1.bf16.msra.mxu0 %v1712
    %3740 = vmatprep.subr.bf16.mxu0 %v1721
    %3741 = vmatpush1.bf16.msra.mxu0 %v1720
    %3742 = vmatprep.subr.bf16.mxu0 %v1729
    %3743 = vmatpush1.bf16.msra.mxu0 %v1728
    %3744 = vmatprep.subr.bf16.mxu0 %v1737
    %3745 = vmatpush1.bf16.msra.mxu0 %v1736
    %3746 = vmatprep.subr.bf16.mxu0 %v1745
    %3747 = vmatpush1.bf16.msra.mxu0 %v1744
    %3748 = vmatprep.subr.bf16.mxu0 %v1753
    %3749 = vmatpush1.bf16.msra.mxu0 %v1752
    %3750 = vmatprep.mubr.bf16.mxu0 %v3302
    %3751 = vmatmul.mubr.bf16.gmra.mrb[0].mxu0 %v3301
    %v3752 = vpop.f32.mrb[0].mxu0
    %v3753 = vadd.f32 0.0, %v3752
    %v3754 = vpop.f32.mrb[0].mxu0
    %v3755 = vadd.f32 0.0, %v3754
    %v3756 = vpop.f32.mrb[0].mxu0
    %v3757 = vpop.f32.mrb[0].mxu0
    %3758 = vdwg.mxu0
    %3759 = vmatprep.subr.bf16.mxu0 %v1635
    %3760 = vmatpush1.bf16.msra.mxu0 %v1634
    %3761 = vmatprep.subr.bf16.mxu0 %v1643
    %3762 = vmatpush1.bf16.msra.mxu0 %v1642
    %3763 = vmatprep.subr.bf16.mxu0 %v1651
    %3764 = vmatpush1.bf16.msra.mxu0 %v1650
    %3765 = vmatprep.subr.bf16.mxu0 %v1659
    %3766 = vmatpush1.bf16.msra.mxu0 %v1658
    %3767 = vmatprep.subr.bf16.mxu0 %v1667
    %3768 = vmatpush1.bf16.msra.mxu0 %v1666
    %3769 = vmatprep.subr.bf16.mxu0 %v1675
    %3770 = vmatpush1.bf16.msra.mxu0 %v1674
    %3771 = vmatprep.subr.bf16.mxu0 %v1683
    %3772 = vmatpush1.bf16.msra.mxu0 %v1682
    %3773 = vmatprep.subr.bf16.mxu0 %v1691
    %3774 = vmatpush1.bf16.msra.mxu0 %v1690
    %3775 = vmatprep.subr.bf16.mxu0 %v1699
    %3776 = vmatpush1.bf16.msra.mxu0 %v1698
    %3777 = vmatprep.subr.bf16.mxu0 %v1707
    %3778 = vmatpush1.bf16.msra.mxu0 %v1706
    %3779 = vmatprep.subr.bf16.mxu0 %v1715
    %3780 = vmatpush1.bf16.msra.mxu0 %v1714
    %3781 = vmatprep.subr.bf16.mxu0 %v1723
    %3782 = vmatpush1.bf16.msra.mxu0 %v1722
    %3783 = vmatprep.subr.bf16.mxu0 %v1731
    %3784 = vmatpush1.bf16.msra.mxu0 %v1730
    %3785 = vmatprep.subr.bf16.mxu0 %v1739
    %3786 = vmatpush1.bf16.msra.mxu0 %v1738
    %3787 = vmatprep.subr.bf16.mxu0 %v1747
    %3788 = vmatpush1.bf16.msra.mxu0 %v1746
    %3789 = vmatprep.subr.bf16.mxu0 %v1755
    %3790 = vmatpush1.bf16.msra.mxu0 %v1754
    %3791 = vmatprep.mubr.bf16.mxu0 %v3302
    %3792 = vmatmul.mubr.bf16.gmra.mrb[0].mxu0 %v3301
    %v3793 = vpop.f32.mrb[0].mxu0
    %v3794 = vadd.f32 0.0, %v3793
    %v3795 = vpop.f32.mrb[0].mxu0
    %v3796 = vadd.f32 0.0, %v3795
    %v3797 = vpop.f32.mrb[0].mxu0
    %v3798 = vpop.f32.mrb[0].mxu0
    %3799 = vdwg.mxu0
    %3800 = vmatprep.subr.bf16.mxu0 %v1637
    %3801 = vmatpush1.bf16.msra.mxu0 %v1636
    %3802 = vmatprep.subr.bf16.mxu0 %v1645
    %3803 = vmatpush1.bf16.msra.mxu0 %v1644
    %3804 = vmatprep.subr.bf16.mxu0 %v1653
    %3805 = vmatpush1.bf16.msra.mxu0 %v1652
    %3806 = vmatprep.subr.bf16.mxu0 %v1661
    %3807 = vmatpush1.bf16.msra.mxu0 %v1660
    %3808 = vmatprep.subr.bf16.mxu0 %v1669
    %3809 = vmatpush1.bf16.msra.mxu0 %v1668
    %3810 = vmatprep.subr.bf16.mxu0 %v1677
    %3811 = vmatpush1.bf16.msra.mxu0 %v1676
    %3812 = vmatprep.subr.bf16.mxu0 %v1685
    %3813 = vmatpush1.bf16.msra.mxu0 %v1684
    %3814 = vmatprep.subr.bf16.mxu0 %v1693
    %3815 = vmatpush1.bf16.msra.mxu0 %v1692
    %3816 = vmatprep.subr.bf16.mxu0 %v1701
    %3817 = vmatpush1.bf16.msra.mxu0 %v1700
    %3818 = vmatprep.subr.bf16.mxu0 %v1709
    %3819 = vmatpush1.bf16.msra.mxu0 %v1708
    %3820 = vmatprep.subr.bf16.mxu0 %v1717
    %3821 = vmatpush1.bf16.msra.mxu0 %v1716
    %3822 = vmatprep.subr.bf16.mxu0 %v1725
    %3823 = vmatpush1.bf16.msra.mxu0 %v1724
    %3824 = vmatprep.subr.bf16.mxu0 %v1733
    %3825 = vmatpush1.bf16.msra.mxu0 %v1732
    %3826 = vmatprep.subr.bf16.mxu0 %v1741
    %3827 = vmatpush1.bf16.msra.mxu0 %v1740
    %3828 = vmatprep.subr.bf16.mxu0 %v1749
    %3829 = vmatpush1.bf16.msra.mxu0 %v1748
    %3830 = vmatprep.subr.bf16.mxu0 %v1757
    %3831 = vmatpush1.bf16.msra.mxu0 %v1756
    %3832 = vmatprep.mubr.bf16.mxu0 %v3302
    %3833 = vmatmul.mubr.bf16.gmra.mrb[0].mxu0 %v3301
    %v3834 = vpop.f32.mrb[0].mxu0
    %v3835 = vadd.f32 0.0, %v3834
    %v3836 = vpop.f32.mrb[0].mxu0
    %v3837 = vadd.f32 0.0, %v3836
    %v3838 = vpop.f32.mrb[0].mxu0
    %v3839 = vpop.f32.mrb[0].mxu0
    %3840 = vdwg.mxu0
    %v3841 = vadd.f32 %v614, %v3712
    %v3842 = vadd.f32 %v616, %v3714
    %v3843 = vadd.f32 %v687, %v3753
    %v3844 = vadd.f32 %v689, %v3755
    %v3845 = vadd.f32 %v760, %v3794
    %v3846 = vadd.f32 %v762, %v3796
    %v3847 = vadd.f32 %v833, %v3835
    %v3848 = vadd.f32 %v835, %v3837
    %v3849 = vmul.f32 %v3841, 0.5
    %v3850 = vmul.f32 %v3842, 0.5
    %v3851 = vtanh.pop %v3849
    %v3852 = vtanh.pop %v3850
    %v3853 = vadd.f32 %v3851, 1.0
    %v3854 = vadd.f32 %v3852, 1.0
    %v3855 = vmul.f32 %v3853, 0.5
    %v3856 = vmul.f32 %v3854, 0.5
    %v3857 = vmul.f32 %v3843, 0.5
    %v3858 = vmul.f32 %v3844, 0.5
    %v3859 = vtanh.pop %v3857
    %v3860 = vtanh.pop %v3858
    %v3861 = vadd.f32 %v3859, 1.0
    %v3862 = vadd.f32 %v3860, 1.0
    %v3863 = vmul.f32 %v3861, 0.5
    %v3864 = vmul.f32 %v3862, 0.5
    %v3865 = vtanh.pop %v3845
    %v3866 = vtanh.pop %v3846
    %v3867 = vmul.f32 %v3847, 0.5
    %v3868 = vmul.f32 %v3848, 0.5
    %v3869 = vtanh.pop %v3867
    %v3870 = vtanh.pop %v3868
    %v3871 = vadd.f32 %v3869, 1.0
    %v3872 = vadd.f32 %v3870, 1.0
    %v3873 = vmul.f32 %v3871, 0.5
    %v3874 = vmul.f32 %v3872, 0.5
    %v3875 = vmul.f32 %v3863, %v3295
    %v3876 = vmul.f32 %v3864, %v3296
    %v3877 = vmul.f32 %v3855, %v3865
    %v3878 = vmul.f32 %v3856, %v3866
    %v3879 = vadd.f32 %v3875, %v3877
    %v3880 = vadd.f32 %v3876, %v3878
    %v3881 = vtanh.pop %v3879
    %v3882 = vtanh.pop %v3880
    %v3883 = vmul.f32 %v3873, %v3881
    %v3884 = vmul.f32 %v3874, %v3882
    %v3885 = vpack.c.bf16 %v3883, %v3883
    %v3886 = vpack.c.bf16 %v3884, %v3884
    %v3887 = vpack.c.bf16 %v3675, %v3675
    %v3888 = vpack.c.bf16 %v3676, %v3676
    %3889 = vmatprep.subr.bf16.mxu0 %v1119
    %3890 = vmatpush1.bf16.msra.mxu0 %v1118
    %3891 = vmatprep.subr.bf16.mxu0 %v1127
    %3892 = vmatpush1.bf16.msra.mxu0 %v1126
    %3893 = vmatprep.subr.bf16.mxu0 %v1135
    %3894 = vmatpush1.bf16.msra.mxu0 %v1134
    %3895 = vmatprep.subr.bf16.mxu0 %v1143
    %3896 = vmatpush1.bf16.msra.mxu0 %v1142
    %3897 = vmatprep.subr.bf16.mxu0 %v1151
    %3898 = vmatpush1.bf16.msra.mxu0 %v1150
    %3899 = vmatprep.subr.bf16.mxu0 %v1159
    %3900 = vmatpush1.bf16.msra.mxu0 %v1158
    %3901 = vmatprep.subr.bf16.mxu0 %v1167
    %3902 = vmatpush1.bf16.msra.mxu0 %v1166
    %3903 = vmatprep.subr.bf16.mxu0 %v1175
    %3904 = vmatpush1.bf16.msra.mxu0 %v1174
    %3905 = vmatprep.subr.bf16.mxu0 %v1183
    %3906 = vmatpush1.bf16.msra.mxu0 %v1182
    %3907 = vmatprep.subr.bf16.mxu0 %v1191
    %3908 = vmatpush1.bf16.msra.mxu0 %v1190
    %3909 = vmatprep.subr.bf16.mxu0 %v1199
    %3910 = vmatpush1.bf16.msra.mxu0 %v1198
    %3911 = vmatprep.subr.bf16.mxu0 %v1207
    %3912 = vmatpush1.bf16.msra.mxu0 %v1206
    %3913 = vmatprep.subr.bf16.mxu0 %v1215
    %3914 = vmatpush1.bf16.msra.mxu0 %v1214
    %3915 = vmatprep.subr.bf16.mxu0 %v1223
    %3916 = vmatpush1.bf16.msra.mxu0 %v1222
    %3917 = vmatprep.subr.bf16.mxu0 %v1231
    %3918 = vmatpush1.bf16.msra.mxu0 %v1230
    %3919 = vmatprep.subr.bf16.mxu0 %v1239
    %3920 = vmatpush1.bf16.msra.mxu0 %v1238
    %3921 = vmatprep.mubr.bf16.mxu0 %v3888
    %3922 = vmatmul.mubr.bf16.gmra.mrb[0].mxu0 %v3887
    %v3923 = vpop.f32.mrb[0].mxu0
    %v3924 = vadd.f32 0.0, %v3923
    %v3925 = vpop.f32.mrb[0].mxu0
    %v3926 = vadd.f32 0.0, %v3925
    %v3927 = vpop.f32.mrb[0].mxu0
    %v3928 = vpop.f32.mrb[0].mxu0
    %3929 = vdwg.mxu0
    %3930 = vmatprep.subr.bf16.mxu0 %v1121
    %3931 = vmatpush1.bf16.msra.mxu0 %v1120
    %3932 = vmatprep.subr.bf16.mxu0 %v1129
    %3933 = vmatpush1.bf16.msra.mxu0 %v1128
    %3934 = vmatprep.subr.bf16.mxu0 %v1137
    %3935 = vmatpush1.bf16.msra.mxu0 %v1136
    %3936 = vmatprep.subr.bf16.mxu0 %v1145
    %3937 = vmatpush1.bf16.msra.mxu0 %v1144
    %3938 = vmatprep.subr.bf16.mxu0 %v1153
    %3939 = vmatpush1.bf16.msra.mxu0 %v1152
    %3940 = vmatprep.subr.bf16.mxu0 %v1161
    %3941 = vmatpush1.bf16.msra.mxu0 %v1160
    %3942 = vmatprep.subr.bf16.mxu0 %v1169
    %3943 = vmatpush1.bf16.msra.mxu0 %v1168
    %3944 = vmatprep.subr.bf16.mxu0 %v1177
    %3945 = vmatpush1.bf16.msra.mxu0 %v1176
    %3946 = vmatprep.subr.bf16.mxu0 %v1185
    %3947 = vmatpush1.bf16.msra.mxu0 %v1184
    %3948 = vmatprep.subr.bf16.mxu0 %v1193
    %3949 = vmatpush1.bf16.msra.mxu0 %v1192
    %3950 = vmatprep.subr.bf16.mxu0 %v1201
    %3951 = vmatpush1.bf16.msra.mxu0 %v1200
    %3952 = vmatprep.subr.bf16.mxu0 %v1209
    %3953 = vmatpush1.bf16.msra.mxu0 %v1208
    %3954 = vmatprep.subr.bf16.mxu0 %v1217
    %3955 = vmatpush1.bf16.msra.mxu0 %v1216
    %3956 = vmatprep.subr.bf16.mxu0 %v1225
    %3957 = vmatpush1.bf16.msra.mxu0 %v1224
    %3958 = vmatprep.subr.bf16.mxu0 %v1233
    %3959 = vmatpush1.bf16.msra.mxu0 %v1232
    %3960 = vmatprep.subr.bf16.mxu0 %v1241
    %3961 = vmatpush1.bf16.msra.mxu0 %v1240
    %3962 = vmatprep.mubr.bf16.mxu0 %v3888
    %3963 = vmatmul.mubr.bf16.gmra.mrb[0].mxu0 %v3887
    %v3964 = vpop.f32.mrb[0].mxu0
    %v3965 = vadd.f32 0.0, %v3964
    %v3966 = vpop.f32.mrb[0].mxu0
    %v3967 = vadd.f32 0.0, %v3966
    %v3968 = vpop.f32.mrb[0].mxu0
    %v3969 = vpop.f32.mrb[0].mxu0
    %3970 = vdwg.mxu0
    %3971 = vmatprep.subr.bf16.mxu0 %v1123
    %3972 = vmatpush1.bf16.msra.mxu0 %v1122
    %3973 = vmatprep.subr.bf16.mxu0 %v1131
    %3974 = vmatpush1.bf16.msra.mxu0 %v1130
    %3975 = vmatprep.subr.bf16.mxu0 %v1139
    %3976 = vmatpush1.bf16.msra.mxu0 %v1138
    %3977 = vmatprep.subr.bf16.mxu0 %v1147
    %3978 = vmatpush1.bf16.msra.mxu0 %v1146
    %3979 = vmatprep.subr.bf16.mxu0 %v1155
    %3980 = vmatpush1.bf16.msra.mxu0 %v1154
    %3981 = vmatprep.subr.bf16.mxu0 %v1163
    %3982 = vmatpush1.bf16.msra.mxu0 %v1162
    %3983 = vmatprep.subr.bf16.mxu0 %v1171
    %3984 = vmatpush1.bf16.msra.mxu0 %v1170
    %3985 = vmatprep.subr.bf16.mxu0 %v1179
    %3986 = vmatpush1.bf16.msra.mxu0 %v1178
    %3987 = vmatprep.subr.bf16.mxu0 %v1187
    %3988 = vmatpush1.bf16.msra.mxu0 %v1186
    %3989 = vmatprep.subr.bf16.mxu0 %v1195
    %3990 = vmatpush1.bf16.msra.mxu0 %v1194
    %3991 = vmatprep.subr.bf16.mxu0 %v1203
    %3992 = vmatpush1.bf16.msra.mxu0 %v1202
    %3993 = vmatprep.subr.bf16.mxu0 %v1211
    %3994 = vmatpush1.bf16.msra.mxu0 %v1210
    %3995 = vmatprep.subr.bf16.mxu0 %v1219
    %3996 = vmatpush1.bf16.msra.mxu0 %v1218
    %3997 = vmatprep.subr.bf16.mxu0 %v1227
    %3998 = vmatpush1.bf16.msra.mxu0 %v1226
    %3999 = vmatprep.subr.bf16.mxu0 %v1235
    %4000 = vmatpush1.bf16.msra.mxu0 %v1234
    %4001 = vmatprep.subr.bf16.mxu0 %v1243
    %4002 = vmatpush1.bf16.msra.mxu0 %v1242
    %4003 = vmatprep.mubr.bf16.mxu0 %v3888
    %4004 = vmatmul.mubr.bf16.gmra.mrb[0].mxu0 %v3887
    %v4005 = vpop.f32.mrb[0].mxu0
    %v4006 = vadd.f32 0.0, %v4005
    %v4007 = vpop.f32.mrb[0].mxu0
    %v4008 = vadd.f32 0.0, %v4007
    %v4009 = vpop.f32.mrb[0].mxu0
    %v4010 = vpop.f32.mrb[0].mxu0
    %4011 = vdwg.mxu0
    %4012 = vmatprep.subr.bf16.mxu0 %v1125
    %4013 = vmatpush1.bf16.msra.mxu0 %v1124
    %4014 = vmatprep.subr.bf16.mxu0 %v1133
    %4015 = vmatpush1.bf16.msra.mxu0 %v1132
    %4016 = vmatprep.subr.bf16.mxu0 %v1141
    %4017 = vmatpush1.bf16.msra.mxu0 %v1140
    %4018 = vmatprep.subr.bf16.mxu0 %v1149
    %4019 = vmatpush1.bf16.msra.mxu0 %v1148
    %4020 = vmatprep.subr.bf16.mxu0 %v1157
    %4021 = vmatpush1.bf16.msra.mxu0 %v1156
    %4022 = vmatprep.subr.bf16.mxu0 %v1165
    %4023 = vmatpush1.bf16.msra.mxu0 %v1164
    %4024 = vmatprep.subr.bf16.mxu0 %v1173
    %4025 = vmatpush1.bf16.msra.mxu0 %v1172
    %4026 = vmatprep.subr.bf16.mxu0 %v1181
    %4027 = vmatpush1.bf16.msra.mxu0 %v1180
    %4028 = vmatprep.subr.bf16.mxu0 %v1189
    %4029 = vmatpush1.bf16.msra.mxu0 %v1188
    %4030 = vmatprep.subr.bf16.mxu0 %v1197
    %4031 = vmatpush1.bf16.msra.mxu0 %v1196
    %4032 = vmatprep.subr.bf16.mxu0 %v1205
    %4033 = vmatpush1.bf16.msra.mxu0 %v1204
    %4034 = vmatprep.subr.bf16.mxu0 %v1213
    %4035 = vmatpush1.bf16.msra.mxu0 %v1212
    %4036 = vmatprep.subr.bf16.mxu0 %v1221
    %4037 = vmatpush1.bf16.msra.mxu0 %v1220
    %4038 = vmatprep.subr.bf16.mxu0 %v1229
    %4039 = vmatpush1.bf16.msra.mxu0 %v1228
    %4040 = vmatprep.subr.bf16.mxu0 %v1237
    %4041 = vmatpush1.bf16.msra.mxu0 %v1236
    %4042 = vmatprep.subr.bf16.mxu0 %v1245
    %4043 = vmatpush1.bf16.msra.mxu0 %v1244
    %4044 = vmatprep.mubr.bf16.mxu0 %v3888
    %4045 = vmatmul.mubr.bf16.gmra.mrb[0].mxu0 %v3887
    %v4046 = vpop.f32.mrb[0].mxu0
    %v4047 = vadd.f32 0.0, %v4046
    %v4048 = vpop.f32.mrb[0].mxu0
    %v4049 = vadd.f32 0.0, %v4048
    %v4050 = vpop.f32.mrb[0].mxu0
    %v4051 = vpop.f32.mrb[0].mxu0
    %4052 = vdwg.mxu0
    %4053 = vmatprep.subr.bf16.mxu0 %v991
    %4054 = vmatpush1.bf16.msra.mxu0 %v990
    %4055 = vmatprep.subr.bf16.mxu0 %v999
    %4056 = vmatpush1.bf16.msra.mxu0 %v998
    %4057 = vmatprep.subr.bf16.mxu0 %v1007
    %4058 = vmatpush1.bf16.msra.mxu0 %v1006
    %4059 = vmatprep.subr.bf16.mxu0 %v1015
    %4060 = vmatpush1.bf16.msra.mxu0 %v1014
    %4061 = vmatprep.subr.bf16.mxu0 %v1023
    %4062 = vmatpush1.bf16.msra.mxu0 %v1022
    %4063 = vmatprep.subr.bf16.mxu0 %v1031
    %4064 = vmatpush1.bf16.msra.mxu0 %v1030
    %4065 = vmatprep.subr.bf16.mxu0 %v1039
    %4066 = vmatpush1.bf16.msra.mxu0 %v1038
    %4067 = vmatprep.subr.bf16.mxu0 %v1047
    %4068 = vmatpush1.bf16.msra.mxu0 %v1046
    %4069 = vmatprep.subr.bf16.mxu0 %v1055
    %4070 = vmatpush1.bf16.msra.mxu0 %v1054
    %4071 = vmatprep.subr.bf16.mxu0 %v1063
    %4072 = vmatpush1.bf16.msra.mxu0 %v1062
    %4073 = vmatprep.subr.bf16.mxu0 %v1071
    %4074 = vmatpush1.bf16.msra.mxu0 %v1070
    %4075 = vmatprep.subr.bf16.mxu0 %v1079
    %4076 = vmatpush1.bf16.msra.mxu0 %v1078
    %4077 = vmatprep.subr.bf16.mxu0 %v1087
    %4078 = vmatpush1.bf16.msra.mxu0 %v1086
    %4079 = vmatprep.subr.bf16.mxu0 %v1095
    %4080 = vmatpush1.bf16.msra.mxu0 %v1094
    %4081 = vmatprep.subr.bf16.mxu0 %v1103
    %4082 = vmatpush1.bf16.msra.mxu0 %v1102
    %4083 = vmatprep.subr.bf16.mxu0 %v1111
    %4084 = vmatpush1.bf16.msra.mxu0 %v1110
    %4085 = vmatprep.mubr.bf16.mxu0 %v3886
    %4086 = vmatmul.mubr.bf16.gmra.mrb[0].mxu0 %v3885
    %v4087 = vpop.f32.mrb[0].mxu0
    %v4088 = vadd.f32 %v3924, %v4087
    %v4089 = vpop.f32.mrb[0].mxu0
    %v4090 = vadd.f32 %v3926, %v4089
    %v4091 = vpop.f32.mrb[0].mxu0
    %v4092 = vpop.f32.mrb[0].mxu0
    %4093 = vdwg.mxu0
    %4094 = vmatprep.subr.bf16.mxu0 %v993
    %4095 = vmatpush1.bf16.msra.mxu0 %v992
    %4096 = vmatprep.subr.bf16.mxu0 %v1001
    %4097 = vmatpush1.bf16.msra.mxu0 %v1000
    %4098 = vmatprep.subr.bf16.mxu0 %v1009
    %4099 = vmatpush1.bf16.msra.mxu0 %v1008
    %4100 = vmatprep.subr.bf16.mxu0 %v1017
    %4101 = vmatpush1.bf16.msra.mxu0 %v1016
    %4102 = vmatprep.subr.bf16.mxu0 %v1025
    %4103 = vmatpush1.bf16.msra.mxu0 %v1024
    %4104 = vmatprep.subr.bf16.mxu0 %v1033
    %4105 = vmatpush1.bf16.msra.mxu0 %v1032
    %4106 = vmatprep.subr.bf16.mxu0 %v1041
    %4107 = vmatpush1.bf16.msra.mxu0 %v1040
    %4108 = vmatprep.subr.bf16.mxu0 %v1049
    %4109 = vmatpush1.bf16.msra.mxu0 %v1048
    %4110 = vmatprep.subr.bf16.mxu0 %v1057
    %4111 = vmatpush1.bf16.msra.mxu0 %v1056
    %4112 = vmatprep.subr.bf16.mxu0 %v1065
    %4113 = vmatpush1.bf16.msra.mxu0 %v1064
    %4114 = vmatprep.subr.bf16.mxu0 %v1073
    %4115 = vmatpush1.bf16.msra.mxu0 %v1072
    %4116 = vmatprep.subr.bf16.mxu0 %v1081
    %4117 = vmatpush1.bf16.msra.mxu0 %v1080
    %4118 = vmatprep.subr.bf16.mxu0 %v1089
    %4119 = vmatpush1.bf16.msra.mxu0 %v1088
    %4120 = vmatprep.subr.bf16.mxu0 %v1097
    %4121 = vmatpush1.bf16.msra.mxu0 %v1096
    %4122 = vmatprep.subr.bf16.mxu0 %v1105
    %4123 = vmatpush1.bf16.msra.mxu0 %v1104
    %4124 = vmatprep.subr.bf16.mxu0 %v1113
    %4125 = vmatpush1.bf16.msra.mxu0 %v1112
    %4126 = vmatprep.mubr.bf16.mxu0 %v3886
    %4127 = vmatmul.mubr.bf16.gmra.mrb[0].mxu0 %v3885
    %v4128 = vpop.f32.mrb[0].mxu0
    %v4129 = vadd.f32 %v3965, %v4128
    %v4130 = vpop.f32.mrb[0].mxu0
    %v4131 = vadd.f32 %v3967, %v4130
    %v4132 = vpop.f32.mrb[0].mxu0
    %v4133 = vpop.f32.mrb[0].mxu0
    %4134 = vdwg.mxu0
    %4135 = vmatprep.subr.bf16.mxu0 %v995
    %4136 = vmatpush1.bf16.msra.mxu0 %v994
    %4137 = vmatprep.subr.bf16.mxu0 %v1003
    %4138 = vmatpush1.bf16.msra.mxu0 %v1002
    %4139 = vmatprep.subr.bf16.mxu0 %v1011
    %4140 = vmatpush1.bf16.msra.mxu0 %v1010
    %4141 = vmatprep.subr.bf16.mxu0 %v1019
    %4142 = vmatpush1.bf16.msra.mxu0 %v1018
    %4143 = vmatprep.subr.bf16.mxu0 %v1027
    %4144 = vmatpush1.bf16.msra.mxu0 %v1026
    %4145 = vmatprep.subr.bf16.mxu0 %v1035
    %4146 = vmatpush1.bf16.msra.mxu0 %v1034
    %4147 = vmatprep.subr.bf16.mxu0 %v1043
    %4148 = vmatpush1.bf16.msra.mxu0 %v1042
    %4149 = vmatprep.subr.bf16.mxu0 %v1051
    %4150 = vmatpush1.bf16.msra.mxu0 %v1050
    %4151 = vmatprep.subr.bf16.mxu0 %v1059
    %4152 = vmatpush1.bf16.msra.mxu0 %v1058
    %4153 = vmatprep.subr.bf16.mxu0 %v1067
    %4154 = vmatpush1.bf16.msra.mxu0 %v1066
    %4155 = vmatprep.subr.bf16.mxu0 %v1075
    %4156 = vmatpush1.bf16.msra.mxu0 %v1074
    %4157 = vmatprep.subr.bf16.mxu0 %v1083
    %4158 = vmatpush1.bf16.msra.mxu0 %v1082
    %4159 = vmatprep.subr.bf16.mxu0 %v1091
    %4160 = vmatpush1.bf16.msra.mxu0 %v1090
    %4161 = vmatprep.subr.bf16.mxu0 %v1099
    %4162 = vmatpush1.bf16.msra.mxu0 %v1098
    %4163 = vmatprep.subr.bf16.mxu0 %v1107
    %4164 = vmatpush1.bf16.msra.mxu0 %v1106
    %4165 = vmatprep.subr.bf16.mxu0 %v1115
    %4166 = vmatpush1.bf16.msra.mxu0 %v1114
    %4167 = vmatprep.mubr.bf16.mxu0 %v3886
    %4168 = vmatmul.mubr.bf16.gmra.mrb[0].mxu0 %v3885
    %v4169 = vpop.f32.mrb[0].mxu0
    %v4170 = vadd.f32 %v4006, %v4169
    %v4171 = vpop.f32.mrb[0].mxu0
    %v4172 = vadd.f32 %v4008, %v4171
    %v4173 = vpop.f32.mrb[0].mxu0
    %v4174 = vpop.f32.mrb[0].mxu0
    %4175 = vdwg.mxu0
    %4176 = vmatprep.subr.bf16.mxu0 %v997
    %4177 = vmatpush1.bf16.msra.mxu0 %v996
    %4178 = vmatprep.subr.bf16.mxu0 %v1005
    %4179 = vmatpush1.bf16.msra.mxu0 %v1004
    %4180 = vmatprep.subr.bf16.mxu0 %v1013
    %4181 = vmatpush1.bf16.msra.mxu0 %v1012
    %4182 = vmatprep.subr.bf16.mxu0 %v1021
    %4183 = vmatpush1.bf16.msra.mxu0 %v1020
    %4184 = vmatprep.subr.bf16.mxu0 %v1029
    %4185 = vmatpush1.bf16.msra.mxu0 %v1028
    %4186 = vmatprep.subr.bf16.mxu0 %v1037
    %4187 = vmatpush1.bf16.msra.mxu0 %v1036
    %4188 = vmatprep.subr.bf16.mxu0 %v1045
    %4189 = vmatpush1.bf16.msra.mxu0 %v1044
    %4190 = vmatprep.subr.bf16.mxu0 %v1053
    %4191 = vmatpush1.bf16.msra.mxu0 %v1052
    %4192 = vmatprep.subr.bf16.mxu0 %v1061
    %4193 = vmatpush1.bf16.msra.mxu0 %v1060
    %4194 = vmatprep.subr.bf16.mxu0 %v1069
    %4195 = vmatpush1.bf16.msra.mxu0 %v1068
    %4196 = vmatprep.subr.bf16.mxu0 %v1077
    %4197 = vmatpush1.bf16.msra.mxu0 %v1076
    %4198 = vmatprep.subr.bf16.mxu0 %v1085
    %4199 = vmatpush1.bf16.msra.mxu0 %v1084
    %4200 = vmatprep.subr.bf16.mxu0 %v1093
    %4201 = vmatpush1.bf16.msra.mxu0 %v1092
    %4202 = vmatprep.subr.bf16.mxu0 %v1101
    %4203 = vmatpush1.bf16.msra.mxu0 %v1100
    %4204 = vmatprep.subr.bf16.mxu0 %v1109
    %4205 = vmatpush1.bf16.msra.mxu0 %v1108
    %4206 = vmatprep.subr.bf16.mxu0 %v1117
    %4207 = vmatpush1.bf16.msra.mxu0 %v1116
    %4208 = vmatprep.mubr.bf16.mxu0 %v3886
    %4209 = vmatmul.mubr.bf16.gmra.mrb[0].mxu0 %v3885
    %v4210 = vpop.f32.mrb[0].mxu0
    %v4211 = vadd.f32 %v4047, %v4210
    %v4212 = vpop.f32.mrb[0].mxu0
    %v4213 = vadd.f32 %v4049, %v4212
    %v4214 = vpop.f32.mrb[0].mxu0
    %v4215 = vpop.f32.mrb[0].mxu0
    %4216 = vdwg.mxu0
    %v4217 = vadd.f32 %v4088, %v2428
    %v4218 = vadd.f32 %v4090, %v2432
    %v4219 = vadd.f32 %v4129, %v2436
    %v4220 = vadd.f32 %v4131, %v2440
    %v4221 = vadd.f32 %v4170, %v2444
    %v4222 = vadd.f32 %v4172, %v2448
    %v4223 = vadd.f32 %v4211, %v2452
    %v4224 = vadd.f32 %v4213, %v2456
    %v4225 = vmul.f32 %v4217, 0.5
    %v4226 = vmul.f32 %v4218, 0.5
    %v4227 = vtanh.pop %v4225
    %v4228 = vtanh.pop %v4226
    %v4229 = vadd.f32 %v4227, 1.0
    %v4230 = vadd.f32 %v4228, 1.0
    %v4231 = vmul.f32 %v4229, 0.5
    %v4232 = vmul.f32 %v4230, 0.5
    %v4233 = vmul.f32 %v4219, 0.5
    %v4234 = vmul.f32 %v4220, 0.5
    %v4235 = vtanh.pop %v4233
    %v4236 = vtanh.pop %v4234
    %v4237 = vadd.f32 %v4235, 1.0
    %v4238 = vadd.f32 %v4236, 1.0
    %v4239 = vmul.f32 %v4237, 0.5
    %v4240 = vmul.f32 %v4238, 0.5
    %v4241 = vtanh.pop %v4221
    %v4242 = vtanh.pop %v4222
    %v4243 = vmul.f32 %v4223, 0.5
    %v4244 = vmul.f32 %v4224, 0.5
    %v4245 = vtanh.pop %v4243
    %v4246 = vtanh.pop %v4244
    %v4247 = vadd.f32 %v4245, 1.0
    %v4248 = vadd.f32 %v4246, 1.0
    %v4249 = vmul.f32 %v4247, 0.5
    %v4250 = vmul.f32 %v4248, 0.5
    %v4251 = vmul.f32 %v4239, %v3671
    %v4252 = vmul.f32 %v4240, %v3672
    %v4253 = vmul.f32 %v4231, %v4241
    %v4254 = vmul.f32 %v4232, %v4242
    %v4255 = vadd.f32 %v4251, %v4253
    %v4256 = vadd.f32 %v4252, %v4254
    %v4257 = vtanh.pop %v4255
    %v4258 = vtanh.pop %v4256
    %v4259 = vmul.f32 %v4249, %v4257
    %v4260 = vmul.f32 %v4250, %v4258
    %4261 = vmatprep.subr.bf16.mxu0 %v1631
    %4262 = vmatpush1.bf16.msra.mxu0 %v1630
    %4263 = vmatprep.subr.bf16.mxu0 %v1639
    %4264 = vmatpush1.bf16.msra.mxu0 %v1638
    %4265 = vmatprep.subr.bf16.mxu0 %v1647
    %4266 = vmatpush1.bf16.msra.mxu0 %v1646
    %4267 = vmatprep.subr.bf16.mxu0 %v1655
    %4268 = vmatpush1.bf16.msra.mxu0 %v1654
    %4269 = vmatprep.subr.bf16.mxu0 %v1663
    %4270 = vmatpush1.bf16.msra.mxu0 %v1662
    %4271 = vmatprep.subr.bf16.mxu0 %v1671
    %4272 = vmatpush1.bf16.msra.mxu0 %v1670
    %4273 = vmatprep.subr.bf16.mxu0 %v1679
    %4274 = vmatpush1.bf16.msra.mxu0 %v1678
    %4275 = vmatprep.subr.bf16.mxu0 %v1687
    %4276 = vmatpush1.bf16.msra.mxu0 %v1686
    %4277 = vmatprep.subr.bf16.mxu0 %v1695
    %4278 = vmatpush1.bf16.msra.mxu0 %v1694
    %4279 = vmatprep.subr.bf16.mxu0 %v1703
    %4280 = vmatpush1.bf16.msra.mxu0 %v1702
    %4281 = vmatprep.subr.bf16.mxu0 %v1711
    %4282 = vmatpush1.bf16.msra.mxu0 %v1710
    %4283 = vmatprep.subr.bf16.mxu0 %v1719
    %4284 = vmatpush1.bf16.msra.mxu0 %v1718
    %4285 = vmatprep.subr.bf16.mxu0 %v1727
    %4286 = vmatpush1.bf16.msra.mxu0 %v1726
    %4287 = vmatprep.subr.bf16.mxu0 %v1735
    %4288 = vmatpush1.bf16.msra.mxu0 %v1734
    %4289 = vmatprep.subr.bf16.mxu0 %v1743
    %4290 = vmatpush1.bf16.msra.mxu0 %v1742
    %4291 = vmatprep.subr.bf16.mxu0 %v1751
    %4292 = vmatpush1.bf16.msra.mxu0 %v1750
    %4293 = vmatprep.mubr.bf16.mxu0 %v3886
    %4294 = vmatmul.mubr.bf16.gmra.mrb[0].mxu0 %v3885
    %v4295 = vpop.f32.mrb[0].mxu0
    %v4296 = vadd.f32 0.0, %v4295
    %v4297 = vpop.f32.mrb[0].mxu0
    %v4298 = vadd.f32 0.0, %v4297
    %v4299 = vpop.f32.mrb[0].mxu0
    %v4300 = vpop.f32.mrb[0].mxu0
    %4301 = vdwg.mxu0
    %4302 = vmatprep.subr.bf16.mxu0 %v1633
    %4303 = vmatpush1.bf16.msra.mxu0 %v1632
    %4304 = vmatprep.subr.bf16.mxu0 %v1641
    %4305 = vmatpush1.bf16.msra.mxu0 %v1640
    %4306 = vmatprep.subr.bf16.mxu0 %v1649
    %4307 = vmatpush1.bf16.msra.mxu0 %v1648
    %4308 = vmatprep.subr.bf16.mxu0 %v1657
    %4309 = vmatpush1.bf16.msra.mxu0 %v1656
    %4310 = vmatprep.subr.bf16.mxu0 %v1665
    %4311 = vmatpush1.bf16.msra.mxu0 %v1664
    %4312 = vmatprep.subr.bf16.mxu0 %v1673
    %4313 = vmatpush1.bf16.msra.mxu0 %v1672
    %4314 = vmatprep.subr.bf16.mxu0 %v1681
    %4315 = vmatpush1.bf16.msra.mxu0 %v1680
    %4316 = vmatprep.subr.bf16.mxu0 %v1689
    %4317 = vmatpush1.bf16.msra.mxu0 %v1688
    %4318 = vmatprep.subr.bf16.mxu0 %v1697
    %4319 = vmatpush1.bf16.msra.mxu0 %v1696
    %4320 = vmatprep.subr.bf16.mxu0 %v1705
    %4321 = vmatpush1.bf16.msra.mxu0 %v1704
    %4322 = vmatprep.subr.bf16.mxu0 %v1713
    %4323 = vmatpush1.bf16.msra.mxu0 %v1712
    %4324 = vmatprep.subr.bf16.mxu0 %v1721
    %4325 = vmatpush1.bf16.msra.mxu0 %v1720
    %4326 = vmatprep.subr.bf16.mxu0 %v1729
    %4327 = vmatpush1.bf16.msra.mxu0 %v1728
    %4328 = vmatprep.subr.bf16.mxu0 %v1737
    %4329 = vmatpush1.bf16.msra.mxu0 %v1736
    %4330 = vmatprep.subr.bf16.mxu0 %v1745
    %4331 = vmatpush1.bf16.msra.mxu0 %v1744
    %4332 = vmatprep.subr.bf16.mxu0 %v1753
    %4333 = vmatpush1.bf16.msra.mxu0 %v1752
    %4334 = vmatprep.mubr.bf16.mxu0 %v3886
    %4335 = vmatmul.mubr.bf16.gmra.mrb[0].mxu0 %v3885
    %v4336 = vpop.f32.mrb[0].mxu0
    %v4337 = vadd.f32 0.0, %v4336
    %v4338 = vpop.f32.mrb[0].mxu0
    %v4339 = vadd.f32 0.0, %v4338
    %v4340 = vpop.f32.mrb[0].mxu0
    %v4341 = vpop.f32.mrb[0].mxu0
    %4342 = vdwg.mxu0
    %4343 = vmatprep.subr.bf16.mxu0 %v1635
    %4344 = vmatpush1.bf16.msra.mxu0 %v1634
    %4345 = vmatprep.subr.bf16.mxu0 %v1643
    %4346 = vmatpush1.bf16.msra.mxu0 %v1642
    %4347 = vmatprep.subr.bf16.mxu0 %v1651
    %4348 = vmatpush1.bf16.msra.mxu0 %v1650
    %4349 = vmatprep.subr.bf16.mxu0 %v1659
    %4350 = vmatpush1.bf16.msra.mxu0 %v1658
    %4351 = vmatprep.subr.bf16.mxu0 %v1667
    %4352 = vmatpush1.bf16.msra.mxu0 %v1666
    %4353 = vmatprep.subr.bf16.mxu0 %v1675
    %4354 = vmatpush1.bf16.msra.mxu0 %v1674
    %4355 = vmatprep.subr.bf16.mxu0 %v1683
    %4356 = vmatpush1.bf16.msra.mxu0 %v1682
    %4357 = vmatprep.subr.bf16.mxu0 %v1691
    %4358 = vmatpush1.bf16.msra.mxu0 %v1690
    %4359 = vmatprep.subr.bf16.mxu0 %v1699
    %4360 = vmatpush1.bf16.msra.mxu0 %v1698
    %4361 = vmatprep.subr.bf16.mxu0 %v1707
    %4362 = vmatpush1.bf16.msra.mxu0 %v1706
    %4363 = vmatprep.subr.bf16.mxu0 %v1715
    %4364 = vmatpush1.bf16.msra.mxu0 %v1714
    %4365 = vmatprep.subr.bf16.mxu0 %v1723
    %4366 = vmatpush1.bf16.msra.mxu0 %v1722
    %4367 = vmatprep.subr.bf16.mxu0 %v1731
    %4368 = vmatpush1.bf16.msra.mxu0 %v1730
    %4369 = vmatprep.subr.bf16.mxu0 %v1739
    %4370 = vmatpush1.bf16.msra.mxu0 %v1738
    %4371 = vmatprep.subr.bf16.mxu0 %v1747
    %4372 = vmatpush1.bf16.msra.mxu0 %v1746
    %4373 = vmatprep.subr.bf16.mxu0 %v1755
    %4374 = vmatpush1.bf16.msra.mxu0 %v1754
    %4375 = vmatprep.mubr.bf16.mxu0 %v3886
    %4376 = vmatmul.mubr.bf16.gmra.mrb[0].mxu0 %v3885
    %v4377 = vpop.f32.mrb[0].mxu0
    %v4378 = vadd.f32 0.0, %v4377
    %v4379 = vpop.f32.mrb[0].mxu0
    %v4380 = vadd.f32 0.0, %v4379
    %v4381 = vpop.f32.mrb[0].mxu0
    %v4382 = vpop.f32.mrb[0].mxu0
    %4383 = vdwg.mxu0
    %4384 = vmatprep.subr.bf16.mxu0 %v1637
    %4385 = vmatpush1.bf16.msra.mxu0 %v1636
    %4386 = vmatprep.subr.bf16.mxu0 %v1645
    %4387 = vmatpush1.bf16.msra.mxu0 %v1644
    %4388 = vmatprep.subr.bf16.mxu0 %v1653
    %4389 = vmatpush1.bf16.msra.mxu0 %v1652
    %4390 = vmatprep.subr.bf16.mxu0 %v1661
    %4391 = vmatpush1.bf16.msra.mxu0 %v1660
    %4392 = vmatprep.subr.bf16.mxu0 %v1669
    %4393 = vmatpush1.bf16.msra.mxu0 %v1668
    %4394 = vmatprep.subr.bf16.mxu0 %v1677
    %4395 = vmatpush1.bf16.msra.mxu0 %v1676
    %4396 = vmatprep.subr.bf16.mxu0 %v1685
    %4397 = vmatpush1.bf16.msra.mxu0 %v1684
    %4398 = vmatprep.subr.bf16.mxu0 %v1693
    %4399 = vmatpush1.bf16.msra.mxu0 %v1692
    %4400 = vmatprep.subr.bf16.mxu0 %v1701
    %4401 = vmatpush1.bf16.msra.mxu0 %v1700
    %4402 = vmatprep.subr.bf16.mxu0 %v1709
    %4403 = vmatpush1.bf16.msra.mxu0 %v1708
    %4404 = vmatprep.subr.bf16.mxu0 %v1717
    %4405 = vmatpush1.bf16.msra.mxu0 %v1716
    %4406 = vmatprep.subr.bf16.mxu0 %v1725
    %4407 = vmatpush1.bf16.msra.mxu0 %v1724
    %4408 = vmatprep.subr.bf16.mxu0 %v1733
    %4409 = vmatpush1.bf16.msra.mxu0 %v1732
    %4410 = vmatprep.subr.bf16.mxu0 %v1741
    %4411 = vmatpush1.bf16.msra.mxu0 %v1740
    %4412 = vmatprep.subr.bf16.mxu0 %v1749
    %4413 = vmatpush1.bf16.msra.mxu0 %v1748
    %4414 = vmatprep.subr.bf16.mxu0 %v1757
    %4415 = vmatpush1.bf16.msra.mxu0 %v1756
    %4416 = vmatprep.mubr.bf16.mxu0 %v3886
    %4417 = vmatmul.mubr.bf16.gmra.mrb[0].mxu0 %v3885
    %v4418 = vpop.f32.mrb[0].mxu0
    %v4419 = vadd.f32 0.0, %v4418
    %v4420 = vpop.f32.mrb[0].mxu0
    %v4421 = vadd.f32 0.0, %v4420
    %v4422 = vpop.f32.mrb[0].mxu0
    %v4423 = vpop.f32.mrb[0].mxu0
    %4424 = vdwg.mxu0
    %v4425 = vadd.f32 %v620, %v4296
    %v4426 = vadd.f32 %v622, %v4298
    %v4427 = vadd.f32 %v693, %v4337
    %v4428 = vadd.f32 %v695, %v4339
    %v4429 = vadd.f32 %v766, %v4378
    %v4430 = vadd.f32 %v768, %v4380
    %v4431 = vadd.f32 %v839, %v4419
    %v4432 = vadd.f32 %v841, %v4421
    %v4433 = vmul.f32 %v4425, 0.5
    %v4434 = vmul.f32 %v4426, 0.5
    %v4435 = vtanh.pop %v4433
    %v4436 = vtanh.pop %v4434
    %v4437 = vadd.f32 %v4435, 1.0
    %v4438 = vadd.f32 %v4436, 1.0
    %v4439 = vmul.f32 %v4437, 0.5
    %v4440 = vmul.f32 %v4438, 0.5
    %v4441 = vmul.f32 %v4427, 0.5
    %v4442 = vmul.f32 %v4428, 0.5
    %v4443 = vtanh.pop %v4441
    %v4444 = vtanh.pop %v4442
    %v4445 = vadd.f32 %v4443, 1.0
    %v4446 = vadd.f32 %v4444, 1.0
    %v4447 = vmul.f32 %v4445, 0.5
    %v4448 = vmul.f32 %v4446, 0.5
    %v4449 = vtanh.pop %v4429
    %v4450 = vtanh.pop %v4430
    %v4451 = vmul.f32 %v4431, 0.5
    %v4452 = vmul.f32 %v4432, 0.5
    %v4453 = vtanh.pop %v4451
    %v4454 = vtanh.pop %v4452
    %v4455 = vadd.f32 %v4453, 1.0
    %v4456 = vadd.f32 %v4454, 1.0
    %v4457 = vmul.f32 %v4455, 0.5
    %v4458 = vmul.f32 %v4456, 0.5
    %v4459 = vmul.f32 %v4447, %v3879
    %v4460 = vmul.f32 %v4448, %v3880
    %v4461 = vmul.f32 %v4439, %v4449
    %v4462 = vmul.f32 %v4440, %v4450
    %v4463 = vadd.f32 %v4459, %v4461
    %v4464 = vadd.f32 %v4460, %v4462
    %v4465 = vtanh.pop %v4463
    %v4466 = vtanh.pop %v4464
    %v4467 = vmul.f32 %v4457, %v4465
    %v4468 = vmul.f32 %v4458, %v4466
    %v4469 = vpack.c.bf16 %v4467, %v4467
    %v4470 = vpack.c.bf16 %v4468, %v4468
    %v4471 = vpack.c.bf16 %v4259, %v4259
    %v4472 = vpack.c.bf16 %v4260, %v4260
    %4473 = vmatprep.subr.bf16.mxu0 %v1119
    %4474 = vmatpush1.bf16.msra.mxu0 %v1118
    %4475 = vmatprep.subr.bf16.mxu0 %v1127
    %4476 = vmatpush1.bf16.msra.mxu0 %v1126
    %4477 = vmatprep.subr.bf16.mxu0 %v1135
    %4478 = vmatpush1.bf16.msra.mxu0 %v1134
    %4479 = vmatprep.subr.bf16.mxu0 %v1143
    %4480 = vmatpush1.bf16.msra.mxu0 %v1142
    %4481 = vmatprep.subr.bf16.mxu0 %v1151
    %4482 = vmatpush1.bf16.msra.mxu0 %v1150
    %4483 = vmatprep.subr.bf16.mxu0 %v1159
    %4484 = vmatpush1.bf16.msra.mxu0 %v1158
    %4485 = vmatprep.subr.bf16.mxu0 %v1167
    %4486 = vmatpush1.bf16.msra.mxu0 %v1166
    %4487 = vmatprep.subr.bf16.mxu0 %v1175
    %4488 = vmatpush1.bf16.msra.mxu0 %v1174
    %4489 = vmatprep.subr.bf16.mxu0 %v1183
    %4490 = vmatpush1.bf16.msra.mxu0 %v1182
    %4491 = vmatprep.subr.bf16.mxu0 %v1191
    %4492 = vmatpush1.bf16.msra.mxu0 %v1190
    %4493 = vmatprep.subr.bf16.mxu0 %v1199
    %4494 = vmatpush1.bf16.msra.mxu0 %v1198
    %4495 = vmatprep.subr.bf16.mxu0 %v1207
    %4496 = vmatpush1.bf16.msra.mxu0 %v1206
    %4497 = vmatprep.subr.bf16.mxu0 %v1215
    %4498 = vmatpush1.bf16.msra.mxu0 %v1214
    %4499 = vmatprep.subr.bf16.mxu0 %v1223
    %4500 = vmatpush1.bf16.msra.mxu0 %v1222
    %4501 = vmatprep.subr.bf16.mxu0 %v1231
    %4502 = vmatpush1.bf16.msra.mxu0 %v1230
    %4503 = vmatprep.subr.bf16.mxu0 %v1239
    %4504 = vmatpush1.bf16.msra.mxu0 %v1238
    %4505 = vmatprep.mubr.bf16.mxu0 %v4472
    %4506 = vmatmul.mubr.bf16.gmra.mrb[0].mxu0 %v4471
    %v4507 = vpop.f32.mrb[0].mxu0
    %v4508 = vadd.f32 0.0, %v4507
    %v4509 = vpop.f32.mrb[0].mxu0
    %v4510 = vadd.f32 0.0, %v4509
    %v4511 = vpop.f32.mrb[0].mxu0
    %v4512 = vpop.f32.mrb[0].mxu0
    %4513 = vdwg.mxu0
    %4514 = vmatprep.subr.bf16.mxu0 %v1121
    %4515 = vmatpush1.bf16.msra.mxu0 %v1120
    %4516 = vmatprep.subr.bf16.mxu0 %v1129
    %4517 = vmatpush1.bf16.msra.mxu0 %v1128
    %4518 = vmatprep.subr.bf16.mxu0 %v1137
    %4519 = vmatpush1.bf16.msra.mxu0 %v1136
    %4520 = vmatprep.subr.bf16.mxu0 %v1145
    %4521 = vmatpush1.bf16.msra.mxu0 %v1144
    %4522 = vmatprep.subr.bf16.mxu0 %v1153
    %4523 = vmatpush1.bf16.msra.mxu0 %v1152
    %4524 = vmatprep.subr.bf16.mxu0 %v1161
    %4525 = vmatpush1.bf16.msra.mxu0 %v1160
    %4526 = vmatprep.subr.bf16.mxu0 %v1169
    %4527 = vmatpush1.bf16.msra.mxu0 %v1168
    %4528 = vmatprep.subr.bf16.mxu0 %v1177
    %4529 = vmatpush1.bf16.msra.mxu0 %v1176
    %4530 = vmatprep.subr.bf16.mxu0 %v1185
    %4531 = vmatpush1.bf16.msra.mxu0 %v1184
    %4532 = vmatprep.subr.bf16.mxu0 %v1193
    %4533 = vmatpush1.bf16.msra.mxu0 %v1192
    %4534 = vmatprep.subr.bf16.mxu0 %v1201
    %4535 = vmatpush1.bf16.msra.mxu0 %v1200
    %4536 = vmatprep.subr.bf16.mxu0 %v1209
    %4537 = vmatpush1.bf16.msra.mxu0 %v1208
    %4538 = vmatprep.subr.bf16.mxu0 %v1217
    %4539 = vmatpush1.bf16.msra.mxu0 %v1216
    %4540 = vmatprep.subr.bf16.mxu0 %v1225
    %4541 = vmatpush1.bf16.msra.mxu0 %v1224
    %4542 = vmatprep.subr.bf16.mxu0 %v1233
    %4543 = vmatpush1.bf16.msra.mxu0 %v1232
    %4544 = vmatprep.subr.bf16.mxu0 %v1241
    %4545 = vmatpush1.bf16.msra.mxu0 %v1240
    %4546 = vmatprep.mubr.bf16.mxu0 %v4472
    %4547 = vmatmul.mubr.bf16.gmra.mrb[0].mxu0 %v4471
    %v4548 = vpop.f32.mrb[0].mxu0
    %v4549 = vadd.f32 0.0, %v4548
    %v4550 = vpop.f32.mrb[0].mxu0
    %v4551 = vadd.f32 0.0, %v4550
    %v4552 = vpop.f32.mrb[0].mxu0
    %v4553 = vpop.f32.mrb[0].mxu0
    %4554 = vdwg.mxu0
    %4555 = vmatprep.subr.bf16.mxu0 %v1123
    %4556 = vmatpush1.bf16.msra.mxu0 %v1122
    %4557 = vmatprep.subr.bf16.mxu0 %v1131
    %4558 = vmatpush1.bf16.msra.mxu0 %v1130
    %4559 = vmatprep.subr.bf16.mxu0 %v1139
    %4560 = vmatpush1.bf16.msra.mxu0 %v1138
    %4561 = vmatprep.subr.bf16.mxu0 %v1147
    %4562 = vmatpush1.bf16.msra.mxu0 %v1146
    %4563 = vmatprep.subr.bf16.mxu0 %v1155
    %4564 = vmatpush1.bf16.msra.mxu0 %v1154
    %4565 = vmatprep.subr.bf16.mxu0 %v1163
    %4566 = vmatpush1.bf16.msra.mxu0 %v1162
    %4567 = vmatprep.subr.bf16.mxu0 %v1171
    %4568 = vmatpush1.bf16.msra.mxu0 %v1170
    %4569 = vmatprep.subr.bf16.mxu0 %v1179
    %4570 = vmatpush1.bf16.msra.mxu0 %v1178
    %4571 = vmatprep.subr.bf16.mxu0 %v1187
    %4572 = vmatpush1.bf16.msra.mxu0 %v1186
    %4573 = vmatprep.subr.bf16.mxu0 %v1195
    %4574 = vmatpush1.bf16.msra.mxu0 %v1194
    %4575 = vmatprep.subr.bf16.mxu0 %v1203
    %4576 = vmatpush1.bf16.msra.mxu0 %v1202
    %4577 = vmatprep.subr.bf16.mxu0 %v1211
    %4578 = vmatpush1.bf16.msra.mxu0 %v1210
    %4579 = vmatprep.subr.bf16.mxu0 %v1219
    %4580 = vmatpush1.bf16.msra.mxu0 %v1218
    %4581 = vmatprep.subr.bf16.mxu0 %v1227
    %4582 = vmatpush1.bf16.msra.mxu0 %v1226
    %4583 = vmatprep.subr.bf16.mxu0 %v1235
    %4584 = vmatpush1.bf16.msra.mxu0 %v1234
    %4585 = vmatprep.subr.bf16.mxu0 %v1243
    %4586 = vmatpush1.bf16.msra.mxu0 %v1242
    %4587 = vmatprep.mubr.bf16.mxu0 %v4472
    %4588 = vmatmul.mubr.bf16.gmra.mrb[0].mxu0 %v4471
    %v4589 = vpop.f32.mrb[0].mxu0
    %v4590 = vadd.f32 0.0, %v4589
    %v4591 = vpop.f32.mrb[0].mxu0
    %v4592 = vadd.f32 0.0, %v4591
    %v4593 = vpop.f32.mrb[0].mxu0
    %v4594 = vpop.f32.mrb[0].mxu0
    %4595 = vdwg.mxu0
    %4596 = vmatprep.subr.bf16.mxu0 %v1125
    %4597 = vmatpush1.bf16.msra.mxu0 %v1124
    %4598 = vmatprep.subr.bf16.mxu0 %v1133
    %4599 = vmatpush1.bf16.msra.mxu0 %v1132
    %4600 = vmatprep.subr.bf16.mxu0 %v1141
    %4601 = vmatpush1.bf16.msra.mxu0 %v1140
    %4602 = vmatprep.subr.bf16.mxu0 %v1149
    %4603 = vmatpush1.bf16.msra.mxu0 %v1148
    %4604 = vmatprep.subr.bf16.mxu0 %v1157
    %4605 = vmatpush1.bf16.msra.mxu0 %v1156
    %4606 = vmatprep.subr.bf16.mxu0 %v1165
    %4607 = vmatpush1.bf16.msra.mxu0 %v1164
    %4608 = vmatprep.subr.bf16.mxu0 %v1173
    %4609 = vmatpush1.bf16.msra.mxu0 %v1172
    %4610 = vmatprep.subr.bf16.mxu0 %v1181
    %4611 = vmatpush1.bf16.msra.mxu0 %v1180
    %4612 = vmatprep.subr.bf16.mxu0 %v1189
    %4613 = vmatpush1.bf16.msra.mxu0 %v1188
    %4614 = vmatprep.subr.bf16.mxu0 %v1197
    %4615 = vmatpush1.bf16.msra.mxu0 %v1196
    %4616 = vmatprep.subr.bf16.mxu0 %v1205
    %4617 = vmatpush1.bf16.msra.mxu0 %v1204
    %4618 = vmatprep.subr.bf16.mxu0 %v1213
    %4619 = vmatpush1.bf16.msra.mxu0 %v1212
    %4620 = vmatprep.subr.bf16.mxu0 %v1221
    %4621 = vmatpush1.bf16.msra.mxu0 %v1220
    %4622 = vmatprep.subr.bf16.mxu0 %v1229
    %4623 = vmatpush1.bf16.msra.mxu0 %v1228
    %4624 = vmatprep.subr.bf16.mxu0 %v1237
    %4625 = vmatpush1.bf16.msra.mxu0 %v1236
    %4626 = vmatprep.subr.bf16.mxu0 %v1245
    %4627 = vmatpush1.bf16.msra.mxu0 %v1244
    %4628 = vmatprep.mubr.bf16.mxu0 %v4472
    %4629 = vmatmul.mubr.bf16.gmra.mrb[0].mxu0 %v4471
    %v4630 = vpop.f32.mrb[0].mxu0
    %v4631 = vadd.f32 0.0, %v4630
    %v4632 = vpop.f32.mrb[0].mxu0
    %v4633 = vadd.f32 0.0, %v4632
    %v4634 = vpop.f32.mrb[0].mxu0
    %v4635 = vpop.f32.mrb[0].mxu0
    %4636 = vdwg.mxu0
    %4637 = vmatprep.subr.bf16.mxu0 %v991
    %4638 = vmatpush1.bf16.msra.mxu0 %v990
    %4639 = vmatprep.subr.bf16.mxu0 %v999
    %4640 = vmatpush1.bf16.msra.mxu0 %v998
    %4641 = vmatprep.subr.bf16.mxu0 %v1007
    %4642 = vmatpush1.bf16.msra.mxu0 %v1006
    %4643 = vmatprep.subr.bf16.mxu0 %v1015
    %4644 = vmatpush1.bf16.msra.mxu0 %v1014
    %4645 = vmatprep.subr.bf16.mxu0 %v1023
    %4646 = vmatpush1.bf16.msra.mxu0 %v1022
    %4647 = vmatprep.subr.bf16.mxu0 %v1031
    %4648 = vmatpush1.bf16.msra.mxu0 %v1030
    %4649 = vmatprep.subr.bf16.mxu0 %v1039
    %4650 = vmatpush1.bf16.msra.mxu0 %v1038
    %4651 = vmatprep.subr.bf16.mxu0 %v1047
    %4652 = vmatpush1.bf16.msra.mxu0 %v1046
    %4653 = vmatprep.subr.bf16.mxu0 %v1055
    %4654 = vmatpush1.bf16.msra.mxu0 %v1054
    %4655 = vmatprep.subr.bf16.mxu0 %v1063
    %4656 = vmatpush1.bf16.msra.mxu0 %v1062
    %4657 = vmatprep.subr.bf16.mxu0 %v1071
    %4658 = vmatpush1.bf16.msra.mxu0 %v1070
    %4659 = vmatprep.subr.bf16.mxu0 %v1079
    %4660 = vmatpush1.bf16.msra.mxu0 %v1078
    %4661 = vmatprep.subr.bf16.mxu0 %v1087
    %4662 = vmatpush1.bf16.msra.mxu0 %v1086
    %4663 = vmatprep.subr.bf16.mxu0 %v1095
    %4664 = vmatpush1.bf16.msra.mxu0 %v1094
    %4665 = vmatprep.subr.bf16.mxu0 %v1103
    %4666 = vmatpush1.bf16.msra.mxu0 %v1102
    %4667 = vmatprep.subr.bf16.mxu0 %v1111
    %4668 = vmatpush1.bf16.msra.mxu0 %v1110
    %4669 = vmatprep.mubr.bf16.mxu0 %v4470
    %4670 = vmatmul.mubr.bf16.gmra.mrb[0].mxu0 %v4469
    %v4671 = vpop.f32.mrb[0].mxu0
    %v4672 = vadd.f32 %v4508, %v4671
    %v4673 = vpop.f32.mrb[0].mxu0
    %v4674 = vadd.f32 %v4510, %v4673
    %v4675 = vpop.f32.mrb[0].mxu0
    %v4676 = vpop.f32.mrb[0].mxu0
    %4677 = vdwg.mxu0
    %4678 = vmatprep.subr.bf16.mxu0 %v993
    %4679 = vmatpush1.bf16.msra.mxu0 %v992
    %4680 = vmatprep.subr.bf16.mxu0 %v1001
    %4681 = vmatpush1.bf16.msra.mxu0 %v1000
    %4682 = vmatprep.subr.bf16.mxu0 %v1009
    %4683 = vmatpush1.bf16.msra.mxu0 %v1008
    %4684 = vmatprep.subr.bf16.mxu0 %v1017
    %4685 = vmatpush1.bf16.msra.mxu0 %v1016
    %4686 = vmatprep.subr.bf16.mxu0 %v1025
    %4687 = vmatpush1.bf16.msra.mxu0 %v1024
    %4688 = vmatprep.subr.bf16.mxu0 %v1033
    %4689 = vmatpush1.bf16.msra.mxu0 %v1032
    %4690 = vmatprep.subr.bf16.mxu0 %v1041
    %4691 = vmatpush1.bf16.msra.mxu0 %v1040
    %4692 = vmatprep.subr.bf16.mxu0 %v1049
    %4693 = vmatpush1.bf16.msra.mxu0 %v1048
    %4694 = vmatprep.subr.bf16.mxu0 %v1057
    %4695 = vmatpush1.bf16.msra.mxu0 %v1056
    %4696 = vmatprep.subr.bf16.mxu0 %v1065
    %4697 = vmatpush1.bf16.msra.mxu0 %v1064
    %4698 = vmatprep.subr.bf16.mxu0 %v1073
    %4699 = vmatpush1.bf16.msra.mxu0 %v1072
    %4700 = vmatprep.subr.bf16.mxu0 %v1081
    %4701 = vmatpush1.bf16.msra.mxu0 %v1080
    %4702 = vmatprep.subr.bf16.mxu0 %v1089
    %4703 = vmatpush1.bf16.msra.mxu0 %v1088
    %4704 = vmatprep.subr.bf16.mxu0 %v1097
    %4705 = vmatpush1.bf16.msra.mxu0 %v1096
    %4706 = vmatprep.subr.bf16.mxu0 %v1105
    %4707 = vmatpush1.bf16.msra.mxu0 %v1104
    %4708 = vmatprep.subr.bf16.mxu0 %v1113
    %4709 = vmatpush1.bf16.msra.mxu0 %v1112
    %4710 = vmatprep.mubr.bf16.mxu0 %v4470
    %4711 = vmatmul.mubr.bf16.gmra.mrb[0].mxu0 %v4469
    %v4712 = vpop.f32.mrb[0].mxu0
    %v4713 = vadd.f32 %v4549, %v4712
    %v4714 = vpop.f32.mrb[0].mxu0
    %v4715 = vadd.f32 %v4551, %v4714
    %v4716 = vpop.f32.mrb[0].mxu0
    %v4717 = vpop.f32.mrb[0].mxu0
    %4718 = vdwg.mxu0
    %4719 = vmatprep.subr.bf16.mxu0 %v995
    %4720 = vmatpush1.bf16.msra.mxu0 %v994
    %4721 = vmatprep.subr.bf16.mxu0 %v1003
    %4722 = vmatpush1.bf16.msra.mxu0 %v1002
    %4723 = vmatprep.subr.bf16.mxu0 %v1011
    %4724 = vmatpush1.bf16.msra.mxu0 %v1010
    %4725 = vmatprep.subr.bf16.mxu0 %v1019
    %4726 = vmatpush1.bf16.msra.mxu0 %v1018
    %4727 = vmatprep.subr.bf16.mxu0 %v1027
    %4728 = vmatpush1.bf16.msra.mxu0 %v1026
    %4729 = vmatprep.subr.bf16.mxu0 %v1035
    %4730 = vmatpush1.bf16.msra.mxu0 %v1034
    %4731 = vmatprep.subr.bf16.mxu0 %v1043
    %4732 = vmatpush1.bf16.msra.mxu0 %v1042
    %4733 = vmatprep.subr.bf16.mxu0 %v1051
    %4734 = vmatpush1.bf16.msra.mxu0 %v1050
    %4735 = vmatprep.subr.bf16.mxu0 %v1059
    %4736 = vmatpush1.bf16.msra.mxu0 %v1058
    %4737 = vmatprep.subr.bf16.mxu0 %v1067
    %4738 = vmatpush1.bf16.msra.mxu0 %v1066
    %4739 = vmatprep.subr.bf16.mxu0 %v1075
    %4740 = vmatpush1.bf16.msra.mxu0 %v1074
    %4741 = vmatprep.subr.bf16.mxu0 %v1083
    %4742 = vmatpush1.bf16.msra.mxu0 %v1082
    %4743 = vmatprep.subr.bf16.mxu0 %v1091
    %4744 = vmatpush1.bf16.msra.mxu0 %v1090
    %4745 = vmatprep.subr.bf16.mxu0 %v1099
    %4746 = vmatpush1.bf16.msra.mxu0 %v1098
    %4747 = vmatprep.subr.bf16.mxu0 %v1107
    %4748 = vmatpush1.bf16.msra.mxu0 %v1106
    %4749 = vmatprep.subr.bf16.mxu0 %v1115
    %4750 = vmatpush1.bf16.msra.mxu0 %v1114
    %4751 = vmatprep.mubr.bf16.mxu0 %v4470
    %4752 = vmatmul.mubr.bf16.gmra.mrb[0].mxu0 %v4469
    %v4753 = vpop.f32.mrb[0].mxu0
    %v4754 = vadd.f32 %v4590, %v4753
    %v4755 = vpop.f32.mrb[0].mxu0
    %v4756 = vadd.f32 %v4592, %v4755
    %v4757 = vpop.f32.mrb[0].mxu0
    %v4758 = vpop.f32.mrb[0].mxu0
    %4759 = vdwg.mxu0
    %4760 = vmatprep.subr.bf16.mxu0 %v997
    %4761 = vmatpush1.bf16.msra.mxu0 %v996
    %4762 = vmatprep.subr.bf16.mxu0 %v1005
    %4763 = vmatpush1.bf16.msra.mxu0 %v1004
    %4764 = vmatprep.subr.bf16.mxu0 %v1013
    %4765 = vmatpush1.bf16.msra.mxu0 %v1012
    %4766 = vmatprep.subr.bf16.mxu0 %v1021
    %4767 = vmatpush1.bf16.msra.mxu0 %v1020
    %4768 = vmatprep.subr.bf16.mxu0 %v1029
    %4769 = vmatpush1.bf16.msra.mxu0 %v1028
    %4770 = vmatprep.subr.bf16.mxu0 %v1037
    %4771 = vmatpush1.bf16.msra.mxu0 %v1036
    %4772 = vmatprep.subr.bf16.mxu0 %v1045
    %4773 = vmatpush1.bf16.msra.mxu0 %v1044
    %4774 = vmatprep.subr.bf16.mxu0 %v1053
    %4775 = vmatpush1.bf16.msra.mxu0 %v1052
    %4776 = vmatprep.subr.bf16.mxu0 %v1061
    %4777 = vmatpush1.bf16.msra.mxu0 %v1060
    %4778 = vmatprep.subr.bf16.mxu0 %v1069
    %4779 = vmatpush1.bf16.msra.mxu0 %v1068
    %4780 = vmatprep.subr.bf16.mxu0 %v1077
    %4781 = vmatpush1.bf16.msra.mxu0 %v1076
    %4782 = vmatprep.subr.bf16.mxu0 %v1085
    %4783 = vmatpush1.bf16.msra.mxu0 %v1084
    %4784 = vmatprep.subr.bf16.mxu0 %v1093
    %4785 = vmatpush1.bf16.msra.mxu0 %v1092
    %4786 = vmatprep.subr.bf16.mxu0 %v1101
    %4787 = vmatpush1.bf16.msra.mxu0 %v1100
    %4788 = vmatprep.subr.bf16.mxu0 %v1109
    %4789 = vmatpush1.bf16.msra.mxu0 %v1108
    %4790 = vmatprep.subr.bf16.mxu0 %v1117
    %4791 = vmatpush1.bf16.msra.mxu0 %v1116
    %4792 = vmatprep.mubr.bf16.mxu0 %v4470
    %4793 = vmatmul.mubr.bf16.gmra.mrb[0].mxu0 %v4469
    %v4794 = vpop.f32.mrb[0].mxu0
    %v4795 = vadd.f32 %v4631, %v4794
    %v4796 = vpop.f32.mrb[0].mxu0
    %v4797 = vadd.f32 %v4633, %v4796
    %v4798 = vpop.f32.mrb[0].mxu0
    %v4799 = vpop.f32.mrb[0].mxu0
    %4800 = vdwg.mxu0
    %v4801 = vadd.f32 %v4672, %v2428
    %v4802 = vadd.f32 %v4674, %v2432
    %v4803 = vadd.f32 %v4713, %v2436
    %v4804 = vadd.f32 %v4715, %v2440
    %v4805 = vadd.f32 %v4754, %v2444
    %v4806 = vadd.f32 %v4756, %v2448
    %v4807 = vadd.f32 %v4795, %v2452
    %v4808 = vadd.f32 %v4797, %v2456
    %v4809 = vmul.f32 %v4801, 0.5
    %v4810 = vmul.f32 %v4802, 0.5
    %v4811 = vtanh.pop %v4809
    %v4812 = vtanh.pop %v4810
    %v4813 = vadd.f32 %v4811, 1.0
    %v4814 = vadd.f32 %v4812, 1.0
    %v4815 = vmul.f32 %v4813, 0.5
    %v4816 = vmul.f32 %v4814, 0.5
    %v4817 = vmul.f32 %v4803, 0.5
    %v4818 = vmul.f32 %v4804, 0.5
    %v4819 = vtanh.pop %v4817
    %v4820 = vtanh.pop %v4818
    %v4821 = vadd.f32 %v4819, 1.0
    %v4822 = vadd.f32 %v4820, 1.0
    %v4823 = vmul.f32 %v4821, 0.5
    %v4824 = vmul.f32 %v4822, 0.5
    %v4825 = vtanh.pop %v4805
    %v4826 = vtanh.pop %v4806
    %v4827 = vmul.f32 %v4807, 0.5
    %v4828 = vmul.f32 %v4808, 0.5
    %v4829 = vtanh.pop %v4827
    %v4830 = vtanh.pop %v4828
    %v4831 = vadd.f32 %v4829, 1.0
    %v4832 = vadd.f32 %v4830, 1.0
    %v4833 = vmul.f32 %v4831, 0.5
    %v4834 = vmul.f32 %v4832, 0.5
    %v4835 = vmul.f32 %v4823, %v4255
    %v4836 = vmul.f32 %v4824, %v4256
    %v4837 = vmul.f32 %v4815, %v4825
    %v4838 = vmul.f32 %v4816, %v4826
    %v4839 = vadd.f32 %v4835, %v4837
    %v4840 = vadd.f32 %v4836, %v4838
    %v4841 = vtanh.pop %v4839
    %v4842 = vtanh.pop %v4840
    %v4843 = vmul.f32 %v4833, %v4841
    %v4844 = vmul.f32 %v4834, %v4842
    %4845 = vmatprep.subr.bf16.mxu0 %v1631
    %4846 = vmatpush1.bf16.msra.mxu0 %v1630
    %4847 = vmatprep.subr.bf16.mxu0 %v1639
    %4848 = vmatpush1.bf16.msra.mxu0 %v1638
    %4849 = vmatprep.subr.bf16.mxu0 %v1647
    %4850 = vmatpush1.bf16.msra.mxu0 %v1646
    %4851 = vmatprep.subr.bf16.mxu0 %v1655
    %4852 = vmatpush1.bf16.msra.mxu0 %v1654
    %4853 = vmatprep.subr.bf16.mxu0 %v1663
    %4854 = vmatpush1.bf16.msra.mxu0 %v1662
    %4855 = vmatprep.subr.bf16.mxu0 %v1671
    %4856 = vmatpush1.bf16.msra.mxu0 %v1670
    %4857 = vmatprep.subr.bf16.mxu0 %v1679
    %4858 = vmatpush1.bf16.msra.mxu0 %v1678
    %4859 = vmatprep.subr.bf16.mxu0 %v1687
    %4860 = vmatpush1.bf16.msra.mxu0 %v1686
    %4861 = vmatprep.subr.bf16.mxu0 %v1695
    %4862 = vmatpush1.bf16.msra.mxu0 %v1694
    %4863 = vmatprep.subr.bf16.mxu0 %v1703
    %4864 = vmatpush1.bf16.msra.mxu0 %v1702
    %4865 = vmatprep.subr.bf16.mxu0 %v1711
    %4866 = vmatpush1.bf16.msra.mxu0 %v1710
    %4867 = vmatprep.subr.bf16.mxu0 %v1719
    %4868 = vmatpush1.bf16.msra.mxu0 %v1718
    %4869 = vmatprep.subr.bf16.mxu0 %v1727
    %4870 = vmatpush1.bf16.msra.mxu0 %v1726
    %4871 = vmatprep.subr.bf16.mxu0 %v1735
    %4872 = vmatpush1.bf16.msra.mxu0 %v1734
    %4873 = vmatprep.subr.bf16.mxu0 %v1743
    %4874 = vmatpush1.bf16.msra.mxu0 %v1742
    %4875 = vmatprep.subr.bf16.mxu0 %v1751
    %4876 = vmatpush1.bf16.msra.mxu0 %v1750
    %4877 = vmatprep.mubr.bf16.mxu0 %v4470
    %4878 = vmatmul.mubr.bf16.gmra.mrb[0].mxu0 %v4469
    %v4879 = vpop.f32.mrb[0].mxu0
    %v4880 = vadd.f32 0.0, %v4879
    %v4881 = vpop.f32.mrb[0].mxu0
    %v4882 = vadd.f32 0.0, %v4881
    %v4883 = vpop.f32.mrb[0].mxu0
    %v4884 = vpop.f32.mrb[0].mxu0
    %4885 = vdwg.mxu0
    %4886 = vmatprep.subr.bf16.mxu0 %v1633
    %4887 = vmatpush1.bf16.msra.mxu0 %v1632
    %4888 = vmatprep.subr.bf16.mxu0 %v1641
    %4889 = vmatpush1.bf16.msra.mxu0 %v1640
    %4890 = vmatprep.subr.bf16.mxu0 %v1649
    %4891 = vmatpush1.bf16.msra.mxu0 %v1648
    %4892 = vmatprep.subr.bf16.mxu0 %v1657
    %4893 = vmatpush1.bf16.msra.mxu0 %v1656
    %4894 = vmatprep.subr.bf16.mxu0 %v1665
    %4895 = vmatpush1.bf16.msra.mxu0 %v1664
    %4896 = vmatprep.subr.bf16.mxu0 %v1673
    %4897 = vmatpush1.bf16.msra.mxu0 %v1672
    %4898 = vmatprep.subr.bf16.mxu0 %v1681
    %4899 = vmatpush1.bf16.msra.mxu0 %v1680
    %4900 = vmatprep.subr.bf16.mxu0 %v1689
    %4901 = vmatpush1.bf16.msra.mxu0 %v1688
    %4902 = vmatprep.subr.bf16.mxu0 %v1697
    %4903 = vmatpush1.bf16.msra.mxu0 %v1696
    %4904 = vmatprep.subr.bf16.mxu0 %v1705
    %4905 = vmatpush1.bf16.msra.mxu0 %v1704
    %4906 = vmatprep.subr.bf16.mxu0 %v1713
    %4907 = vmatpush1.bf16.msra.mxu0 %v1712
    %4908 = vmatprep.subr.bf16.mxu0 %v1721
    %4909 = vmatpush1.bf16.msra.mxu0 %v1720
    %4910 = vmatprep.subr.bf16.mxu0 %v1729
    %4911 = vmatpush1.bf16.msra.mxu0 %v1728
    %4912 = vmatprep.subr.bf16.mxu0 %v1737
    %4913 = vmatpush1.bf16.msra.mxu0 %v1736
    %4914 = vmatprep.subr.bf16.mxu0 %v1745
    %4915 = vmatpush1.bf16.msra.mxu0 %v1744
    %4916 = vmatprep.subr.bf16.mxu0 %v1753
    %4917 = vmatpush1.bf16.msra.mxu0 %v1752
    %4918 = vmatprep.mubr.bf16.mxu0 %v4470
    %4919 = vmatmul.mubr.bf16.gmra.mrb[0].mxu0 %v4469
    %v4920 = vpop.f32.mrb[0].mxu0
    %v4921 = vadd.f32 0.0, %v4920
    %v4922 = vpop.f32.mrb[0].mxu0
    %v4923 = vadd.f32 0.0, %v4922
    %v4924 = vpop.f32.mrb[0].mxu0
    %v4925 = vpop.f32.mrb[0].mxu0
    %4926 = vdwg.mxu0
    %4927 = vmatprep.subr.bf16.mxu0 %v1635
    %4928 = vmatpush1.bf16.msra.mxu0 %v1634
    %4929 = vmatprep.subr.bf16.mxu0 %v1643
    %4930 = vmatpush1.bf16.msra.mxu0 %v1642
    %4931 = vmatprep.subr.bf16.mxu0 %v1651
    %4932 = vmatpush1.bf16.msra.mxu0 %v1650
    %4933 = vmatprep.subr.bf16.mxu0 %v1659
    %4934 = vmatpush1.bf16.msra.mxu0 %v1658
    %4935 = vmatprep.subr.bf16.mxu0 %v1667
    %4936 = vmatpush1.bf16.msra.mxu0 %v1666
    %4937 = vmatprep.subr.bf16.mxu0 %v1675
    %4938 = vmatpush1.bf16.msra.mxu0 %v1674
    %4939 = vmatprep.subr.bf16.mxu0 %v1683
    %4940 = vmatpush1.bf16.msra.mxu0 %v1682
    %4941 = vmatprep.subr.bf16.mxu0 %v1691
    %4942 = vmatpush1.bf16.msra.mxu0 %v1690
    %4943 = vmatprep.subr.bf16.mxu0 %v1699
    %4944 = vmatpush1.bf16.msra.mxu0 %v1698
    %4945 = vmatprep.subr.bf16.mxu0 %v1707
    %4946 = vmatpush1.bf16.msra.mxu0 %v1706
    %4947 = vmatprep.subr.bf16.mxu0 %v1715
    %4948 = vmatpush1.bf16.msra.mxu0 %v1714
    %4949 = vmatprep.subr.bf16.mxu0 %v1723
    %4950 = vmatpush1.bf16.msra.mxu0 %v1722
    %4951 = vmatprep.subr.bf16.mxu0 %v1731
    %4952 = vmatpush1.bf16.msra.mxu0 %v1730
    %4953 = vmatprep.subr.bf16.mxu0 %v1739
    %4954 = vmatpush1.bf16.msra.mxu0 %v1738
    %4955 = vmatprep.subr.bf16.mxu0 %v1747
    %4956 = vmatpush1.bf16.msra.mxu0 %v1746
    %4957 = vmatprep.subr.bf16.mxu0 %v1755
    %4958 = vmatpush1.bf16.msra.mxu0 %v1754
    %4959 = vmatprep.mubr.bf16.mxu0 %v4470
    %4960 = vmatmul.mubr.bf16.gmra.mrb[0].mxu0 %v4469
    %v4961 = vpop.f32.mrb[0].mxu0
    %v4962 = vadd.f32 0.0, %v4961
    %v4963 = vpop.f32.mrb[0].mxu0
    %v4964 = vadd.f32 0.0, %v4963
    %v4965 = vpop.f32.mrb[0].mxu0
    %v4966 = vpop.f32.mrb[0].mxu0
    %4967 = vdwg.mxu0
    %4968 = vmatprep.subr.bf16.mxu0 %v1637
    %4969 = vmatpush1.bf16.msra.mxu0 %v1636
    %4970 = vmatprep.subr.bf16.mxu0 %v1645
    %4971 = vmatpush1.bf16.msra.mxu0 %v1644
    %4972 = vmatprep.subr.bf16.mxu0 %v1653
    %4973 = vmatpush1.bf16.msra.mxu0 %v1652
    %4974 = vmatprep.subr.bf16.mxu0 %v1661
    %4975 = vmatpush1.bf16.msra.mxu0 %v1660
    %4976 = vmatprep.subr.bf16.mxu0 %v1669
    %4977 = vmatpush1.bf16.msra.mxu0 %v1668
    %4978 = vmatprep.subr.bf16.mxu0 %v1677
    %4979 = vmatpush1.bf16.msra.mxu0 %v1676
    %4980 = vmatprep.subr.bf16.mxu0 %v1685
    %4981 = vmatpush1.bf16.msra.mxu0 %v1684
    %4982 = vmatprep.subr.bf16.mxu0 %v1693
    %4983 = vmatpush1.bf16.msra.mxu0 %v1692
    %4984 = vmatprep.subr.bf16.mxu0 %v1701
    %4985 = vmatpush1.bf16.msra.mxu0 %v1700
    %4986 = vmatprep.subr.bf16.mxu0 %v1709
    %4987 = vmatpush1.bf16.msra.mxu0 %v1708
    %4988 = vmatprep.subr.bf16.mxu0 %v1717
    %4989 = vmatpush1.bf16.msra.mxu0 %v1716
    %4990 = vmatprep.subr.bf16.mxu0 %v1725
    %4991 = vmatpush1.bf16.msra.mxu0 %v1724
    %4992 = vmatprep.subr.bf16.mxu0 %v1733
    %4993 = vmatpush1.bf16.msra.mxu0 %v1732
    %4994 = vmatprep.subr.bf16.mxu0 %v1741
    %4995 = vmatpush1.bf16.msra.mxu0 %v1740
    %4996 = vmatprep.subr.bf16.mxu0 %v1749
    %4997 = vmatpush1.bf16.msra.mxu0 %v1748
    %4998 = vmatprep.subr.bf16.mxu0 %v1757
    %4999 = vmatpush1.bf16.msra.mxu0 %v1756
    %5000 = vmatprep.mubr.bf16.mxu0 %v4470
    %5001 = vmatmul.mubr.bf16.gmra.mrb[0].mxu0 %v4469
    %v5002 = vpop.f32.mrb[0].mxu0
    %v5003 = vadd.f32 0.0, %v5002
    %v5004 = vpop.f32.mrb[0].mxu0
    %v5005 = vadd.f32 0.0, %v5004
    %v5006 = vpop.f32.mrb[0].mxu0
    %v5007 = vpop.f32.mrb[0].mxu0
    %5008 = vdwg.mxu0
    %v5009 = vadd.f32 %v624, %v4880
    %v5010 = vadd.f32 %v626, %v4882
    %v5011 = vadd.f32 %v697, %v4921
    %v5012 = vadd.f32 %v699, %v4923
    %v5013 = vadd.f32 %v770, %v4962
    %v5014 = vadd.f32 %v772, %v4964
    %v5015 = vadd.f32 %v843, %v5003
    %v5016 = vadd.f32 %v845, %v5005
    %v5017 = vmul.f32 %v5009, 0.5
    %v5018 = vmul.f32 %v5010, 0.5
    %v5019 = vtanh.pop %v5017
    %v5020 = vtanh.pop %v5018
    %v5021 = vadd.f32 %v5019, 1.0
    %v5022 = vadd.f32 %v5020, 1.0
    %v5023 = vmul.f32 %v5021, 0.5
    %v5024 = vmul.f32 %v5022, 0.5
    %v5025 = vmul.f32 %v5011, 0.5
    %v5026 = vmul.f32 %v5012, 0.5
    %v5027 = vtanh.pop %v5025
    %v5028 = vtanh.pop %v5026
    %v5029 = vadd.f32 %v5027, 1.0
    %v5030 = vadd.f32 %v5028, 1.0
    %v5031 = vmul.f32 %v5029, 0.5
    %v5032 = vmul.f32 %v5030, 0.5
    %v5033 = vtanh.pop %v5013
    %v5034 = vtanh.pop %v5014
    %v5035 = vmul.f32 %v5015, 0.5
    %v5036 = vmul.f32 %v5016, 0.5
    %v5037 = vtanh.pop %v5035
    %v5038 = vtanh.pop %v5036
    %v5039 = vadd.f32 %v5037, 1.0
    %v5040 = vadd.f32 %v5038, 1.0
    %v5041 = vmul.f32 %v5039, 0.5
    %v5042 = vmul.f32 %v5040, 0.5
    %v5043 = vmul.f32 %v5031, %v4463
    %v5044 = vmul.f32 %v5032, %v4464
    %v5045 = vmul.f32 %v5023, %v5033
    %v5046 = vmul.f32 %v5024, %v5034
    %v5047 = vadd.f32 %v5043, %v5045
    %v5048 = vadd.f32 %v5044, %v5046
    %v5049 = vtanh.pop %v5047
    %v5050 = vtanh.pop %v5048
    %v5051 = vmul.f32 %v5041, %v5049
    %v5052 = vmul.f32 %v5042, %v5050
    %v5053 = vpack.c.bf16 %v5051, %v5051
    %v5054 = vpack.c.bf16 %v5052, %v5052
    %v5055 = vpack.c.bf16 %v4843, %v4843
    %v5056 = vpack.c.bf16 %v4844, %v4844
    %5057 = vmatprep.subr.bf16.mxu0 %v1119
    %5058 = vmatpush1.bf16.msra.mxu0 %v1118
    %5059 = vmatprep.subr.bf16.mxu0 %v1127
    %5060 = vmatpush1.bf16.msra.mxu0 %v1126
    %5061 = vmatprep.subr.bf16.mxu0 %v1135
    %5062 = vmatpush1.bf16.msra.mxu0 %v1134
    %5063 = vmatprep.subr.bf16.mxu0 %v1143
    %5064 = vmatpush1.bf16.msra.mxu0 %v1142
    %5065 = vmatprep.subr.bf16.mxu0 %v1151
    %5066 = vmatpush1.bf16.msra.mxu0 %v1150
    %5067 = vmatprep.subr.bf16.mxu0 %v1159
    %5068 = vmatpush1.bf16.msra.mxu0 %v1158
    %5069 = vmatprep.subr.bf16.mxu0 %v1167
    %5070 = vmatpush1.bf16.msra.mxu0 %v1166
    %5071 = vmatprep.subr.bf16.mxu0 %v1175
    %5072 = vmatpush1.bf16.msra.mxu0 %v1174
    %5073 = vmatprep.subr.bf16.mxu0 %v1183
    %5074 = vmatpush1.bf16.msra.mxu0 %v1182
    %5075 = vmatprep.subr.bf16.mxu0 %v1191
    %5076 = vmatpush1.bf16.msra.mxu0 %v1190
    %5077 = vmatprep.subr.bf16.mxu0 %v1199
    %5078 = vmatpush1.bf16.msra.mxu0 %v1198
    %5079 = vmatprep.subr.bf16.mxu0 %v1207
    %5080 = vmatpush1.bf16.msra.mxu0 %v1206
    %5081 = vmatprep.subr.bf16.mxu0 %v1215
    %5082 = vmatpush1.bf16.msra.mxu0 %v1214
    %5083 = vmatprep.subr.bf16.mxu0 %v1223
    %5084 = vmatpush1.bf16.msra.mxu0 %v1222
    %5085 = vmatprep.subr.bf16.mxu0 %v1231
    %5086 = vmatpush1.bf16.msra.mxu0 %v1230
    %5087 = vmatprep.subr.bf16.mxu0 %v1239
    %5088 = vmatpush1.bf16.msra.mxu0 %v1238
    %5089 = vmatprep.mubr.bf16.mxu0 %v5056
    %5090 = vmatmul.mubr.bf16.gmra.mrb[0].mxu0 %v5055
    %v5091 = vpop.f32.mrb[0].mxu0
    %v5092 = vadd.f32 0.0, %v5091
    %v5093 = vpop.f32.mrb[0].mxu0
    %v5094 = vadd.f32 0.0, %v5093
    %v5095 = vpop.f32.mrb[0].mxu0
    %v5096 = vpop.f32.mrb[0].mxu0
    %5097 = vdwg.mxu0
    %5098 = vmatprep.subr.bf16.mxu0 %v1121
    %5099 = vmatpush1.bf16.msra.mxu0 %v1120
    %5100 = vmatprep.subr.bf16.mxu0 %v1129
    %5101 = vmatpush1.bf16.msra.mxu0 %v1128
    %5102 = vmatprep.subr.bf16.mxu0 %v1137
    %5103 = vmatpush1.bf16.msra.mxu0 %v1136
    %5104 = vmatprep.subr.bf16.mxu0 %v1145
    %5105 = vmatpush1.bf16.msra.mxu0 %v1144
    %5106 = vmatprep.subr.bf16.mxu0 %v1153
    %5107 = vmatpush1.bf16.msra.mxu0 %v1152
    %5108 = vmatprep.subr.bf16.mxu0 %v1161
    %5109 = vmatpush1.bf16.msra.mxu0 %v1160
    %5110 = vmatprep.subr.bf16.mxu0 %v1169
    %5111 = vmatpush1.bf16.msra.mxu0 %v1168
    %5112 = vmatprep.subr.bf16.mxu0 %v1177
    %5113 = vmatpush1.bf16.msra.mxu0 %v1176
    %5114 = vmatprep.subr.bf16.mxu0 %v1185
    %5115 = vmatpush1.bf16.msra.mxu0 %v1184
    %5116 = vmatprep.subr.bf16.mxu0 %v1193
    %5117 = vmatpush1.bf16.msra.mxu0 %v1192
    %5118 = vmatprep.subr.bf16.mxu0 %v1201
    %5119 = vmatpush1.bf16.msra.mxu0 %v1200
    %5120 = vmatprep.subr.bf16.mxu0 %v1209
    %5121 = vmatpush1.bf16.msra.mxu0 %v1208
    %5122 = vmatprep.subr.bf16.mxu0 %v1217
    %5123 = vmatpush1.bf16.msra.mxu0 %v1216
    %5124 = vmatprep.subr.bf16.mxu0 %v1225
    %5125 = vmatpush1.bf16.msra.mxu0 %v1224
    %5126 = vmatprep.subr.bf16.mxu0 %v1233
    %5127 = vmatpush1.bf16.msra.mxu0 %v1232
    %5128 = vmatprep.subr.bf16.mxu0 %v1241
    %5129 = vmatpush1.bf16.msra.mxu0 %v1240
    %5130 = vmatprep.mubr.bf16.mxu0 %v5056
    %5131 = vmatmul.mubr.bf16.gmra.mrb[0].mxu0 %v5055
    %v5132 = vpop.f32.mrb[0].mxu0
    %v5133 = vadd.f32 0.0, %v5132
    %v5134 = vpop.f32.mrb[0].mxu0
    %v5135 = vadd.f32 0.0, %v5134
    %v5136 = vpop.f32.mrb[0].mxu0
    %v5137 = vpop.f32.mrb[0].mxu0
    %5138 = vdwg.mxu0
    %5139 = vmatprep.subr.bf16.mxu0 %v1123
    %5140 = vmatpush1.bf16.msra.mxu0 %v1122
    %5141 = vmatprep.subr.bf16.mxu0 %v1131
    %5142 = vmatpush1.bf16.msra.mxu0 %v1130
    %5143 = vmatprep.subr.bf16.mxu0 %v1139
    %5144 = vmatpush1.bf16.msra.mxu0 %v1138
    %5145 = vmatprep.subr.bf16.mxu0 %v1147
    %5146 = vmatpush1.bf16.msra.mxu0 %v1146
    %5147 = vmatprep.subr.bf16.mxu0 %v1155
    %5148 = vmatpush1.bf16.msra.mxu0 %v1154
    %5149 = vmatprep.subr.bf16.mxu0 %v1163
    %5150 = vmatpush1.bf16.msra.mxu0 %v1162
    %5151 = vmatprep.subr.bf16.mxu0 %v1171
    %5152 = vmatpush1.bf16.msra.mxu0 %v1170
    %5153 = vmatprep.subr.bf16.mxu0 %v1179
    %5154 = vmatpush1.bf16.msra.mxu0 %v1178
    %5155 = vmatprep.subr.bf16.mxu0 %v1187
    %5156 = vmatpush1.bf16.msra.mxu0 %v1186
    %5157 = vmatprep.subr.bf16.mxu0 %v1195
    %5158 = vmatpush1.bf16.msra.mxu0 %v1194
    %5159 = vmatprep.subr.bf16.mxu0 %v1203
    %5160 = vmatpush1.bf16.msra.mxu0 %v1202
    %5161 = vmatprep.subr.bf16.mxu0 %v1211
    %5162 = vmatpush1.bf16.msra.mxu0 %v1210
    %5163 = vmatprep.subr.bf16.mxu0 %v1219
    %5164 = vmatpush1.bf16.msra.mxu0 %v1218
    %5165 = vmatprep.subr.bf16.mxu0 %v1227
    %5166 = vmatpush1.bf16.msra.mxu0 %v1226
    %5167 = vmatprep.subr.bf16.mxu0 %v1235
    %5168 = vmatpush1.bf16.msra.mxu0 %v1234
    %5169 = vmatprep.subr.bf16.mxu0 %v1243
    %5170 = vmatpush1.bf16.msra.mxu0 %v1242
    %5171 = vmatprep.mubr.bf16.mxu0 %v5056
    %5172 = vmatmul.mubr.bf16.gmra.mrb[0].mxu0 %v5055
    %v5173 = vpop.f32.mrb[0].mxu0
    %v5174 = vadd.f32 0.0, %v5173
    %v5175 = vpop.f32.mrb[0].mxu0
    %v5176 = vadd.f32 0.0, %v5175
    %v5177 = vpop.f32.mrb[0].mxu0
    %v5178 = vpop.f32.mrb[0].mxu0
    %5179 = vdwg.mxu0
    %5180 = vmatprep.subr.bf16.mxu0 %v1125
    %5181 = vmatpush1.bf16.msra.mxu0 %v1124
    %5182 = vmatprep.subr.bf16.mxu0 %v1133
    %5183 = vmatpush1.bf16.msra.mxu0 %v1132
    %5184 = vmatprep.subr.bf16.mxu0 %v1141
    %5185 = vmatpush1.bf16.msra.mxu0 %v1140
    %5186 = vmatprep.subr.bf16.mxu0 %v1149
    %5187 = vmatpush1.bf16.msra.mxu0 %v1148
    %5188 = vmatprep.subr.bf16.mxu0 %v1157
    %5189 = vmatpush1.bf16.msra.mxu0 %v1156
    %5190 = vmatprep.subr.bf16.mxu0 %v1165
    %5191 = vmatpush1.bf16.msra.mxu0 %v1164
    %5192 = vmatprep.subr.bf16.mxu0 %v1173
    %5193 = vmatpush1.bf16.msra.mxu0 %v1172
    %5194 = vmatprep.subr.bf16.mxu0 %v1181
    %5195 = vmatpush1.bf16.msra.mxu0 %v1180
    %5196 = vmatprep.subr.bf16.mxu0 %v1189
    %5197 = vmatpush1.bf16.msra.mxu0 %v1188
    %5198 = vmatprep.subr.bf16.mxu0 %v1197
    %5199 = vmatpush1.bf16.msra.mxu0 %v1196
    %5200 = vmatprep.subr.bf16.mxu0 %v1205
    %5201 = vmatpush1.bf16.msra.mxu0 %v1204
    %5202 = vmatprep.subr.bf16.mxu0 %v1213
    %5203 = vmatpush1.bf16.msra.mxu0 %v1212
    %5204 = vmatprep.subr.bf16.mxu0 %v1221
    %5205 = vmatpush1.bf16.msra.mxu0 %v1220
    %5206 = vmatprep.subr.bf16.mxu0 %v1229
    %5207 = vmatpush1.bf16.msra.mxu0 %v1228
    %5208 = vmatprep.subr.bf16.mxu0 %v1237
    %5209 = vmatpush1.bf16.msra.mxu0 %v1236
    %5210 = vmatprep.subr.bf16.mxu0 %v1245
    %5211 = vmatpush1.bf16.msra.mxu0 %v1244
    %5212 = vmatprep.mubr.bf16.mxu0 %v5056
    %5213 = vmatmul.mubr.bf16.gmra.mrb[0].mxu0 %v5055
    %v5214 = vpop.f32.mrb[0].mxu0
    %v5215 = vadd.f32 0.0, %v5214
    %v5216 = vpop.f32.mrb[0].mxu0
    %v5217 = vadd.f32 0.0, %v5216
    %v5218 = vpop.f32.mrb[0].mxu0
    %v5219 = vpop.f32.mrb[0].mxu0
    %5220 = vdwg.mxu0
    %5221 = vmatprep.subr.bf16.mxu0 %v991
    %5222 = vmatpush1.bf16.msra.mxu0 %v990
    %5223 = vmatprep.subr.bf16.mxu0 %v999
    %5224 = vmatpush1.bf16.msra.mxu0 %v998
    %5225 = vmatprep.subr.bf16.mxu0 %v1007
    %5226 = vmatpush1.bf16.msra.mxu0 %v1006
    %5227 = vmatprep.subr.bf16.mxu0 %v1015
    %5228 = vmatpush1.bf16.msra.mxu0 %v1014
    %5229 = vmatprep.subr.bf16.mxu0 %v1023
    %5230 = vmatpush1.bf16.msra.mxu0 %v1022
    %5231 = vmatprep.subr.bf16.mxu0 %v1031
    %5232 = vmatpush1.bf16.msra.mxu0 %v1030
    %5233 = vmatprep.subr.bf16.mxu0 %v1039
    %5234 = vmatpush1.bf16.msra.mxu0 %v1038
    %5235 = vmatprep.subr.bf16.mxu0 %v1047
    %5236 = vmatpush1.bf16.msra.mxu0 %v1046
    %5237 = vmatprep.subr.bf16.mxu0 %v1055
    %5238 = vmatpush1.bf16.msra.mxu0 %v1054
    %5239 = vmatprep.subr.bf16.mxu0 %v1063
    %5240 = vmatpush1.bf16.msra.mxu0 %v1062
    %5241 = vmatprep.subr.bf16.mxu0 %v1071
    %5242 = vmatpush1.bf16.msra.mxu0 %v1070
    %5243 = vmatprep.subr.bf16.mxu0 %v1079
    %5244 = vmatpush1.bf16.msra.mxu0 %v1078
    %5245 = vmatprep.subr.bf16.mxu0 %v1087
    %5246 = vmatpush1.bf16.msra.mxu0 %v1086
    %5247 = vmatprep.subr.bf16.mxu0 %v1095
    %5248 = vmatpush1.bf16.msra.mxu0 %v1094
    %5249 = vmatprep.subr.bf16.mxu0 %v1103
    %5250 = vmatpush1.bf16.msra.mxu0 %v1102
    %5251 = vmatprep.subr.bf16.mxu0 %v1111
    %5252 = vmatpush1.bf16.msra.mxu0 %v1110
    %5253 = vmatprep.mubr.bf16.mxu0 %v5054
    %5254 = vmatmul.mubr.bf16.gmra.mrb[0].mxu0 %v5053
    %v5255 = vpop.f32.mrb[0].mxu0
    %v5256 = vadd.f32 %v5092, %v5255
    %v5257 = vpop.f32.mrb[0].mxu0
    %v5258 = vadd.f32 %v5094, %v5257
    %v5259 = vpop.f32.mrb[0].mxu0
    %v5260 = vpop.f32.mrb[0].mxu0
    %5261 = vdwg.mxu0
    %5262 = vmatprep.subr.bf16.mxu0 %v993
    %5263 = vmatpush1.bf16.msra.mxu0 %v992
    %5264 = vmatprep.subr.bf16.mxu0 %v1001
    %5265 = vmatpush1.bf16.msra.mxu0 %v1000
    %5266 = vmatprep.subr.bf16.mxu0 %v1009
    %5267 = vmatpush1.bf16.msra.mxu0 %v1008
    %5268 = vmatprep.subr.bf16.mxu0 %v1017
    %5269 = vmatpush1.bf16.msra.mxu0 %v1016
    %5270 = vmatprep.subr.bf16.mxu0 %v1025
    %5271 = vmatpush1.bf16.msra.mxu0 %v1024
    %5272 = vmatprep.subr.bf16.mxu0 %v1033
    %5273 = vmatpush1.bf16.msra.mxu0 %v1032
    %5274 = vmatprep.subr.bf16.mxu0 %v1041
    %5275 = vmatpush1.bf16.msra.mxu0 %v1040
    %5276 = vmatprep.subr.bf16.mxu0 %v1049
    %5277 = vmatpush1.bf16.msra.mxu0 %v1048
    %5278 = vmatprep.subr.bf16.mxu0 %v1057
    %5279 = vmatpush1.bf16.msra.mxu0 %v1056
    %5280 = vmatprep.subr.bf16.mxu0 %v1065
    %5281 = vmatpush1.bf16.msra.mxu0 %v1064
    %5282 = vmatprep.subr.bf16.mxu0 %v1073
    %5283 = vmatpush1.bf16.msra.mxu0 %v1072
    %5284 = vmatprep.subr.bf16.mxu0 %v1081
    %5285 = vmatpush1.bf16.msra.mxu0 %v1080
    %5286 = vmatprep.subr.bf16.mxu0 %v1089
    %5287 = vmatpush1.bf16.msra.mxu0 %v1088
    %5288 = vmatprep.subr.bf16.mxu0 %v1097
    %5289 = vmatpush1.bf16.msra.mxu0 %v1096
    %5290 = vmatprep.subr.bf16.mxu0 %v1105
    %5291 = vmatpush1.bf16.msra.mxu0 %v1104
    %5292 = vmatprep.subr.bf16.mxu0 %v1113
    %5293 = vmatpush1.bf16.msra.mxu0 %v1112
    %5294 = vmatprep.mubr.bf16.mxu0 %v5054
    %5295 = vmatmul.mubr.bf16.gmra.mrb[0].mxu0 %v5053
    %v5296 = vpop.f32.mrb[0].mxu0
    %v5297 = vadd.f32 %v5133, %v5296
    %v5298 = vpop.f32.mrb[0].mxu0
    %v5299 = vadd.f32 %v5135, %v5298
    %v5300 = vpop.f32.mrb[0].mxu0
    %v5301 = vpop.f32.mrb[0].mxu0
    %5302 = vdwg.mxu0
    %5303 = vmatprep.subr.bf16.mxu0 %v995
    %5304 = vmatpush1.bf16.msra.mxu0 %v994
    %5305 = vmatprep.subr.bf16.mxu0 %v1003
    %5306 = vmatpush1.bf16.msra.mxu0 %v1002
    %5307 = vmatprep.subr.bf16.mxu0 %v1011
    %5308 = vmatpush1.bf16.msra.mxu0 %v1010
    %5309 = vmatprep.subr.bf16.mxu0 %v1019
    %5310 = vmatpush1.bf16.msra.mxu0 %v1018
    %5311 = vmatprep.subr.bf16.mxu0 %v1027
    %5312 = vmatpush1.bf16.msra.mxu0 %v1026
    %5313 = vmatprep.subr.bf16.mxu0 %v1035
    %5314 = vmatpush1.bf16.msra.mxu0 %v1034
    %5315 = vmatprep.subr.bf16.mxu0 %v1043
    %5316 = vmatpush1.bf16.msra.mxu0 %v1042
    %5317 = vmatprep.subr.bf16.mxu0 %v1051
    %5318 = vmatpush1.bf16.msra.mxu0 %v1050
    %5319 = vmatprep.subr.bf16.mxu0 %v1059
    %5320 = vmatpush1.bf16.msra.mxu0 %v1058
    %5321 = vmatprep.subr.bf16.mxu0 %v1067
    %5322 = vmatpush1.bf16.msra.mxu0 %v1066
    %5323 = vmatprep.subr.bf16.mxu0 %v1075
    %5324 = vmatpush1.bf16.msra.mxu0 %v1074
    %5325 = vmatprep.subr.bf16.mxu0 %v1083
    %5326 = vmatpush1.bf16.msra.mxu0 %v1082
    %5327 = vmatprep.subr.bf16.mxu0 %v1091
    %5328 = vmatpush1.bf16.msra.mxu0 %v1090
    %5329 = vmatprep.subr.bf16.mxu0 %v1099
    %5330 = vmatpush1.bf16.msra.mxu0 %v1098
    %5331 = vmatprep.subr.bf16.mxu0 %v1107
    %5332 = vmatpush1.bf16.msra.mxu0 %v1106
    %5333 = vmatprep.subr.bf16.mxu0 %v1115
    %5334 = vmatpush1.bf16.msra.mxu0 %v1114
    %5335 = vmatprep.mubr.bf16.mxu0 %v5054
    %5336 = vmatmul.mubr.bf16.gmra.mrb[0].mxu0 %v5053
    %v5337 = vpop.f32.mrb[0].mxu0
    %v5338 = vadd.f32 %v5174, %v5337
    %v5339 = vpop.f32.mrb[0].mxu0
    %v5340 = vadd.f32 %v5176, %v5339
    %v5341 = vpop.f32.mrb[0].mxu0
    %v5342 = vpop.f32.mrb[0].mxu0
    %5343 = vdwg.mxu0
    %5344 = vmatprep.subr.bf16.mxu0 %v997
    %5345 = vmatpush1.bf16.msra.mxu0 %v996
    %5346 = vmatprep.subr.bf16.mxu0 %v1005
    %5347 = vmatpush1.bf16.msra.mxu0 %v1004
    %5348 = vmatprep.subr.bf16.mxu0 %v1013
    %5349 = vmatpush1.bf16.msra.mxu0 %v1012
    %5350 = vmatprep.subr.bf16.mxu0 %v1021
    %5351 = vmatpush1.bf16.msra.mxu0 %v1020
    %5352 = vmatprep.subr.bf16.mxu0 %v1029
    %5353 = vmatpush1.bf16.msra.mxu0 %v1028
    %5354 = vmatprep.subr.bf16.mxu0 %v1037
    %5355 = vmatpush1.bf16.msra.mxu0 %v1036
    %5356 = vmatprep.subr.bf16.mxu0 %v1045
    %5357 = vmatpush1.bf16.msra.mxu0 %v1044
    %5358 = vmatprep.subr.bf16.mxu0 %v1053
    %5359 = vmatpush1.bf16.msra.mxu0 %v1052
    %5360 = vmatprep.subr.bf16.mxu0 %v1061
    %5361 = vmatpush1.bf16.msra.mxu0 %v1060
    %5362 = vmatprep.subr.bf16.mxu0 %v1069
    %5363 = vmatpush1.bf16.msra.mxu0 %v1068
    %5364 = vmatprep.subr.bf16.mxu0 %v1077
    %5365 = vmatpush1.bf16.msra.mxu0 %v1076
    %5366 = vmatprep.subr.bf16.mxu0 %v1085
    %5367 = vmatpush1.bf16.msra.mxu0 %v1084
    %5368 = vmatprep.subr.bf16.mxu0 %v1093
    %5369 = vmatpush1.bf16.msra.mxu0 %v1092
    %5370 = vmatprep.subr.bf16.mxu0 %v1101
    %5371 = vmatpush1.bf16.msra.mxu0 %v1100
    %5372 = vmatprep.subr.bf16.mxu0 %v1109
    %5373 = vmatpush1.bf16.msra.mxu0 %v1108
    %5374 = vmatprep.subr.bf16.mxu0 %v1117
    %5375 = vmatpush1.bf16.msra.mxu0 %v1116
    %5376 = vmatprep.mubr.bf16.mxu0 %v5054
    %5377 = vmatmul.mubr.bf16.gmra.mrb[0].mxu0 %v5053
    %v5378 = vpop.f32.mrb[0].mxu0
    %v5379 = vadd.f32 %v5215, %v5378
    %v5380 = vpop.f32.mrb[0].mxu0
    %v5381 = vadd.f32 %v5217, %v5380
    %v5382 = vpop.f32.mrb[0].mxu0
    %v5383 = vpop.f32.mrb[0].mxu0
    %5384 = vdwg.mxu0
    %v5385 = vadd.f32 %v5256, %v2428
    %v5386 = vadd.f32 %v5258, %v2432
    %v5387 = vadd.f32 %v5297, %v2436
    %v5388 = vadd.f32 %v5299, %v2440
    %v5389 = vadd.f32 %v5338, %v2444
    %v5390 = vadd.f32 %v5340, %v2448
    %v5391 = vadd.f32 %v5379, %v2452
    %v5392 = vadd.f32 %v5381, %v2456
    %v5393 = vmul.f32 %v5385, 0.5
    %v5394 = vmul.f32 %v5386, 0.5
    %v5395 = vtanh.pop %v5393
    %v5396 = vtanh.pop %v5394
    %v5397 = vadd.f32 %v5395, 1.0
    %v5398 = vadd.f32 %v5396, 1.0
    %v5399 = vmul.f32 %v5397, 0.5
    %v5400 = vmul.f32 %v5398, 0.5
    %v5401 = vmul.f32 %v5387, 0.5
    %v5402 = vmul.f32 %v5388, 0.5
    %v5403 = vtanh.pop %v5401
    %v5404 = vtanh.pop %v5402
    %v5405 = vadd.f32 %v5403, 1.0
    %v5406 = vadd.f32 %v5404, 1.0
    %v5407 = vmul.f32 %v5405, 0.5
    %v5408 = vmul.f32 %v5406, 0.5
    %v5409 = vtanh.pop %v5389
    %v5410 = vtanh.pop %v5390
    %v5411 = vmul.f32 %v5391, 0.5
    %v5412 = vmul.f32 %v5392, 0.5
    %v5413 = vtanh.pop %v5411
    %v5414 = vtanh.pop %v5412
    %v5415 = vadd.f32 %v5413, 1.0
    %v5416 = vadd.f32 %v5414, 1.0
    %v5417 = vmul.f32 %v5415, 0.5
    %v5418 = vmul.f32 %v5416, 0.5
    %v5419 = vmul.f32 %v5407, %v4839
    %v5420 = vmul.f32 %v5408, %v4840
    %v5421 = vmul.f32 %v5399, %v5409
    %v5422 = vmul.f32 %v5400, %v5410
    %v5423 = vadd.f32 %v5419, %v5421
    %v5424 = vadd.f32 %v5420, %v5422
    %v5425 = vtanh.pop %v5423
    %v5426 = vtanh.pop %v5424
    %v5427 = vmul.f32 %v5417, %v5425
    %v5428 = vmul.f32 %v5418, %v5426
    %5429 = vmatprep.subr.bf16.mxu0 %v1631
    %5430 = vmatpush1.bf16.msra.mxu0 %v1630
    %5431 = vmatprep.subr.bf16.mxu0 %v1639
    %5432 = vmatpush1.bf16.msra.mxu0 %v1638
    %5433 = vmatprep.subr.bf16.mxu0 %v1647
    %5434 = vmatpush1.bf16.msra.mxu0 %v1646
    %5435 = vmatprep.subr.bf16.mxu0 %v1655
    %5436 = vmatpush1.bf16.msra.mxu0 %v1654
    %5437 = vmatprep.subr.bf16.mxu0 %v1663
    %5438 = vmatpush1.bf16.msra.mxu0 %v1662
    %5439 = vmatprep.subr.bf16.mxu0 %v1671
    %5440 = vmatpush1.bf16.msra.mxu0 %v1670
    %5441 = vmatprep.subr.bf16.mxu0 %v1679
    %5442 = vmatpush1.bf16.msra.mxu0 %v1678
    %5443 = vmatprep.subr.bf16.mxu0 %v1687
    %5444 = vmatpush1.bf16.msra.mxu0 %v1686
    %5445 = vmatprep.subr.bf16.mxu0 %v1695
    %5446 = vmatpush1.bf16.msra.mxu0 %v1694
    %5447 = vmatprep.subr.bf16.mxu0 %v1703
    %5448 = vmatpush1.bf16.msra.mxu0 %v1702
    %5449 = vmatprep.subr.bf16.mxu0 %v1711
    %5450 = vmatpush1.bf16.msra.mxu0 %v1710
    %5451 = vmatprep.subr.bf16.mxu0 %v1719
    %5452 = vmatpush1.bf16.msra.mxu0 %v1718
    %5453 = vmatprep.subr.bf16.mxu0 %v1727
    %5454 = vmatpush1.bf16.msra.mxu0 %v1726
    %5455 = vmatprep.subr.bf16.mxu0 %v1735
    %5456 = vmatpush1.bf16.msra.mxu0 %v1734
    %5457 = vmatprep.subr.bf16.mxu0 %v1743
    %5458 = vmatpush1.bf16.msra.mxu0 %v1742
    %5459 = vmatprep.subr.bf16.mxu0 %v1751
    %5460 = vmatpush1.bf16.msra.mxu0 %v1750
    %5461 = vmatprep.mubr.bf16.mxu0 %v5054
    %5462 = vmatmul.mubr.bf16.gmra.mrb[0].mxu0 %v5053
    %v5463 = vpop.f32.mrb[0].mxu0
    %v5464 = vadd.f32 0.0, %v5463
    %v5465 = vpop.f32.mrb[0].mxu0
    %v5466 = vadd.f32 0.0, %v5465
    %v5467 = vpop.f32.mrb[0].mxu0
    %v5468 = vpop.f32.mrb[0].mxu0
    %5469 = vdwg.mxu0
    %5470 = vmatprep.subr.bf16.mxu0 %v1633
    %5471 = vmatpush1.bf16.msra.mxu0 %v1632
    %5472 = vmatprep.subr.bf16.mxu0 %v1641
    %5473 = vmatpush1.bf16.msra.mxu0 %v1640
    %5474 = vmatprep.subr.bf16.mxu0 %v1649
    %5475 = vmatpush1.bf16.msra.mxu0 %v1648
    %5476 = vmatprep.subr.bf16.mxu0 %v1657
    %5477 = vmatpush1.bf16.msra.mxu0 %v1656
    %5478 = vmatprep.subr.bf16.mxu0 %v1665
    %5479 = vmatpush1.bf16.msra.mxu0 %v1664
    %5480 = vmatprep.subr.bf16.mxu0 %v1673
    %5481 = vmatpush1.bf16.msra.mxu0 %v1672
    %5482 = vmatprep.subr.bf16.mxu0 %v1681
    %5483 = vmatpush1.bf16.msra.mxu0 %v1680
    %5484 = vmatprep.subr.bf16.mxu0 %v1689
    %5485 = vmatpush1.bf16.msra.mxu0 %v1688
    %5486 = vmatprep.subr.bf16.mxu0 %v1697
    %5487 = vmatpush1.bf16.msra.mxu0 %v1696
    %5488 = vmatprep.subr.bf16.mxu0 %v1705
    %5489 = vmatpush1.bf16.msra.mxu0 %v1704
    %5490 = vmatprep.subr.bf16.mxu0 %v1713
    %5491 = vmatpush1.bf16.msra.mxu0 %v1712
    %5492 = vmatprep.subr.bf16.mxu0 %v1721
    %5493 = vmatpush1.bf16.msra.mxu0 %v1720
    %5494 = vmatprep.subr.bf16.mxu0 %v1729
    %5495 = vmatpush1.bf16.msra.mxu0 %v1728
    %5496 = vmatprep.subr.bf16.mxu0 %v1737
    %5497 = vmatpush1.bf16.msra.mxu0 %v1736
    %5498 = vmatprep.subr.bf16.mxu0 %v1745
    %5499 = vmatpush1.bf16.msra.mxu0 %v1744
    %5500 = vmatprep.subr.bf16.mxu0 %v1753
    %5501 = vmatpush1.bf16.msra.mxu0 %v1752
    %5502 = vmatprep.mubr.bf16.mxu0 %v5054
    %5503 = vmatmul.mubr.bf16.gmra.mrb[0].mxu0 %v5053
    %v5504 = vpop.f32.mrb[0].mxu0
    %v5505 = vadd.f32 0.0, %v5504
    %v5506 = vpop.f32.mrb[0].mxu0
    %v5507 = vadd.f32 0.0, %v5506
    %v5508 = vpop.f32.mrb[0].mxu0
    %v5509 = vpop.f32.mrb[0].mxu0
    %5510 = vdwg.mxu0
    %5511 = vmatprep.subr.bf16.mxu0 %v1635
    %5512 = vmatpush1.bf16.msra.mxu0 %v1634
    %5513 = vmatprep.subr.bf16.mxu0 %v1643
    %5514 = vmatpush1.bf16.msra.mxu0 %v1642
    %5515 = vmatprep.subr.bf16.mxu0 %v1651
    %5516 = vmatpush1.bf16.msra.mxu0 %v1650
    %5517 = vmatprep.subr.bf16.mxu0 %v1659
    %5518 = vmatpush1.bf16.msra.mxu0 %v1658
    %5519 = vmatprep.subr.bf16.mxu0 %v1667
    %5520 = vmatpush1.bf16.msra.mxu0 %v1666
    %5521 = vmatprep.subr.bf16.mxu0 %v1675
    %5522 = vmatpush1.bf16.msra.mxu0 %v1674
    %5523 = vmatprep.subr.bf16.mxu0 %v1683
    %5524 = vmatpush1.bf16.msra.mxu0 %v1682
    %5525 = vmatprep.subr.bf16.mxu0 %v1691
    %5526 = vmatpush1.bf16.msra.mxu0 %v1690
    %5527 = vmatprep.subr.bf16.mxu0 %v1699
    %5528 = vmatpush1.bf16.msra.mxu0 %v1698
    %5529 = vmatprep.subr.bf16.mxu0 %v1707
    %5530 = vmatpush1.bf16.msra.mxu0 %v1706
    %5531 = vmatprep.subr.bf16.mxu0 %v1715
    %5532 = vmatpush1.bf16.msra.mxu0 %v1714
    %5533 = vmatprep.subr.bf16.mxu0 %v1723
    %5534 = vmatpush1.bf16.msra.mxu0 %v1722
    %5535 = vmatprep.subr.bf16.mxu0 %v1731
    %5536 = vmatpush1.bf16.msra.mxu0 %v1730
    %5537 = vmatprep.subr.bf16.mxu0 %v1739
    %5538 = vmatpush1.bf16.msra.mxu0 %v1738
    %5539 = vmatprep.subr.bf16.mxu0 %v1747
    %5540 = vmatpush1.bf16.msra.mxu0 %v1746
    %5541 = vmatprep.subr.bf16.mxu0 %v1755
    %5542 = vmatpush1.bf16.msra.mxu0 %v1754
    %5543 = vmatprep.mubr.bf16.mxu0 %v5054
    %5544 = vmatmul.mubr.bf16.gmra.mrb[0].mxu0 %v5053
    %v5545 = vpop.f32.mrb[0].mxu0
    %v5546 = vadd.f32 0.0, %v5545
    %v5547 = vpop.f32.mrb[0].mxu0
    %v5548 = vadd.f32 0.0, %v5547
    %v5549 = vpop.f32.mrb[0].mxu0
    %v5550 = vpop.f32.mrb[0].mxu0
    %5551 = vdwg.mxu0
    %5552 = vmatprep.subr.bf16.mxu0 %v1637
    %5553 = vmatpush1.bf16.msra.mxu0 %v1636
    %5554 = vmatprep.subr.bf16.mxu0 %v1645
    %5555 = vmatpush1.bf16.msra.mxu0 %v1644
    %5556 = vmatprep.subr.bf16.mxu0 %v1653
    %5557 = vmatpush1.bf16.msra.mxu0 %v1652
    %5558 = vmatprep.subr.bf16.mxu0 %v1661
    %5559 = vmatpush1.bf16.msra.mxu0 %v1660
    %5560 = vmatprep.subr.bf16.mxu0 %v1669
    %5561 = vmatpush1.bf16.msra.mxu0 %v1668
    %5562 = vmatprep.subr.bf16.mxu0 %v1677
    %5563 = vmatpush1.bf16.msra.mxu0 %v1676
    %5564 = vmatprep.subr.bf16.mxu0 %v1685
    %5565 = vmatpush1.bf16.msra.mxu0 %v1684
    %5566 = vmatprep.subr.bf16.mxu0 %v1693
    %5567 = vmatpush1.bf16.msra.mxu0 %v1692
    %5568 = vmatprep.subr.bf16.mxu0 %v1701
    %5569 = vmatpush1.bf16.msra.mxu0 %v1700
    %5570 = vmatprep.subr.bf16.mxu0 %v1709
    %5571 = vmatpush1.bf16.msra.mxu0 %v1708
    %5572 = vmatprep.subr.bf16.mxu0 %v1717
    %5573 = vmatpush1.bf16.msra.mxu0 %v1716
    %5574 = vmatprep.subr.bf16.mxu0 %v1725
    %5575 = vmatpush1.bf16.msra.mxu0 %v1724
    %5576 = vmatprep.subr.bf16.mxu0 %v1733
    %5577 = vmatpush1.bf16.msra.mxu0 %v1732
    %5578 = vmatprep.subr.bf16.mxu0 %v1741
    %5579 = vmatpush1.bf16.msra.mxu0 %v1740
    %5580 = vmatprep.subr.bf16.mxu0 %v1749
    %5581 = vmatpush1.bf16.msra.mxu0 %v1748
    %5582 = vmatprep.subr.bf16.mxu0 %v1757
    %5583 = vmatpush1.bf16.msra.mxu0 %v1756
    %5584 = vmatprep.mubr.bf16.mxu0 %v5054
    %5585 = vmatmul.mubr.bf16.gmra.mrb[0].mxu0 %v5053
    %v5586 = vpop.f32.mrb[0].mxu0
    %v5587 = vadd.f32 0.0, %v5586
    %v5588 = vpop.f32.mrb[0].mxu0
    %v5589 = vadd.f32 0.0, %v5588
    %v5590 = vpop.f32.mrb[0].mxu0
    %v5591 = vpop.f32.mrb[0].mxu0
    %5592 = vdwg.mxu0
    %v5593 = vadd.f32 %v630, %v5464
    %v5594 = vadd.f32 %v632, %v5466
    %v5595 = vadd.f32 %v703, %v5505
    %v5596 = vadd.f32 %v705, %v5507
    %v5597 = vadd.f32 %v776, %v5546
    %v5598 = vadd.f32 %v778, %v5548
    %v5599 = vadd.f32 %v849, %v5587
    %v5600 = vadd.f32 %v851, %v5589
    %v5601 = vmul.f32 %v5593, 0.5
    %v5602 = vmul.f32 %v5594, 0.5
    %v5603 = vtanh.pop %v5601
    %v5604 = vtanh.pop %v5602
    %v5605 = vadd.f32 %v5603, 1.0
    %v5606 = vadd.f32 %v5604, 1.0
    %v5607 = vmul.f32 %v5605, 0.5
    %v5608 = vmul.f32 %v5606, 0.5
    %v5609 = vmul.f32 %v5595, 0.5
    %v5610 = vmul.f32 %v5596, 0.5
    %v5611 = vtanh.pop %v5609
    %v5612 = vtanh.pop %v5610
    %v5613 = vadd.f32 %v5611, 1.0
    %v5614 = vadd.f32 %v5612, 1.0
    %v5615 = vmul.f32 %v5613, 0.5
    %v5616 = vmul.f32 %v5614, 0.5
    %v5617 = vtanh.pop %v5597
    %v5618 = vtanh.pop %v5598
    %v5619 = vmul.f32 %v5599, 0.5
    %v5620 = vmul.f32 %v5600, 0.5
    %v5621 = vtanh.pop %v5619
    %v5622 = vtanh.pop %v5620
    %v5623 = vadd.f32 %v5621, 1.0
    %v5624 = vadd.f32 %v5622, 1.0
    %v5625 = vmul.f32 %v5623, 0.5
    %v5626 = vmul.f32 %v5624, 0.5
    %v5627 = vmul.f32 %v5615, %v5047
    %v5628 = vmul.f32 %v5616, %v5048
    %v5629 = vmul.f32 %v5607, %v5617
    %v5630 = vmul.f32 %v5608, %v5618
    %v5631 = vadd.f32 %v5627, %v5629
    %v5632 = vadd.f32 %v5628, %v5630
    %v5633 = vtanh.pop %v5631
    %v5634 = vtanh.pop %v5632
    %v5635 = vmul.f32 %v5625, %v5633
    %v5636 = vmul.f32 %v5626, %v5634
    %v5637 = vpack.c.bf16 %v5635, %v5635
    %v5638 = vpack.c.bf16 %v5636, %v5636
    %v5639 = vpack.c.bf16 %v5427, %v5427
    %v5640 = vpack.c.bf16 %v5428, %v5428
    %5641 = vmatprep.subr.bf16.mxu0 %v1119
    %5642 = vmatpush1.bf16.msra.mxu0 %v1118
    %5643 = vmatprep.subr.bf16.mxu0 %v1127
    %5644 = vmatpush1.bf16.msra.mxu0 %v1126
    %5645 = vmatprep.subr.bf16.mxu0 %v1135
    %5646 = vmatpush1.bf16.msra.mxu0 %v1134
    %5647 = vmatprep.subr.bf16.mxu0 %v1143
    %5648 = vmatpush1.bf16.msra.mxu0 %v1142
    %5649 = vmatprep.subr.bf16.mxu0 %v1151
    %5650 = vmatpush1.bf16.msra.mxu0 %v1150
    %5651 = vmatprep.subr.bf16.mxu0 %v1159
    %5652 = vmatpush1.bf16.msra.mxu0 %v1158
    %5653 = vmatprep.subr.bf16.mxu0 %v1167
    %5654 = vmatpush1.bf16.msra.mxu0 %v1166
    %5655 = vmatprep.subr.bf16.mxu0 %v1175
    %5656 = vmatpush1.bf16.msra.mxu0 %v1174
    %5657 = vmatprep.subr.bf16.mxu0 %v1183
    %5658 = vmatpush1.bf16.msra.mxu0 %v1182
    %5659 = vmatprep.subr.bf16.mxu0 %v1191
    %5660 = vmatpush1.bf16.msra.mxu0 %v1190
    %5661 = vmatprep.subr.bf16.mxu0 %v1199
    %5662 = vmatpush1.bf16.msra.mxu0 %v1198
    %5663 = vmatprep.subr.bf16.mxu0 %v1207
    %5664 = vmatpush1.bf16.msra.mxu0 %v1206
    %5665 = vmatprep.subr.bf16.mxu0 %v1215
    %5666 = vmatpush1.bf16.msra.mxu0 %v1214
    %5667 = vmatprep.subr.bf16.mxu0 %v1223
    %5668 = vmatpush1.bf16.msra.mxu0 %v1222
    %5669 = vmatprep.subr.bf16.mxu0 %v1231
    %5670 = vmatpush1.bf16.msra.mxu0 %v1230
    %5671 = vmatprep.subr.bf16.mxu0 %v1239
    %5672 = vmatpush1.bf16.msra.mxu0 %v1238
    %5673 = vmatprep.mubr.bf16.mxu0 %v5640
    %5674 = vmatmul.mubr.bf16.gmra.mrb[0].mxu0 %v5639
    %v5675 = vpop.f32.mrb[0].mxu0
    %v5676 = vadd.f32 0.0, %v5675
    %v5677 = vpop.f32.mrb[0].mxu0
    %v5678 = vadd.f32 0.0, %v5677
    %v5679 = vpop.f32.mrb[0].mxu0
    %v5680 = vpop.f32.mrb[0].mxu0
    %5681 = vdwg.mxu0
    %5682 = vmatprep.subr.bf16.mxu0 %v1121
    %5683 = vmatpush1.bf16.msra.mxu0 %v1120
    %5684 = vmatprep.subr.bf16.mxu0 %v1129
    %5685 = vmatpush1.bf16.msra.mxu0 %v1128
    %5686 = vmatprep.subr.bf16.mxu0 %v1137
    %5687 = vmatpush1.bf16.msra.mxu0 %v1136
    %5688 = vmatprep.subr.bf16.mxu0 %v1145
    %5689 = vmatpush1.bf16.msra.mxu0 %v1144
    %5690 = vmatprep.subr.bf16.mxu0 %v1153
    %5691 = vmatpush1.bf16.msra.mxu0 %v1152
    %5692 = vmatprep.subr.bf16.mxu0 %v1161
    %5693 = vmatpush1.bf16.msra.mxu0 %v1160
    %5694 = vmatprep.subr.bf16.mxu0 %v1169
    %5695 = vmatpush1.bf16.msra.mxu0 %v1168
    %5696 = vmatprep.subr.bf16.mxu0 %v1177
    %5697 = vmatpush1.bf16.msra.mxu0 %v1176
    %5698 = vmatprep.subr.bf16.mxu0 %v1185
    %5699 = vmatpush1.bf16.msra.mxu0 %v1184
    %5700 = vmatprep.subr.bf16.mxu0 %v1193
    %5701 = vmatpush1.bf16.msra.mxu0 %v1192
    %5702 = vmatprep.subr.bf16.mxu0 %v1201
    %5703 = vmatpush1.bf16.msra.mxu0 %v1200
    %5704 = vmatprep.subr.bf16.mxu0 %v1209
    %5705 = vmatpush1.bf16.msra.mxu0 %v1208
    %5706 = vmatprep.subr.bf16.mxu0 %v1217
    %5707 = vmatpush1.bf16.msra.mxu0 %v1216
    %5708 = vmatprep.subr.bf16.mxu0 %v1225
    %5709 = vmatpush1.bf16.msra.mxu0 %v1224
    %5710 = vmatprep.subr.bf16.mxu0 %v1233
    %5711 = vmatpush1.bf16.msra.mxu0 %v1232
    %5712 = vmatprep.subr.bf16.mxu0 %v1241
    %5713 = vmatpush1.bf16.msra.mxu0 %v1240
    %5714 = vmatprep.mubr.bf16.mxu0 %v5640
    %5715 = vmatmul.mubr.bf16.gmra.mrb[0].mxu0 %v5639
    %v5716 = vpop.f32.mrb[0].mxu0
    %v5717 = vadd.f32 0.0, %v5716
    %v5718 = vpop.f32.mrb[0].mxu0
    %v5719 = vadd.f32 0.0, %v5718
    %v5720 = vpop.f32.mrb[0].mxu0
    %v5721 = vpop.f32.mrb[0].mxu0
    %5722 = vdwg.mxu0
    %5723 = vmatprep.subr.bf16.mxu0 %v1123
    %5724 = vmatpush1.bf16.msra.mxu0 %v1122
    %5725 = vmatprep.subr.bf16.mxu0 %v1131
    %5726 = vmatpush1.bf16.msra.mxu0 %v1130
    %5727 = vmatprep.subr.bf16.mxu0 %v1139
    %5728 = vmatpush1.bf16.msra.mxu0 %v1138
    %5729 = vmatprep.subr.bf16.mxu0 %v1147
    %5730 = vmatpush1.bf16.msra.mxu0 %v1146
    %5731 = vmatprep.subr.bf16.mxu0 %v1155
    %5732 = vmatpush1.bf16.msra.mxu0 %v1154
    %5733 = vmatprep.subr.bf16.mxu0 %v1163
    %5734 = vmatpush1.bf16.msra.mxu0 %v1162
    %5735 = vmatprep.subr.bf16.mxu0 %v1171
    %5736 = vmatpush1.bf16.msra.mxu0 %v1170
    %5737 = vmatprep.subr.bf16.mxu0 %v1179
    %5738 = vmatpush1.bf16.msra.mxu0 %v1178
    %5739 = vmatprep.subr.bf16.mxu0 %v1187
    %5740 = vmatpush1.bf16.msra.mxu0 %v1186
    %5741 = vmatprep.subr.bf16.mxu0 %v1195
    %5742 = vmatpush1.bf16.msra.mxu0 %v1194
    %5743 = vmatprep.subr.bf16.mxu0 %v1203
    %5744 = vmatpush1.bf16.msra.mxu0 %v1202
    %5745 = vmatprep.subr.bf16.mxu0 %v1211
    %5746 = vmatpush1.bf16.msra.mxu0 %v1210
    %5747 = vmatprep.subr.bf16.mxu0 %v1219
    %5748 = vmatpush1.bf16.msra.mxu0 %v1218
    %5749 = vmatprep.subr.bf16.mxu0 %v1227
    %5750 = vmatpush1.bf16.msra.mxu0 %v1226
    %5751 = vmatprep.subr.bf16.mxu0 %v1235
    %5752 = vmatpush1.bf16.msra.mxu0 %v1234
    %5753 = vmatprep.subr.bf16.mxu0 %v1243
    %5754 = vmatpush1.bf16.msra.mxu0 %v1242
    %5755 = vmatprep.mubr.bf16.mxu0 %v5640
    %5756 = vmatmul.mubr.bf16.gmra.mrb[0].mxu0 %v5639
    %v5757 = vpop.f32.mrb[0].mxu0
    %v5758 = vadd.f32 0.0, %v5757
    %v5759 = vpop.f32.mrb[0].mxu0
    %v5760 = vadd.f32 0.0, %v5759
    %v5761 = vpop.f32.mrb[0].mxu0
    %v5762 = vpop.f32.mrb[0].mxu0
    %5763 = vdwg.mxu0
    %5764 = vmatprep.subr.bf16.mxu0 %v1125
    %5765 = vmatpush1.bf16.msra.mxu0 %v1124
    %5766 = vmatprep.subr.bf16.mxu0 %v1133
    %5767 = vmatpush1.bf16.msra.mxu0 %v1132
    %5768 = vmatprep.subr.bf16.mxu0 %v1141
    %5769 = vmatpush1.bf16.msra.mxu0 %v1140
    %5770 = vmatprep.subr.bf16.mxu0 %v1149
    %5771 = vmatpush1.bf16.msra.mxu0 %v1148
    %5772 = vmatprep.subr.bf16.mxu0 %v1157
    %5773 = vmatpush1.bf16.msra.mxu0 %v1156
    %5774 = vmatprep.subr.bf16.mxu0 %v1165
    %5775 = vmatpush1.bf16.msra.mxu0 %v1164
    %5776 = vmatprep.subr.bf16.mxu0 %v1173
    %5777 = vmatpush1.bf16.msra.mxu0 %v1172
    %5778 = vmatprep.subr.bf16.mxu0 %v1181
    %5779 = vmatpush1.bf16.msra.mxu0 %v1180
    %5780 = vmatprep.subr.bf16.mxu0 %v1189
    %5781 = vmatpush1.bf16.msra.mxu0 %v1188
    %5782 = vmatprep.subr.bf16.mxu0 %v1197
    %5783 = vmatpush1.bf16.msra.mxu0 %v1196
    %5784 = vmatprep.subr.bf16.mxu0 %v1205
    %5785 = vmatpush1.bf16.msra.mxu0 %v1204
    %5786 = vmatprep.subr.bf16.mxu0 %v1213
    %5787 = vmatpush1.bf16.msra.mxu0 %v1212
    %5788 = vmatprep.subr.bf16.mxu0 %v1221
    %5789 = vmatpush1.bf16.msra.mxu0 %v1220
    %5790 = vmatprep.subr.bf16.mxu0 %v1229
    %5791 = vmatpush1.bf16.msra.mxu0 %v1228
    %5792 = vmatprep.subr.bf16.mxu0 %v1237
    %5793 = vmatpush1.bf16.msra.mxu0 %v1236
    %5794 = vmatprep.subr.bf16.mxu0 %v1245
    %5795 = vmatpush1.bf16.msra.mxu0 %v1244
    %5796 = vmatprep.mubr.bf16.mxu0 %v5640
    %5797 = vmatmul.mubr.bf16.gmra.mrb[0].mxu0 %v5639
    %v5798 = vpop.f32.mrb[0].mxu0
    %v5799 = vadd.f32 0.0, %v5798
    %v5800 = vpop.f32.mrb[0].mxu0
    %v5801 = vadd.f32 0.0, %v5800
    %v5802 = vpop.f32.mrb[0].mxu0
    %v5803 = vpop.f32.mrb[0].mxu0
    %5804 = vdwg.mxu0
    %5805 = vmatprep.subr.bf16.mxu0 %v991
    %5806 = vmatpush1.bf16.msra.mxu0 %v990
    %5807 = vmatprep.subr.bf16.mxu0 %v999
    %5808 = vmatpush1.bf16.msra.mxu0 %v998
    %5809 = vmatprep.subr.bf16.mxu0 %v1007
    %5810 = vmatpush1.bf16.msra.mxu0 %v1006
    %5811 = vmatprep.subr.bf16.mxu0 %v1015
    %5812 = vmatpush1.bf16.msra.mxu0 %v1014
    %5813 = vmatprep.subr.bf16.mxu0 %v1023
    %5814 = vmatpush1.bf16.msra.mxu0 %v1022
    %5815 = vmatprep.subr.bf16.mxu0 %v1031
    %5816 = vmatpush1.bf16.msra.mxu0 %v1030
    %5817 = vmatprep.subr.bf16.mxu0 %v1039
    %5818 = vmatpush1.bf16.msra.mxu0 %v1038
    %5819 = vmatprep.subr.bf16.mxu0 %v1047
    %5820 = vmatpush1.bf16.msra.mxu0 %v1046
    %5821 = vmatprep.subr.bf16.mxu0 %v1055
    %5822 = vmatpush1.bf16.msra.mxu0 %v1054
    %5823 = vmatprep.subr.bf16.mxu0 %v1063
    %5824 = vmatpush1.bf16.msra.mxu0 %v1062
    %5825 = vmatprep.subr.bf16.mxu0 %v1071
    %5826 = vmatpush1.bf16.msra.mxu0 %v1070
    %5827 = vmatprep.subr.bf16.mxu0 %v1079
    %5828 = vmatpush1.bf16.msra.mxu0 %v1078
    %5829 = vmatprep.subr.bf16.mxu0 %v1087
    %5830 = vmatpush1.bf16.msra.mxu0 %v1086
    %5831 = vmatprep.subr.bf16.mxu0 %v1095
    %5832 = vmatpush1.bf16.msra.mxu0 %v1094
    %5833 = vmatprep.subr.bf16.mxu0 %v1103
    %5834 = vmatpush1.bf16.msra.mxu0 %v1102
    %5835 = vmatprep.subr.bf16.mxu0 %v1111
    %5836 = vmatpush1.bf16.msra.mxu0 %v1110
    %5837 = vmatprep.mubr.bf16.mxu0 %v5638
    %5838 = vmatmul.mubr.bf16.gmra.mrb[0].mxu0 %v5637
    %v5839 = vpop.f32.mrb[0].mxu0
    %v5840 = vadd.f32 %v5676, %v5839
    %v5841 = vpop.f32.mrb[0].mxu0
    %v5842 = vadd.f32 %v5678, %v5841
    %v5843 = vpop.f32.mrb[0].mxu0
    %v5844 = vpop.f32.mrb[0].mxu0
    %5845 = vdwg.mxu0
    %5846 = vmatprep.subr.bf16.mxu0 %v993
    %5847 = vmatpush1.bf16.msra.mxu0 %v992
    %5848 = vmatprep.subr.bf16.mxu0 %v1001
    %5849 = vmatpush1.bf16.msra.mxu0 %v1000
    %5850 = vmatprep.subr.bf16.mxu0 %v1009
    %5851 = vmatpush1.bf16.msra.mxu0 %v1008
    %5852 = vmatprep.subr.bf16.mxu0 %v1017
    %5853 = vmatpush1.bf16.msra.mxu0 %v1016
    %5854 = vmatprep.subr.bf16.mxu0 %v1025
    %5855 = vmatpush1.bf16.msra.mxu0 %v1024
    %5856 = vmatprep.subr.bf16.mxu0 %v1033
    %5857 = vmatpush1.bf16.msra.mxu0 %v1032
    %5858 = vmatprep.subr.bf16.mxu0 %v1041
    %5859 = vmatpush1.bf16.msra.mxu0 %v1040
    %5860 = vmatprep.subr.bf16.mxu0 %v1049
    %5861 = vmatpush1.bf16.msra.mxu0 %v1048
    %5862 = vmatprep.subr.bf16.mxu0 %v1057
    %5863 = vmatpush1.bf16.msra.mxu0 %v1056
    %5864 = vmatprep.subr.bf16.mxu0 %v1065
    %5865 = vmatpush1.bf16.msra.mxu0 %v1064
    %5866 = vmatprep.subr.bf16.mxu0 %v1073
    %5867 = vmatpush1.bf16.msra.mxu0 %v1072
    %5868 = vmatprep.subr.bf16.mxu0 %v1081
    %5869 = vmatpush1.bf16.msra.mxu0 %v1080
    %5870 = vmatprep.subr.bf16.mxu0 %v1089
    %5871 = vmatpush1.bf16.msra.mxu0 %v1088
    %5872 = vmatprep.subr.bf16.mxu0 %v1097
    %5873 = vmatpush1.bf16.msra.mxu0 %v1096
    %5874 = vmatprep.subr.bf16.mxu0 %v1105
    %5875 = vmatpush1.bf16.msra.mxu0 %v1104
    %5876 = vmatprep.subr.bf16.mxu0 %v1113
    %5877 = vmatpush1.bf16.msra.mxu0 %v1112
    %5878 = vmatprep.mubr.bf16.mxu0 %v5638
    %5879 = vmatmul.mubr.bf16.gmra.mrb[0].mxu0 %v5637
    %v5880 = vpop.f32.mrb[0].mxu0
    %v5881 = vadd.f32 %v5717, %v5880
    %v5882 = vpop.f32.mrb[0].mxu0
    %v5883 = vadd.f32 %v5719, %v5882
    %v5884 = vpop.f32.mrb[0].mxu0
    %v5885 = vpop.f32.mrb[0].mxu0
    %5886 = vdwg.mxu0
    %5887 = vmatprep.subr.bf16.mxu0 %v995
    %5888 = vmatpush1.bf16.msra.mxu0 %v994
    %5889 = vmatprep.subr.bf16.mxu0 %v1003
    %5890 = vmatpush1.bf16.msra.mxu0 %v1002
    %5891 = vmatprep.subr.bf16.mxu0 %v1011
    %5892 = vmatpush1.bf16.msra.mxu0 %v1010
    %5893 = vmatprep.subr.bf16.mxu0 %v1019
    %5894 = vmatpush1.bf16.msra.mxu0 %v1018
    %5895 = vmatprep.subr.bf16.mxu0 %v1027
    %5896 = vmatpush1.bf16.msra.mxu0 %v1026
    %5897 = vmatprep.subr.bf16.mxu0 %v1035
    %5898 = vmatpush1.bf16.msra.mxu0 %v1034
    %5899 = vmatprep.subr.bf16.mxu0 %v1043
    %5900 = vmatpush1.bf16.msra.mxu0 %v1042
    %5901 = vmatprep.subr.bf16.mxu0 %v1051
    %5902 = vmatpush1.bf16.msra.mxu0 %v1050
    %5903 = vmatprep.subr.bf16.mxu0 %v1059
    %5904 = vmatpush1.bf16.msra.mxu0 %v1058
    %5905 = vmatprep.subr.bf16.mxu0 %v1067
    %5906 = vmatpush1.bf16.msra.mxu0 %v1066
    %5907 = vmatprep.subr.bf16.mxu0 %v1075
    %5908 = vmatpush1.bf16.msra.mxu0 %v1074
    %5909 = vmatprep.subr.bf16.mxu0 %v1083
    %5910 = vmatpush1.bf16.msra.mxu0 %v1082
    %5911 = vmatprep.subr.bf16.mxu0 %v1091
    %5912 = vmatpush1.bf16.msra.mxu0 %v1090
    %5913 = vmatprep.subr.bf16.mxu0 %v1099
    %5914 = vmatpush1.bf16.msra.mxu0 %v1098
    %5915 = vmatprep.subr.bf16.mxu0 %v1107
    %5916 = vmatpush1.bf16.msra.mxu0 %v1106
    %5917 = vmatprep.subr.bf16.mxu0 %v1115
    %5918 = vmatpush1.bf16.msra.mxu0 %v1114
    %5919 = vmatprep.mubr.bf16.mxu0 %v5638
    %5920 = vmatmul.mubr.bf16.gmra.mrb[0].mxu0 %v5637
    %v5921 = vpop.f32.mrb[0].mxu0
    %v5922 = vadd.f32 %v5758, %v5921
    %v5923 = vpop.f32.mrb[0].mxu0
    %v5924 = vadd.f32 %v5760, %v5923
    %v5925 = vpop.f32.mrb[0].mxu0
    %v5926 = vpop.f32.mrb[0].mxu0
    %5927 = vdwg.mxu0
    %5928 = vmatprep.subr.bf16.mxu0 %v997
    %5929 = vmatpush1.bf16.msra.mxu0 %v996
    %5930 = vmatprep.subr.bf16.mxu0 %v1005
    %5931 = vmatpush1.bf16.msra.mxu0 %v1004
    %5932 = vmatprep.subr.bf16.mxu0 %v1013
    %5933 = vmatpush1.bf16.msra.mxu0 %v1012
    %5934 = vmatprep.subr.bf16.mxu0 %v1021
    %5935 = vmatpush1.bf16.msra.mxu0 %v1020
    %5936 = vmatprep.subr.bf16.mxu0 %v1029
    %5937 = vmatpush1.bf16.msra.mxu0 %v1028
    %5938 = vmatprep.subr.bf16.mxu0 %v1037
    %5939 = vmatpush1.bf16.msra.mxu0 %v1036
    %5940 = vmatprep.subr.bf16.mxu0 %v1045
    %5941 = vmatpush1.bf16.msra.mxu0 %v1044
    %5942 = vmatprep.subr.bf16.mxu0 %v1053
    %5943 = vmatpush1.bf16.msra.mxu0 %v1052
    %5944 = vmatprep.subr.bf16.mxu0 %v1061
    %5945 = vmatpush1.bf16.msra.mxu0 %v1060
    %5946 = vmatprep.subr.bf16.mxu0 %v1069
    %5947 = vmatpush1.bf16.msra.mxu0 %v1068
    %5948 = vmatprep.subr.bf16.mxu0 %v1077
    %5949 = vmatpush1.bf16.msra.mxu0 %v1076
    %5950 = vmatprep.subr.bf16.mxu0 %v1085
    %5951 = vmatpush1.bf16.msra.mxu0 %v1084
    %5952 = vmatprep.subr.bf16.mxu0 %v1093
    %5953 = vmatpush1.bf16.msra.mxu0 %v1092
    %5954 = vmatprep.subr.bf16.mxu0 %v1101
    %5955 = vmatpush1.bf16.msra.mxu0 %v1100
    %5956 = vmatprep.subr.bf16.mxu0 %v1109
    %5957 = vmatpush1.bf16.msra.mxu0 %v1108
    %5958 = vmatprep.subr.bf16.mxu0 %v1117
    %5959 = vmatpush1.bf16.msra.mxu0 %v1116
    %5960 = vmatprep.mubr.bf16.mxu0 %v5638
    %5961 = vmatmul.mubr.bf16.gmra.mrb[0].mxu0 %v5637
    %v5962 = vpop.f32.mrb[0].mxu0
    %v5963 = vadd.f32 %v5799, %v5962
    %v5964 = vpop.f32.mrb[0].mxu0
    %v5965 = vadd.f32 %v5801, %v5964
    %v5966 = vpop.f32.mrb[0].mxu0
    %v5967 = vpop.f32.mrb[0].mxu0
    %5968 = vdwg.mxu0
    %v5969 = vadd.f32 %v5840, %v2428
    %v5970 = vadd.f32 %v5842, %v2432
    %v5971 = vadd.f32 %v5881, %v2436
    %v5972 = vadd.f32 %v5883, %v2440
    %v5973 = vadd.f32 %v5922, %v2444
    %v5974 = vadd.f32 %v5924, %v2448
    %v5975 = vadd.f32 %v5963, %v2452
    %v5976 = vadd.f32 %v5965, %v2456
    %v5977 = vmul.f32 %v5969, 0.5
    %v5978 = vmul.f32 %v5970, 0.5
    %v5979 = vtanh.pop %v5977
    %v5980 = vtanh.pop %v5978
    %v5981 = vadd.f32 %v5979, 1.0
    %v5982 = vadd.f32 %v5980, 1.0
    %v5983 = vmul.f32 %v5981, 0.5
    %v5984 = vmul.f32 %v5982, 0.5
    %v5985 = vmul.f32 %v5971, 0.5
    %v5986 = vmul.f32 %v5972, 0.5
    %v5987 = vtanh.pop %v5985
    %v5988 = vtanh.pop %v5986
    %v5989 = vadd.f32 %v5987, 1.0
    %v5990 = vadd.f32 %v5988, 1.0
    %v5991 = vmul.f32 %v5989, 0.5
    %v5992 = vmul.f32 %v5990, 0.5
    %v5993 = vtanh.pop %v5973
    %v5994 = vtanh.pop %v5974
    %v5995 = vmul.f32 %v5975, 0.5
    %v5996 = vmul.f32 %v5976, 0.5
    %v5997 = vtanh.pop %v5995
    %v5998 = vtanh.pop %v5996
    %v5999 = vadd.f32 %v5997, 1.0
    %v6000 = vadd.f32 %v5998, 1.0
    %v6001 = vmul.f32 %v5999, 0.5
    %v6002 = vmul.f32 %v6000, 0.5
    %v6003 = vmul.f32 %v5991, %v5423
    %v6004 = vmul.f32 %v5992, %v5424
    %v6005 = vmul.f32 %v5983, %v5993
    %v6006 = vmul.f32 %v5984, %v5994
    %v6007 = vadd.f32 %v6003, %v6005
    %v6008 = vadd.f32 %v6004, %v6006
    %v6009 = vtanh.pop %v6007
    %v6010 = vtanh.pop %v6008
    %v6011 = vmul.f32 %v6001, %v6009
    %v6012 = vmul.f32 %v6002, %v6010
    %6013 = vmatprep.subr.bf16.mxu0 %v1631
    %6014 = vmatpush1.bf16.msra.mxu0 %v1630
    %6015 = vmatprep.subr.bf16.mxu0 %v1639
    %6016 = vmatpush1.bf16.msra.mxu0 %v1638
    %6017 = vmatprep.subr.bf16.mxu0 %v1647
    %6018 = vmatpush1.bf16.msra.mxu0 %v1646
    %6019 = vmatprep.subr.bf16.mxu0 %v1655
    %6020 = vmatpush1.bf16.msra.mxu0 %v1654
    %6021 = vmatprep.subr.bf16.mxu0 %v1663
    %6022 = vmatpush1.bf16.msra.mxu0 %v1662
    %6023 = vmatprep.subr.bf16.mxu0 %v1671
    %6024 = vmatpush1.bf16.msra.mxu0 %v1670
    %6025 = vmatprep.subr.bf16.mxu0 %v1679
    %6026 = vmatpush1.bf16.msra.mxu0 %v1678
    %6027 = vmatprep.subr.bf16.mxu0 %v1687
    %6028 = vmatpush1.bf16.msra.mxu0 %v1686
    %6029 = vmatprep.subr.bf16.mxu0 %v1695
    %6030 = vmatpush1.bf16.msra.mxu0 %v1694
    %6031 = vmatprep.subr.bf16.mxu0 %v1703
    %6032 = vmatpush1.bf16.msra.mxu0 %v1702
    %6033 = vmatprep.subr.bf16.mxu0 %v1711
    %6034 = vmatpush1.bf16.msra.mxu0 %v1710
    %6035 = vmatprep.subr.bf16.mxu0 %v1719
    %6036 = vmatpush1.bf16.msra.mxu0 %v1718
    %6037 = vmatprep.subr.bf16.mxu0 %v1727
    %6038 = vmatpush1.bf16.msra.mxu0 %v1726
    %6039 = vmatprep.subr.bf16.mxu0 %v1735
    %6040 = vmatpush1.bf16.msra.mxu0 %v1734
    %6041 = vmatprep.subr.bf16.mxu0 %v1743
    %6042 = vmatpush1.bf16.msra.mxu0 %v1742
    %6043 = vmatprep.subr.bf16.mxu0 %v1751
    %6044 = vmatpush1.bf16.msra.mxu0 %v1750
    %6045 = vmatprep.mubr.bf16.mxu0 %v5638
    %6046 = vmatmul.mubr.bf16.gmra.mrb[0].mxu0 %v5637
    %v6047 = vpop.f32.mrb[0].mxu0
    %v6048 = vadd.f32 0.0, %v6047
    %v6049 = vpop.f32.mrb[0].mxu0
    %v6050 = vadd.f32 0.0, %v6049
    %v6051 = vpop.f32.mrb[0].mxu0
    %v6052 = vpop.f32.mrb[0].mxu0
    %6053 = vdwg.mxu0
    %6054 = vmatprep.subr.bf16.mxu0 %v1633
    %6055 = vmatpush1.bf16.msra.mxu0 %v1632
    %6056 = vmatprep.subr.bf16.mxu0 %v1641
    %6057 = vmatpush1.bf16.msra.mxu0 %v1640
    %6058 = vmatprep.subr.bf16.mxu0 %v1649
    %6059 = vmatpush1.bf16.msra.mxu0 %v1648
    %6060 = vmatprep.subr.bf16.mxu0 %v1657
    %6061 = vmatpush1.bf16.msra.mxu0 %v1656
    %6062 = vmatprep.subr.bf16.mxu0 %v1665
    %6063 = vmatpush1.bf16.msra.mxu0 %v1664
    %6064 = vmatprep.subr.bf16.mxu0 %v1673
    %6065 = vmatpush1.bf16.msra.mxu0 %v1672
    %6066 = vmatprep.subr.bf16.mxu0 %v1681
    %6067 = vmatpush1.bf16.msra.mxu0 %v1680
    %6068 = vmatprep.subr.bf16.mxu0 %v1689
    %6069 = vmatpush1.bf16.msra.mxu0 %v1688
    %6070 = vmatprep.subr.bf16.mxu0 %v1697
    %6071 = vmatpush1.bf16.msra.mxu0 %v1696
    %6072 = vmatprep.subr.bf16.mxu0 %v1705
    %6073 = vmatpush1.bf16.msra.mxu0 %v1704
    %6074 = vmatprep.subr.bf16.mxu0 %v1713
    %6075 = vmatpush1.bf16.msra.mxu0 %v1712
    %6076 = vmatprep.subr.bf16.mxu0 %v1721
    %6077 = vmatpush1.bf16.msra.mxu0 %v1720
    %6078 = vmatprep.subr.bf16.mxu0 %v1729
    %6079 = vmatpush1.bf16.msra.mxu0 %v1728
    %6080 = vmatprep.subr.bf16.mxu0 %v1737
    %6081 = vmatpush1.bf16.msra.mxu0 %v1736
    %6082 = vmatprep.subr.bf16.mxu0 %v1745
    %6083 = vmatpush1.bf16.msra.mxu0 %v1744
    %6084 = vmatprep.subr.bf16.mxu0 %v1753
    %6085 = vmatpush1.bf16.msra.mxu0 %v1752
    %6086 = vmatprep.mubr.bf16.mxu0 %v5638
    %6087 = vmatmul.mubr.bf16.gmra.mrb[0].mxu0 %v5637
    %v6088 = vpop.f32.mrb[0].mxu0
    %v6089 = vadd.f32 0.0, %v6088
    %v6090 = vpop.f32.mrb[0].mxu0
    %v6091 = vadd.f32 0.0, %v6090
    %v6092 = vpop.f32.mrb[0].mxu0
    %v6093 = vpop.f32.mrb[0].mxu0
    %6094 = vdwg.mxu0
    %6095 = vmatprep.subr.bf16.mxu0 %v1635
    %6096 = vmatpush1.bf16.msra.mxu0 %v1634
    %6097 = vmatprep.subr.bf16.mxu0 %v1643
    %6098 = vmatpush1.bf16.msra.mxu0 %v1642
    %6099 = vmatprep.subr.bf16.mxu0 %v1651
    %6100 = vmatpush1.bf16.msra.mxu0 %v1650
    %6101 = vmatprep.subr.bf16.mxu0 %v1659
    %6102 = vmatpush1.bf16.msra.mxu0 %v1658
    %6103 = vmatprep.subr.bf16.mxu0 %v1667
    %6104 = vmatpush1.bf16.msra.mxu0 %v1666
    %6105 = vmatprep.subr.bf16.mxu0 %v1675
    %6106 = vmatpush1.bf16.msra.mxu0 %v1674
    %6107 = vmatprep.subr.bf16.mxu0 %v1683
    %6108 = vmatpush1.bf16.msra.mxu0 %v1682
    %6109 = vmatprep.subr.bf16.mxu0 %v1691
    %6110 = vmatpush1.bf16.msra.mxu0 %v1690
    %6111 = vmatprep.subr.bf16.mxu0 %v1699
    %6112 = vmatpush1.bf16.msra.mxu0 %v1698
    %6113 = vmatprep.subr.bf16.mxu0 %v1707
    %6114 = vmatpush1.bf16.msra.mxu0 %v1706
    %6115 = vmatprep.subr.bf16.mxu0 %v1715
    %6116 = vmatpush1.bf16.msra.mxu0 %v1714
    %6117 = vmatprep.subr.bf16.mxu0 %v1723
    %6118 = vmatpush1.bf16.msra.mxu0 %v1722
    %6119 = vmatprep.subr.bf16.mxu0 %v1731
    %6120 = vmatpush1.bf16.msra.mxu0 %v1730
    %6121 = vmatprep.subr.bf16.mxu0 %v1739
    %6122 = vmatpush1.bf16.msra.mxu0 %v1738
    %6123 = vmatprep.subr.bf16.mxu0 %v1747
    %6124 = vmatpush1.bf16.msra.mxu0 %v1746
    %6125 = vmatprep.subr.bf16.mxu0 %v1755
    %6126 = vmatpush1.bf16.msra.mxu0 %v1754
    %6127 = vmatprep.mubr.bf16.mxu0 %v5638
    %6128 = vmatmul.mubr.bf16.gmra.mrb[0].mxu0 %v5637
    %v6129 = vpop.f32.mrb[0].mxu0
    %v6130 = vadd.f32 0.0, %v6129
    %v6131 = vpop.f32.mrb[0].mxu0
    %v6132 = vadd.f32 0.0, %v6131
    %v6133 = vpop.f32.mrb[0].mxu0
    %v6134 = vpop.f32.mrb[0].mxu0
    %6135 = vdwg.mxu0
    %6136 = vmatprep.subr.bf16.mxu0 %v1637
    %6137 = vmatpush1.bf16.msra.mxu0 %v1636
    %6138 = vmatprep.subr.bf16.mxu0 %v1645
    %6139 = vmatpush1.bf16.msra.mxu0 %v1644
    %6140 = vmatprep.subr.bf16.mxu0 %v1653
    %6141 = vmatpush1.bf16.msra.mxu0 %v1652
    %6142 = vmatprep.subr.bf16.mxu0 %v1661
    %6143 = vmatpush1.bf16.msra.mxu0 %v1660
    %6144 = vmatprep.subr.bf16.mxu0 %v1669
    %6145 = vmatpush1.bf16.msra.mxu0 %v1668
    %6146 = vmatprep.subr.bf16.mxu0 %v1677
    %6147 = vmatpush1.bf16.msra.mxu0 %v1676
    %6148 = vmatprep.subr.bf16.mxu0 %v1685
    %6149 = vmatpush1.bf16.msra.mxu0 %v1684
    %6150 = vmatprep.subr.bf16.mxu0 %v1693
    %6151 = vmatpush1.bf16.msra.mxu0 %v1692
    %6152 = vmatprep.subr.bf16.mxu0 %v1701
    %6153 = vmatpush1.bf16.msra.mxu0 %v1700
    %6154 = vmatprep.subr.bf16.mxu0 %v1709
    %6155 = vmatpush1.bf16.msra.mxu0 %v1708
    %6156 = vmatprep.subr.bf16.mxu0 %v1717
    %6157 = vmatpush1.bf16.msra.mxu0 %v1716
    %6158 = vmatprep.subr.bf16.mxu0 %v1725
    %6159 = vmatpush1.bf16.msra.mxu0 %v1724
    %6160 = vmatprep.subr.bf16.mxu0 %v1733
    %6161 = vmatpush1.bf16.msra.mxu0 %v1732
    %6162 = vmatprep.subr.bf16.mxu0 %v1741
    %6163 = vmatpush1.bf16.msra.mxu0 %v1740
    %6164 = vmatprep.subr.bf16.mxu0 %v1749
    %6165 = vmatpush1.bf16.msra.mxu0 %v1748
    %6166 = vmatprep.subr.bf16.mxu0 %v1757
    %6167 = vmatpush1.bf16.msra.mxu0 %v1756
    %6168 = vmatprep.mubr.bf16.mxu0 %v5638
    %6169 = vmatmul.mubr.bf16.gmra.mrb[0].mxu0 %v5637
    %v6170 = vpop.f32.mrb[0].mxu0
    %v6171 = vadd.f32 0.0, %v6170
    %v6172 = vpop.f32.mrb[0].mxu0
    %v6173 = vadd.f32 0.0, %v6172
    %v6174 = vpop.f32.mrb[0].mxu0
    %v6175 = vpop.f32.mrb[0].mxu0
    %6176 = vdwg.mxu0
    %v6177 = vadd.f32 %v634, %v6048
    %v6178 = vadd.f32 %v636, %v6050
    %v6179 = vadd.f32 %v707, %v6089
    %v6180 = vadd.f32 %v709, %v6091
    %v6181 = vadd.f32 %v780, %v6130
    %v6182 = vadd.f32 %v782, %v6132
    %v6183 = vadd.f32 %v853, %v6171
    %v6184 = vadd.f32 %v855, %v6173
    %v6185 = vmul.f32 %v6177, 0.5
    %v6186 = vmul.f32 %v6178, 0.5
    %v6187 = vtanh.pop %v6185
    %v6188 = vtanh.pop %v6186
    %v6189 = vadd.f32 %v6187, 1.0
    %v6190 = vadd.f32 %v6188, 1.0
    %v6191 = vmul.f32 %v6189, 0.5
    %v6192 = vmul.f32 %v6190, 0.5
    %v6193 = vmul.f32 %v6179, 0.5
    %v6194 = vmul.f32 %v6180, 0.5
    %v6195 = vtanh.pop %v6193
    %v6196 = vtanh.pop %v6194
    %v6197 = vadd.f32 %v6195, 1.0
    %v6198 = vadd.f32 %v6196, 1.0
    %v6199 = vmul.f32 %v6197, 0.5
    %v6200 = vmul.f32 %v6198, 0.5
    %v6201 = vtanh.pop %v6181
    %v6202 = vtanh.pop %v6182
    %v6203 = vmul.f32 %v6183, 0.5
    %v6204 = vmul.f32 %v6184, 0.5
    %v6205 = vtanh.pop %v6203
    %v6206 = vtanh.pop %v6204
    %v6207 = vadd.f32 %v6205, 1.0
    %v6208 = vadd.f32 %v6206, 1.0
    %v6209 = vmul.f32 %v6207, 0.5
    %v6210 = vmul.f32 %v6208, 0.5
    %v6211 = vmul.f32 %v6199, %v5631
    %v6212 = vmul.f32 %v6200, %v5632
    %v6213 = vmul.f32 %v6191, %v6201
    %v6214 = vmul.f32 %v6192, %v6202
    %v6215 = vadd.f32 %v6211, %v6213
    %v6216 = vadd.f32 %v6212, %v6214
    %v6217 = vtanh.pop %v6215
    %v6218 = vtanh.pop %v6216
    %v6219 = vmul.f32 %v6209, %v6217
    %v6220 = vmul.f32 %v6210, %v6218
    %v6221 = vpack.c.bf16 %v6219, %v6219
    %v6222 = vpack.c.bf16 %v6220, %v6220
    %v6223 = vpack.c.bf16 %v6011, %v6011
    %v6224 = vpack.c.bf16 %v6012, %v6012
    %6225 = vmatprep.subr.bf16.mxu0 %v1119
    %6226 = vmatpush1.bf16.msra.mxu0 %v1118
    %6227 = vmatprep.subr.bf16.mxu0 %v1127
    %6228 = vmatpush1.bf16.msra.mxu0 %v1126
    %6229 = vmatprep.subr.bf16.mxu0 %v1135
    %6230 = vmatpush1.bf16.msra.mxu0 %v1134
    %6231 = vmatprep.subr.bf16.mxu0 %v1143
    %6232 = vmatpush1.bf16.msra.mxu0 %v1142
    %6233 = vmatprep.subr.bf16.mxu0 %v1151
    %6234 = vmatpush1.bf16.msra.mxu0 %v1150
    %6235 = vmatprep.subr.bf16.mxu0 %v1159
    %6236 = vmatpush1.bf16.msra.mxu0 %v1158
    %6237 = vmatprep.subr.bf16.mxu0 %v1167
    %6238 = vmatpush1.bf16.msra.mxu0 %v1166
    %6239 = vmatprep.subr.bf16.mxu0 %v1175
    %6240 = vmatpush1.bf16.msra.mxu0 %v1174
    %6241 = vmatprep.subr.bf16.mxu0 %v1183
    %6242 = vmatpush1.bf16.msra.mxu0 %v1182
    %6243 = vmatprep.subr.bf16.mxu0 %v1191
    %6244 = vmatpush1.bf16.msra.mxu0 %v1190
    %6245 = vmatprep.subr.bf16.mxu0 %v1199
    %6246 = vmatpush1.bf16.msra.mxu0 %v1198
    %6247 = vmatprep.subr.bf16.mxu0 %v1207
    %6248 = vmatpush1.bf16.msra.mxu0 %v1206
    %6249 = vmatprep.subr.bf16.mxu0 %v1215
    %6250 = vmatpush1.bf16.msra.mxu0 %v1214
    %6251 = vmatprep.subr.bf16.mxu0 %v1223
    %6252 = vmatpush1.bf16.msra.mxu0 %v1222
    %6253 = vmatprep.subr.bf16.mxu0 %v1231
    %6254 = vmatpush1.bf16.msra.mxu0 %v1230
    %6255 = vmatprep.subr.bf16.mxu0 %v1239
    %6256 = vmatpush1.bf16.msra.mxu0 %v1238
    %6257 = vmatprep.mubr.bf16.mxu0 %v6224
    %6258 = vmatmul.mubr.bf16.gmra.mrb[0].mxu0 %v6223
    %v6259 = vpop.f32.mrb[0].mxu0
    %v6260 = vadd.f32 0.0, %v6259
    %v6261 = vpop.f32.mrb[0].mxu0
    %v6262 = vadd.f32 0.0, %v6261
    %v6263 = vpop.f32.mrb[0].mxu0
    %v6264 = vpop.f32.mrb[0].mxu0
    %6265 = vdwg.mxu0
    %6266 = vmatprep.subr.bf16.mxu0 %v1121
    %6267 = vmatpush1.bf16.msra.mxu0 %v1120
    %6268 = vmatprep.subr.bf16.mxu0 %v1129
    %6269 = vmatpush1.bf16.msra.mxu0 %v1128
    %6270 = vmatprep.subr.bf16.mxu0 %v1137
    %6271 = vmatpush1.bf16.msra.mxu0 %v1136
    %6272 = vmatprep.subr.bf16.mxu0 %v1145
    %6273 = vmatpush1.bf16.msra.mxu0 %v1144
    %6274 = vmatprep.subr.bf16.mxu0 %v1153
    %6275 = vmatpush1.bf16.msra.mxu0 %v1152
    %6276 = vmatprep.subr.bf16.mxu0 %v1161
    %6277 = vmatpush1.bf16.msra.mxu0 %v1160
    %6278 = vmatprep.subr.bf16.mxu0 %v1169
    %6279 = vmatpush1.bf16.msra.mxu0 %v1168
    %6280 = vmatprep.subr.bf16.mxu0 %v1177
    %6281 = vmatpush1.bf16.msra.mxu0 %v1176
    %6282 = vmatprep.subr.bf16.mxu0 %v1185
    %6283 = vmatpush1.bf16.msra.mxu0 %v1184
    %6284 = vmatprep.subr.bf16.mxu0 %v1193
    %6285 = vmatpush1.bf16.msra.mxu0 %v1192
    %6286 = vmatprep.subr.bf16.mxu0 %v1201
    %6287 = vmatpush1.bf16.msra.mxu0 %v1200
    %6288 = vmatprep.subr.bf16.mxu0 %v1209
    %6289 = vmatpush1.bf16.msra.mxu0 %v1208
    %6290 = vmatprep.subr.bf16.mxu0 %v1217
    %6291 = vmatpush1.bf16.msra.mxu0 %v1216
    %6292 = vmatprep.subr.bf16.mxu0 %v1225
    %6293 = vmatpush1.bf16.msra.mxu0 %v1224
    %6294 = vmatprep.subr.bf16.mxu0 %v1233
    %6295 = vmatpush1.bf16.msra.mxu0 %v1232
    %6296 = vmatprep.subr.bf16.mxu0 %v1241
    %6297 = vmatpush1.bf16.msra.mxu0 %v1240
    %6298 = vmatprep.mubr.bf16.mxu0 %v6224
    %6299 = vmatmul.mubr.bf16.gmra.mrb[0].mxu0 %v6223
    %v6300 = vpop.f32.mrb[0].mxu0
    %v6301 = vadd.f32 0.0, %v6300
    %v6302 = vpop.f32.mrb[0].mxu0
    %v6303 = vadd.f32 0.0, %v6302
    %v6304 = vpop.f32.mrb[0].mxu0
    %v6305 = vpop.f32.mrb[0].mxu0
    %6306 = vdwg.mxu0
    %6307 = vmatprep.subr.bf16.mxu0 %v1123
    %6308 = vmatpush1.bf16.msra.mxu0 %v1122
    %6309 = vmatprep.subr.bf16.mxu0 %v1131
    %6310 = vmatpush1.bf16.msra.mxu0 %v1130
    %6311 = vmatprep.subr.bf16.mxu0 %v1139
    %6312 = vmatpush1.bf16.msra.mxu0 %v1138
    %6313 = vmatprep.subr.bf16.mxu0 %v1147
    %6314 = vmatpush1.bf16.msra.mxu0 %v1146
    %6315 = vmatprep.subr.bf16.mxu0 %v1155
    %6316 = vmatpush1.bf16.msra.mxu0 %v1154
    %6317 = vmatprep.subr.bf16.mxu0 %v1163
    %6318 = vmatpush1.bf16.msra.mxu0 %v1162
    %6319 = vmatprep.subr.bf16.mxu0 %v1171
    %6320 = vmatpush1.bf16.msra.mxu0 %v1170
    %6321 = vmatprep.subr.bf16.mxu0 %v1179
    %6322 = vmatpush1.bf16.msra.mxu0 %v1178
    %6323 = vmatprep.subr.bf16.mxu0 %v1187
    %6324 = vmatpush1.bf16.msra.mxu0 %v1186
    %6325 = vmatprep.subr.bf16.mxu0 %v1195
    %6326 = vmatpush1.bf16.msra.mxu0 %v1194
    %6327 = vmatprep.subr.bf16.mxu0 %v1203
    %6328 = vmatpush1.bf16.msra.mxu0 %v1202
    %6329 = vmatprep.subr.bf16.mxu0 %v1211
    %6330 = vmatpush1.bf16.msra.mxu0 %v1210
    %6331 = vmatprep.subr.bf16.mxu0 %v1219
    %6332 = vmatpush1.bf16.msra.mxu0 %v1218
    %6333 = vmatprep.subr.bf16.mxu0 %v1227
    %6334 = vmatpush1.bf16.msra.mxu0 %v1226
    %6335 = vmatprep.subr.bf16.mxu0 %v1235
    %6336 = vmatpush1.bf16.msra.mxu0 %v1234
    %6337 = vmatprep.subr.bf16.mxu0 %v1243
    %6338 = vmatpush1.bf16.msra.mxu0 %v1242
    %6339 = vmatprep.mubr.bf16.mxu0 %v6224
    %6340 = vmatmul.mubr.bf16.gmra.mrb[0].mxu0 %v6223
    %v6341 = vpop.f32.mrb[0].mxu0
    %v6342 = vadd.f32 0.0, %v6341
    %v6343 = vpop.f32.mrb[0].mxu0
    %v6344 = vadd.f32 0.0, %v6343
    %v6345 = vpop.f32.mrb[0].mxu0
    %v6346 = vpop.f32.mrb[0].mxu0
    %6347 = vdwg.mxu0
    %6348 = vmatprep.subr.bf16.mxu0 %v1125
    %6349 = vmatpush1.bf16.msra.mxu0 %v1124
    %6350 = vmatprep.subr.bf16.mxu0 %v1133
    %6351 = vmatpush1.bf16.msra.mxu0 %v1132
    %6352 = vmatprep.subr.bf16.mxu0 %v1141
    %6353 = vmatpush1.bf16.msra.mxu0 %v1140
    %6354 = vmatprep.subr.bf16.mxu0 %v1149
    %6355 = vmatpush1.bf16.msra.mxu0 %v1148
    %6356 = vmatprep.subr.bf16.mxu0 %v1157
    %6357 = vmatpush1.bf16.msra.mxu0 %v1156
    %6358 = vmatprep.subr.bf16.mxu0 %v1165
    %6359 = vmatpush1.bf16.msra.mxu0 %v1164
    %6360 = vmatprep.subr.bf16.mxu0 %v1173
    %6361 = vmatpush1.bf16.msra.mxu0 %v1172
    %6362 = vmatprep.subr.bf16.mxu0 %v1181
    %6363 = vmatpush1.bf16.msra.mxu0 %v1180
    %6364 = vmatprep.subr.bf16.mxu0 %v1189
    %6365 = vmatpush1.bf16.msra.mxu0 %v1188
    %6366 = vmatprep.subr.bf16.mxu0 %v1197
    %6367 = vmatpush1.bf16.msra.mxu0 %v1196
    %6368 = vmatprep.subr.bf16.mxu0 %v1205
    %6369 = vmatpush1.bf16.msra.mxu0 %v1204
    %6370 = vmatprep.subr.bf16.mxu0 %v1213
    %6371 = vmatpush1.bf16.msra.mxu0 %v1212
    %6372 = vmatprep.subr.bf16.mxu0 %v1221
    %6373 = vmatpush1.bf16.msra.mxu0 %v1220
    %6374 = vmatprep.subr.bf16.mxu0 %v1229
    %6375 = vmatpush1.bf16.msra.mxu0 %v1228
    %6376 = vmatprep.subr.bf16.mxu0 %v1237
    %6377 = vmatpush1.bf16.msra.mxu0 %v1236
    %6378 = vmatprep.subr.bf16.mxu0 %v1245
    %6379 = vmatpush1.bf16.msra.mxu0 %v1244
    %6380 = vmatprep.mubr.bf16.mxu0 %v6224
    %6381 = vmatmul.mubr.bf16.gmra.mrb[0].mxu0 %v6223
    %v6382 = vpop.f32.mrb[0].mxu0
    %v6383 = vadd.f32 0.0, %v6382
    %v6384 = vpop.f32.mrb[0].mxu0
    %v6385 = vadd.f32 0.0, %v6384
    %v6386 = vpop.f32.mrb[0].mxu0
    %v6387 = vpop.f32.mrb[0].mxu0
    %6388 = vdwg.mxu0
    %6389 = vmatprep.subr.bf16.mxu0 %v991
    %6390 = vmatpush1.bf16.msra.mxu0 %v990
    %6391 = vmatprep.subr.bf16.mxu0 %v999
    %6392 = vmatpush1.bf16.msra.mxu0 %v998
    %6393 = vmatprep.subr.bf16.mxu0 %v1007
    %6394 = vmatpush1.bf16.msra.mxu0 %v1006
    %6395 = vmatprep.subr.bf16.mxu0 %v1015
    %6396 = vmatpush1.bf16.msra.mxu0 %v1014
    %6397 = vmatprep.subr.bf16.mxu0 %v1023
    %6398 = vmatpush1.bf16.msra.mxu0 %v1022
    %6399 = vmatprep.subr.bf16.mxu0 %v1031
    %6400 = vmatpush1.bf16.msra.mxu0 %v1030
    %6401 = vmatprep.subr.bf16.mxu0 %v1039
    %6402 = vmatpush1.bf16.msra.mxu0 %v1038
    %6403 = vmatprep.subr.bf16.mxu0 %v1047
    %6404 = vmatpush1.bf16.msra.mxu0 %v1046
    %6405 = vmatprep.subr.bf16.mxu0 %v1055
    %6406 = vmatpush1.bf16.msra.mxu0 %v1054
    %6407 = vmatprep.subr.bf16.mxu0 %v1063
    %6408 = vmatpush1.bf16.msra.mxu0 %v1062
    %6409 = vmatprep.subr.bf16.mxu0 %v1071
    %6410 = vmatpush1.bf16.msra.mxu0 %v1070
    %6411 = vmatprep.subr.bf16.mxu0 %v1079
    %6412 = vmatpush1.bf16.msra.mxu0 %v1078
    %6413 = vmatprep.subr.bf16.mxu0 %v1087
    %6414 = vmatpush1.bf16.msra.mxu0 %v1086
    %6415 = vmatprep.subr.bf16.mxu0 %v1095
    %6416 = vmatpush1.bf16.msra.mxu0 %v1094
    %6417 = vmatprep.subr.bf16.mxu0 %v1103
    %6418 = vmatpush1.bf16.msra.mxu0 %v1102
    %6419 = vmatprep.subr.bf16.mxu0 %v1111
    %6420 = vmatpush1.bf16.msra.mxu0 %v1110
    %6421 = vmatprep.mubr.bf16.mxu0 %v6222
    %6422 = vmatmul.mubr.bf16.gmra.mrb[0].mxu0 %v6221
    %v6423 = vpop.f32.mrb[0].mxu0
    %v6424 = vadd.f32 %v6260, %v6423
    %v6425 = vpop.f32.mrb[0].mxu0
    %v6426 = vadd.f32 %v6262, %v6425
    %v6427 = vpop.f32.mrb[0].mxu0
    %v6428 = vpop.f32.mrb[0].mxu0
    %6429 = vdwg.mxu0
    %6430 = vmatprep.subr.bf16.mxu0 %v993
    %6431 = vmatpush1.bf16.msra.mxu0 %v992
    %6432 = vmatprep.subr.bf16.mxu0 %v1001
    %6433 = vmatpush1.bf16.msra.mxu0 %v1000
    %6434 = vmatprep.subr.bf16.mxu0 %v1009
    %6435 = vmatpush1.bf16.msra.mxu0 %v1008
    %6436 = vmatprep.subr.bf16.mxu0 %v1017
    %6437 = vmatpush1.bf16.msra.mxu0 %v1016
    %6438 = vmatprep.subr.bf16.mxu0 %v1025
    %6439 = vmatpush1.bf16.msra.mxu0 %v1024
    %6440 = vmatprep.subr.bf16.mxu0 %v1033
    %6441 = vmatpush1.bf16.msra.mxu0 %v1032
    %6442 = vmatprep.subr.bf16.mxu0 %v1041
    %6443 = vmatpush1.bf16.msra.mxu0 %v1040
    %6444 = vmatprep.subr.bf16.mxu0 %v1049
    %6445 = vmatpush1.bf16.msra.mxu0 %v1048
    %6446 = vmatprep.subr.bf16.mxu0 %v1057
    %6447 = vmatpush1.bf16.msra.mxu0 %v1056
    %6448 = vmatprep.subr.bf16.mxu0 %v1065
    %6449 = vmatpush1.bf16.msra.mxu0 %v1064
    %6450 = vmatprep.subr.bf16.mxu0 %v1073
    %6451 = vmatpush1.bf16.msra.mxu0 %v1072
    %6452 = vmatprep.subr.bf16.mxu0 %v1081
    %6453 = vmatpush1.bf16.msra.mxu0 %v1080
    %6454 = vmatprep.subr.bf16.mxu0 %v1089
    %6455 = vmatpush1.bf16.msra.mxu0 %v1088
    %6456 = vmatprep.subr.bf16.mxu0 %v1097
    %6457 = vmatpush1.bf16.msra.mxu0 %v1096
    %6458 = vmatprep.subr.bf16.mxu0 %v1105
    %6459 = vmatpush1.bf16.msra.mxu0 %v1104
    %6460 = vmatprep.subr.bf16.mxu0 %v1113
    %6461 = vmatpush1.bf16.msra.mxu0 %v1112
    %6462 = vmatprep.mubr.bf16.mxu0 %v6222
    %6463 = vmatmul.mubr.bf16.gmra.mrb[0].mxu0 %v6221
    %v6464 = vpop.f32.mrb[0].mxu0
    %v6465 = vadd.f32 %v6301, %v6464
    %v6466 = vpop.f32.mrb[0].mxu0
    %v6467 = vadd.f32 %v6303, %v6466
    %v6468 = vpop.f32.mrb[0].mxu0
    %v6469 = vpop.f32.mrb[0].mxu0
    %6470 = vdwg.mxu0
    %6471 = vmatprep.subr.bf16.mxu0 %v995
    %6472 = vmatpush1.bf16.msra.mxu0 %v994
    %6473 = vmatprep.subr.bf16.mxu0 %v1003
    %6474 = vmatpush1.bf16.msra.mxu0 %v1002
    %6475 = vmatprep.subr.bf16.mxu0 %v1011
    %6476 = vmatpush1.bf16.msra.mxu0 %v1010
    %6477 = vmatprep.subr.bf16.mxu0 %v1019
    %6478 = vmatpush1.bf16.msra.mxu0 %v1018
    %6479 = vmatprep.subr.bf16.mxu0 %v1027
    %6480 = vmatpush1.bf16.msra.mxu0 %v1026
    %6481 = vmatprep.subr.bf16.mxu0 %v1035
    %6482 = vmatpush1.bf16.msra.mxu0 %v1034
    %6483 = vmatprep.subr.bf16.mxu0 %v1043
    %6484 = vmatpush1.bf16.msra.mxu0 %v1042
    %6485 = vmatprep.subr.bf16.mxu0 %v1051
    %6486 = vmatpush1.bf16.msra.mxu0 %v1050
    %6487 = vmatprep.subr.bf16.mxu0 %v1059
    %6488 = vmatpush1.bf16.msra.mxu0 %v1058
    %6489 = vmatprep.subr.bf16.mxu0 %v1067
    %6490 = vmatpush1.bf16.msra.mxu0 %v1066
    %6491 = vmatprep.subr.bf16.mxu0 %v1075
    %6492 = vmatpush1.bf16.msra.mxu0 %v1074
    %6493 = vmatprep.subr.bf16.mxu0 %v1083
    %6494 = vmatpush1.bf16.msra.mxu0 %v1082
    %6495 = vmatprep.subr.bf16.mxu0 %v1091
    %6496 = vmatpush1.bf16.msra.mxu0 %v1090
    %6497 = vmatprep.subr.bf16.mxu0 %v1099
    %6498 = vmatpush1.bf16.msra.mxu0 %v1098
    %6499 = vmatprep.subr.bf16.mxu0 %v1107
    %6500 = vmatpush1.bf16.msra.mxu0 %v1106
    %6501 = vmatprep.subr.bf16.mxu0 %v1115
    %6502 = vmatpush1.bf16.msra.mxu0 %v1114
    %6503 = vmatprep.mubr.bf16.mxu0 %v6222
    %6504 = vmatmul.mubr.bf16.gmra.mrb[0].mxu0 %v6221
    %v6505 = vpop.f32.mrb[0].mxu0
    %v6506 = vadd.f32 %v6342, %v6505
    %v6507 = vpop.f32.mrb[0].mxu0
    %v6508 = vadd.f32 %v6344, %v6507
    %v6509 = vpop.f32.mrb[0].mxu0
    %v6510 = vpop.f32.mrb[0].mxu0
    %6511 = vdwg.mxu0
    %6512 = vmatprep.subr.bf16.mxu0 %v997
    %6513 = vmatpush1.bf16.msra.mxu0 %v996
    %6514 = vmatprep.subr.bf16.mxu0 %v1005
    %6515 = vmatpush1.bf16.msra.mxu0 %v1004
    %6516 = vmatprep.subr.bf16.mxu0 %v1013
    %6517 = vmatpush1.bf16.msra.mxu0 %v1012
    %6518 = vmatprep.subr.bf16.mxu0 %v1021
    %6519 = vmatpush1.bf16.msra.mxu0 %v1020
    %6520 = vmatprep.subr.bf16.mxu0 %v1029
    %6521 = vmatpush1.bf16.msra.mxu0 %v1028
    %6522 = vmatprep.subr.bf16.mxu0 %v1037
    %6523 = vmatpush1.bf16.msra.mxu0 %v1036
    %6524 = vmatprep.subr.bf16.mxu0 %v1045
    %6525 = vmatpush1.bf16.msra.mxu0 %v1044
    %6526 = vmatprep.subr.bf16.mxu0 %v1053
    %6527 = vmatpush1.bf16.msra.mxu0 %v1052
    %6528 = vmatprep.subr.bf16.mxu0 %v1061
    %6529 = vmatpush1.bf16.msra.mxu0 %v1060
    %6530 = vmatprep.subr.bf16.mxu0 %v1069
    %6531 = vmatpush1.bf16.msra.mxu0 %v1068
    %6532 = vmatprep.subr.bf16.mxu0 %v1077
    %6533 = vmatpush1.bf16.msra.mxu0 %v1076
    %6534 = vmatprep.subr.bf16.mxu0 %v1085
    %6535 = vmatpush1.bf16.msra.mxu0 %v1084
    %6536 = vmatprep.subr.bf16.mxu0 %v1093
    %6537 = vmatpush1.bf16.msra.mxu0 %v1092
    %6538 = vmatprep.subr.bf16.mxu0 %v1101
    %6539 = vmatpush1.bf16.msra.mxu0 %v1100
    %6540 = vmatprep.subr.bf16.mxu0 %v1109
    %6541 = vmatpush1.bf16.msra.mxu0 %v1108
    %6542 = vmatprep.subr.bf16.mxu0 %v1117
    %6543 = vmatpush1.bf16.msra.mxu0 %v1116
    %6544 = vmatprep.mubr.bf16.mxu0 %v6222
    %6545 = vmatmul.mubr.bf16.gmra.mrb[0].mxu0 %v6221
    %v6546 = vpop.f32.mrb[0].mxu0
    %v6547 = vadd.f32 %v6383, %v6546
    %v6548 = vpop.f32.mrb[0].mxu0
    %v6549 = vadd.f32 %v6385, %v6548
    %v6550 = vpop.f32.mrb[0].mxu0
    %v6551 = vpop.f32.mrb[0].mxu0
    %6552 = vdwg.mxu0
    %v6553 = vadd.f32 %v6424, %v2428
    %v6554 = vadd.f32 %v6426, %v2432
    %v6555 = vadd.f32 %v6465, %v2436
    %v6556 = vadd.f32 %v6467, %v2440
    %v6557 = vadd.f32 %v6506, %v2444
    %v6558 = vadd.f32 %v6508, %v2448
    %v6559 = vadd.f32 %v6547, %v2452
    %v6560 = vadd.f32 %v6549, %v2456
    %v6561 = vmul.f32 %v6553, 0.5
    %v6562 = vmul.f32 %v6554, 0.5
    %v6563 = vtanh.pop %v6561
    %v6564 = vtanh.pop %v6562
    %v6565 = vadd.f32 %v6563, 1.0
    %v6566 = vadd.f32 %v6564, 1.0
    %v6567 = vmul.f32 %v6565, 0.5
    %v6568 = vmul.f32 %v6566, 0.5
    %v6569 = vmul.f32 %v6555, 0.5
    %v6570 = vmul.f32 %v6556, 0.5
    %v6571 = vtanh.pop %v6569
    %v6572 = vtanh.pop %v6570
    %v6573 = vadd.f32 %v6571, 1.0
    %v6574 = vadd.f32 %v6572, 1.0
    %v6575 = vmul.f32 %v6573, 0.5
    %v6576 = vmul.f32 %v6574, 0.5
    %v6577 = vtanh.pop %v6557
    %v6578 = vtanh.pop %v6558
    %v6579 = vmul.f32 %v6559, 0.5
    %v6580 = vmul.f32 %v6560, 0.5
    %v6581 = vtanh.pop %v6579
    %v6582 = vtanh.pop %v6580
    %v6583 = vadd.f32 %v6581, 1.0
    %v6584 = vadd.f32 %v6582, 1.0
    %v6585 = vmul.f32 %v6583, 0.5
    %v6586 = vmul.f32 %v6584, 0.5
    %v6587 = vmul.f32 %v6575, %v6007
    %v6588 = vmul.f32 %v6576, %v6008
    %v6589 = vmul.f32 %v6567, %v6577
    %v6590 = vmul.f32 %v6568, %v6578
    %v6591 = vadd.f32 %v6587, %v6589
    %v6592 = vadd.f32 %v6588, %v6590
    %v6593 = vtanh.pop %v6591
    %v6594 = vtanh.pop %v6592
    %v6595 = vmul.f32 %v6585, %v6593
    %v6596 = vmul.f32 %v6586, %v6594
    %s6597 = smul.u32 4, 32
    %s6598 = smul.u32 %s6597, 1
    %s6599 = sshll.u32 %s6598, 4
    %6600 = dma.done %s89, %s6599
    %v6601 = vpack.c.bf16 %v6595, %v6595
    %v6602 = vpack.c.bf16 %v6596, %v6596
    %v6603 = vld [vmem:[#allocation3] sm:$0xff]
    %v6604 = vld [vmem:[#allocation3 + $0x8] sm:$0xff]
    %v6605 = vld [vmem:[#allocation3 + $0x10] sm:$0xff]
    %v6606 = vld [vmem:[#allocation3 + $0x18] sm:$0xff]
    %v6607 = vld [vmem:[#allocation3 + $0x20] sm:$0xff]
    %v6608 = vld [vmem:[#allocation3 + $0x28] sm:$0xff]
    %v6609 = vld [vmem:[#allocation3 + $0x30] sm:$0xff]
    %v6610 = vld [vmem:[#allocation3 + $0x38] sm:$0xff]
    %v6611 = vld [vmem:[#allocation3 + $0x40] sm:$0xff]
    %v6612 = vld [vmem:[#allocation3 + $0x48] sm:$0xff]
    %v6613 = vld [vmem:[#allocation3 + $0x50] sm:$0xff]
    %v6614 = vld [vmem:[#allocation3 + $0x58] sm:$0xff]
    %v6615 = vld [vmem:[#allocation3 + $0x60] sm:$0xff]
    %v6616 = vld [vmem:[#allocation3 + $0x68] sm:$0xff]
    %v6617 = vld [vmem:[#allocation3 + $0x70] sm:$0xff]
    %v6618 = vld [vmem:[#allocation3 + $0x78] sm:$0xff]
    %v6619 = vld [vmem:[%s7] sm:$0x1]
    %v6621 = vlaneseq
    %v6622 = vshrl.u32 %v6621, 7
    %v6623 = vsub.s32 0, %v6622
    %v6624 = vrot.slane %v6619, %v6623
    %6626 = vmatprep.subr.bf16.mxu0 0
    %6627 = vmatpush1.bf16.msra.mxu0 %v6603
    %6628 = vmatprep.subr.bf16.mxu0 0
    %6629 = vmatpush1.bf16.msra.mxu0 %v6604
    %6630 = vmatprep.subr.bf16.mxu0 0
    %6631 = vmatpush1.bf16.msra.mxu0 %v6605
    %6632 = vmatprep.subr.bf16.mxu0 0
    %6633 = vmatpush1.bf16.msra.mxu0 %v6606
    %6634 = vmatprep.subr.bf16.mxu0 0
    %6635 = vmatpush1.bf16.msra.mxu0 %v6607
    %6636 = vmatprep.subr.bf16.mxu0 0
    %6637 = vmatpush1.bf16.msra.mxu0 %v6608
    %6638 = vmatprep.subr.bf16.mxu0 0
    %6639 = vmatpush1.bf16.msra.mxu0 %v6609
    %6640 = vmatprep.subr.bf16.mxu0 0
    %6641 = vmatpush1.bf16.msra.mxu0 %v6610
    %6642 = vmatprep.subr.bf16.mxu0 0
    %6643 = vmatpush1.bf16.msra.mxu0 %v6611
    %6644 = vmatprep.subr.bf16.mxu0 0
    %6645 = vmatpush1.bf16.msra.mxu0 %v6612
    %6646 = vmatprep.subr.bf16.mxu0 0
    %6647 = vmatpush1.bf16.msra.mxu0 %v6613
    %6648 = vmatprep.subr.bf16.mxu0 0
    %6649 = vmatpush1.bf16.msra.mxu0 %v6614
    %6650 = vmatprep.subr.bf16.mxu0 0
    %6651 = vmatpush1.bf16.msra.mxu0 %v6615
    %6652 = vmatprep.subr.bf16.mxu0 0
    %6653 = vmatpush1.bf16.msra.mxu0 %v6616
    %6654 = vmatprep.subr.bf16.mxu0 0
    %6655 = vmatpush1.bf16.msra.mxu0 %v6617
    %6656 = vmatprep.subr.bf16.mxu0 0
    %6657 = vmatpush1.bf16.msra.mxu0 %v6618
    %6658 = vmatprep.mubr.bf16.mxu0 %v6602
    %6659 = vmatmul.mubr.bf16.gmra.mrb[0].mxu0 %v6601
    %v6660 = vpop.f32.mrb[0].mxu0
    %v6661 = vadd.f32 %v6624, %v6660
    %v6662 = vpop.f32.mrb[0].mxu0
    %v6663 = vpop.f32.mrb[0].mxu0
    %v6664 = vpop.f32.mrb[0].mxu0
    %6665 = vdwg.mxu0
    %6666 = vst [vmem:[%s8] sm:$0xff] %v6661
    // Predicated region
    $region38: #{char_lstm_forward.1} parent=1 // pred_check
      _
    $region39: #{char_lstm_forward.1} parent=1 // pred_check_branch
      %6668 = sbr.rel (0) target = $region41
    $region40: #{char_lstm_forward.1} parent=1 // pred_region
      _
    $region41: #{char_lstm_forward.1} parent=1 // pred_fallthru
      _
    // Predicated region
    $region42: #{char_lstm_forward.1} parent=1 // pred_check
      _
    $region43: #{char_lstm_forward.1} parent=1 // pred_check_branch
      %6670 = sbr.rel (0) target = $region45
    $region44: #{char_lstm_forward.1} parent=1 // pred_region
      _
    $region45: #{char_lstm_forward.1} parent=1 // pred_fallthru
      _
    %6671 = vsyncpa [#allocation6], 1
    %6672 = vsyncpa [#allocation8], 1
  %6673 = vsyncmov [#allocation4]
  %s6674 = vpop.sfrf %6673
  %p6675 = scmp.eq.s32.totalorder %s6674, 0
  %p6676 = pneg %p6675
  %6678 = shalt.err (%p6676)
  %s6679 = scalar_lea.sflag [#allocation4], 1
  %6680 = vsyncmov %s6679
  %s6681 = vpop.sfrf %6680
  %p6682 = scmp.eq.s32.totalorder %s6681, 0
  %p6683 = pneg %p6682
  %6685 = shalt.err (%p6683)

</llo_original>
